<compile_context>
chip_gen: v5e
topology: v5e:2x2
jax: 0.10.0
libtpu: 0.0.40
codegen_flags: <defaults>
</compile_context>

<pallas_src>
import jax
import jax.numpy as jnp
from jax import lax
from jax.experimental import pallas as pl
from jax.experimental.pallas import tpu as pltpu

_LANE = 128


def _round_up(x, m):
    return (x + m - 1) // m * m


# -----------------------------------------------------------------------------
# Fused kernel: conv1+BN1+ReLU -> conv2+BN2+ReLU -> ConvTranspose2d(k=2,s=2)
# -----------------------------------------------------------------------------
def _decoder_block_kernel(x_ref, w1_ref, g1_ref, b1_ref,
                          w2_ref, g2_ref, b2_ref,
                          wt_ref, bt_ref,
                          out_ref, pad1_ref, pad2_ref):
    # Shapes (all channel dims pre-padded to multiples of 128 = lane width):
    #   x_ref   : (N, H, W, Cin_p)      bf16  NHWC input
    #   w1_ref  : (9*Cin_p,  Cmid_p)    bf16  conv1 weight, rows (dy, dx, cin)
    #   w2_ref  : (9*Cmid_p, Cmid_p)    bf16  conv2 weight
    #   g*/b*   : (1, Cmid_p)           f32   BN gamma/beta (zero on pad chans)
    #   wt_ref  : (Cmid_p, C4p)         bf16  deconv weight, cols (kh, kw, cout)
    #   bt_ref  : (1, C4p)              f32   deconv bias tiled over (kh, kw)
    #   out_ref : (N*H*W, C4p)          f32   lane-dense output slab
    #   pad1/2  : (N, H+2, W+2, C)      bf16  zero-halo activation scratch
    N, H, W, _ = x_ref.shape
    Cmid = w1_ref.shape[1]
    M = N * H * W
    eps = 1e-5
    inv_m = 1.0 / M

    def halo_pad_store(pad_ref, interior):
        # Zero only the 1-pixel halo (4 thin slabs); the interior is fully
        # overwritten, so no full-buffer zeroing pass is needed.
        C = pad_ref.shape[-1]
        zrow = jnp.zeros((N, 1, W + 2, C), pad_ref.dtype)
        zcol = jnp.zeros((N, H, 1, C), pad_ref.dtype)
        pad_ref[:, 0:1, :, :] = zrow
        pad_ref[:, H + 1:H + 2, :, :] = zrow
        pad_ref[:, 1:H + 1, 0:1, :] = zcol
        pad_ref[:, 1:H + 1, W + 1:W + 2, :] = zcol
        pad_ref[:, 1:H + 1, 1:W + 1, :] = interior

    def im2col(pad_ref):
        # (N, H+2, W+2, C) -> (M, 9*C), taps ordered (dy, dx, c).  With C a
        # multiple of 128 every tap occupies whole lane-tiles (no cross-lane
        # shuffle work in the concat).
        C = pad_ref.shape[-1]
        taps = [pad_ref[:, dy:dy + H, dx:dx + W, :]
                for dy in range(3) for dx in range(3)]
        return jnp.concatenate(taps, axis=-1).reshape(M, 9 * C)

    def bn_relu(h, gamma, beta):
        # Training-mode BatchNorm: single reduction pass (sum + sumsq, f32)
        # and one fused scale/shift FMA pass; rsqrt goes to the EUP.
        s1 = jnp.sum(h, axis=0, keepdims=True)
        s2 = jnp.sum(h * h, axis=0, keepdims=True)
        mean = s1 * inv_m
        var = jnp.maximum(s2 * inv_m - mean * mean, 0.0)   # biased variance
        scale = gamma * lax.rsqrt(var + eps)
        shift = beta - mean * scale
        return jnp.maximum(h * scale + shift, 0.0)

    # ---- conv1 (3x3, pad=1) + BN1 + ReLU ------------------------------------
    # Conv bias omitted: training-mode BN mean subtraction cancels it exactly.
    halo_pad_store(pad1_ref, x_ref[...])
    h1 = jnp.dot(im2col(pad1_ref), w1_ref[...],
                 preferred_element_type=jnp.float32)          # (M, Cmid_p) f32
    h1 = bn_relu(h1, g1_ref[...], b1_ref[...])

    # ---- conv2 (3x3, pad=1) + BN2 + ReLU ------------------------------------
    halo_pad_store(pad2_ref,
                   h1.reshape(N, H, W, Cmid).astype(pad2_ref.dtype))
    h2 = jnp.dot(im2col(pad2_ref), w2_ref[...],
                 preferred_element_type=jnp.float32)          # (M, Cmid_p) f32
    h2 = bn_relu(h2, g2_ref[...], b2_ref[...])

    # ---- ConvTranspose2d(k=2, s=2): one matmul, lane-dense (M, C4p) store ----
    out_ref[...] = jnp.dot(h2.astype(wt_ref.dtype), wt_ref[...],
                           preferred_element_type=jnp.float32) + bt_ref[...]


# -----------------------------------------------------------------------------
# Public wrapper: NCHW in / NCHW out, like the PyTorch module.
# -----------------------------------------------------------------------------
def _decoder_block_impl(x_nchw, p, out_ch):
    N, Cin, H, W = x_nchw.shape
    Cin_p = p["w1"].shape[0] // 9
    Cmid_p = p["w1"].shape[1]
    C4p = p["wt"].shape[1]
    M = N * H * W

    # NCHW -> NHWC, bf16, channels zero-padded to a lane multiple (128).
    x = jnp.transpose(x_nchw, (0, 2, 3, 1)).astype(jnp.bfloat16)
    x = jnp.pad(x, ((0, 0), (0, 0), (0, 0), (0, Cin_p - Cin)))

    flops = 2 * M * (9 * Cin_p * Cmid_p + 9 * Cmid_p * Cmid_p + Cmid_p * C4p)
    bytes_accessed = int(
        x.size * 2
        + (p["w1"].size + p["w2"].size + p["wt"].size) * 2
        + (4 * Cmid_p + C4p) * 4
        + M * C4p * 4)

    y = pl.pallas_call(
        _decoder_block_kernel,
        out_shape=jax.ShapeDtypeStruct((M, C4p), jnp.float32),
        in_specs=[pl.BlockSpec(memory_space=pltpu.MemorySpace.VMEM)] * 9,
        out_specs=pl.BlockSpec(memory_space=pltpu.MemorySpace.VMEM),
        scratch_shapes=[
            pltpu.VMEM((N, H + 2, W + 2, Cin_p), jnp.bfloat16),   # padded x
            pltpu.VMEM((N, H + 2, W + 2, Cmid_p), jnp.bfloat16),  # padded h1
        ],
        compiler_params=pltpu.CompilerParams(
            vmem_limit_bytes=64 * 1024 * 1024),
        cost_estimate=pl.CostEstimate(flops=flops,
                                      transcendentals=2 * Cmid_p,
                                      bytes_accessed=bytes_accessed),
        # TODO(synk): at real decoder shapes (large N*H*W) grid over row tiles
        # ("parallel" axis for v7x megacore) with a two-pass BN (sum/sumsq
        # scratch, finalize under pl.when) and per-tap matmul accumulation so
        # neither the 9x im2col slab nor the full activation set must be
        # VMEM-resident on v7x's 64 MiB.
    )(x, p["w1"], p["g1"], p["b1"], p["w2"], p["g2"], p["b2"],
      p["wt"], p["bt"])

    # Stride-2 interleave + NCHW; drop lane padding.  Pure reshape/transpose
    # glue on the final tensor (kept f32 to match the PyTorch output dtype).
    y = y[:, :4 * out_ch].reshape(N, H, W, 2, 2, out_ch)    # (n,i,j,kh,kw,c)
    y = jnp.transpose(y, (0, 5, 1, 3, 2, 4))                # (n,c,i,kh,j,kw)
    return y.reshape(N, out_ch, 2 * H, 2 * W)


decoder_block = jax.jit(_decoder_block_impl, static_argnames="out_ch")


# -----------------------------------------------------------------------------
# One-time parameter preparation (PyTorch layouts -> kernel layouts, padded,
# bf16).  Padded channels carry zero weights / zero gamma / zero beta, so they
# stay exactly zero through the whole pipeline and are sliced off at the end.
# -----------------------------------------------------------------------------
def prepare_params(params):
    f32, bf16 = jnp.float32, jnp.bfloat16
    cmid, cin = params["conv1_w"].shape[:2]
    cout = params["deconv_w"].shape[1]
    cin_p = _round_up(cin, _LANE)
    cmid_p = _round_up(cmid, _LANE)
    c4p = _round_up(4 * cout, _LANE)

    def conv_tap_major(w, cin_pad, cout_pad):
        # (Cout, Cin, 3, 3) -> (9*Cin_p, Cout_p), rows ordered (dy, dx, cin).
        w = jnp.pad(w, ((0, cout_pad - w.shape[0]), (0, cin_pad - w.shape[1]),
                        (0, 0), (0, 0)))
        return jnp.transpose(w, (2, 3, 1, 0)).reshape(9 * cin_pad, cout_pad)

    def row(v, n_pad):
        return jnp.pad(v, (0, n_pad - v.shape[0])).reshape(1, -1).astype(f32)

    # ConvTranspose2d weight (Cmid, Cout, 2, 2) -> (Cmid_p, C4p), columns
    # ordered (kh, kw, cout); bias tiled per (kh, kw), zero on padded lanes.
    wt = jnp.pad(params["deconv_w"],
                 ((0, cmid_p - cmid), (0, 0), (0, 0), (0, 0)))
    wt = jnp.transpose(wt, (0, 2, 3, 1)).reshape(cmid_p, 4 * cout)
    wt = jnp.pad(wt, ((0, 0), (0, c4p - 4 * cout)))
    bt = jnp.pad(jnp.tile(params["deconv_b"], 4), (0, c4p - 4 * cout))

    # conv1_b / conv2_b intentionally dropped: training-mode BatchNorm's mean
    # subtraction cancels a per-channel pre-BN bias exactly.
    return {
        "w1": conv_tap_major(params["conv1_w"], cin_p, cmid_p).astype(bf16),
        "g1": row(params["bn1_g"], cmid_p), "b1": row(params["bn1_b"], cmid_p),
        "w2": conv_tap_major(params["conv2_w"], cmid_p, cmid_p).astype(bf16),
        "g2": row(params["bn2_g"], cmid_p), "b2": row(params["bn2_b"], cmid_p),
        "wt": wt.astype(bf16),
        "bt": bt.reshape(1, -1).astype(f32),
    }


# -----------------------------------------------------------------------------
# Deterministic parameter construction (PyTorch-layout shapes).
# -----------------------------------------------------------------------------
def make_params(key, in_ch, mid_ch, out_ch):
    ks = jax.random.split(key, 6)
    return {
        "conv1_w": 0.1 * jax.random.normal(ks[0], (mid_ch, in_ch, 3, 3), jnp.float32),
        "conv1_b": 0.1 * jax.random.normal(ks[1], (mid_ch,), jnp.float32),
        "bn1_g": jnp.ones((mid_ch,), jnp.float32),
        "bn1_b": jnp.zeros((mid_ch,), jnp.float32),
        "conv2_w": 0.1 * jax.random.normal(ks[2], (mid_ch, mid_ch, 3, 3), jnp.float32),
        "conv2_b": 0.1 * jax.random.normal(ks[3], (mid_ch,), jnp.float32),
        "bn2_g": jnp.ones((mid_ch,), jnp.float32),
        "bn2_b": jnp.zeros((mid_ch,), jnp.float32),
        "deconv_w": 0.1 * jax.random.normal(ks[4], (mid_ch, out_ch, 2, 2), jnp.float32),
        "deconv_b": 0.1 * jax.random.normal(ks[5], (out_ch,), jnp.float32),
    }


# -----------------------------------------------------------------------------
# Pure-JAX reference (mirrors the kernel's bf16 quantization points so only
# accumulation-order noise remains).
# -----------------------------------------------------------------------------
def _reference(x_nchw, params):
    f32, bf16 = jnp.float32, jnp.bfloat16
    eps = 1e-5

    def conv3x3(x_nhwc, w_oihw, b):
        w = jnp.transpose(w_oihw, (2, 3, 1, 0)).astype(bf16)      # HWIO
        y = lax.conv_general_dilated(
            x_nhwc.astype(bf16), w, window_strides=(1, 1), padding="SAME",
            dimension_numbers=("NHWC", "HWIO", "NHWC"),
            preferred_element_type=f32)
        return y + b.astype(f32)

    def bn_relu(h, g, b):
        mean = jnp.mean(h, axis=(0, 1, 2), keepdims=True)
        var = jnp.mean(jnp.square(h - mean), axis=(0, 1, 2), keepdims=True)
        return jnp.maximum((h - mean) * (g / jnp.sqrt(var + eps)) + b, 0.0)

    x = jnp.transpose(x_nchw, (0, 2, 3, 1))
    h = bn_relu(conv3x3(x, params["conv1_w"], params["conv1_b"]),
                params["bn1_g"], params["bn1_b"])
    h = bn_relu(conv3x3(h, params["conv2_w"], params["conv2_b"]),
                params["bn2_g"], params["bn2_b"])
    # ConvTranspose2d(k=2, s=2): each input pixel emits its own 2x2 block.
    y = jnp.einsum("nijc,cokl->nijklo", h.astype(bf16),
                   params["deconv_w"].astype(bf16),
                   preferred_element_type=f32) + params["deconv_b"]
    N, H, W = y.shape[:3]
    cout = y.shape[-1]
    y = jnp.transpose(y, (0, 5, 1, 3, 2, 4))
    return y.reshape(N, cout, 2 * H, 2 * W)


if __name__ == "__main__":
    N, Cin, Cmid, Cout, H, W = 2, 8, 16, 8, 16, 16

    key = jax.random.PRNGKey(0)
    kx, kp = jax.random.split(key)
    x = jax.random.normal(kx, (N, Cin, H, W), jnp.float32)
    params = make_params(kp, Cin, Cmid, Cout)
    prepped = prepare_params(params)      # one-time weight pack / pad / cast

    out = jax.block_until_ready(decoder_block(x, prepped, out_ch=Cout))

    assert out.shape == (N, Cout, 2 * H, 2 * W), out.shape
    assert out.dtype == jnp.float32
    assert bool(jnp.all(jnp.isfinite(out)))

    ref = _reference(x, params)
    err = float(jnp.max(jnp.abs(out - ref)))
    assert err < 3e-2, f"max |err| vs reference = {err}"
    print("KERNEL_OK")
</pallas_src>

<mosaic_0001>
module attributes {stable_mosaic.version = 11 : i64} {
  func.func @_decoder_block_kernel(%arg0: memref<2x16x16x128xbf16, #tpu.memory_space<vmem>>, %arg1: memref<1152x128xbf16, #tpu.memory_space<vmem>>, %arg2: memref<1x128xf32, #tpu.memory_space<vmem>>, %arg3: memref<1x128xf32, #tpu.memory_space<vmem>>, %arg4: memref<1152x128xbf16, #tpu.memory_space<vmem>>, %arg5: memref<1x128xf32, #tpu.memory_space<vmem>>, %arg6: memref<1x128xf32, #tpu.memory_space<vmem>>, %arg7: memref<128x128xbf16, #tpu.memory_space<vmem>>, %arg8: memref<1x128xf32, #tpu.memory_space<vmem>>, %arg9: memref<512x128xf32, #tpu.memory_space<vmem>>, %arg10: memref<2x18x18x128xbf16, #tpu.memory_space<vmem>>, %arg11: memref<2x18x18x128xbf16, #tpu.memory_space<vmem>>) attributes {dimension_semantics = [], scalar_prefetch = 0 : i64, scratch_operands = 2 : i64, tpu.core_type = #tpu.core_type<tc>} {
    %c0 = arith.constant 0 : index
    %c0_0 = arith.constant 0 : index
    %c0_1 = arith.constant 0 : index
    %c0_2 = arith.constant 0 : index
    %0 = vector.load %arg0[%c0, %c0_0, %c0_1, %c0_2] : memref<2x16x16x128xbf16, #tpu.memory_space<vmem>>, vector<2x16x16x128xbf16>
    %cst = arith.constant 0.000000e+00 : bf16
    %1 = vector.broadcast %cst : bf16 to vector<2x1x18x128xbf16>
    %cst_3 = arith.constant 0.000000e+00 : bf16
    %2 = vector.broadcast %cst_3 : bf16 to vector<2x16x1x128xbf16>
    %c0_4 = arith.constant 0 : index
    %c0_5 = arith.constant 0 : index
    %c0_6 = arith.constant 0 : index
    %c0_7 = arith.constant 0 : index
    %3 = vector.load %arg10[%c0_4, %c0_5, %c0_6, %c0_7] : memref<2x18x18x128xbf16, #tpu.memory_space<vmem>>, vector<2x1x18x128xbf16>
    tpu.vector_store %arg10[%c0_4, %c0_5, %c0_6, %c0_7], %1 {strides = array<i32>} : memref<2x18x18x128xbf16, #tpu.memory_space<vmem>>, vector<2x1x18x128xbf16>,
    %c0_8 = arith.constant 0 : index
    %c17 = arith.constant 17 : index
    %c0_9 = arith.constant 0 : index
    %c0_10 = arith.constant 0 : index
    %4 = vector.load %arg10[%c0_8, %c17, %c0_9, %c0_10] : memref<2x18x18x128xbf16, #tpu.memory_space<vmem>>, vector<2x1x18x128xbf16>
    tpu.vector_store %arg10[%c0_8, %c17, %c0_9, %c0_10], %1 {strides = array<i32>} : memref<2x18x18x128xbf16, #tpu.memory_space<vmem>>, vector<2x1x18x128xbf16>,
    %c0_11 = arith.constant 0 : index
    %c1 = arith.constant 1 : index
    %c0_12 = arith.constant 0 : index
    %c0_13 = arith.constant 0 : index
    %5 = vector.load %arg10[%c0_11, %c1, %c0_12, %c0_13] : memref<2x18x18x128xbf16, #tpu.memory_space<vmem>>, vector<2x16x1x128xbf16>
    tpu.vector_store %arg10[%c0_11, %c1, %c0_12, %c0_13], %2 {strides = array<i32>} : memref<2x18x18x128xbf16, #tpu.memory_space<vmem>>, vector<2x16x1x128xbf16>,
    %c0_14 = arith.constant 0 : index
    %c1_15 = arith.constant 1 : index
    %c17_16 = arith.constant 17 : index
    %c0_17 = arith.constant 0 : index
    %6 = vector.load %arg10[%c0_14, %c1_15, %c17_16, %c0_17] : memref<2x18x18x128xbf16, #tpu.memory_space<vmem>>, vector<2x16x1x128xbf16>
    tpu.vector_store %arg10[%c0_14, %c1_15, %c17_16, %c0_17], %2 {strides = array<i32>} : memref<2x18x18x128xbf16, #tpu.memory_space<vmem>>, vector<2x16x1x128xbf16>,
    %c0_18 = arith.constant 0 : index
    %c1_19 = arith.constant 1 : index
    %c1_20 = arith.constant 1 : index
    %c0_21 = arith.constant 0 : index
    %7 = vector.load %arg10[%c0_18, %c1_19, %c1_20, %c0_21] : memref<2x18x18x128xbf16, #tpu.memory_space<vmem>>, vector<2x16x16x128xbf16>
    tpu.vector_store %arg10[%c0_18, %c1_19, %c1_20, %c0_21], %0 {strides = array<i32>} : memref<2x18x18x128xbf16, #tpu.memory_space<vmem>>, vector<2x16x16x128xbf16>,
    %c0_22 = arith.constant 0 : index
    %c0_23 = arith.constant 0 : index
    %c0_24 = arith.constant 0 : index
    %c0_25 = arith.constant 0 : index
    %8 = vector.load %arg10[%c0_22, %c0_23, %c0_24, %c0_25] : memref<2x18x18x128xbf16, #tpu.memory_space<vmem>>, vector<2x16x16x128xbf16>
    %c0_26 = arith.constant 0 : index
    %c0_27 = arith.constant 0 : index
    %c1_28 = arith.constant 1 : index
    %c0_29 = arith.constant 0 : index
    %9 = vector.load %arg10[%c0_26, %c0_27, %c1_28, %c0_29] : memref<2x18x18x128xbf16, #tpu.memory_space<vmem>>, vector<2x16x16x128xbf16>
    %c0_30 = arith.constant 0 : index
    %c0_31 = arith.constant 0 : index
    %c2 = arith.constant 2 : index
    %c0_32 = arith.constant 0 : index
    %10 = vector.load %arg10[%c0_30, %c0_31, %c2, %c0_32] : memref<2x18x18x128xbf16, #tpu.memory_space<vmem>>, vector<2x16x16x128xbf16>
    %c0_33 = arith.constant 0 : index
    %c1_34 = arith.constant 1 : index
    %c0_35 = arith.constant 0 : index
    %c0_36 = arith.constant 0 : index
    %11 = vector.load %arg10[%c0_33, %c1_34, %c0_35, %c0_36] : memref<2x18x18x128xbf16, #tpu.memory_space<vmem>>, vector<2x16x16x128xbf16>
    %c0_37 = arith.constant 0 : index
    %c1_38 = arith.constant 1 : index
    %c1_39 = arith.constant 1 : index
    %c0_40 = arith.constant 0 : index
    %12 = vector.load %arg10[%c0_37, %c1_38, %c1_39, %c0_40] : memref<2x18x18x128xbf16, #tpu.memory_space<vmem>>, vector<2x16x16x128xbf16>
    %c0_41 = arith.constant 0 : index
    %c1_42 = arith.constant 1 : index
    %c2_43 = arith.constant 2 : index
    %c0_44 = arith.constant 0 : index
    %13 = vector.load %arg10[%c0_41, %c1_42, %c2_43, %c0_44] : memref<2x18x18x128xbf16, #tpu.memory_space<vmem>>, vector<2x16x16x128xbf16>
    %c0_45 = arith.constant 0 : index
    %c2_46 = arith.constant 2 : index
    %c0_47 = arith.constant 0 : index
    %c0_48 = arith.constant 0 : index
    %14 = vector.load %arg10[%c0_45, %c2_46, %c0_47, %c0_48] : memref<2x18x18x128xbf16, #tpu.memory_space<vmem>>, vector<2x16x16x128xbf16>
    %c0_49 = arith.constant 0 : index
    %c2_50 = arith.constant 2 : index
    %c1_51 = arith.constant 1 : index
    %c0_52 = arith.constant 0 : index
    %15 = vector.load %arg10[%c0_49, %c2_50, %c1_51, %c0_52] : memref<2x18x18x128xbf16, #tpu.memory_space<vmem>>, vector<2x16x16x128xbf16>
    %c0_53 = arith.constant 0 : index
    %c2_54 = arith.constant 2 : index
    %c2_55 = arith.constant 2 : index
    %c0_56 = arith.constant 0 : index
    %16 = vector.load %arg10[%c0_53, %c2_54, %c2_55, %c0_56] : memref<2x18x18x128xbf16, #tpu.memory_space<vmem>>, vector<2x16x16x128xbf16>
    %17 = tpu.concatenate %8, %9, %10, %11, %12, %13, %14, %15, %16 in 3 : vector<2x16x16x128xbf16>, vector<2x16x16x128xbf16>, vector<2x16x16x128xbf16>, vector<2x16x16x128xbf16>, vector<2x16x16x128xbf16>, vector<2x16x16x128xbf16>, vector<2x16x16x128xbf16>, vector<2x16x16x128xbf16>, vector<2x16x16x128xbf16> -> vector<2x16x16x1152xbf16>
    %18 = vector.shape_cast %17 : vector<2x16x16x1152xbf16> to vector<512x1152xbf16>
    %c0_57 = arith.constant 0 : index
    %c0_58 = arith.constant 0 : index
    %19 = vector.load %arg1[%c0_57, %c0_58] : memref<1152x128xbf16, #tpu.memory_space<vmem>>, vector<1152x128xbf16>
    %cst_59 = arith.constant dense<0.000000e+00> : vector<512x128xf32>
    %20 = tpu.matmul %18, %19, %cst_59 {dimension_numbers = #tpu.dot_dimension_numbers<[1], [0], [0], [1], [0, 0, 1, 1], [], []>} : vector<512x1152xbf16>, vector<1152x128xbf16>, vector<512x128xf32> -> vector<512x128xf32>
    %c0_60 = arith.constant 0 : index
    %c0_61 = arith.constant 0 : index
    %21 = vector.load %arg2[%c0_60, %c0_61] : memref<1x128xf32, #tpu.memory_space<vmem>>, vector<1x128xf32>
    %c0_62 = arith.constant 0 : index
    %c0_63 = arith.constant 0 : index
    %22 = vector.load %arg3[%c0_62, %c0_63] : memref<1x128xf32, #tpu.memory_space<vmem>>, vector<1x128xf32>
    %cst_64 = arith.constant dense<0.000000e+00> : vector<128xf32>
    %23 = vector.multi_reduction <add>, %20, %cst_64 [0] : vector<512x128xf32> to vector<128xf32>
    %24 = vector.shape_cast %23 : vector<128xf32> to vector<1x128xf32>
    %25 = arith.mulf %20, %20 : vector<512x128xf32>
    %cst_65 = arith.constant dense<0.000000e+00> : vector<128xf32>
    %26 = vector.multi_reduction <add>, %25, %cst_65 [0] : vector<512x128xf32> to vector<128xf32>
    %27 = vector.shape_cast %26 : vector<128xf32> to vector<1x128xf32>
    %cst_66 = arith.constant 0.001953125 : f32
    %28 = vector.broadcast %cst_66 : f32 to vector<1x128xf32>
    %29 = arith.mulf %24, %28 : vector<1x128xf32>
    %cst_67 = arith.constant 0.001953125 : f32
    %30 = vector.broadcast %cst_67 : f32 to vector<1x128xf32>
    %31 = arith.mulf %27, %30 : vector<1x128xf32>
    %32 = arith.mulf %29, %29 : vector<1x128xf32>
    %33 = arith.subf %31, %32 : vector<1x128xf32>
    %cst_68 = arith.constant 0.000000e+00 : f32
    %34 = vector.broadcast %cst_68 : f32 to vector<1x128xf32>
    %35 = arith.maximumf %33, %34 : vector<1x128xf32>
    %cst_69 = arith.constant 9.99999974E-6 : f32
    %36 = vector.broadcast %cst_69 : f32 to vector<1x128xf32>
    %37 = arith.addf %35, %36 : vector<1x128xf32>
    %38 = math.rsqrt %37 : vector<1x128xf32>
    %39 = arith.mulf %21, %38 : vector<1x128xf32>
    %40 = arith.mulf %29, %39 : vector<1x128xf32>
    %41 = arith.subf %22, %40 : vector<1x128xf32>
    %42 = vector.broadcast %39 : vector<1x128xf32> to vector<512x128xf32>
    %43 = arith.mulf %20, %42 : vector<512x128xf32>
    %44 = vector.broadcast %41 : vector<1x128xf32> to vector<512x128xf32>
    %45 = arith.addf %43, %44 : vector<512x128xf32>
    %cst_70 = arith.constant 0.000000e+00 : f32
    %46 = vector.broadcast %cst_70 : f32 to vector<512x128xf32>
    %47 = arith.maximumf %45, %46 : vector<512x128xf32>
    %48 = vector.shape_cast %47 : vector<512x128xf32> to vector<2x16x16x128xf32>
    %49 = arith.truncf %48 : vector<2x16x16x128xf32> to vector<2x16x16x128xbf16>
    %cst_71 = arith.constant 0.000000e+00 : bf16
    %50 = vector.broadcast %cst_71 : bf16 to vector<2x1x18x128xbf16>
    %cst_72 = arith.constant 0.000000e+00 : bf16
    %51 = vector.broadcast %cst_72 : bf16 to vector<2x16x1x128xbf16>
    %c0_73 = arith.constant 0 : index
    %c0_74 = arith.constant 0 : index
    %c0_75 = arith.constant 0 : index
    %c0_76 = arith.constant 0 : index
    %52 = vector.load %arg11[%c0_73, %c0_74, %c0_75, %c0_76] : memref<2x18x18x128xbf16, #tpu.memory_space<vmem>>, vector<2x1x18x128xbf16>
    tpu.vector_store %arg11[%c0_73, %c0_74, %c0_75, %c0_76], %50 {strides = array<i32>} : memref<2x18x18x128xbf16, #tpu.memory_space<vmem>>, vector<2x1x18x128xbf16>,
    %c0_77 = arith.constant 0 : index
    %c17_78 = arith.constant 17 : index
    %c0_79 = arith.constant 0 : index
    %c0_80 = arith.constant 0 : index
    %53 = vector.load %arg11[%c0_77, %c17_78, %c0_79, %c0_80] : memref<2x18x18x128xbf16, #tpu.memory_space<vmem>>, vector<2x1x18x128xbf16>
    tpu.vector_store %arg11[%c0_77, %c17_78, %c0_79, %c0_80], %50 {strides = array<i32>} : memref<2x18x18x128xbf16, #tpu.memory_space<vmem>>, vector<2x1x18x128xbf16>,
    %c0_81 = arith.constant 0 : index
    %c1_82 = arith.constant 1 : index
    %c0_83 = arith.constant 0 : index
    %c0_84 = arith.constant 0 : index
    %54 = vector.load %arg11[%c0_81, %c1_82, %c0_83, %c0_84] : memref<2x18x18x128xbf16, #tpu.memory_space<vmem>>, vector<2x16x1x128xbf16>
    tpu.vector_store %arg11[%c0_81, %c1_82, %c0_83, %c0_84], %51 {strides = array<i32>} : memref<2x18x18x128xbf16, #tpu.memory_space<vmem>>, vector<2x16x1x128xbf16>,
    %c0_85 = arith.constant 0 : index
    %c1_86 = arith.constant 1 : index
    %c17_87 = arith.constant 17 : index
    %c0_88 = arith.constant 0 : index
    %55 = vector.load %arg11[%c0_85, %c1_86, %c17_87, %c0_88] : memref<2x18x18x128xbf16, #tpu.memory_space<vmem>>, vector<2x16x1x128xbf16>
    tpu.vector_store %arg11[%c0_85, %c1_86, %c17_87, %c0_88], %51 {strides = array<i32>} : memref<2x18x18x128xbf16, #tpu.memory_space<vmem>>, vector<2x16x1x128xbf16>,
    %c0_89 = arith.constant 0 : index
    %c1_90 = arith.constant 1 : index
    %c1_91 = arith.constant 1 : index
    %c0_92 = arith.constant 0 : index
    %56 = vector.load %arg11[%c0_89, %c1_90, %c1_91, %c0_92] : memref<2x18x18x128xbf16, #tpu.memory_space<vmem>>, vector<2x16x16x128xbf16>
    tpu.vector_store %arg11[%c0_89, %c1_90, %c1_91, %c0_92], %49 {strides = array<i32>} : memref<2x18x18x128xbf16, #tpu.memory_space<vmem>>, vector<2x16x16x128xbf16>,
    %c0_93 = arith.constant 0 : index
    %c0_94 = arith.constant 0 : index
    %c0_95 = arith.constant 0 : index
    %c0_96 = arith.constant 0 : index
    %57 = vector.load %arg11[%c0_93, %c0_94, %c0_95, %c0_96] : memref<2x18x18x128xbf16, #tpu.memory_space<vmem>>, vector<2x16x16x128xbf16>
    %c0_97 = arith.constant 0 : index
    %c0_98 = arith.constant 0 : index
    %c1_99 = arith.constant 1 : index
    %c0_100 = arith.constant 0 : index
    %58 = vector.load %arg11[%c0_97, %c0_98, %c1_99, %c0_100] : memref<2x18x18x128xbf16, #tpu.memory_space<vmem>>, vector<2x16x16x128xbf16>
    %c0_101 = arith.constant 0 : index
    %c0_102 = arith.constant 0 : index
    %c2_103 = arith.constant 2 : index
    %c0_104 = arith.constant 0 : index
    %59 = vector.load %arg11[%c0_101, %c0_102, %c2_103, %c0_104] : memref<2x18x18x128xbf16, #tpu.memory_space<vmem>>, vector<2x16x16x128xbf16>
    %c0_105 = arith.constant 0 : index
    %c1_106 = arith.constant 1 : index
    %c0_107 = arith.constant 0 : index
    %c0_108 = arith.constant 0 : index
    %60 = vector.load %arg11[%c0_105, %c1_106, %c0_107, %c0_108] : memref<2x18x18x128xbf16, #tpu.memory_space<vmem>>, vector<2x16x16x128xbf16>
    %c0_109 = arith.constant 0 : index
    %c1_110 = arith.constant 1 : index
    %c1_111 = arith.constant 1 : index
    %c0_112 = arith.constant 0 : index
    %61 = vector.load %arg11[%c0_109, %c1_110, %c1_111, %c0_112] : memref<2x18x18x128xbf16, #tpu.memory_space<vmem>>, vector<2x16x16x128xbf16>
    %c0_113 = arith.constant 0 : index
    %c1_114 = arith.constant 1 : index
    %c2_115 = arith.constant 2 : index
    %c0_116 = arith.constant 0 : index
    %62 = vector.load %arg11[%c0_113, %c1_114, %c2_115, %c0_116] : memref<2x18x18x128xbf16, #tpu.memory_space<vmem>>, vector<2x16x16x128xbf16>
    %c0_117 = arith.constant 0 : index
    %c2_118 = arith.constant 2 : index
    %c0_119 = arith.constant 0 : index
    %c0_120 = arith.constant 0 : index
    %63 = vector.load %arg11[%c0_117, %c2_118, %c0_119, %c0_120] : memref<2x18x18x128xbf16, #tpu.memory_space<vmem>>, vector<2x16x16x128xbf16>
    %c0_121 = arith.constant 0 : index
    %c2_122 = arith.constant 2 : index
    %c1_123 = arith.constant 1 : index
    %c0_124 = arith.constant 0 : index
    %64 = vector.load %arg11[%c0_121, %c2_122, %c1_123, %c0_124] : memref<2x18x18x128xbf16, #tpu.memory_space<vmem>>, vector<2x16x16x128xbf16>
    %c0_125 = arith.constant 0 : index
    %c2_126 = arith.constant 2 : index
    %c2_127 = arith.constant 2 : index
    %c0_128 = arith.constant 0 : index
    %65 = vector.load %arg11[%c0_125, %c2_126, %c2_127, %c0_128] : memref<2x18x18x128xbf16, #tpu.memory_space<vmem>>, vector<2x16x16x128xbf16>
    %66 = tpu.concatenate %57, %58, %59, %60, %61, %62, %63, %64, %65 in 3 : vector<2x16x16x128xbf16>, vector<2x16x16x128xbf16>, vector<2x16x16x128xbf16>, vector<2x16x16x128xbf16>, vector<2x16x16x128xbf16>, vector<2x16x16x128xbf16>, vector<2x16x16x128xbf16>, vector<2x16x16x128xbf16>, vector<2x16x16x128xbf16> -> vector<2x16x16x1152xbf16>
    %67 = vector.shape_cast %66 : vector<2x16x16x1152xbf16> to vector<512x1152xbf16>
    %c0_129 = arith.constant 0 : index
    %c0_130 = arith.constant 0 : index
    %68 = vector.load %arg4[%c0_129, %c0_130] : memref<1152x128xbf16, #tpu.memory_space<vmem>>, vector<1152x128xbf16>
    %cst_131 = arith.constant dense<0.000000e+00> : vector<512x128xf32>
    %69 = tpu.matmul %67, %68, %cst_131 {dimension_numbers = #tpu.dot_dimension_numbers<[1], [0], [0], [1], [0, 0, 1, 1], [], []>} : vector<512x1152xbf16>, vector<1152x128xbf16>, vector<512x128xf32> -> vector<512x128xf32>
    %c0_132 = arith.constant 0 : index
    %c0_133 = arith.constant 0 : index
    %70 = vector.load %arg5[%c0_132, %c0_133] : memref<1x128xf32, #tpu.memory_space<vmem>>, vector<1x128xf32>
    %c0_134 = arith.constant 0 : index
    %c0_135 = arith.constant 0 : index
    %71 = vector.load %arg6[%c0_134, %c0_135] : memref<1x128xf32, #tpu.memory_space<vmem>>, vector<1x128xf32>
    %cst_136 = arith.constant dense<0.000000e+00> : vector<128xf32>
    %72 = vector.multi_reduction <add>, %69, %cst_136 [0] : vector<512x128xf32> to vector<128xf32>
    %73 = vector.shape_cast %72 : vector<128xf32> to vector<1x128xf32>
    %74 = arith.mulf %69, %69 : vector<512x128xf32>
    %cst_137 = arith.constant dense<0.000000e+00> : vector<128xf32>
    %75 = vector.multi_reduction <add>, %74, %cst_137 [0] : vector<512x128xf32> to vector<128xf32>
    %76 = vector.shape_cast %75 : vector<128xf32> to vector<1x128xf32>
    %cst_138 = arith.constant 0.001953125 : f32
    %77 = vector.broadcast %cst_138 : f32 to vector<1x128xf32>
    %78 = arith.mulf %73, %77 : vector<1x128xf32>
    %cst_139 = arith.constant 0.001953125 : f32
    %79 = vector.broadcast %cst_139 : f32 to vector<1x128xf32>
    %80 = arith.mulf %76, %79 : vector<1x128xf32>
    %81 = arith.mulf %78, %78 : vector<1x128xf32>
    %82 = arith.subf %80, %81 : vector<1x128xf32>
    %cst_140 = arith.constant 0.000000e+00 : f32
    %83 = vector.broadcast %cst_140 : f32 to vector<1x128xf32>
    %84 = arith.maximumf %82, %83 : vector<1x128xf32>
    %cst_141 = arith.constant 9.99999974E-6 : f32
    %85 = vector.broadcast %cst_141 : f32 to vector<1x128xf32>
    %86 = arith.addf %84, %85 : vector<1x128xf32>
    %87 = math.rsqrt %86 : vector<1x128xf32>
    %88 = arith.mulf %70, %87 : vector<1x128xf32>
    %89 = arith.mulf %78, %88 : vector<1x128xf32>
    %90 = arith.subf %71, %89 : vector<1x128xf32>
    %91 = vector.broadcast %88 : vector<1x128xf32> to vector<512x128xf32>
    %92 = arith.mulf %69, %91 : vector<512x128xf32>
    %93 = vector.broadcast %90 : vector<1x128xf32> to vector<512x128xf32>
    %94 = arith.addf %92, %93 : vector<512x128xf32>
    %cst_142 = arith.constant 0.000000e+00 : f32
    %95 = vector.broadcast %cst_142 : f32 to vector<512x128xf32>
    %96 = arith.maximumf %94, %95 : vector<512x128xf32>
    %97 = arith.truncf %96 : vector<512x128xf32> to vector<512x128xbf16>
    %c0_143 = arith.constant 0 : index
    %c0_144 = arith.constant 0 : index
    %98 = vector.load %arg7[%c0_143, %c0_144] : memref<128x128xbf16, #tpu.memory_space<vmem>>, vector<128x128xbf16>
    %cst_145 = arith.constant dense<0.000000e+00> : vector<512x128xf32>
    %99 = tpu.matmul %97, %98, %cst_145 {dimension_numbers = #tpu.dot_dimension_numbers<[1], [0], [0], [1], [0, 0, 1, 1], [], []>} : vector<512x128xbf16>, vector<128x128xbf16>, vector<512x128xf32> -> vector<512x128xf32>
    %c0_146 = arith.constant 0 : index
    %c0_147 = arith.constant 0 : index
    %100 = vector.load %arg8[%c0_146, %c0_147] : memref<1x128xf32, #tpu.memory_space<vmem>>, vector<1x128xf32>
    %101 = vector.broadcast %100 : vector<1x128xf32> to vector<512x128xf32>
    %102 = arith.addf %99, %101 : vector<512x128xf32>
    %c0_148 = arith.constant 0 : index
    %c0_149 = arith.constant 0 : index
    %103 = vector.load %arg9[%c0_148, %c0_149] : memref<512x128xf32, #tpu.memory_space<vmem>>, vector<512x128xf32>
    tpu.vector_store %arg9[%c0_148, %c0_149], %102 {strides = array<i32>} : memref<512x128xf32, #tpu.memory_space<vmem>>, vector<512x128xf32>,
    return
  }
}

</mosaic_0001>

<llo_original>
// kernel: _decoder_block_impl.1
$region0: #{_decoder_block_impl.1}
  #allocation0 [shape = 'u32[]', space=smem, size = 0x4, offset = 0x4, fixed_abs, tag = 'smem constant byte address 0x4 - core index']
  #allocation1 [shape = 'u32[72,128]{1,0:T(1,128)}', space=vmem, size = 0x9000, scoped, tag = 'internal scratch']
  #allocation2 [shape = 'bf16[2,18,18,128]{3,2,1,0:T(8,128)(2,1)}', space=vmem, size = 0x36000, scoped, tag = 'scratch operand']
  #allocation3 [shape = 'bf16[2,18,18,128]{3,2,1,0:T(8,128)(2,1)}', space=vmem, size = 0x36000, scoped, tag = 'scratch operand']
  %s0 = inlined_call_operand.vmem [shape: bf16[2,16,16,128], index: 0, kind: input, shape index: {}]
  %s1 = inlined_call_operand.vmem [shape: bf16[1152,128], index: 1, kind: input, shape index: {}]
  %s2 = inlined_call_operand.vmem [shape: f32[1,128], index: 2, kind: input, shape index: {}]
  %s3 = inlined_call_operand.vmem [shape: f32[1,128], index: 3, kind: input, shape index: {}]
  %s4 = inlined_call_operand.vmem [shape: bf16[1152,128], index: 4, kind: input, shape index: {}]
  %s5 = inlined_call_operand.vmem [shape: f32[1,128], index: 5, kind: input, shape index: {}]
  %s6 = inlined_call_operand.vmem [shape: f32[1,128], index: 6, kind: input, shape index: {}]
  %s7 = inlined_call_operand.vmem [shape: bf16[128,128], index: 7, kind: input, shape index: {}]
  %s8 = inlined_call_operand.vmem [shape: f32[1,128], index: 8, kind: input, shape index: {}]
  %s9 = inlined_call_operand.vmem [shape: f32[512,128], index: 9, kind: output, shape index: {}]
  %s10 = sld [smem:[#allocation0]]
  $region46: #{_decoder_block_impl.1} parent=0
    _
  %s12 = ssub.s32 1, %s10
  %s13 = scalar_select 0, %s12, %s10
  // Predicated region
  $region2: #{_decoder_block_impl.1} parent=0 // pred_check
    _
  $region3: #{_decoder_block_impl.1} parent=0 // pred_check_branch
    %15 = sbr.rel (0) target = $region5
  $region4: #{_decoder_block_impl.1} parent=0 // pred_region
    _
  $region5: #{_decoder_block_impl.1} parent=0 // pred_fallthru
    _
  // Predicated region
  $region6: #{_decoder_block_impl.1} parent=0 // pred_check
    _
  $region7: #{_decoder_block_impl.1} parent=0 // pred_check_branch
    %17 = sbr.rel (0) target = $region9
  $region8: #{_decoder_block_impl.1} parent=0 // pred_region
    _
  $region9: #{_decoder_block_impl.1} parent=0 // pred_fallthru
    _
  // Predicated region
  $region10: #{_decoder_block_impl.1} parent=0 // pred_check
    _
  $region11: #{_decoder_block_impl.1} parent=0 // pred_check_branch
    %19 = sbr.rel (0) target = $region13
  $region12: #{_decoder_block_impl.1} parent=0 // pred_region
    _
  $region13: #{_decoder_block_impl.1} parent=0 // pred_fallthru
    _
  // Predicated region
  $region14: #{_decoder_block_impl.1} parent=0 // pred_check
    _
  $region15: #{_decoder_block_impl.1} parent=0 // pred_check_branch
    %21 = sbr.rel (0) target = $region17
  $region16: #{_decoder_block_impl.1} parent=0 // pred_region
    _
  $region17: #{_decoder_block_impl.1} parent=0 // pred_fallthru
    _
  // Predicated region
  $region18: #{_decoder_block_impl.1} parent=0 // pred_check
    _
  $region19: #{_decoder_block_impl.1} parent=0 // pred_check_branch
    %23 = sbr.rel (0) target = $region21
  $region20: #{_decoder_block_impl.1} parent=0 // pred_region
    _
  $region21: #{_decoder_block_impl.1} parent=0 // pred_fallthru
    _
  // Predicated region
  $region22: #{_decoder_block_impl.1} parent=0 // pred_check
    _
  $region23: #{_decoder_block_impl.1} parent=0 // pred_check_branch
    %25 = sbr.rel (0) target = $region25
  $region24: #{_decoder_block_impl.1} parent=0 // pred_region
    _
  $region25: #{_decoder_block_impl.1} parent=0 // pred_fallthru
    _
  // Predicated region
  $region26: #{_decoder_block_impl.1} parent=0 // pred_check
    _
  $region27: #{_decoder_block_impl.1} parent=0 // pred_check_branch
    %27 = sbr.rel (0) target = $region29
  $region28: #{_decoder_block_impl.1} parent=0 // pred_region
    _
  $region29: #{_decoder_block_impl.1} parent=0 // pred_fallthru
    _
  // Predicated region
  $region30: #{_decoder_block_impl.1} parent=0 // pred_check
    _
  $region31: #{_decoder_block_impl.1} parent=0 // pred_check_branch
    %29 = sbr.rel (0) target = $region33
  $region32: #{_decoder_block_impl.1} parent=0 // pred_region
    _
  $region33: #{_decoder_block_impl.1} parent=0 // pred_fallthru
    _
  // Predicated region
  $region34: #{_decoder_block_impl.1} parent=0 // pred_check
    _
  $region35: #{_decoder_block_impl.1} parent=0 // pred_check_branch
    %31 = sbr.rel (0) target = $region37
  $region36: #{_decoder_block_impl.1} parent=0 // pred_region
    _
  $region37: #{_decoder_block_impl.1} parent=0 // pred_fallthru
    _
  %v33 = vld [vmem:[%s0] sm:$0xf]
  %v34 = vld [vmem:[%s0 + $0x4] sm:$0xf]
  %v35 = vld [vmem:[%s0 + $0x8] sm:$0xf]
  %v36 = vld [vmem:[%s0 + $0xc] sm:$0xf]
  %v37 = vld [vmem:[%s0 + $0x10] sm:$0xf]
  %v38 = vld [vmem:[%s0 + $0x14] sm:$0xf]
  %v39 = vld [vmem:[%s0 + $0x18] sm:$0xf]
  %v40 = vld [vmem:[%s0 + $0x1c] sm:$0xf]
  %v41 = vld [vmem:[%s0 + $0x20] sm:$0xf]
  %v42 = vld [vmem:[%s0 + $0x24] sm:$0xf]
  %v43 = vld [vmem:[%s0 + $0x28] sm:$0xf]
  %v44 = vld [vmem:[%s0 + $0x2c] sm:$0xf]
  %v45 = vld [vmem:[%s0 + $0x30] sm:$0xf]
  %v46 = vld [vmem:[%s0 + $0x34] sm:$0xf]
  %v47 = vld [vmem:[%s0 + $0x38] sm:$0xf]
  %v48 = vld [vmem:[%s0 + $0x3c] sm:$0xf]
  %v49 = vld [vmem:[%s0 + $0x40] sm:$0xf]
  %v50 = vld [vmem:[%s0 + $0x44] sm:$0xf]
  %v51 = vld [vmem:[%s0 + $0x48] sm:$0xf]
  %v52 = vld [vmem:[%s0 + $0x4c] sm:$0xf]
  %v53 = vld [vmem:[%s0 + $0x50] sm:$0xf]
  %v54 = vld [vmem:[%s0 + $0x54] sm:$0xf]
  %v55 = vld [vmem:[%s0 + $0x58] sm:$0xf]
  %v56 = vld [vmem:[%s0 + $0x5c] sm:$0xf]
  %v57 = vld [vmem:[%s0 + $0x60] sm:$0xf]
  %v58 = vld [vmem:[%s0 + $0x64] sm:$0xf]
  %v59 = vld [vmem:[%s0 + $0x68] sm:$0xf]
  %v60 = vld [vmem:[%s0 + $0x6c] sm:$0xf]
  %v61 = vld [vmem:[%s0 + $0x70] sm:$0xf]
  %v62 = vld [vmem:[%s0 + $0x74] sm:$0xf]
  %v63 = vld [vmem:[%s0 + $0x78] sm:$0xf]
  %v64 = vld [vmem:[%s0 + $0x7c] sm:$0xf]
  %v65 = vld [vmem:[%s0 + $0x80] sm:$0xf]
  %v66 = vld [vmem:[%s0 + $0x84] sm:$0xf]
  %v67 = vld [vmem:[%s0 + $0x88] sm:$0xf]
  %v68 = vld [vmem:[%s0 + $0x8c] sm:$0xf]
  %v69 = vld [vmem:[%s0 + $0x90] sm:$0xf]
  %v70 = vld [vmem:[%s0 + $0x94] sm:$0xf]
  %v71 = vld [vmem:[%s0 + $0x98] sm:$0xf]
  %v72 = vld [vmem:[%s0 + $0x9c] sm:$0xf]
  %v73 = vld [vmem:[%s0 + $0xa0] sm:$0xf]
  %v74 = vld [vmem:[%s0 + $0xa4] sm:$0xf]
  %v75 = vld [vmem:[%s0 + $0xa8] sm:$0xf]
  %v76 = vld [vmem:[%s0 + $0xac] sm:$0xf]
  %v77 = vld [vmem:[%s0 + $0xb0] sm:$0xf]
  %v78 = vld [vmem:[%s0 + $0xb4] sm:$0xf]
  %v79 = vld [vmem:[%s0 + $0xb8] sm:$0xf]
  %v80 = vld [vmem:[%s0 + $0xbc] sm:$0xf]
  %v81 = vld [vmem:[%s0 + $0xc0] sm:$0xf]
  %v82 = vld [vmem:[%s0 + $0xc4] sm:$0xf]
  %v83 = vld [vmem:[%s0 + $0xc8] sm:$0xf]
  %v84 = vld [vmem:[%s0 + $0xcc] sm:$0xf]
  %v85 = vld [vmem:[%s0 + $0xd0] sm:$0xf]
  %v86 = vld [vmem:[%s0 + $0xd4] sm:$0xf]
  %v87 = vld [vmem:[%s0 + $0xd8] sm:$0xf]
  %v88 = vld [vmem:[%s0 + $0xdc] sm:$0xf]
  %v89 = vld [vmem:[%s0 + $0xe0] sm:$0xf]
  %v90 = vld [vmem:[%s0 + $0xe4] sm:$0xf]
  %v91 = vld [vmem:[%s0 + $0xe8] sm:$0xf]
  %v92 = vld [vmem:[%s0 + $0xec] sm:$0xf]
  %v93 = vld [vmem:[%s0 + $0xf0] sm:$0xf]
  %v94 = vld [vmem:[%s0 + $0xf4] sm:$0xf]
  %v95 = vld [vmem:[%s0 + $0xf8] sm:$0xf]
  %v96 = vld [vmem:[%s0 + $0xfc] sm:$0xf]
  %97 = vst [vmem:[#allocation2] sm:$0xf] 0
  %98 = vst [vmem:[#allocation2 + $0x4] sm:$0xf] 0
  %99 = vst [vmem:[#allocation2 + $0x8] sm:$0x1] 0
  %100 = vst [vmem:[#allocation2 + $0xd8] sm:$0xf] 0
  %101 = vst [vmem:[#allocation2 + $0xdc] sm:$0xf] 0
  %102 = vst [vmem:[#allocation2 + $0xe0] sm:$0x1] 0
  %s103 = scalar_lea.vmem [#allocation2], 204
  %104 = vst [vmem:[%s103] sm:$0xf] 0
  %105 = vst [vmem:[%s103 + $0x4] sm:$0xf] 0
  %106 = vst [vmem:[%s103 + $0x8] sm:$0x1] 0
  %107 = vst [vmem:[%s103 + $0xd8] sm:$0xf] 0
  %108 = vst [vmem:[%s103 + $0xdc] sm:$0xf] 0
  %109 = vst [vmem:[%s103 + $0xe0] sm:$0x1] 0
  %s110 = scalar_lea.vmem [#allocation2], 12
  %vm111 = vcmask 1040384
  %vm112 = vsmask.f32 256
  %vm113 = vmand %vm111, %vm112
  %v114 = vld [vmem:[%s110] sm:$0x1]
  %v115 = vsel %vm113, 0, %v114
  %116 = vst [vmem:[%s110] sm:$0x1] %v115
  %v117 = vld [vmem:[%s110 + $0xc] sm:$0x1]
  %v118 = vsel %vm113, 0, %v117
  %119 = vst [vmem:[%s110 + $0xc] sm:$0x1] %v118
  %v120 = vld [vmem:[%s110 + $0x18] sm:$0x1]
  %v121 = vsel %vm113, 0, %v120
  %122 = vst [vmem:[%s110 + $0x18] sm:$0x1] %v121
  %v123 = vld [vmem:[%s110 + $0x24] sm:$0x1]
  %v124 = vsel %vm113, 0, %v123
  %125 = vst [vmem:[%s110 + $0x24] sm:$0x1] %v124
  %v126 = vld [vmem:[%s110 + $0x30] sm:$0x1]
  %v127 = vsel %vm113, 0, %v126
  %128 = vst [vmem:[%s110 + $0x30] sm:$0x1] %v127
  %v129 = vld [vmem:[%s110 + $0x3c] sm:$0x1]
  %v130 = vsel %vm113, 0, %v129
  %131 = vst [vmem:[%s110 + $0x3c] sm:$0x1] %v130
  %v132 = vld [vmem:[%s110 + $0x48] sm:$0x1]
  %v133 = vsel %vm113, 0, %v132
  %134 = vst [vmem:[%s110 + $0x48] sm:$0x1] %v133
  %v135 = vld [vmem:[%s110 + $0x54] sm:$0x1]
  %v136 = vsel %vm113, 0, %v135
  %137 = vst [vmem:[%s110 + $0x54] sm:$0x1] %v136
  %v138 = vld [vmem:[%s110 + $0x60] sm:$0x1]
  %v139 = vsel %vm113, 0, %v138
  %140 = vst [vmem:[%s110 + $0x60] sm:$0x1] %v139
  %v141 = vld [vmem:[%s110 + $0x6c] sm:$0x1]
  %v142 = vsel %vm113, 0, %v141
  %143 = vst [vmem:[%s110 + $0x6c] sm:$0x1] %v142
  %v144 = vld [vmem:[%s110 + $0x78] sm:$0x1]
  %v145 = vsel %vm113, 0, %v144
  %146 = vst [vmem:[%s110 + $0x78] sm:$0x1] %v145
  %v147 = vld [vmem:[%s110 + $0x84] sm:$0x1]
  %v148 = vsel %vm113, 0, %v147
  %149 = vst [vmem:[%s110 + $0x84] sm:$0x1] %v148
  %v150 = vld [vmem:[%s110 + $0x90] sm:$0x1]
  %v151 = vsel %vm113, 0, %v150
  %152 = vst [vmem:[%s110 + $0x90] sm:$0x1] %v151
  %v153 = vld [vmem:[%s110 + $0x9c] sm:$0x1]
  %v154 = vsel %vm113, 0, %v153
  %155 = vst [vmem:[%s110 + $0x9c] sm:$0x1] %v154
  %v156 = vld [vmem:[%s110 + $0xa8] sm:$0x1]
  %v157 = vsel %vm113, 0, %v156
  %158 = vst [vmem:[%s110 + $0xa8] sm:$0x1] %v157
  %v159 = vld [vmem:[%s110 + $0xb4] sm:$0x1]
  %v160 = vsel %vm113, 0, %v159
  %161 = vst [vmem:[%s110 + $0xb4] sm:$0x1] %v160
  %v162 = vld [vmem:[%s110 + $0xd8] sm:$0x1]
  %v163 = vsel %vm113, 0, %v162
  %164 = vst [vmem:[%s110 + $0xd8] sm:$0x1] %v163
  %v165 = vld [vmem:[%s110 + $0xe4] sm:$0x1]
  %v166 = vsel %vm113, 0, %v165
  %167 = vst [vmem:[%s110 + $0xe4] sm:$0x1] %v166
  %v168 = vld [vmem:[%s110 + $0xf0] sm:$0x1]
  %v169 = vsel %vm113, 0, %v168
  %170 = vst [vmem:[%s110 + $0xf0] sm:$0x1] %v169
  %v171 = vld [vmem:[%s110 + $0xfc] sm:$0x1]
  %v172 = vsel %vm113, 0, %v171
  %173 = vst [vmem:[%s110 + $0xfc] sm:$0x1] %v172
  %v174 = vld [vmem:[%s110 + $0x108] sm:$0x1]
  %v175 = vsel %vm113, 0, %v174
  %176 = vst [vmem:[%s110 + $0x108] sm:$0x1] %v175
  %v177 = vld [vmem:[%s110 + $0x114] sm:$0x1]
  %v178 = vsel %vm113, 0, %v177
  %179 = vst [vmem:[%s110 + $0x114] sm:$0x1] %v178
  %v180 = vld [vmem:[%s110 + $0x120] sm:$0x1]
  %v181 = vsel %vm113, 0, %v180
  %182 = vst [vmem:[%s110 + $0x120] sm:$0x1] %v181
  %v183 = vld [vmem:[%s110 + $0x12c] sm:$0x1]
  %v184 = vsel %vm113, 0, %v183
  %185 = vst [vmem:[%s110 + $0x12c] sm:$0x1] %v184
  %v186 = vld [vmem:[%s110 + $0x138] sm:$0x1]
  %v187 = vsel %vm113, 0, %v186
  %188 = vst [vmem:[%s110 + $0x138] sm:$0x1] %v187
  %v189 = vld [vmem:[%s110 + $0x144] sm:$0x1]
  %v190 = vsel %vm113, 0, %v189
  %191 = vst [vmem:[%s110 + $0x144] sm:$0x1] %v190
  %v192 = vld [vmem:[%s110 + $0x150] sm:$0x1]
  %v193 = vsel %vm113, 0, %v192
  %194 = vst [vmem:[%s110 + $0x150] sm:$0x1] %v193
  %v195 = vld [vmem:[%s110 + $0x15c] sm:$0x1]
  %v196 = vsel %vm113, 0, %v195
  %197 = vst [vmem:[%s110 + $0x15c] sm:$0x1] %v196
  %v198 = vld [vmem:[%s110 + $0x168] sm:$0x1]
  %v199 = vsel %vm113, 0, %v198
  %200 = vst [vmem:[%s110 + $0x168] sm:$0x1] %v199
  %v201 = vld [vmem:[%s110 + $0x174] sm:$0x1]
  %v202 = vsel %vm113, 0, %v201
  %203 = vst [vmem:[%s110 + $0x174] sm:$0x1] %v202
  %v204 = vld [vmem:[%s110 + $0x180] sm:$0x1]
  %v205 = vsel %vm113, 0, %v204
  %206 = vst [vmem:[%s110 + $0x180] sm:$0x1] %v205
  %v207 = vld [vmem:[%s110 + $0x18c] sm:$0x1]
  %v208 = vsel %vm113, 0, %v207
  %209 = vst [vmem:[%s110 + $0x18c] sm:$0x1] %v208
  %vm210 = vsmask.f32 7938
  %vm211 = vmand %vm111, %vm210
  %v212 = vld [vmem:[%s110 + $0x8] sm:$0x1]
  %v213 = vsel %vm211, 0, %v212
  %214 = vst [vmem:[%s110 + $0x8] sm:$0x1] %v213
  %v215 = vld [vmem:[%s110 + $0x14] sm:$0x1]
  %v216 = vsel %vm211, 0, %v215
  %217 = vst [vmem:[%s110 + $0x14] sm:$0x1] %v216
  %v218 = vld [vmem:[%s110 + $0x20] sm:$0x1]
  %v219 = vsel %vm211, 0, %v218
  %220 = vst [vmem:[%s110 + $0x20] sm:$0x1] %v219
  %v221 = vld [vmem:[%s110 + $0x2c] sm:$0x1]
  %v222 = vsel %vm211, 0, %v221
  %223 = vst [vmem:[%s110 + $0x2c] sm:$0x1] %v222
  %v224 = vld [vmem:[%s110 + $0x38] sm:$0x1]
  %v225 = vsel %vm211, 0, %v224
  %226 = vst [vmem:[%s110 + $0x38] sm:$0x1] %v225
  %v227 = vld [vmem:[%s110 + $0x44] sm:$0x1]
  %v228 = vsel %vm211, 0, %v227
  %229 = vst [vmem:[%s110 + $0x44] sm:$0x1] %v228
  %v230 = vld [vmem:[%s110 + $0x50] sm:$0x1]
  %v231 = vsel %vm211, 0, %v230
  %232 = vst [vmem:[%s110 + $0x50] sm:$0x1] %v231
  %v233 = vld [vmem:[%s110 + $0x5c] sm:$0x1]
  %v234 = vsel %vm211, 0, %v233
  %235 = vst [vmem:[%s110 + $0x5c] sm:$0x1] %v234
  %v236 = vld [vmem:[%s110 + $0x68] sm:$0x1]
  %v237 = vsel %vm211, 0, %v236
  %238 = vst [vmem:[%s110 + $0x68] sm:$0x1] %v237
  %v239 = vld [vmem:[%s110 + $0x74] sm:$0x1]
  %v240 = vsel %vm211, 0, %v239
  %241 = vst [vmem:[%s110 + $0x74] sm:$0x1] %v240
  %v242 = vld [vmem:[%s110 + $0x80] sm:$0x1]
  %v243 = vsel %vm211, 0, %v242
  %244 = vst [vmem:[%s110 + $0x80] sm:$0x1] %v243
  %v245 = vld [vmem:[%s110 + $0x8c] sm:$0x1]
  %v246 = vsel %vm211, 0, %v245
  %247 = vst [vmem:[%s110 + $0x8c] sm:$0x1] %v246
  %v248 = vld [vmem:[%s110 + $0x98] sm:$0x1]
  %v249 = vsel %vm211, 0, %v248
  %250 = vst [vmem:[%s110 + $0x98] sm:$0x1] %v249
  %v251 = vld [vmem:[%s110 + $0xa4] sm:$0x1]
  %v252 = vsel %vm211, 0, %v251
  %253 = vst [vmem:[%s110 + $0xa4] sm:$0x1] %v252
  %v254 = vld [vmem:[%s110 + $0xb0] sm:$0x1]
  %v255 = vsel %vm211, 0, %v254
  %256 = vst [vmem:[%s110 + $0xb0] sm:$0x1] %v255
  %v257 = vld [vmem:[%s110 + $0xbc] sm:$0x1]
  %v258 = vsel %vm211, 0, %v257
  %259 = vst [vmem:[%s110 + $0xbc] sm:$0x1] %v258
  %v260 = vld [vmem:[%s110 + $0xe0] sm:$0x1]
  %v261 = vsel %vm211, 0, %v260
  %262 = vst [vmem:[%s110 + $0xe0] sm:$0x1] %v261
  %v263 = vld [vmem:[%s110 + $0xec] sm:$0x1]
  %v264 = vsel %vm211, 0, %v263
  %265 = vst [vmem:[%s110 + $0xec] sm:$0x1] %v264
  %v266 = vld [vmem:[%s110 + $0xf8] sm:$0x1]
  %v267 = vsel %vm211, 0, %v266
  %268 = vst [vmem:[%s110 + $0xf8] sm:$0x1] %v267
  %v269 = vld [vmem:[%s110 + $0x104] sm:$0x1]
  %v270 = vsel %vm211, 0, %v269
  %271 = vst [vmem:[%s110 + $0x104] sm:$0x1] %v270
  %v272 = vld [vmem:[%s110 + $0x110] sm:$0x1]
  %v273 = vsel %vm211, 0, %v272
  %274 = vst [vmem:[%s110 + $0x110] sm:$0x1] %v273
  %v275 = vld [vmem:[%s110 + $0x11c] sm:$0x1]
  %v276 = vsel %vm211, 0, %v275
  %277 = vst [vmem:[%s110 + $0x11c] sm:$0x1] %v276
  %v278 = vld [vmem:[%s110 + $0x128] sm:$0x1]
  %v279 = vsel %vm211, 0, %v278
  %280 = vst [vmem:[%s110 + $0x128] sm:$0x1] %v279
  %v281 = vld [vmem:[%s110 + $0x134] sm:$0x1]
  %v282 = vsel %vm211, 0, %v281
  %283 = vst [vmem:[%s110 + $0x134] sm:$0x1] %v282
  %v284 = vld [vmem:[%s110 + $0x140] sm:$0x1]
  %v285 = vsel %vm211, 0, %v284
  %286 = vst [vmem:[%s110 + $0x140] sm:$0x1] %v285
  %v287 = vld [vmem:[%s110 + $0x14c] sm:$0x1]
  %v288 = vsel %vm211, 0, %v287
  %289 = vst [vmem:[%s110 + $0x14c] sm:$0x1] %v288
  %v290 = vld [vmem:[%s110 + $0x158] sm:$0x1]
  %v291 = vsel %vm211, 0, %v290
  %292 = vst [vmem:[%s110 + $0x158] sm:$0x1] %v291
  %v293 = vld [vmem:[%s110 + $0x164] sm:$0x1]
  %v294 = vsel %vm211, 0, %v293
  %295 = vst [vmem:[%s110 + $0x164] sm:$0x1] %v294
  %v296 = vld [vmem:[%s110 + $0x170] sm:$0x1]
  %v297 = vsel %vm211, 0, %v296
  %298 = vst [vmem:[%s110 + $0x170] sm:$0x1] %v297
  %v299 = vld [vmem:[%s110 + $0x17c] sm:$0x1]
  %v300 = vsel %vm211, 0, %v299
  %301 = vst [vmem:[%s110 + $0x17c] sm:$0x1] %v300
  %v302 = vld [vmem:[%s110 + $0x188] sm:$0x1]
  %v303 = vsel %vm211, 0, %v302
  %304 = vst [vmem:[%s110 + $0x188] sm:$0x1] %v303
  %v305 = vld [vmem:[%s110 + $0x194] sm:$0x1]
  %v306 = vsel %vm211, 0, %v305
  %307 = vst [vmem:[%s110 + $0x194] sm:$0x1] %v306
  %vm308 = vsmask.f32 4368
  %vm309 = vmor %vm112, %vm308
  %v311 = vshrl.u32 %v33, 16
  %v313 = vrot.slane %v311, 7
  %v314 = vshll.u32 %v33, 16
  %v316 = vor.u32 %v313, %v314
  %v317 = vrot.slane %v313, 4
  %v319 = vshrl.u32 %v34, 16
  %v321 = vrot.slane %v319, 7
  %v322 = vshll.u32 %v34, 16
  %v324 = vor.u32 %v321, %v322
  %v325 = vsel %vm309, %v317, %v324
  %v326 = vrot.slane %v321, 4
  %v328 = vshrl.u32 %v35, 16
  %v330 = vrot.slane %v328, 7
  %v331 = vshll.u32 %v35, 16
  %v333 = vor.u32 %v330, %v331
  %v334 = vrot.slane %v330, 4
  %v336 = vshrl.u32 %v36, 16
  %v338 = vrot.slane %v336, 7
  %v339 = vshll.u32 %v36, 16
  %v341 = vor.u32 %v338, %v339
  %v342 = vsel %vm309, %v334, %v341
  %v343 = vrot.slane %v338, 4
  %v345 = vshrl.u32 %v37, 16
  %v347 = vrot.slane %v345, 7
  %v348 = vshll.u32 %v37, 16
  %v350 = vor.u32 %v347, %v348
  %v351 = vrot.slane %v347, 4
  %v353 = vshrl.u32 %v38, 16
  %v355 = vrot.slane %v353, 7
  %v356 = vshll.u32 %v38, 16
  %v358 = vor.u32 %v355, %v356
  %v359 = vsel %vm309, %v351, %v358
  %v360 = vrot.slane %v355, 4
  %v362 = vshrl.u32 %v39, 16
  %v364 = vrot.slane %v362, 7
  %v365 = vshll.u32 %v39, 16
  %v367 = vor.u32 %v364, %v365
  %v368 = vrot.slane %v364, 4
  %v370 = vshrl.u32 %v40, 16
  %v372 = vrot.slane %v370, 7
  %v373 = vshll.u32 %v40, 16
  %v375 = vor.u32 %v372, %v373
  %v376 = vsel %vm309, %v368, %v375
  %v377 = vrot.slane %v372, 4
  %v379 = vshrl.u32 %v41, 16
  %v381 = vrot.slane %v379, 7
  %v382 = vshll.u32 %v41, 16
  %v384 = vor.u32 %v381, %v382
  %v385 = vrot.slane %v381, 4
  %v387 = vshrl.u32 %v42, 16
  %v389 = vrot.slane %v387, 7
  %v390 = vshll.u32 %v42, 16
  %v392 = vor.u32 %v389, %v390
  %v393 = vsel %vm309, %v385, %v392
  %v394 = vrot.slane %v389, 4
  %v396 = vshrl.u32 %v43, 16
  %v398 = vrot.slane %v396, 7
  %v399 = vshll.u32 %v43, 16
  %v401 = vor.u32 %v398, %v399
  %v402 = vrot.slane %v398, 4
  %v404 = vshrl.u32 %v44, 16
  %v406 = vrot.slane %v404, 7
  %v407 = vshll.u32 %v44, 16
  %v409 = vor.u32 %v406, %v407
  %v410 = vsel %vm309, %v402, %v409
  %v411 = vrot.slane %v406, 4
  %v413 = vshrl.u32 %v45, 16
  %v415 = vrot.slane %v413, 7
  %v416 = vshll.u32 %v45, 16
  %v418 = vor.u32 %v415, %v416
  %v419 = vrot.slane %v415, 4
  %v421 = vshrl.u32 %v46, 16
  %v423 = vrot.slane %v421, 7
  %v424 = vshll.u32 %v46, 16
  %v426 = vor.u32 %v423, %v424
  %v427 = vsel %vm309, %v419, %v426
  %v428 = vrot.slane %v423, 4
  %v430 = vshrl.u32 %v47, 16
  %v432 = vrot.slane %v430, 7
  %v433 = vshll.u32 %v47, 16
  %v435 = vor.u32 %v432, %v433
  %v436 = vrot.slane %v432, 4
  %v438 = vshrl.u32 %v48, 16
  %v440 = vrot.slane %v438, 7
  %v441 = vshll.u32 %v48, 16
  %v443 = vor.u32 %v440, %v441
  %v444 = vsel %vm309, %v436, %v443
  %v445 = vrot.slane %v440, 4
  %v447 = vshrl.u32 %v49, 16
  %v449 = vrot.slane %v447, 7
  %v450 = vshll.u32 %v49, 16
  %v452 = vor.u32 %v449, %v450
  %v453 = vrot.slane %v449, 4
  %v455 = vshrl.u32 %v50, 16
  %v457 = vrot.slane %v455, 7
  %v458 = vshll.u32 %v50, 16
  %v460 = vor.u32 %v457, %v458
  %v461 = vsel %vm309, %v453, %v460
  %v462 = vrot.slane %v457, 4
  %v464 = vshrl.u32 %v51, 16
  %v466 = vrot.slane %v464, 7
  %v467 = vshll.u32 %v51, 16
  %v469 = vor.u32 %v466, %v467
  %v470 = vrot.slane %v466, 4
  %v472 = vshrl.u32 %v52, 16
  %v474 = vrot.slane %v472, 7
  %v475 = vshll.u32 %v52, 16
  %v477 = vor.u32 %v474, %v475
  %v478 = vsel %vm309, %v470, %v477
  %v479 = vrot.slane %v474, 4
  %v481 = vshrl.u32 %v53, 16
  %v483 = vrot.slane %v481, 7
  %v484 = vshll.u32 %v53, 16
  %v486 = vor.u32 %v483, %v484
  %v487 = vrot.slane %v483, 4
  %v489 = vshrl.u32 %v54, 16
  %v491 = vrot.slane %v489, 7
  %v492 = vshll.u32 %v54, 16
  %v494 = vor.u32 %v491, %v492
  %v495 = vsel %vm309, %v487, %v494
  %v496 = vrot.slane %v491, 4
  %v498 = vshrl.u32 %v55, 16
  %v500 = vrot.slane %v498, 7
  %v501 = vshll.u32 %v55, 16
  %v503 = vor.u32 %v500, %v501
  %v504 = vrot.slane %v500, 4
  %v506 = vshrl.u32 %v56, 16
  %v508 = vrot.slane %v506, 7
  %v509 = vshll.u32 %v56, 16
  %v511 = vor.u32 %v508, %v509
  %v512 = vsel %vm309, %v504, %v511
  %v513 = vrot.slane %v508, 4
  %v515 = vshrl.u32 %v57, 16
  %v517 = vrot.slane %v515, 7
  %v518 = vshll.u32 %v57, 16
  %v520 = vor.u32 %v517, %v518
  %v521 = vrot.slane %v517, 4
  %v523 = vshrl.u32 %v58, 16
  %v525 = vrot.slane %v523, 7
  %v526 = vshll.u32 %v58, 16
  %v528 = vor.u32 %v525, %v526
  %v529 = vsel %vm309, %v521, %v528
  %v530 = vrot.slane %v525, 4
  %v532 = vshrl.u32 %v59, 16
  %v534 = vrot.slane %v532, 7
  %v535 = vshll.u32 %v59, 16
  %v537 = vor.u32 %v534, %v535
  %v538 = vrot.slane %v534, 4
  %v540 = vshrl.u32 %v60, 16
  %v542 = vrot.slane %v540, 7
  %v543 = vshll.u32 %v60, 16
  %v545 = vor.u32 %v542, %v543
  %v546 = vsel %vm309, %v538, %v545
  %v547 = vrot.slane %v542, 4
  %v549 = vshrl.u32 %v61, 16
  %v551 = vrot.slane %v549, 7
  %v552 = vshll.u32 %v61, 16
  %v554 = vor.u32 %v551, %v552
  %v555 = vrot.slane %v551, 4
  %v557 = vshrl.u32 %v62, 16
  %v559 = vrot.slane %v557, 7
  %v560 = vshll.u32 %v62, 16
  %v562 = vor.u32 %v559, %v560
  %v563 = vsel %vm309, %v555, %v562
  %v564 = vrot.slane %v559, 4
  %v566 = vshrl.u32 %v63, 16
  %v568 = vrot.slane %v566, 7
  %v569 = vshll.u32 %v63, 16
  %v571 = vor.u32 %v568, %v569
  %v572 = vrot.slane %v568, 4
  %v574 = vshrl.u32 %v64, 16
  %v576 = vrot.slane %v574, 7
  %v577 = vshll.u32 %v64, 16
  %v579 = vor.u32 %v576, %v577
  %v580 = vsel %vm309, %v572, %v579
  %v581 = vrot.slane %v576, 4
  %v583 = vshrl.u32 %v65, 16
  %v585 = vrot.slane %v583, 7
  %v586 = vshll.u32 %v65, 16
  %v588 = vor.u32 %v585, %v586
  %v589 = vrot.slane %v585, 4
  %v591 = vshrl.u32 %v66, 16
  %v593 = vrot.slane %v591, 7
  %v594 = vshll.u32 %v66, 16
  %v596 = vor.u32 %v593, %v594
  %v597 = vsel %vm309, %v589, %v596
  %v598 = vrot.slane %v593, 4
  %v600 = vshrl.u32 %v67, 16
  %v602 = vrot.slane %v600, 7
  %v603 = vshll.u32 %v67, 16
  %v605 = vor.u32 %v602, %v603
  %v606 = vrot.slane %v602, 4
  %v608 = vshrl.u32 %v68, 16
  %v610 = vrot.slane %v608, 7
  %v611 = vshll.u32 %v68, 16
  %v613 = vor.u32 %v610, %v611
  %v614 = vsel %vm309, %v606, %v613
  %v615 = vrot.slane %v610, 4
  %v617 = vshrl.u32 %v69, 16
  %v619 = vrot.slane %v617, 7
  %v620 = vshll.u32 %v69, 16
  %v622 = vor.u32 %v619, %v620
  %v623 = vrot.slane %v619, 4
  %v625 = vshrl.u32 %v70, 16
  %v627 = vrot.slane %v625, 7
  %v628 = vshll.u32 %v70, 16
  %v630 = vor.u32 %v627, %v628
  %v631 = vsel %vm309, %v623, %v630
  %v632 = vrot.slane %v627, 4
  %v634 = vshrl.u32 %v71, 16
  %v636 = vrot.slane %v634, 7
  %v637 = vshll.u32 %v71, 16
  %v639 = vor.u32 %v636, %v637
  %v640 = vrot.slane %v636, 4
  %v642 = vshrl.u32 %v72, 16
  %v644 = vrot.slane %v642, 7
  %v645 = vshll.u32 %v72, 16
  %v647 = vor.u32 %v644, %v645
  %v648 = vsel %vm309, %v640, %v647
  %v649 = vrot.slane %v644, 4
  %v651 = vshrl.u32 %v73, 16
  %v653 = vrot.slane %v651, 7
  %v654 = vshll.u32 %v73, 16
  %v656 = vor.u32 %v653, %v654
  %v657 = vrot.slane %v653, 4
  %v659 = vshrl.u32 %v74, 16
  %v661 = vrot.slane %v659, 7
  %v662 = vshll.u32 %v74, 16
  %v664 = vor.u32 %v661, %v662
  %v665 = vsel %vm309, %v657, %v664
  %v666 = vrot.slane %v661, 4
  %v668 = vshrl.u32 %v75, 16
  %v670 = vrot.slane %v668, 7
  %v671 = vshll.u32 %v75, 16
  %v673 = vor.u32 %v670, %v671
  %v674 = vrot.slane %v670, 4
  %v676 = vshrl.u32 %v76, 16
  %v678 = vrot.slane %v676, 7
  %v679 = vshll.u32 %v76, 16
  %v681 = vor.u32 %v678, %v679
  %v682 = vsel %vm309, %v674, %v681
  %v683 = vrot.slane %v678, 4
  %v685 = vshrl.u32 %v77, 16
  %v687 = vrot.slane %v685, 7
  %v688 = vshll.u32 %v77, 16
  %v690 = vor.u32 %v687, %v688
  %v691 = vrot.slane %v687, 4
  %v693 = vshrl.u32 %v78, 16
  %v695 = vrot.slane %v693, 7
  %v696 = vshll.u32 %v78, 16
  %v698 = vor.u32 %v695, %v696
  %v699 = vsel %vm309, %v691, %v698
  %v700 = vrot.slane %v695, 4
  %v702 = vshrl.u32 %v79, 16
  %v704 = vrot.slane %v702, 7
  %v705 = vshll.u32 %v79, 16
  %v707 = vor.u32 %v704, %v705
  %v708 = vrot.slane %v704, 4
  %v710 = vshrl.u32 %v80, 16
  %v712 = vrot.slane %v710, 7
  %v713 = vshll.u32 %v80, 16
  %v715 = vor.u32 %v712, %v713
  %v716 = vsel %vm309, %v708, %v715
  %v717 = vrot.slane %v712, 4
  %v719 = vshrl.u32 %v81, 16
  %v721 = vrot.slane %v719, 7
  %v722 = vshll.u32 %v81, 16
  %v724 = vor.u32 %v721, %v722
  %v725 = vrot.slane %v721, 4
  %v727 = vshrl.u32 %v82, 16
  %v729 = vrot.slane %v727, 7
  %v730 = vshll.u32 %v82, 16
  %v732 = vor.u32 %v729, %v730
  %v733 = vsel %vm309, %v725, %v732
  %v734 = vrot.slane %v729, 4
  %v736 = vshrl.u32 %v83, 16
  %v738 = vrot.slane %v736, 7
  %v739 = vshll.u32 %v83, 16
  %v741 = vor.u32 %v738, %v739
  %v742 = vrot.slane %v738, 4
  %v744 = vshrl.u32 %v84, 16
  %v746 = vrot.slane %v744, 7
  %v747 = vshll.u32 %v84, 16
  %v749 = vor.u32 %v746, %v747
  %v750 = vsel %vm309, %v742, %v749
  %v751 = vrot.slane %v746, 4
  %v753 = vshrl.u32 %v85, 16
  %v755 = vrot.slane %v753, 7
  %v756 = vshll.u32 %v85, 16
  %v758 = vor.u32 %v755, %v756
  %v759 = vrot.slane %v755, 4
  %v761 = vshrl.u32 %v86, 16
  %v763 = vrot.slane %v761, 7
  %v764 = vshll.u32 %v86, 16
  %v766 = vor.u32 %v763, %v764
  %v767 = vsel %vm309, %v759, %v766
  %v768 = vrot.slane %v763, 4
  %v770 = vshrl.u32 %v87, 16
  %v772 = vrot.slane %v770, 7
  %v773 = vshll.u32 %v87, 16
  %v775 = vor.u32 %v772, %v773
  %v776 = vrot.slane %v772, 4
  %v778 = vshrl.u32 %v88, 16
  %v780 = vrot.slane %v778, 7
  %v781 = vshll.u32 %v88, 16
  %v783 = vor.u32 %v780, %v781
  %v784 = vsel %vm309, %v776, %v783
  %v785 = vrot.slane %v780, 4
  %v787 = vshrl.u32 %v89, 16
  %v789 = vrot.slane %v787, 7
  %v790 = vshll.u32 %v89, 16
  %v792 = vor.u32 %v789, %v790
  %v793 = vrot.slane %v789, 4
  %v795 = vshrl.u32 %v90, 16
  %v797 = vrot.slane %v795, 7
  %v798 = vshll.u32 %v90, 16
  %v800 = vor.u32 %v797, %v798
  %v801 = vsel %vm309, %v793, %v800
  %v802 = vrot.slane %v797, 4
  %v804 = vshrl.u32 %v91, 16
  %v806 = vrot.slane %v804, 7
  %v807 = vshll.u32 %v91, 16
  %v809 = vor.u32 %v806, %v807
  %v810 = vrot.slane %v806, 4
  %v812 = vshrl.u32 %v92, 16
  %v814 = vrot.slane %v812, 7
  %v815 = vshll.u32 %v92, 16
  %v817 = vor.u32 %v814, %v815
  %v818 = vsel %vm309, %v810, %v817
  %v819 = vrot.slane %v814, 4
  %v821 = vshrl.u32 %v93, 16
  %v823 = vrot.slane %v821, 7
  %v824 = vshll.u32 %v93, 16
  %v826 = vor.u32 %v823, %v824
  %v827 = vrot.slane %v823, 4
  %v829 = vshrl.u32 %v94, 16
  %v831 = vrot.slane %v829, 7
  %v832 = vshll.u32 %v94, 16
  %v834 = vor.u32 %v831, %v832
  %v835 = vsel %vm309, %v827, %v834
  %v836 = vrot.slane %v831, 4
  %v838 = vshrl.u32 %v95, 16
  %v840 = vrot.slane %v838, 7
  %v841 = vshll.u32 %v95, 16
  %v843 = vor.u32 %v840, %v841
  %v844 = vrot.slane %v840, 4
  %v846 = vshrl.u32 %v96, 16
  %v848 = vrot.slane %v846, 7
  %v849 = vshll.u32 %v96, 16
  %v851 = vor.u32 %v848, %v849
  %v852 = vsel %vm309, %v844, %v851
  %v853 = vrot.slane %v848, 4
  %vm950 = vcmask 1043456
  %vm951 = vmand %vm950, %vm210
  %v952 = vld [vmem:[%s110] sm:$0xf]
  %v953 = vsel %vm951, %v316, %v952
  %954 = vst [vmem:[%s110] sm:$0xf] %v953
  %955 = vst [vmem:[%s110 + $0x4] sm:$0xf] %v325
  %v956 = vld [vmem:[%s110 + $0x8] sm:$0x1]
  %v957 = vsel %vm113, %v326, %v956
  %958 = vst [vmem:[%s110 + $0x8] sm:$0x1] %v957
  %v959 = vld [vmem:[%s110 + $0xc] sm:$0xf]
  %v960 = vsel %vm951, %v333, %v959
  %961 = vst [vmem:[%s110 + $0xc] sm:$0xf] %v960
  %962 = vst [vmem:[%s110 + $0x10] sm:$0xf] %v342
  %v963 = vld [vmem:[%s110 + $0x14] sm:$0x1]
  %v964 = vsel %vm113, %v343, %v963
  %965 = vst [vmem:[%s110 + $0x14] sm:$0x1] %v964
  %v966 = vld [vmem:[%s110 + $0x18] sm:$0xf]
  %v967 = vsel %vm951, %v350, %v966
  %968 = vst [vmem:[%s110 + $0x18] sm:$0xf] %v967
  %969 = vst [vmem:[%s110 + $0x1c] sm:$0xf] %v359
  %v970 = vld [vmem:[%s110 + $0x20] sm:$0x1]
  %v971 = vsel %vm113, %v360, %v970
  %972 = vst [vmem:[%s110 + $0x20] sm:$0x1] %v971
  %v973 = vld [vmem:[%s110 + $0x24] sm:$0xf]
  %v974 = vsel %vm951, %v367, %v973
  %975 = vst [vmem:[%s110 + $0x24] sm:$0xf] %v974
  %976 = vst [vmem:[%s110 + $0x28] sm:$0xf] %v376
  %v977 = vld [vmem:[%s110 + $0x2c] sm:$0x1]
  %v978 = vsel %vm113, %v377, %v977
  %979 = vst [vmem:[%s110 + $0x2c] sm:$0x1] %v978
  %v980 = vld [vmem:[%s110 + $0x30] sm:$0xf]
  %v981 = vsel %vm951, %v384, %v980
  %982 = vst [vmem:[%s110 + $0x30] sm:$0xf] %v981
  %983 = vst [vmem:[%s110 + $0x34] sm:$0xf] %v393
  %v984 = vld [vmem:[%s110 + $0x38] sm:$0x1]
  %v985 = vsel %vm113, %v394, %v984
  %986 = vst [vmem:[%s110 + $0x38] sm:$0x1] %v985
  %v987 = vld [vmem:[%s110 + $0x3c] sm:$0xf]
  %v988 = vsel %vm951, %v401, %v987
  %989 = vst [vmem:[%s110 + $0x3c] sm:$0xf] %v988
  %990 = vst [vmem:[%s110 + $0x40] sm:$0xf] %v410
  %v991 = vld [vmem:[%s110 + $0x44] sm:$0x1]
  %v992 = vsel %vm113, %v411, %v991
  %993 = vst [vmem:[%s110 + $0x44] sm:$0x1] %v992
  %v994 = vld [vmem:[%s110 + $0x48] sm:$0xf]
  %v995 = vsel %vm951, %v418, %v994
  %996 = vst [vmem:[%s110 + $0x48] sm:$0xf] %v995
  %997 = vst [vmem:[%s110 + $0x4c] sm:$0xf] %v427
  %v998 = vld [vmem:[%s110 + $0x50] sm:$0x1]
  %v999 = vsel %vm113, %v428, %v998
  %1000 = vst [vmem:[%s110 + $0x50] sm:$0x1] %v999
  %v1001 = vld [vmem:[%s110 + $0x54] sm:$0xf]
  %v1002 = vsel %vm951, %v435, %v1001
  %1003 = vst [vmem:[%s110 + $0x54] sm:$0xf] %v1002
  %1004 = vst [vmem:[%s110 + $0x58] sm:$0xf] %v444
  %v1005 = vld [vmem:[%s110 + $0x5c] sm:$0x1]
  %v1006 = vsel %vm113, %v445, %v1005
  %1007 = vst [vmem:[%s110 + $0x5c] sm:$0x1] %v1006
  %v1008 = vld [vmem:[%s110 + $0x60] sm:$0xf]
  %v1009 = vsel %vm951, %v452, %v1008
  %1010 = vst [vmem:[%s110 + $0x60] sm:$0xf] %v1009
  %1011 = vst [vmem:[%s110 + $0x64] sm:$0xf] %v461
  %v1012 = vld [vmem:[%s110 + $0x68] sm:$0x1]
  %v1013 = vsel %vm113, %v462, %v1012
  %1014 = vst [vmem:[%s110 + $0x68] sm:$0x1] %v1013
  %v1015 = vld [vmem:[%s110 + $0x6c] sm:$0xf]
  %v1016 = vsel %vm951, %v469, %v1015
  %1017 = vst [vmem:[%s110 + $0x6c] sm:$0xf] %v1016
  %1018 = vst [vmem:[%s110 + $0x70] sm:$0xf] %v478
  %v1019 = vld [vmem:[%s110 + $0x74] sm:$0x1]
  %v1020 = vsel %vm113, %v479, %v1019
  %1021 = vst [vmem:[%s110 + $0x74] sm:$0x1] %v1020
  %v1022 = vld [vmem:[%s110 + $0x78] sm:$0xf]
  %v1023 = vsel %vm951, %v486, %v1022
  %1024 = vst [vmem:[%s110 + $0x78] sm:$0xf] %v1023
  %1025 = vst [vmem:[%s110 + $0x7c] sm:$0xf] %v495
  %v1026 = vld [vmem:[%s110 + $0x80] sm:$0x1]
  %v1027 = vsel %vm113, %v496, %v1026
  %1028 = vst [vmem:[%s110 + $0x80] sm:$0x1] %v1027
  %v1029 = vld [vmem:[%s110 + $0x84] sm:$0xf]
  %v1030 = vsel %vm951, %v503, %v1029
  %1031 = vst [vmem:[%s110 + $0x84] sm:$0xf] %v1030
  %1032 = vst [vmem:[%s110 + $0x88] sm:$0xf] %v512
  %v1033 = vld [vmem:[%s110 + $0x8c] sm:$0x1]
  %v1034 = vsel %vm113, %v513, %v1033
  %1035 = vst [vmem:[%s110 + $0x8c] sm:$0x1] %v1034
  %v1036 = vld [vmem:[%s110 + $0x90] sm:$0xf]
  %v1037 = vsel %vm951, %v520, %v1036
  %1038 = vst [vmem:[%s110 + $0x90] sm:$0xf] %v1037
  %1039 = vst [vmem:[%s110 + $0x94] sm:$0xf] %v529
  %v1040 = vld [vmem:[%s110 + $0x98] sm:$0x1]
  %v1041 = vsel %vm113, %v530, %v1040
  %1042 = vst [vmem:[%s110 + $0x98] sm:$0x1] %v1041
  %v1043 = vld [vmem:[%s110 + $0x9c] sm:$0xf]
  %v1044 = vsel %vm951, %v537, %v1043
  %1045 = vst [vmem:[%s110 + $0x9c] sm:$0xf] %v1044
  %1046 = vst [vmem:[%s110 + $0xa0] sm:$0xf] %v546
  %v1047 = vld [vmem:[%s110 + $0xa4] sm:$0x1]
  %v1048 = vsel %vm113, %v547, %v1047
  %1049 = vst [vmem:[%s110 + $0xa4] sm:$0x1] %v1048
  %v1050 = vld [vmem:[%s110 + $0xa8] sm:$0xf]
  %v1051 = vsel %vm951, %v554, %v1050
  %1052 = vst [vmem:[%s110 + $0xa8] sm:$0xf] %v1051
  %1053 = vst [vmem:[%s110 + $0xac] sm:$0xf] %v563
  %v1054 = vld [vmem:[%s110 + $0xb0] sm:$0x1]
  %v1055 = vsel %vm113, %v564, %v1054
  %1056 = vst [vmem:[%s110 + $0xb0] sm:$0x1] %v1055
  %v1057 = vld [vmem:[%s110 + $0xb4] sm:$0xf]
  %v1058 = vsel %vm951, %v571, %v1057
  %1059 = vst [vmem:[%s110 + $0xb4] sm:$0xf] %v1058
  %1060 = vst [vmem:[%s110 + $0xb8] sm:$0xf] %v580
  %v1061 = vld [vmem:[%s110 + $0xbc] sm:$0x1]
  %v1062 = vsel %vm113, %v581, %v1061
  %1063 = vst [vmem:[%s110 + $0xbc] sm:$0x1] %v1062
  %v1064 = vld [vmem:[%s110 + $0xd8] sm:$0xf]
  %v1065 = vsel %vm951, %v588, %v1064
  %1066 = vst [vmem:[%s110 + $0xd8] sm:$0xf] %v1065
  %1067 = vst [vmem:[%s110 + $0xdc] sm:$0xf] %v597
  %v1068 = vld [vmem:[%s110 + $0xe0] sm:$0x1]
  %v1069 = vsel %vm113, %v598, %v1068
  %1070 = vst [vmem:[%s110 + $0xe0] sm:$0x1] %v1069
  %v1071 = vld [vmem:[%s110 + $0xe4] sm:$0xf]
  %v1072 = vsel %vm951, %v605, %v1071
  %1073 = vst [vmem:[%s110 + $0xe4] sm:$0xf] %v1072
  %1074 = vst [vmem:[%s110 + $0xe8] sm:$0xf] %v614
  %v1075 = vld [vmem:[%s110 + $0xec] sm:$0x1]
  %v1076 = vsel %vm113, %v615, %v1075
  %1077 = vst [vmem:[%s110 + $0xec] sm:$0x1] %v1076
  %v1078 = vld [vmem:[%s110 + $0xf0] sm:$0xf]
  %v1079 = vsel %vm951, %v622, %v1078
  %1080 = vst [vmem:[%s110 + $0xf0] sm:$0xf] %v1079
  %1081 = vst [vmem:[%s110 + $0xf4] sm:$0xf] %v631
  %v1082 = vld [vmem:[%s110 + $0xf8] sm:$0x1]
  %v1083 = vsel %vm113, %v632, %v1082
  %1084 = vst [vmem:[%s110 + $0xf8] sm:$0x1] %v1083
  %v1085 = vld [vmem:[%s110 + $0xfc] sm:$0xf]
  %v1086 = vsel %vm951, %v639, %v1085
  %1087 = vst [vmem:[%s110 + $0xfc] sm:$0xf] %v1086
  %1088 = vst [vmem:[%s110 + $0x100] sm:$0xf] %v648
  %v1089 = vld [vmem:[%s110 + $0x104] sm:$0x1]
  %v1090 = vsel %vm113, %v649, %v1089
  %1091 = vst [vmem:[%s110 + $0x104] sm:$0x1] %v1090
  %v1092 = vld [vmem:[%s110 + $0x108] sm:$0xf]
  %v1093 = vsel %vm951, %v656, %v1092
  %1094 = vst [vmem:[%s110 + $0x108] sm:$0xf] %v1093
  %1095 = vst [vmem:[%s110 + $0x10c] sm:$0xf] %v665
  %v1096 = vld [vmem:[%s110 + $0x110] sm:$0x1]
  %v1097 = vsel %vm113, %v666, %v1096
  %1098 = vst [vmem:[%s110 + $0x110] sm:$0x1] %v1097
  %v1099 = vld [vmem:[%s110 + $0x114] sm:$0xf]
  %v1100 = vsel %vm951, %v673, %v1099
  %1101 = vst [vmem:[%s110 + $0x114] sm:$0xf] %v1100
  %1102 = vst [vmem:[%s110 + $0x118] sm:$0xf] %v682
  %v1103 = vld [vmem:[%s110 + $0x11c] sm:$0x1]
  %v1104 = vsel %vm113, %v683, %v1103
  %1105 = vst [vmem:[%s110 + $0x11c] sm:$0x1] %v1104
  %v1106 = vld [vmem:[%s110 + $0x120] sm:$0xf]
  %v1107 = vsel %vm951, %v690, %v1106
  %1108 = vst [vmem:[%s110 + $0x120] sm:$0xf] %v1107
  %1109 = vst [vmem:[%s110 + $0x124] sm:$0xf] %v699
  %v1110 = vld [vmem:[%s110 + $0x128] sm:$0x1]
  %v1111 = vsel %vm113, %v700, %v1110
  %1112 = vst [vmem:[%s110 + $0x128] sm:$0x1] %v1111
  %v1113 = vld [vmem:[%s110 + $0x12c] sm:$0xf]
  %v1114 = vsel %vm951, %v707, %v1113
  %1115 = vst [vmem:[%s110 + $0x12c] sm:$0xf] %v1114
  %1116 = vst [vmem:[%s110 + $0x130] sm:$0xf] %v716
  %v1117 = vld [vmem:[%s110 + $0x134] sm:$0x1]
  %v1118 = vsel %vm113, %v717, %v1117
  %1119 = vst [vmem:[%s110 + $0x134] sm:$0x1] %v1118
  %v1120 = vld [vmem:[%s110 + $0x138] sm:$0xf]
  %v1121 = vsel %vm951, %v724, %v1120
  %1122 = vst [vmem:[%s110 + $0x138] sm:$0xf] %v1121
  %1123 = vst [vmem:[%s110 + $0x13c] sm:$0xf] %v733
  %v1124 = vld [vmem:[%s110 + $0x140] sm:$0x1]
  %v1125 = vsel %vm113, %v734, %v1124
  %1126 = vst [vmem:[%s110 + $0x140] sm:$0x1] %v1125
  %v1127 = vld [vmem:[%s110 + $0x144] sm:$0xf]
  %v1128 = vsel %vm951, %v741, %v1127
  %1129 = vst [vmem:[%s110 + $0x144] sm:$0xf] %v1128
  %1130 = vst [vmem:[%s110 + $0x148] sm:$0xf] %v750
  %v1131 = vld [vmem:[%s110 + $0x14c] sm:$0x1]
  %v1132 = vsel %vm113, %v751, %v1131
  %1133 = vst [vmem:[%s110 + $0x14c] sm:$0x1] %v1132
  %v1134 = vld [vmem:[%s110 + $0x150] sm:$0xf]
  %v1135 = vsel %vm951, %v758, %v1134
  %1136 = vst [vmem:[%s110 + $0x150] sm:$0xf] %v1135
  %1137 = vst [vmem:[%s110 + $0x154] sm:$0xf] %v767
  %v1138 = vld [vmem:[%s110 + $0x158] sm:$0x1]
  %v1139 = vsel %vm113, %v768, %v1138
  %1140 = vst [vmem:[%s110 + $0x158] sm:$0x1] %v1139
  %v1141 = vld [vmem:[%s110 + $0x15c] sm:$0xf]
  %v1142 = vsel %vm951, %v775, %v1141
  %1143 = vst [vmem:[%s110 + $0x15c] sm:$0xf] %v1142
  %1144 = vst [vmem:[%s110 + $0x160] sm:$0xf] %v784
  %v1145 = vld [vmem:[%s110 + $0x164] sm:$0x1]
  %v1146 = vsel %vm113, %v785, %v1145
  %1147 = vst [vmem:[%s110 + $0x164] sm:$0x1] %v1146
  %v1148 = vld [vmem:[%s110 + $0x168] sm:$0xf]
  %v1149 = vsel %vm951, %v792, %v1148
  %1150 = vst [vmem:[%s110 + $0x168] sm:$0xf] %v1149
  %1151 = vst [vmem:[%s110 + $0x16c] sm:$0xf] %v801
  %v1152 = vld [vmem:[%s110 + $0x170] sm:$0x1]
  %v1153 = vsel %vm113, %v802, %v1152
  %1154 = vst [vmem:[%s110 + $0x170] sm:$0x1] %v1153
  %v1155 = vld [vmem:[%s110 + $0x174] sm:$0xf]
  %v1156 = vsel %vm951, %v809, %v1155
  %1157 = vst [vmem:[%s110 + $0x174] sm:$0xf] %v1156
  %1158 = vst [vmem:[%s110 + $0x178] sm:$0xf] %v818
  %v1159 = vld [vmem:[%s110 + $0x17c] sm:$0x1]
  %v1160 = vsel %vm113, %v819, %v1159
  %1161 = vst [vmem:[%s110 + $0x17c] sm:$0x1] %v1160
  %v1162 = vld [vmem:[%s110 + $0x180] sm:$0xf]
  %v1163 = vsel %vm951, %v826, %v1162
  %1164 = vst [vmem:[%s110 + $0x180] sm:$0xf] %v1163
  %1165 = vst [vmem:[%s110 + $0x184] sm:$0xf] %v835
  %v1166 = vld [vmem:[%s110 + $0x188] sm:$0x1]
  %v1167 = vsel %vm113, %v836, %v1166
  %1168 = vst [vmem:[%s110 + $0x188] sm:$0x1] %v1167
  %v1169 = vld [vmem:[%s110 + $0x18c] sm:$0xf]
  %v1170 = vsel %vm951, %v843, %v1169
  %1171 = vst [vmem:[%s110 + $0x18c] sm:$0xf] %v1170
  %1172 = vst [vmem:[%s110 + $0x190] sm:$0xf] %v852
  %v1173 = vld [vmem:[%s110 + $0x194] sm:$0x1]
  %v1174 = vsel %vm113, %v853, %v1173
  %1175 = vst [vmem:[%s110 + $0x194] sm:$0x1] %v1174
  %v1176 = vld [vmem:[#allocation2] sm:$0xf]
  %v1177 = vld [vmem:[#allocation2 + $0x4] sm:$0xf]
  %v1178 = vld [vmem:[#allocation2 + $0xc] sm:$0xf]
  %v1179 = vld [vmem:[#allocation2 + $0x10] sm:$0xf]
  %v1180 = vld [vmem:[#allocation2 + $0x18] sm:$0xf]
  %v1181 = vld [vmem:[#allocation2 + $0x1c] sm:$0xf]
  %v1182 = vld [vmem:[#allocation2 + $0x24] sm:$0xf]
  %v1183 = vld [vmem:[#allocation2 + $0x28] sm:$0xf]
  %v1184 = vld [vmem:[#allocation2 + $0x30] sm:$0xf]
  %v1185 = vld [vmem:[#allocation2 + $0x34] sm:$0xf]
  %v1186 = vld [vmem:[#allocation2 + $0x3c] sm:$0xf]
  %v1187 = vld [vmem:[#allocation2 + $0x40] sm:$0xf]
  %v1188 = vld [vmem:[#allocation2 + $0x48] sm:$0xf]
  %v1189 = vld [vmem:[#allocation2 + $0x4c] sm:$0xf]
  %v1190 = vld [vmem:[#allocation2 + $0x54] sm:$0xf]
  %v1191 = vld [vmem:[#allocation2 + $0x58] sm:$0xf]
  %v1192 = vld [vmem:[#allocation2 + $0x60] sm:$0xf]
  %v1193 = vld [vmem:[#allocation2 + $0x64] sm:$0xf]
  %v1194 = vld [vmem:[#allocation2 + $0x6c] sm:$0xf]
  %v1195 = vld [vmem:[#allocation2 + $0x70] sm:$0xf]
  %v1196 = vld [vmem:[#allocation2 + $0x78] sm:$0xf]
  %v1197 = vld [vmem:[#allocation2 + $0x7c] sm:$0xf]
  %v1198 = vld [vmem:[#allocation2 + $0x84] sm:$0xf]
  %v1199 = vld [vmem:[#allocation2 + $0x88] sm:$0xf]
  %v1200 = vld [vmem:[#allocation2 + $0x90] sm:$0xf]
  %v1201 = vld [vmem:[#allocation2 + $0x94] sm:$0xf]
  %v1202 = vld [vmem:[#allocation2 + $0x9c] sm:$0xf]
  %v1203 = vld [vmem:[#allocation2 + $0xa0] sm:$0xf]
  %v1204 = vld [vmem:[#allocation2 + $0xa8] sm:$0xf]
  %v1205 = vld [vmem:[#allocation2 + $0xac] sm:$0xf]
  %v1206 = vld [vmem:[#allocation2 + $0xb4] sm:$0xf]
  %v1207 = vld [vmem:[#allocation2 + $0xb8] sm:$0xf]
  %v1208 = vld [vmem:[#allocation2 + $0xd8] sm:$0xf]
  %v1209 = vld [vmem:[#allocation2 + $0xdc] sm:$0xf]
  %v1210 = vld [vmem:[#allocation2 + $0xe4] sm:$0xf]
  %v1211 = vld [vmem:[#allocation2 + $0xe8] sm:$0xf]
  %v1212 = vld [vmem:[#allocation2 + $0xf0] sm:$0xf]
  %v1213 = vld [vmem:[#allocation2 + $0xf4] sm:$0xf]
  %v1214 = vld [vmem:[#allocation2 + $0xfc] sm:$0xf]
  %v1215 = vld [vmem:[#allocation2 + $0x100] sm:$0xf]
  %v1216 = vld [vmem:[#allocation2 + $0x108] sm:$0xf]
  %v1217 = vld [vmem:[#allocation2 + $0x10c] sm:$0xf]
  %v1218 = vld [vmem:[#allocation2 + $0x114] sm:$0xf]
  %v1219 = vld [vmem:[#allocation2 + $0x118] sm:$0xf]
  %v1220 = vld [vmem:[#allocation2 + $0x120] sm:$0xf]
  %v1221 = vld [vmem:[#allocation2 + $0x124] sm:$0xf]
  %v1222 = vld [vmem:[#allocation2 + $0x12c] sm:$0xf]
  %v1223 = vld [vmem:[#allocation2 + $0x130] sm:$0xf]
  %v1224 = vld [vmem:[#allocation2 + $0x138] sm:$0xf]
  %v1225 = vld [vmem:[#allocation2 + $0x13c] sm:$0xf]
  %v1226 = vld [vmem:[#allocation2 + $0x144] sm:$0xf]
  %v1227 = vld [vmem:[#allocation2 + $0x148] sm:$0xf]
  %v1228 = vld [vmem:[#allocation2 + $0x150] sm:$0xf]
  %v1229 = vld [vmem:[#allocation2 + $0x154] sm:$0xf]
  %v1230 = vld [vmem:[#allocation2 + $0x15c] sm:$0xf]
  %v1231 = vld [vmem:[#allocation2 + $0x160] sm:$0xf]
  %v1232 = vld [vmem:[#allocation2 + $0x168] sm:$0xf]
  %v1233 = vld [vmem:[#allocation2 + $0x16c] sm:$0xf]
  %v1234 = vld [vmem:[#allocation2 + $0x174] sm:$0xf]
  %v1235 = vld [vmem:[#allocation2 + $0x178] sm:$0xf]
  %v1236 = vld [vmem:[#allocation2 + $0x180] sm:$0xf]
  %v1237 = vld [vmem:[#allocation2 + $0x184] sm:$0xf]
  %v1238 = vld [vmem:[#allocation2 + $0x18c] sm:$0xf]
  %v1239 = vld [vmem:[#allocation2 + $0x190] sm:$0xf]
  %v1240 = vld [vmem:[#allocation2 + $0x8] sm:$0x1]
  %v1241 = vld [vmem:[#allocation2 + $0x14] sm:$0x1]
  %v1242 = vld [vmem:[#allocation2 + $0x20] sm:$0x1]
  %v1243 = vld [vmem:[#allocation2 + $0x2c] sm:$0x1]
  %v1244 = vld [vmem:[#allocation2 + $0x38] sm:$0x1]
  %v1245 = vld [vmem:[#allocation2 + $0x44] sm:$0x1]
  %v1246 = vld [vmem:[#allocation2 + $0x50] sm:$0x1]
  %v1247 = vld [vmem:[#allocation2 + $0x5c] sm:$0x1]
  %v1248 = vld [vmem:[#allocation2 + $0x68] sm:$0x1]
  %v1249 = vld [vmem:[#allocation2 + $0x74] sm:$0x1]
  %v1250 = vld [vmem:[#allocation2 + $0x80] sm:$0x1]
  %v1251 = vld [vmem:[#allocation2 + $0x8c] sm:$0x1]
  %v1252 = vld [vmem:[#allocation2 + $0x98] sm:$0x1]
  %v1253 = vld [vmem:[#allocation2 + $0xa4] sm:$0x1]
  %v1254 = vld [vmem:[#allocation2 + $0xb0] sm:$0x1]
  %v1255 = vld [vmem:[#allocation2 + $0xbc] sm:$0x1]
  %v1256 = vld [vmem:[#allocation2 + $0xe0] sm:$0x1]
  %v1257 = vld [vmem:[#allocation2 + $0xec] sm:$0x1]
  %v1258 = vld [vmem:[#allocation2 + $0xf8] sm:$0x1]
  %v1259 = vld [vmem:[#allocation2 + $0x104] sm:$0x1]
  %v1260 = vld [vmem:[#allocation2 + $0x110] sm:$0x1]
  %v1261 = vld [vmem:[#allocation2 + $0x11c] sm:$0x1]
  %v1262 = vld [vmem:[#allocation2 + $0x128] sm:$0x1]
  %v1263 = vld [vmem:[#allocation2 + $0x134] sm:$0x1]
  %v1264 = vld [vmem:[#allocation2 + $0x140] sm:$0x1]
  %v1265 = vld [vmem:[#allocation2 + $0x14c] sm:$0x1]
  %v1266 = vld [vmem:[#allocation2 + $0x158] sm:$0x1]
  %v1267 = vld [vmem:[#allocation2 + $0x164] sm:$0x1]
  %v1268 = vld [vmem:[#allocation2 + $0x170] sm:$0x1]
  %v1269 = vld [vmem:[#allocation2 + $0x17c] sm:$0x1]
  %v1270 = vld [vmem:[#allocation2 + $0x188] sm:$0x1]
  %v1271 = vld [vmem:[#allocation2 + $0x194] sm:$0x1]
  %v1272 = vld [vmem:[#allocation2] sm:$0xe]
  %v1273 = vld [vmem:[#allocation2 + $0xc] sm:$0xe]
  %v1274 = vld [vmem:[#allocation2 + $0x18] sm:$0xe]
  %v1275 = vld [vmem:[#allocation2 + $0x24] sm:$0xe]
  %v1276 = vld [vmem:[#allocation2 + $0x30] sm:$0xe]
  %v1277 = vld [vmem:[#allocation2 + $0x3c] sm:$0xe]
  %v1278 = vld [vmem:[#allocation2 + $0x48] sm:$0xe]
  %v1279 = vld [vmem:[#allocation2 + $0x54] sm:$0xe]
  %v1280 = vld [vmem:[#allocation2 + $0x60] sm:$0xe]
  %v1281 = vld [vmem:[#allocation2 + $0x6c] sm:$0xe]
  %v1282 = vld [vmem:[#allocation2 + $0x78] sm:$0xe]
  %v1283 = vld [vmem:[#allocation2 + $0x84] sm:$0xe]
  %v1284 = vld [vmem:[#allocation2 + $0x90] sm:$0xe]
  %v1285 = vld [vmem:[#allocation2 + $0x9c] sm:$0xe]
  %v1286 = vld [vmem:[#allocation2 + $0xa8] sm:$0xe]
  %v1287 = vld [vmem:[#allocation2 + $0xb4] sm:$0xe]
  %v1288 = vld [vmem:[#allocation2 + $0xd8] sm:$0xe]
  %v1289 = vld [vmem:[#allocation2 + $0xe4] sm:$0xe]
  %v1290 = vld [vmem:[#allocation2 + $0xf0] sm:$0xe]
  %v1291 = vld [vmem:[#allocation2 + $0xfc] sm:$0xe]
  %v1292 = vld [vmem:[#allocation2 + $0x108] sm:$0xe]
  %v1293 = vld [vmem:[#allocation2 + $0x114] sm:$0xe]
  %v1294 = vld [vmem:[#allocation2 + $0x120] sm:$0xe]
  %v1295 = vld [vmem:[#allocation2 + $0x12c] sm:$0xe]
  %v1296 = vld [vmem:[#allocation2 + $0x138] sm:$0xe]
  %v1297 = vld [vmem:[#allocation2 + $0x144] sm:$0xe]
  %v1298 = vld [vmem:[#allocation2 + $0x150] sm:$0xe]
  %v1299 = vld [vmem:[#allocation2 + $0x15c] sm:$0xe]
  %v1300 = vld [vmem:[#allocation2 + $0x168] sm:$0xe]
  %v1301 = vld [vmem:[#allocation2 + $0x174] sm:$0xe]
  %v1302 = vld [vmem:[#allocation2 + $0x180] sm:$0xe]
  %v1303 = vld [vmem:[#allocation2 + $0x18c] sm:$0xe]
  %v1304 = vld [vmem:[%s110] sm:$0xf]
  %v1305 = vld [vmem:[%s110 + $0x4] sm:$0xf]
  %v1306 = vld [vmem:[%s110 + $0xc] sm:$0xf]
  %v1307 = vld [vmem:[%s110 + $0x10] sm:$0xf]
  %v1308 = vld [vmem:[%s110 + $0x18] sm:$0xf]
  %v1309 = vld [vmem:[%s110 + $0x1c] sm:$0xf]
  %v1310 = vld [vmem:[%s110 + $0x24] sm:$0xf]
  %v1311 = vld [vmem:[%s110 + $0x28] sm:$0xf]
  %v1312 = vld [vmem:[%s110 + $0x30] sm:$0xf]
  %v1313 = vld [vmem:[%s110 + $0x34] sm:$0xf]
  %v1314 = vld [vmem:[%s110 + $0x3c] sm:$0xf]
  %v1315 = vld [vmem:[%s110 + $0x40] sm:$0xf]
  %v1316 = vld [vmem:[%s110 + $0x48] sm:$0xf]
  %v1317 = vld [vmem:[%s110 + $0x4c] sm:$0xf]
  %v1318 = vld [vmem:[%s110 + $0x54] sm:$0xf]
  %v1319 = vld [vmem:[%s110 + $0x58] sm:$0xf]
  %v1320 = vld [vmem:[%s110 + $0x60] sm:$0xf]
  %v1321 = vld [vmem:[%s110 + $0x64] sm:$0xf]
  %v1322 = vld [vmem:[%s110 + $0x6c] sm:$0xf]
  %v1323 = vld [vmem:[%s110 + $0x70] sm:$0xf]
  %v1324 = vld [vmem:[%s110 + $0x78] sm:$0xf]
  %v1325 = vld [vmem:[%s110 + $0x7c] sm:$0xf]
  %v1326 = vld [vmem:[%s110 + $0x84] sm:$0xf]
  %v1327 = vld [vmem:[%s110 + $0x88] sm:$0xf]
  %v1328 = vld [vmem:[%s110 + $0x90] sm:$0xf]
  %v1329 = vld [vmem:[%s110 + $0x94] sm:$0xf]
  %v1330 = vld [vmem:[%s110 + $0x9c] sm:$0xf]
  %v1331 = vld [vmem:[%s110 + $0xa0] sm:$0xf]
  %v1332 = vld [vmem:[%s110 + $0xa8] sm:$0xf]
  %v1333 = vld [vmem:[%s110 + $0xac] sm:$0xf]
  %v1334 = vld [vmem:[%s110 + $0xb4] sm:$0xf]
  %v1335 = vld [vmem:[%s110 + $0xb8] sm:$0xf]
  %v1336 = vld [vmem:[%s110 + $0xd8] sm:$0xf]
  %v1337 = vld [vmem:[%s110 + $0xdc] sm:$0xf]
  %v1338 = vld [vmem:[%s110 + $0xe4] sm:$0xf]
  %v1339 = vld [vmem:[%s110 + $0xe8] sm:$0xf]
  %v1340 = vld [vmem:[%s110 + $0xf0] sm:$0xf]
  %v1341 = vld [vmem:[%s110 + $0xf4] sm:$0xf]
  %v1342 = vld [vmem:[%s110 + $0xfc] sm:$0xf]
  %v1343 = vld [vmem:[%s110 + $0x100] sm:$0xf]
  %v1344 = vld [vmem:[%s110 + $0x108] sm:$0xf]
  %v1345 = vld [vmem:[%s110 + $0x10c] sm:$0xf]
  %v1346 = vld [vmem:[%s110 + $0x114] sm:$0xf]
  %v1347 = vld [vmem:[%s110 + $0x118] sm:$0xf]
  %v1348 = vld [vmem:[%s110 + $0x120] sm:$0xf]
  %v1349 = vld [vmem:[%s110 + $0x124] sm:$0xf]
  %v1350 = vld [vmem:[%s110 + $0x12c] sm:$0xf]
  %v1351 = vld [vmem:[%s110 + $0x130] sm:$0xf]
  %v1352 = vld [vmem:[%s110 + $0x138] sm:$0xf]
  %v1353 = vld [vmem:[%s110 + $0x13c] sm:$0xf]
  %v1354 = vld [vmem:[%s110 + $0x144] sm:$0xf]
  %v1355 = vld [vmem:[%s110 + $0x148] sm:$0xf]
  %v1356 = vld [vmem:[%s110 + $0x150] sm:$0xf]
  %v1357 = vld [vmem:[%s110 + $0x154] sm:$0xf]
  %v1358 = vld [vmem:[%s110 + $0x15c] sm:$0xf]
  %v1359 = vld [vmem:[%s110 + $0x160] sm:$0xf]
  %v1360 = vld [vmem:[%s110 + $0x168] sm:$0xf]
  %v1361 = vld [vmem:[%s110 + $0x16c] sm:$0xf]
  %v1362 = vld [vmem:[%s110 + $0x174] sm:$0xf]
  %v1363 = vld [vmem:[%s110 + $0x178] sm:$0xf]
  %v1364 = vld [vmem:[%s110 + $0x180] sm:$0xf]
  %v1365 = vld [vmem:[%s110 + $0x184] sm:$0xf]
  %v1366 = vld [vmem:[%s110 + $0x18c] sm:$0xf]
  %v1367 = vld [vmem:[%s110 + $0x190] sm:$0xf]
  %v1368 = vld [vmem:[%s110 + $0x8] sm:$0x1]
  %v1369 = vld [vmem:[%s110 + $0x14] sm:$0x1]
  %v1370 = vld [vmem:[%s110 + $0x20] sm:$0x1]
  %v1371 = vld [vmem:[%s110 + $0x2c] sm:$0x1]
  %v1372 = vld [vmem:[%s110 + $0x38] sm:$0x1]
  %v1373 = vld [vmem:[%s110 + $0x44] sm:$0x1]
  %v1374 = vld [vmem:[%s110 + $0x50] sm:$0x1]
  %v1375 = vld [vmem:[%s110 + $0x5c] sm:$0x1]
  %v1376 = vld [vmem:[%s110 + $0x68] sm:$0x1]
  %v1377 = vld [vmem:[%s110 + $0x74] sm:$0x1]
  %v1378 = vld [vmem:[%s110 + $0x80] sm:$0x1]
  %v1379 = vld [vmem:[%s110 + $0x8c] sm:$0x1]
  %v1380 = vld [vmem:[%s110 + $0x98] sm:$0x1]
  %v1381 = vld [vmem:[%s110 + $0xa4] sm:$0x1]
  %v1382 = vld [vmem:[%s110 + $0xb0] sm:$0x1]
  %v1383 = vld [vmem:[%s110 + $0xbc] sm:$0x1]
  %v1384 = vld [vmem:[%s110 + $0xe0] sm:$0x1]
  %v1385 = vld [vmem:[%s110 + $0xec] sm:$0x1]
  %v1386 = vld [vmem:[%s110 + $0xf8] sm:$0x1]
  %v1387 = vld [vmem:[%s110 + $0x104] sm:$0x1]
  %v1388 = vld [vmem:[%s110 + $0x110] sm:$0x1]
  %v1389 = vld [vmem:[%s110 + $0x11c] sm:$0x1]
  %v1390 = vld [vmem:[%s110 + $0x128] sm:$0x1]
  %v1391 = vld [vmem:[%s110 + $0x134] sm:$0x1]
  %v1392 = vld [vmem:[%s110 + $0x140] sm:$0x1]
  %v1393 = vld [vmem:[%s110 + $0x14c] sm:$0x1]
  %v1394 = vld [vmem:[%s110 + $0x158] sm:$0x1]
  %v1395 = vld [vmem:[%s110 + $0x164] sm:$0x1]
  %v1396 = vld [vmem:[%s110 + $0x170] sm:$0x1]
  %v1397 = vld [vmem:[%s110 + $0x17c] sm:$0x1]
  %v1398 = vld [vmem:[%s110 + $0x188] sm:$0x1]
  %v1399 = vld [vmem:[%s110 + $0x194] sm:$0x1]
  %v1400 = vld [vmem:[%s110] sm:$0xe]
  %v1401 = vld [vmem:[%s110 + $0xc] sm:$0xe]
  %v1402 = vld [vmem:[%s110 + $0x18] sm:$0xe]
  %v1403 = vld [vmem:[%s110 + $0x24] sm:$0xe]
  %v1404 = vld [vmem:[%s110 + $0x30] sm:$0xe]
  %v1405 = vld [vmem:[%s110 + $0x3c] sm:$0xe]
  %v1406 = vld [vmem:[%s110 + $0x48] sm:$0xe]
  %v1407 = vld [vmem:[%s110 + $0x54] sm:$0xe]
  %v1408 = vld [vmem:[%s110 + $0x60] sm:$0xe]
  %v1409 = vld [vmem:[%s110 + $0x6c] sm:$0xe]
  %v1410 = vld [vmem:[%s110 + $0x78] sm:$0xe]
  %v1411 = vld [vmem:[%s110 + $0x84] sm:$0xe]
  %v1412 = vld [vmem:[%s110 + $0x90] sm:$0xe]
  %v1413 = vld [vmem:[%s110 + $0x9c] sm:$0xe]
  %v1414 = vld [vmem:[%s110 + $0xa8] sm:$0xe]
  %v1415 = vld [vmem:[%s110 + $0xb4] sm:$0xe]
  %v1416 = vld [vmem:[%s110 + $0xd8] sm:$0xe]
  %v1417 = vld [vmem:[%s110 + $0xe4] sm:$0xe]
  %v1418 = vld [vmem:[%s110 + $0xf0] sm:$0xe]
  %v1419 = vld [vmem:[%s110 + $0xfc] sm:$0xe]
  %v1420 = vld [vmem:[%s110 + $0x108] sm:$0xe]
  %v1421 = vld [vmem:[%s110 + $0x114] sm:$0xe]
  %v1422 = vld [vmem:[%s110 + $0x120] sm:$0xe]
  %v1423 = vld [vmem:[%s110 + $0x12c] sm:$0xe]
  %v1424 = vld [vmem:[%s110 + $0x138] sm:$0xe]
  %v1425 = vld [vmem:[%s110 + $0x144] sm:$0xe]
  %v1426 = vld [vmem:[%s110 + $0x150] sm:$0xe]
  %v1427 = vld [vmem:[%s110 + $0x15c] sm:$0xe]
  %v1428 = vld [vmem:[%s110 + $0x168] sm:$0xe]
  %v1429 = vld [vmem:[%s110 + $0x174] sm:$0xe]
  %v1430 = vld [vmem:[%s110 + $0x180] sm:$0xe]
  %v1431 = vld [vmem:[%s110 + $0x18c] sm:$0xe]
  %s1432 = scalar_lea.vmem [#allocation2], 24
  %v1433 = vld [vmem:[%s1432] sm:$0xf]
  %v1434 = vld [vmem:[%s1432 + $0x4] sm:$0xf]
  %v1435 = vld [vmem:[%s1432 + $0xc] sm:$0xf]
  %v1436 = vld [vmem:[%s1432 + $0x10] sm:$0xf]
  %v1437 = vld [vmem:[%s1432 + $0x18] sm:$0xf]
  %v1438 = vld [vmem:[%s1432 + $0x1c] sm:$0xf]
  %v1439 = vld [vmem:[%s1432 + $0x24] sm:$0xf]
  %v1440 = vld [vmem:[%s1432 + $0x28] sm:$0xf]
  %v1441 = vld [vmem:[%s1432 + $0x30] sm:$0xf]
  %v1442 = vld [vmem:[%s1432 + $0x34] sm:$0xf]
  %v1443 = vld [vmem:[%s1432 + $0x3c] sm:$0xf]
  %v1444 = vld [vmem:[%s1432 + $0x40] sm:$0xf]
  %v1445 = vld [vmem:[%s1432 + $0x48] sm:$0xf]
  %v1446 = vld [vmem:[%s1432 + $0x4c] sm:$0xf]
  %v1447 = vld [vmem:[%s1432 + $0x54] sm:$0xf]
  %v1448 = vld [vmem:[%s1432 + $0x58] sm:$0xf]
  %v1449 = vld [vmem:[%s1432 + $0x60] sm:$0xf]
  %v1450 = vld [vmem:[%s1432 + $0x64] sm:$0xf]
  %v1451 = vld [vmem:[%s1432 + $0x6c] sm:$0xf]
  %v1452 = vld [vmem:[%s1432 + $0x70] sm:$0xf]
  %v1453 = vld [vmem:[%s1432 + $0x78] sm:$0xf]
  %v1454 = vld [vmem:[%s1432 + $0x7c] sm:$0xf]
  %v1455 = vld [vmem:[%s1432 + $0x84] sm:$0xf]
  %v1456 = vld [vmem:[%s1432 + $0x88] sm:$0xf]
  %v1457 = vld [vmem:[%s1432 + $0x90] sm:$0xf]
  %v1458 = vld [vmem:[%s1432 + $0x94] sm:$0xf]
  %v1459 = vld [vmem:[%s1432 + $0x9c] sm:$0xf]
  %v1460 = vld [vmem:[%s1432 + $0xa0] sm:$0xf]
  %v1461 = vld [vmem:[%s1432 + $0xa8] sm:$0xf]
  %v1462 = vld [vmem:[%s1432 + $0xac] sm:$0xf]
  %v1463 = vld [vmem:[%s1432 + $0xb4] sm:$0xf]
  %v1464 = vld [vmem:[%s1432 + $0xb8] sm:$0xf]
  %v1465 = vld [vmem:[%s1432 + $0xd8] sm:$0xf]
  %v1466 = vld [vmem:[%s1432 + $0xdc] sm:$0xf]
  %v1467 = vld [vmem:[%s1432 + $0xe4] sm:$0xf]
  %v1468 = vld [vmem:[%s1432 + $0xe8] sm:$0xf]
  %v1469 = vld [vmem:[%s1432 + $0xf0] sm:$0xf]
  %v1470 = vld [vmem:[%s1432 + $0xf4] sm:$0xf]
  %v1471 = vld [vmem:[%s1432 + $0xfc] sm:$0xf]
  %v1472 = vld [vmem:[%s1432 + $0x100] sm:$0xf]
  %v1473 = vld [vmem:[%s1432 + $0x108] sm:$0xf]
  %v1474 = vld [vmem:[%s1432 + $0x10c] sm:$0xf]
  %v1475 = vld [vmem:[%s1432 + $0x114] sm:$0xf]
  %v1476 = vld [vmem:[%s1432 + $0x118] sm:$0xf]
  %v1477 = vld [vmem:[%s1432 + $0x120] sm:$0xf]
  %v1478 = vld [vmem:[%s1432 + $0x124] sm:$0xf]
  %v1479 = vld [vmem:[%s1432 + $0x12c] sm:$0xf]
  %v1480 = vld [vmem:[%s1432 + $0x130] sm:$0xf]
  %v1481 = vld [vmem:[%s1432 + $0x138] sm:$0xf]
  %v1482 = vld [vmem:[%s1432 + $0x13c] sm:$0xf]
  %v1483 = vld [vmem:[%s1432 + $0x144] sm:$0xf]
  %v1484 = vld [vmem:[%s1432 + $0x148] sm:$0xf]
  %v1485 = vld [vmem:[%s1432 + $0x150] sm:$0xf]
  %v1486 = vld [vmem:[%s1432 + $0x154] sm:$0xf]
  %v1487 = vld [vmem:[%s1432 + $0x15c] sm:$0xf]
  %v1488 = vld [vmem:[%s1432 + $0x160] sm:$0xf]
  %v1489 = vld [vmem:[%s1432 + $0x168] sm:$0xf]
  %v1490 = vld [vmem:[%s1432 + $0x16c] sm:$0xf]
  %v1491 = vld [vmem:[%s1432 + $0x174] sm:$0xf]
  %v1492 = vld [vmem:[%s1432 + $0x178] sm:$0xf]
  %v1493 = vld [vmem:[%s1432 + $0x180] sm:$0xf]
  %v1494 = vld [vmem:[%s1432 + $0x184] sm:$0xf]
  %v1495 = vld [vmem:[%s1432 + $0x18c] sm:$0xf]
  %v1496 = vld [vmem:[%s1432 + $0x190] sm:$0xf]
  %v1497 = vld [vmem:[%s1432 + $0x8] sm:$0x1]
  %v1498 = vld [vmem:[%s1432 + $0x14] sm:$0x1]
  %v1499 = vld [vmem:[%s1432 + $0x20] sm:$0x1]
  %v1500 = vld [vmem:[%s1432 + $0x2c] sm:$0x1]
  %v1501 = vld [vmem:[%s1432 + $0x38] sm:$0x1]
  %v1502 = vld [vmem:[%s1432 + $0x44] sm:$0x1]
  %v1503 = vld [vmem:[%s1432 + $0x50] sm:$0x1]
  %v1504 = vld [vmem:[%s1432 + $0x5c] sm:$0x1]
  %v1505 = vld [vmem:[%s1432 + $0x68] sm:$0x1]
  %v1506 = vld [vmem:[%s1432 + $0x74] sm:$0x1]
  %v1507 = vld [vmem:[%s1432 + $0x80] sm:$0x1]
  %v1508 = vld [vmem:[%s1432 + $0x8c] sm:$0x1]
  %v1509 = vld [vmem:[%s1432 + $0x98] sm:$0x1]
  %v1510 = vld [vmem:[%s1432 + $0xa4] sm:$0x1]
  %v1511 = vld [vmem:[%s1432 + $0xb0] sm:$0x1]
  %v1512 = vld [vmem:[%s1432 + $0xbc] sm:$0x1]
  %v1513 = vld [vmem:[%s1432 + $0xe0] sm:$0x1]
  %v1514 = vld [vmem:[%s1432 + $0xec] sm:$0x1]
  %v1515 = vld [vmem:[%s1432 + $0xf8] sm:$0x1]
  %v1516 = vld [vmem:[%s1432 + $0x104] sm:$0x1]
  %v1517 = vld [vmem:[%s1432 + $0x110] sm:$0x1]
  %v1518 = vld [vmem:[%s1432 + $0x11c] sm:$0x1]
  %v1519 = vld [vmem:[%s1432 + $0x128] sm:$0x1]
  %v1520 = vld [vmem:[%s1432 + $0x134] sm:$0x1]
  %v1521 = vld [vmem:[%s1432 + $0x140] sm:$0x1]
  %v1522 = vld [vmem:[%s1432 + $0x14c] sm:$0x1]
  %v1523 = vld [vmem:[%s1432 + $0x158] sm:$0x1]
  %v1524 = vld [vmem:[%s1432 + $0x164] sm:$0x1]
  %v1525 = vld [vmem:[%s1432 + $0x170] sm:$0x1]
  %v1526 = vld [vmem:[%s1432 + $0x17c] sm:$0x1]
  %v1527 = vld [vmem:[%s1432 + $0x188] sm:$0x1]
  %v1528 = vld [vmem:[%s1432 + $0x194] sm:$0x1]
  %v1529 = vld [vmem:[%s1432] sm:$0xe]
  %v1530 = vld [vmem:[%s1432 + $0xc] sm:$0xe]
  %v1531 = vld [vmem:[%s1432 + $0x18] sm:$0xe]
  %v1532 = vld [vmem:[%s1432 + $0x24] sm:$0xe]
  %v1533 = vld [vmem:[%s1432 + $0x30] sm:$0xe]
  %v1534 = vld [vmem:[%s1432 + $0x3c] sm:$0xe]
  %v1535 = vld [vmem:[%s1432 + $0x48] sm:$0xe]
  %v1536 = vld [vmem:[%s1432 + $0x54] sm:$0xe]
  %v1537 = vld [vmem:[%s1432 + $0x60] sm:$0xe]
  %v1538 = vld [vmem:[%s1432 + $0x6c] sm:$0xe]
  %v1539 = vld [vmem:[%s1432 + $0x78] sm:$0xe]
  %v1540 = vld [vmem:[%s1432 + $0x84] sm:$0xe]
  %v1541 = vld [vmem:[%s1432 + $0x90] sm:$0xe]
  %v1542 = vld [vmem:[%s1432 + $0x9c] sm:$0xe]
  %v1543 = vld [vmem:[%s1432 + $0xa8] sm:$0xe]
  %v1544 = vld [vmem:[%s1432 + $0xb4] sm:$0xe]
  %v1545 = vld [vmem:[%s1432 + $0xd8] sm:$0xe]
  %v1546 = vld [vmem:[%s1432 + $0xe4] sm:$0xe]
  %v1547 = vld [vmem:[%s1432 + $0xf0] sm:$0xe]
  %v1548 = vld [vmem:[%s1432 + $0xfc] sm:$0xe]
  %v1549 = vld [vmem:[%s1432 + $0x108] sm:$0xe]
  %v1550 = vld [vmem:[%s1432 + $0x114] sm:$0xe]
  %v1551 = vld [vmem:[%s1432 + $0x120] sm:$0xe]
  %v1552 = vld [vmem:[%s1432 + $0x12c] sm:$0xe]
  %v1553 = vld [vmem:[%s1432 + $0x138] sm:$0xe]
  %v1554 = vld [vmem:[%s1432 + $0x144] sm:$0xe]
  %v1555 = vld [vmem:[%s1432 + $0x150] sm:$0xe]
  %v1556 = vld [vmem:[%s1432 + $0x15c] sm:$0xe]
  %v1557 = vld [vmem:[%s1432 + $0x168] sm:$0xe]
  %v1558 = vld [vmem:[%s1432 + $0x174] sm:$0xe]
  %v1559 = vld [vmem:[%s1432 + $0x180] sm:$0xe]
  %v1560 = vld [vmem:[%s1432 + $0x18c] sm:$0xe]
  %v1625 = vunpack.c.l.b16 %v1176
  %v1626 = vunpack.c.l.b16 %v1177
  %v1627 = vunpack.c.l.b16 %v1178
  %v1628 = vunpack.c.l.b16 %v1179
  %v1629 = vunpack.c.l.b16 %v1180
  %v1630 = vunpack.c.l.b16 %v1181
  %v1631 = vunpack.c.l.b16 %v1182
  %v1632 = vunpack.c.l.b16 %v1183
  %v1633 = vunpack.c.l.b16 %v1184
  %v1634 = vunpack.c.l.b16 %v1185
  %v1635 = vunpack.c.l.b16 %v1186
  %v1636 = vunpack.c.l.b16 %v1187
  %v1637 = vunpack.c.l.b16 %v1188
  %v1638 = vunpack.c.l.b16 %v1189
  %v1639 = vunpack.c.l.b16 %v1190
  %v1640 = vunpack.c.l.b16 %v1191
  %v1641 = vunpack.c.l.b16 %v1192
  %v1642 = vunpack.c.l.b16 %v1193
  %v1643 = vunpack.c.l.b16 %v1194
  %v1644 = vunpack.c.l.b16 %v1195
  %v1645 = vunpack.c.l.b16 %v1196
  %v1646 = vunpack.c.l.b16 %v1197
  %v1647 = vunpack.c.l.b16 %v1198
  %v1648 = vunpack.c.l.b16 %v1199
  %v1649 = vunpack.c.l.b16 %v1200
  %v1650 = vunpack.c.l.b16 %v1201
  %v1651 = vunpack.c.l.b16 %v1202
  %v1652 = vunpack.c.l.b16 %v1203
  %v1653 = vunpack.c.l.b16 %v1204
  %v1654 = vunpack.c.l.b16 %v1205
  %v1655 = vunpack.c.l.b16 %v1206
  %v1656 = vunpack.c.l.b16 %v1207
  %v1657 = vunpack.c.l.b16 %v1208
  %v1658 = vunpack.c.l.b16 %v1209
  %v1659 = vunpack.c.l.b16 %v1210
  %v1660 = vunpack.c.l.b16 %v1211
  %v1661 = vunpack.c.l.b16 %v1212
  %v1662 = vunpack.c.l.b16 %v1213
  %v1663 = vunpack.c.l.b16 %v1214
  %v1664 = vunpack.c.l.b16 %v1215
  %v1665 = vunpack.c.l.b16 %v1216
  %v1666 = vunpack.c.l.b16 %v1217
  %v1667 = vunpack.c.l.b16 %v1218
  %v1668 = vunpack.c.l.b16 %v1219
  %v1669 = vunpack.c.l.b16 %v1220
  %v1670 = vunpack.c.l.b16 %v1221
  %v1671 = vunpack.c.l.b16 %v1222
  %v1672 = vunpack.c.l.b16 %v1223
  %v1673 = vunpack.c.l.b16 %v1224
  %v1674 = vunpack.c.l.b16 %v1225
  %v1675 = vunpack.c.l.b16 %v1226
  %v1676 = vunpack.c.l.b16 %v1227
  %v1677 = vunpack.c.l.b16 %v1228
  %v1678 = vunpack.c.l.b16 %v1229
  %v1679 = vunpack.c.l.b16 %v1230
  %v1680 = vunpack.c.l.b16 %v1231
  %v1681 = vunpack.c.l.b16 %v1232
  %v1682 = vunpack.c.l.b16 %v1233
  %v1683 = vunpack.c.l.b16 %v1234
  %v1684 = vunpack.c.l.b16 %v1235
  %v1685 = vunpack.c.l.b16 %v1236
  %v1686 = vunpack.c.l.b16 %v1237
  %v1687 = vunpack.c.l.b16 %v1238
  %v1688 = vunpack.c.l.b16 %v1239
  %v1689 = vpack.c.b16 %v1626, %v1625
  %v1690 = vpack.c.b16 %v1628, %v1627
  %v1691 = vpack.c.b16 %v1630, %v1629
  %v1692 = vpack.c.b16 %v1632, %v1631
  %v1693 = vpack.c.b16 %v1634, %v1633
  %v1694 = vpack.c.b16 %v1636, %v1635
  %v1695 = vpack.c.b16 %v1638, %v1637
  %v1696 = vpack.c.b16 %v1640, %v1639
  %v1697 = vpack.c.b16 %v1642, %v1641
  %v1698 = vpack.c.b16 %v1644, %v1643
  %v1699 = vpack.c.b16 %v1646, %v1645
  %v1700 = vpack.c.b16 %v1648, %v1647
  %v1701 = vpack.c.b16 %v1650, %v1649
  %v1702 = vpack.c.b16 %v1652, %v1651
  %v1703 = vpack.c.b16 %v1654, %v1653
  %v1704 = vpack.c.b16 %v1656, %v1655
  %v1705 = vpack.c.b16 %v1658, %v1657
  %v1706 = vpack.c.b16 %v1660, %v1659
  %v1707 = vpack.c.b16 %v1662, %v1661
  %v1708 = vpack.c.b16 %v1664, %v1663
  %v1709 = vpack.c.b16 %v1666, %v1665
  %v1710 = vpack.c.b16 %v1668, %v1667
  %v1711 = vpack.c.b16 %v1670, %v1669
  %v1712 = vpack.c.b16 %v1672, %v1671
  %v1713 = vpack.c.b16 %v1674, %v1673
  %v1714 = vpack.c.b16 %v1676, %v1675
  %v1715 = vpack.c.b16 %v1678, %v1677
  %v1716 = vpack.c.b16 %v1680, %v1679
  %v1717 = vpack.c.b16 %v1682, %v1681
  %v1718 = vpack.c.b16 %v1684, %v1683
  %v1719 = vpack.c.b16 %v1686, %v1685
  %v1720 = vpack.c.b16 %v1688, %v1687
  %v1785 = vunpack.c.l.b16 %v1240
  %v1786 = vunpack.c.l.b16 %v1241
  %v1787 = vunpack.c.l.b16 %v1242
  %v1788 = vunpack.c.l.b16 %v1243
  %v1789 = vunpack.c.l.b16 %v1244
  %v1790 = vunpack.c.l.b16 %v1245
  %v1791 = vunpack.c.l.b16 %v1246
  %v1792 = vunpack.c.l.b16 %v1247
  %v1793 = vunpack.c.l.b16 %v1248
  %v1794 = vunpack.c.l.b16 %v1249
  %v1795 = vunpack.c.l.b16 %v1250
  %v1796 = vunpack.c.l.b16 %v1251
  %v1797 = vunpack.c.l.b16 %v1252
  %v1798 = vunpack.c.l.b16 %v1253
  %v1799 = vunpack.c.l.b16 %v1254
  %v1800 = vunpack.c.l.b16 %v1255
  %v1801 = vunpack.c.l.b16 %v1256
  %v1802 = vunpack.c.l.b16 %v1257
  %v1803 = vunpack.c.l.b16 %v1258
  %v1804 = vunpack.c.l.b16 %v1259
  %v1805 = vunpack.c.l.b16 %v1260
  %v1806 = vunpack.c.l.b16 %v1261
  %v1807 = vunpack.c.l.b16 %v1262
  %v1808 = vunpack.c.l.b16 %v1263
  %v1809 = vunpack.c.l.b16 %v1264
  %v1810 = vunpack.c.l.b16 %v1265
  %v1811 = vunpack.c.l.b16 %v1266
  %v1812 = vunpack.c.l.b16 %v1267
  %v1813 = vunpack.c.l.b16 %v1268
  %v1814 = vunpack.c.l.b16 %v1269
  %v1815 = vunpack.c.l.b16 %v1270
  %v1816 = vunpack.c.l.b16 %v1271
  %v1817 = vpack.c.b16 %v1785, %v1785
  %v1818 = vpack.c.b16 %v1786, %v1786
  %v1819 = vpack.c.b16 %v1787, %v1787
  %v1820 = vpack.c.b16 %v1788, %v1788
  %v1821 = vpack.c.b16 %v1789, %v1789
  %v1822 = vpack.c.b16 %v1790, %v1790
  %v1823 = vpack.c.b16 %v1791, %v1791
  %v1824 = vpack.c.b16 %v1792, %v1792
  %v1825 = vpack.c.b16 %v1793, %v1793
  %v1826 = vpack.c.b16 %v1794, %v1794
  %v1827 = vpack.c.b16 %v1795, %v1795
  %v1828 = vpack.c.b16 %v1796, %v1796
  %v1829 = vpack.c.b16 %v1797, %v1797
  %v1830 = vpack.c.b16 %v1798, %v1798
  %v1831 = vpack.c.b16 %v1799, %v1799
  %v1832 = vpack.c.b16 %v1800, %v1800
  %v1833 = vpack.c.b16 %v1801, %v1801
  %v1834 = vpack.c.b16 %v1802, %v1802
  %v1835 = vpack.c.b16 %v1803, %v1803
  %v1836 = vpack.c.b16 %v1804, %v1804
  %v1837 = vpack.c.b16 %v1805, %v1805
  %v1838 = vpack.c.b16 %v1806, %v1806
  %v1839 = vpack.c.b16 %v1807, %v1807
  %v1840 = vpack.c.b16 %v1808, %v1808
  %v1841 = vpack.c.b16 %v1809, %v1809
  %v1842 = vpack.c.b16 %v1810, %v1810
  %v1843 = vpack.c.b16 %v1811, %v1811
  %v1844 = vpack.c.b16 %v1812, %v1812
  %v1845 = vpack.c.b16 %v1813, %v1813
  %v1846 = vpack.c.b16 %v1814, %v1814
  %v1847 = vpack.c.b16 %v1815, %v1815
  %v1848 = vpack.c.b16 %v1816, %v1816
  %vm1849 = vsmask.f32 7424
  %v1851 = vshrl.u32 %v1689, 16
  %v1853 = vshll.u32 %v1689, 16
  %v1855 = vrot.slane %v1853, 1
  %v1856 = vor.u32 %v1851, %v1855
  %v1858 = vshll.u32 %v1817, 16
  %v1860 = vrot.slane %v1858, 1
  %v1861 = vsel %vm1849, %v1856, %v1860
  %v1863 = vshrl.u32 %v1690, 16
  %v1865 = vshll.u32 %v1690, 16
  %v1867 = vrot.slane %v1865, 1
  %v1868 = vor.u32 %v1863, %v1867
  %v1870 = vshll.u32 %v1818, 16
  %v1872 = vrot.slane %v1870, 1
  %v1873 = vsel %vm1849, %v1868, %v1872
  %v1875 = vshrl.u32 %v1691, 16
  %v1877 = vshll.u32 %v1691, 16
  %v1879 = vrot.slane %v1877, 1
  %v1880 = vor.u32 %v1875, %v1879
  %v1882 = vshll.u32 %v1819, 16
  %v1884 = vrot.slane %v1882, 1
  %v1885 = vsel %vm1849, %v1880, %v1884
  %v1887 = vshrl.u32 %v1692, 16
  %v1889 = vshll.u32 %v1692, 16
  %v1891 = vrot.slane %v1889, 1
  %v1892 = vor.u32 %v1887, %v1891
  %v1894 = vshll.u32 %v1820, 16
  %v1896 = vrot.slane %v1894, 1
  %v1897 = vsel %vm1849, %v1892, %v1896
  %v1899 = vshrl.u32 %v1693, 16
  %v1901 = vshll.u32 %v1693, 16
  %v1903 = vrot.slane %v1901, 1
  %v1904 = vor.u32 %v1899, %v1903
  %v1906 = vshll.u32 %v1821, 16
  %v1908 = vrot.slane %v1906, 1
  %v1909 = vsel %vm1849, %v1904, %v1908
  %v1911 = vshrl.u32 %v1694, 16
  %v1913 = vshll.u32 %v1694, 16
  %v1915 = vrot.slane %v1913, 1
  %v1916 = vor.u32 %v1911, %v1915
  %v1918 = vshll.u32 %v1822, 16
  %v1920 = vrot.slane %v1918, 1
  %v1921 = vsel %vm1849, %v1916, %v1920
  %v1923 = vshrl.u32 %v1695, 16
  %v1925 = vshll.u32 %v1695, 16
  %v1927 = vrot.slane %v1925, 1
  %v1928 = vor.u32 %v1923, %v1927
  %v1930 = vshll.u32 %v1823, 16
  %v1932 = vrot.slane %v1930, 1
  %v1933 = vsel %vm1849, %v1928, %v1932
  %v1935 = vshrl.u32 %v1696, 16
  %v1937 = vshll.u32 %v1696, 16
  %v1939 = vrot.slane %v1937, 1
  %v1940 = vor.u32 %v1935, %v1939
  %v1942 = vshll.u32 %v1824, 16
  %v1944 = vrot.slane %v1942, 1
  %v1945 = vsel %vm1849, %v1940, %v1944
  %v1947 = vshrl.u32 %v1697, 16
  %v1949 = vshll.u32 %v1697, 16
  %v1951 = vrot.slane %v1949, 1
  %v1952 = vor.u32 %v1947, %v1951
  %v1954 = vshll.u32 %v1825, 16
  %v1956 = vrot.slane %v1954, 1
  %v1957 = vsel %vm1849, %v1952, %v1956
  %v1959 = vshrl.u32 %v1698, 16
  %v1961 = vshll.u32 %v1698, 16
  %v1963 = vrot.slane %v1961, 1
  %v1964 = vor.u32 %v1959, %v1963
  %v1966 = vshll.u32 %v1826, 16
  %v1968 = vrot.slane %v1966, 1
  %v1969 = vsel %vm1849, %v1964, %v1968
  %v1971 = vshrl.u32 %v1699, 16
  %v1973 = vshll.u32 %v1699, 16
  %v1975 = vrot.slane %v1973, 1
  %v1976 = vor.u32 %v1971, %v1975
  %v1978 = vshll.u32 %v1827, 16
  %v1980 = vrot.slane %v1978, 1
  %v1981 = vsel %vm1849, %v1976, %v1980
  %v1983 = vshrl.u32 %v1700, 16
  %v1985 = vshll.u32 %v1700, 16
  %v1987 = vrot.slane %v1985, 1
  %v1988 = vor.u32 %v1983, %v1987
  %v1990 = vshll.u32 %v1828, 16
  %v1992 = vrot.slane %v1990, 1
  %v1993 = vsel %vm1849, %v1988, %v1992
  %v1995 = vshrl.u32 %v1701, 16
  %v1997 = vshll.u32 %v1701, 16
  %v1999 = vrot.slane %v1997, 1
  %v2000 = vor.u32 %v1995, %v1999
  %v2002 = vshll.u32 %v1829, 16
  %v2004 = vrot.slane %v2002, 1
  %v2005 = vsel %vm1849, %v2000, %v2004
  %v2007 = vshrl.u32 %v1702, 16
  %v2009 = vshll.u32 %v1702, 16
  %v2011 = vrot.slane %v2009, 1
  %v2012 = vor.u32 %v2007, %v2011
  %v2014 = vshll.u32 %v1830, 16
  %v2016 = vrot.slane %v2014, 1
  %v2017 = vsel %vm1849, %v2012, %v2016
  %v2019 = vshrl.u32 %v1703, 16
  %v2021 = vshll.u32 %v1703, 16
  %v2023 = vrot.slane %v2021, 1
  %v2024 = vor.u32 %v2019, %v2023
  %v2026 = vshll.u32 %v1831, 16
  %v2028 = vrot.slane %v2026, 1
  %v2029 = vsel %vm1849, %v2024, %v2028
  %v2031 = vshrl.u32 %v1704, 16
  %v2033 = vshll.u32 %v1704, 16
  %v2035 = vrot.slane %v2033, 1
  %v2036 = vor.u32 %v2031, %v2035
  %v2038 = vshll.u32 %v1832, 16
  %v2040 = vrot.slane %v2038, 1
  %v2041 = vsel %vm1849, %v2036, %v2040
  %v2043 = vshrl.u32 %v1705, 16
  %v2045 = vshll.u32 %v1705, 16
  %v2047 = vrot.slane %v2045, 1
  %v2048 = vor.u32 %v2043, %v2047
  %v2050 = vshll.u32 %v1833, 16
  %v2052 = vrot.slane %v2050, 1
  %v2053 = vsel %vm1849, %v2048, %v2052
  %v2055 = vshrl.u32 %v1706, 16
  %v2057 = vshll.u32 %v1706, 16
  %v2059 = vrot.slane %v2057, 1
  %v2060 = vor.u32 %v2055, %v2059
  %v2062 = vshll.u32 %v1834, 16
  %v2064 = vrot.slane %v2062, 1
  %v2065 = vsel %vm1849, %v2060, %v2064
  %v2067 = vshrl.u32 %v1707, 16
  %v2069 = vshll.u32 %v1707, 16
  %v2071 = vrot.slane %v2069, 1
  %v2072 = vor.u32 %v2067, %v2071
  %v2074 = vshll.u32 %v1835, 16
  %v2076 = vrot.slane %v2074, 1
  %v2077 = vsel %vm1849, %v2072, %v2076
  %v2079 = vshrl.u32 %v1708, 16
  %v2081 = vshll.u32 %v1708, 16
  %v2083 = vrot.slane %v2081, 1
  %v2084 = vor.u32 %v2079, %v2083
  %v2086 = vshll.u32 %v1836, 16
  %v2088 = vrot.slane %v2086, 1
  %v2089 = vsel %vm1849, %v2084, %v2088
  %v2091 = vshrl.u32 %v1709, 16
  %v2093 = vshll.u32 %v1709, 16
  %v2095 = vrot.slane %v2093, 1
  %v2096 = vor.u32 %v2091, %v2095
  %v2098 = vshll.u32 %v1837, 16
  %v2100 = vrot.slane %v2098, 1
  %v2101 = vsel %vm1849, %v2096, %v2100
  %v2103 = vshrl.u32 %v1710, 16
  %v2105 = vshll.u32 %v1710, 16
  %v2107 = vrot.slane %v2105, 1
  %v2108 = vor.u32 %v2103, %v2107
  %v2110 = vshll.u32 %v1838, 16
  %v2112 = vrot.slane %v2110, 1
  %v2113 = vsel %vm1849, %v2108, %v2112
  %v2115 = vshrl.u32 %v1711, 16
  %v2117 = vshll.u32 %v1711, 16
  %v2119 = vrot.slane %v2117, 1
  %v2120 = vor.u32 %v2115, %v2119
  %v2122 = vshll.u32 %v1839, 16
  %v2124 = vrot.slane %v2122, 1
  %v2125 = vsel %vm1849, %v2120, %v2124
  %v2127 = vshrl.u32 %v1712, 16
  %v2129 = vshll.u32 %v1712, 16
  %v2131 = vrot.slane %v2129, 1
  %v2132 = vor.u32 %v2127, %v2131
  %v2134 = vshll.u32 %v1840, 16
  %v2136 = vrot.slane %v2134, 1
  %v2137 = vsel %vm1849, %v2132, %v2136
  %v2139 = vshrl.u32 %v1713, 16
  %v2141 = vshll.u32 %v1713, 16
  %v2143 = vrot.slane %v2141, 1
  %v2144 = vor.u32 %v2139, %v2143
  %v2146 = vshll.u32 %v1841, 16
  %v2148 = vrot.slane %v2146, 1
  %v2149 = vsel %vm1849, %v2144, %v2148
  %v2151 = vshrl.u32 %v1714, 16
  %v2153 = vshll.u32 %v1714, 16
  %v2155 = vrot.slane %v2153, 1
  %v2156 = vor.u32 %v2151, %v2155
  %v2158 = vshll.u32 %v1842, 16
  %v2160 = vrot.slane %v2158, 1
  %v2161 = vsel %vm1849, %v2156, %v2160
  %v2163 = vshrl.u32 %v1715, 16
  %v2165 = vshll.u32 %v1715, 16
  %v2167 = vrot.slane %v2165, 1
  %v2168 = vor.u32 %v2163, %v2167
  %v2170 = vshll.u32 %v1843, 16
  %v2172 = vrot.slane %v2170, 1
  %v2173 = vsel %vm1849, %v2168, %v2172
  %v2175 = vshrl.u32 %v1716, 16
  %v2177 = vshll.u32 %v1716, 16
  %v2179 = vrot.slane %v2177, 1
  %v2180 = vor.u32 %v2175, %v2179
  %v2182 = vshll.u32 %v1844, 16
  %v2184 = vrot.slane %v2182, 1
  %v2185 = vsel %vm1849, %v2180, %v2184
  %v2187 = vshrl.u32 %v1717, 16
  %v2189 = vshll.u32 %v1717, 16
  %v2191 = vrot.slane %v2189, 1
  %v2192 = vor.u32 %v2187, %v2191
  %v2194 = vshll.u32 %v1845, 16
  %v2196 = vrot.slane %v2194, 1
  %v2197 = vsel %vm1849, %v2192, %v2196
  %v2199 = vshrl.u32 %v1718, 16
  %v2201 = vshll.u32 %v1718, 16
  %v2203 = vrot.slane %v2201, 1
  %v2204 = vor.u32 %v2199, %v2203
  %v2206 = vshll.u32 %v1846, 16
  %v2208 = vrot.slane %v2206, 1
  %v2209 = vsel %vm1849, %v2204, %v2208
  %v2211 = vshrl.u32 %v1719, 16
  %v2213 = vshll.u32 %v1719, 16
  %v2215 = vrot.slane %v2213, 1
  %v2216 = vor.u32 %v2211, %v2215
  %v2218 = vshll.u32 %v1847, 16
  %v2220 = vrot.slane %v2218, 1
  %v2221 = vsel %vm1849, %v2216, %v2220
  %v2223 = vshrl.u32 %v1720, 16
  %v2225 = vshll.u32 %v1720, 16
  %v2227 = vrot.slane %v2225, 1
  %v2228 = vor.u32 %v2223, %v2227
  %v2230 = vshll.u32 %v1848, 16
  %v2232 = vrot.slane %v2230, 1
  %v2233 = vsel %vm1849, %v2228, %v2232
  %v2298 = vunpack.c.l.b16 %v1272
  %v2299 = vunpack.c.l.b16 %v1273
  %v2300 = vunpack.c.l.b16 %v1274
  %v2301 = vunpack.c.l.b16 %v1275
  %v2302 = vunpack.c.l.b16 %v1276
  %v2303 = vunpack.c.l.b16 %v1277
  %v2304 = vunpack.c.l.b16 %v1278
  %v2305 = vunpack.c.l.b16 %v1279
  %v2306 = vunpack.c.l.b16 %v1280
  %v2307 = vunpack.c.l.b16 %v1281
  %v2308 = vunpack.c.l.b16 %v1282
  %v2309 = vunpack.c.l.b16 %v1283
  %v2310 = vunpack.c.l.b16 %v1284
  %v2311 = vunpack.c.l.b16 %v1285
  %v2312 = vunpack.c.l.b16 %v1286
  %v2313 = vunpack.c.l.b16 %v1287
  %v2314 = vunpack.c.l.b16 %v1288
  %v2315 = vunpack.c.l.b16 %v1289
  %v2316 = vunpack.c.l.b16 %v1290
  %v2317 = vunpack.c.l.b16 %v1291
  %v2318 = vunpack.c.l.b16 %v1292
  %v2319 = vunpack.c.l.b16 %v1293
  %v2320 = vunpack.c.l.b16 %v1294
  %v2321 = vunpack.c.l.b16 %v1295
  %v2322 = vunpack.c.l.b16 %v1296
  %v2323 = vunpack.c.l.b16 %v1297
  %v2324 = vunpack.c.l.b16 %v1298
  %v2325 = vunpack.c.l.b16 %v1299
  %v2326 = vunpack.c.l.b16 %v1300
  %v2327 = vunpack.c.l.b16 %v1301
  %v2328 = vunpack.c.l.b16 %v1302
  %v2329 = vunpack.c.l.b16 %v1303
  %v2330 = vpack.c.b16 %v1626, %v2298
  %v2331 = vpack.c.b16 %v1628, %v2299
  %v2332 = vpack.c.b16 %v1630, %v2300
  %v2333 = vpack.c.b16 %v1632, %v2301
  %v2334 = vpack.c.b16 %v1634, %v2302
  %v2335 = vpack.c.b16 %v1636, %v2303
  %v2336 = vpack.c.b16 %v1638, %v2304
  %v2337 = vpack.c.b16 %v1640, %v2305
  %v2338 = vpack.c.b16 %v1642, %v2306
  %v2339 = vpack.c.b16 %v1644, %v2307
  %v2340 = vpack.c.b16 %v1646, %v2308
  %v2341 = vpack.c.b16 %v1648, %v2309
  %v2342 = vpack.c.b16 %v1650, %v2310
  %v2343 = vpack.c.b16 %v1652, %v2311
  %v2344 = vpack.c.b16 %v1654, %v2312
  %v2345 = vpack.c.b16 %v1656, %v2313
  %v2346 = vpack.c.b16 %v1658, %v2314
  %v2347 = vpack.c.b16 %v1660, %v2315
  %v2348 = vpack.c.b16 %v1662, %v2316
  %v2349 = vpack.c.b16 %v1664, %v2317
  %v2350 = vpack.c.b16 %v1666, %v2318
  %v2351 = vpack.c.b16 %v1668, %v2319
  %v2352 = vpack.c.b16 %v1670, %v2320
  %v2353 = vpack.c.b16 %v1672, %v2321
  %v2354 = vpack.c.b16 %v1674, %v2322
  %v2355 = vpack.c.b16 %v1676, %v2323
  %v2356 = vpack.c.b16 %v1678, %v2324
  %v2357 = vpack.c.b16 %v1680, %v2325
  %v2358 = vpack.c.b16 %v1682, %v2326
  %v2359 = vpack.c.b16 %v1684, %v2327
  %v2360 = vpack.c.b16 %v1686, %v2328
  %v2361 = vpack.c.b16 %v1688, %v2329
  %vm2362 = vcmask 1046528
  %v2363 = vrot.slane %v2330, 1
  %v2364 = vrot.slane %v1817, 1
  %v2365 = vsel %vm2362, %v2363, %v2364
  %v2366 = vrot.slane %v2331, 1
  %v2367 = vrot.slane %v1818, 1
  %v2368 = vsel %vm2362, %v2366, %v2367
  %v2369 = vrot.slane %v2332, 1
  %v2370 = vrot.slane %v1819, 1
  %v2371 = vsel %vm2362, %v2369, %v2370
  %v2372 = vrot.slane %v2333, 1
  %v2373 = vrot.slane %v1820, 1
  %v2374 = vsel %vm2362, %v2372, %v2373
  %v2375 = vrot.slane %v2334, 1
  %v2376 = vrot.slane %v1821, 1
  %v2377 = vsel %vm2362, %v2375, %v2376
  %v2378 = vrot.slane %v2335, 1
  %v2379 = vrot.slane %v1822, 1
  %v2380 = vsel %vm2362, %v2378, %v2379
  %v2381 = vrot.slane %v2336, 1
  %v2382 = vrot.slane %v1823, 1
  %v2383 = vsel %vm2362, %v2381, %v2382
  %v2384 = vrot.slane %v2337, 1
  %v2385 = vrot.slane %v1824, 1
  %v2386 = vsel %vm2362, %v2384, %v2385
  %v2387 = vrot.slane %v2338, 1
  %v2388 = vrot.slane %v1825, 1
  %v2389 = vsel %vm2362, %v2387, %v2388
  %v2390 = vrot.slane %v2339, 1
  %v2391 = vrot.slane %v1826, 1
  %v2392 = vsel %vm2362, %v2390, %v2391
  %v2393 = vrot.slane %v2340, 1
  %v2394 = vrot.slane %v1827, 1
  %v2395 = vsel %vm2362, %v2393, %v2394
  %v2396 = vrot.slane %v2341, 1
  %v2397 = vrot.slane %v1828, 1
  %v2398 = vsel %vm2362, %v2396, %v2397
  %v2399 = vrot.slane %v2342, 1
  %v2400 = vrot.slane %v1829, 1
  %v2401 = vsel %vm2362, %v2399, %v2400
  %v2402 = vrot.slane %v2343, 1
  %v2403 = vrot.slane %v1830, 1
  %v2404 = vsel %vm2362, %v2402, %v2403
  %v2405 = vrot.slane %v2344, 1
  %v2406 = vrot.slane %v1831, 1
  %v2407 = vsel %vm2362, %v2405, %v2406
  %v2408 = vrot.slane %v2345, 1
  %v2409 = vrot.slane %v1832, 1
  %v2410 = vsel %vm2362, %v2408, %v2409
  %v2411 = vrot.slane %v2346, 1
  %v2412 = vrot.slane %v1833, 1
  %v2413 = vsel %vm2362, %v2411, %v2412
  %v2414 = vrot.slane %v2347, 1
  %v2415 = vrot.slane %v1834, 1
  %v2416 = vsel %vm2362, %v2414, %v2415
  %v2417 = vrot.slane %v2348, 1
  %v2418 = vrot.slane %v1835, 1
  %v2419 = vsel %vm2362, %v2417, %v2418
  %v2420 = vrot.slane %v2349, 1
  %v2421 = vrot.slane %v1836, 1
  %v2422 = vsel %vm2362, %v2420, %v2421
  %v2423 = vrot.slane %v2350, 1
  %v2424 = vrot.slane %v1837, 1
  %v2425 = vsel %vm2362, %v2423, %v2424
  %v2426 = vrot.slane %v2351, 1
  %v2427 = vrot.slane %v1838, 1
  %v2428 = vsel %vm2362, %v2426, %v2427
  %v2429 = vrot.slane %v2352, 1
  %v2430 = vrot.slane %v1839, 1
  %v2431 = vsel %vm2362, %v2429, %v2430
  %v2432 = vrot.slane %v2353, 1
  %v2433 = vrot.slane %v1840, 1
  %v2434 = vsel %vm2362, %v2432, %v2433
  %v2435 = vrot.slane %v2354, 1
  %v2436 = vrot.slane %v1841, 1
  %v2437 = vsel %vm2362, %v2435, %v2436
  %v2438 = vrot.slane %v2355, 1
  %v2439 = vrot.slane %v1842, 1
  %v2440 = vsel %vm2362, %v2438, %v2439
  %v2441 = vrot.slane %v2356, 1
  %v2442 = vrot.slane %v1843, 1
  %v2443 = vsel %vm2362, %v2441, %v2442
  %v2444 = vrot.slane %v2357, 1
  %v2445 = vrot.slane %v1844, 1
  %v2446 = vsel %vm2362, %v2444, %v2445
  %v2447 = vrot.slane %v2358, 1
  %v2448 = vrot.slane %v1845, 1
  %v2449 = vsel %vm2362, %v2447, %v2448
  %v2450 = vrot.slane %v2359, 1
  %v2451 = vrot.slane %v1846, 1
  %v2452 = vsel %vm2362, %v2450, %v2451
  %v2453 = vrot.slane %v2360, 1
  %v2454 = vrot.slane %v1847, 1
  %v2455 = vsel %vm2362, %v2453, %v2454
  %v2456 = vrot.slane %v2361, 1
  %v2457 = vrot.slane %v1848, 1
  %v2458 = vsel %vm2362, %v2456, %v2457
  %v2555 = vunpack.c.l.b16 %v1304
  %v2556 = vunpack.c.l.b16 %v1305
  %v2557 = vunpack.c.l.b16 %v1306
  %v2558 = vunpack.c.l.b16 %v1307
  %v2559 = vunpack.c.l.b16 %v1308
  %v2560 = vunpack.c.l.b16 %v1309
  %v2561 = vunpack.c.l.b16 %v1310
  %v2562 = vunpack.c.l.b16 %v1311
  %v2563 = vunpack.c.l.b16 %v1312
  %v2564 = vunpack.c.l.b16 %v1313
  %v2565 = vunpack.c.l.b16 %v1314
  %v2566 = vunpack.c.l.b16 %v1315
  %v2567 = vunpack.c.l.b16 %v1316
  %v2568 = vunpack.c.l.b16 %v1317
  %v2569 = vunpack.c.l.b16 %v1318
  %v2570 = vunpack.c.l.b16 %v1319
  %v2571 = vunpack.c.l.b16 %v1320
  %v2572 = vunpack.c.l.b16 %v1321
  %v2573 = vunpack.c.l.b16 %v1322
  %v2574 = vunpack.c.l.b16 %v1323
  %v2575 = vunpack.c.l.b16 %v1324
  %v2576 = vunpack.c.l.b16 %v1325
  %v2577 = vunpack.c.l.b16 %v1326
  %v2578 = vunpack.c.l.b16 %v1327
  %v2579 = vunpack.c.l.b16 %v1328
  %v2580 = vunpack.c.l.b16 %v1329
  %v2581 = vunpack.c.l.b16 %v1330
  %v2582 = vunpack.c.l.b16 %v1331
  %v2583 = vunpack.c.l.b16 %v1332
  %v2584 = vunpack.c.l.b16 %v1333
  %v2585 = vunpack.c.l.b16 %v1334
  %v2586 = vunpack.c.l.b16 %v1335
  %v2587 = vunpack.c.l.b16 %v1336
  %v2588 = vunpack.c.l.b16 %v1337
  %v2589 = vunpack.c.l.b16 %v1338
  %v2590 = vunpack.c.l.b16 %v1339
  %v2591 = vunpack.c.l.b16 %v1340
  %v2592 = vunpack.c.l.b16 %v1341
  %v2593 = vunpack.c.l.b16 %v1342
  %v2594 = vunpack.c.l.b16 %v1343
  %v2595 = vunpack.c.l.b16 %v1344
  %v2596 = vunpack.c.l.b16 %v1345
  %v2597 = vunpack.c.l.b16 %v1346
  %v2598 = vunpack.c.l.b16 %v1347
  %v2599 = vunpack.c.l.b16 %v1348
  %v2600 = vunpack.c.l.b16 %v1349
  %v2601 = vunpack.c.l.b16 %v1350
  %v2602 = vunpack.c.l.b16 %v1351
  %v2603 = vunpack.c.l.b16 %v1352
  %v2604 = vunpack.c.l.b16 %v1353
  %v2605 = vunpack.c.l.b16 %v1354
  %v2606 = vunpack.c.l.b16 %v1355
  %v2607 = vunpack.c.l.b16 %v1356
  %v2608 = vunpack.c.l.b16 %v1357
  %v2609 = vunpack.c.l.b16 %v1358
  %v2610 = vunpack.c.l.b16 %v1359
  %v2611 = vunpack.c.l.b16 %v1360
  %v2612 = vunpack.c.l.b16 %v1361
  %v2613 = vunpack.c.l.b16 %v1362
  %v2614 = vunpack.c.l.b16 %v1363
  %v2615 = vunpack.c.l.b16 %v1364
  %v2616 = vunpack.c.l.b16 %v1365
  %v2617 = vunpack.c.l.b16 %v1366
  %v2618 = vunpack.c.l.b16 %v1367
  %v2619 = vpack.c.b16 %v2556, %v2555
  %v2620 = vpack.c.b16 %v2558, %v2557
  %v2621 = vpack.c.b16 %v2560, %v2559
  %v2622 = vpack.c.b16 %v2562, %v2561
  %v2623 = vpack.c.b16 %v2564, %v2563
  %v2624 = vpack.c.b16 %v2566, %v2565
  %v2625 = vpack.c.b16 %v2568, %v2567
  %v2626 = vpack.c.b16 %v2570, %v2569
  %v2627 = vpack.c.b16 %v2572, %v2571
  %v2628 = vpack.c.b16 %v2574, %v2573
  %v2629 = vpack.c.b16 %v2576, %v2575
  %v2630 = vpack.c.b16 %v2578, %v2577
  %v2631 = vpack.c.b16 %v2580, %v2579
  %v2632 = vpack.c.b16 %v2582, %v2581
  %v2633 = vpack.c.b16 %v2584, %v2583
  %v2634 = vpack.c.b16 %v2586, %v2585
  %v2635 = vpack.c.b16 %v2588, %v2587
  %v2636 = vpack.c.b16 %v2590, %v2589
  %v2637 = vpack.c.b16 %v2592, %v2591
  %v2638 = vpack.c.b16 %v2594, %v2593
  %v2639 = vpack.c.b16 %v2596, %v2595
  %v2640 = vpack.c.b16 %v2598, %v2597
  %v2641 = vpack.c.b16 %v2600, %v2599
  %v2642 = vpack.c.b16 %v2602, %v2601
  %v2643 = vpack.c.b16 %v2604, %v2603
  %v2644 = vpack.c.b16 %v2606, %v2605
  %v2645 = vpack.c.b16 %v2608, %v2607
  %v2646 = vpack.c.b16 %v2610, %v2609
  %v2647 = vpack.c.b16 %v2612, %v2611
  %v2648 = vpack.c.b16 %v2614, %v2613
  %v2649 = vpack.c.b16 %v2616, %v2615
  %v2650 = vpack.c.b16 %v2618, %v2617
  %v2715 = vunpack.c.l.b16 %v1368
  %v2716 = vunpack.c.l.b16 %v1369
  %v2717 = vunpack.c.l.b16 %v1370
  %v2718 = vunpack.c.l.b16 %v1371
  %v2719 = vunpack.c.l.b16 %v1372
  %v2720 = vunpack.c.l.b16 %v1373
  %v2721 = vunpack.c.l.b16 %v1374
  %v2722 = vunpack.c.l.b16 %v1375
  %v2723 = vunpack.c.l.b16 %v1376
  %v2724 = vunpack.c.l.b16 %v1377
  %v2725 = vunpack.c.l.b16 %v1378
  %v2726 = vunpack.c.l.b16 %v1379
  %v2727 = vunpack.c.l.b16 %v1380
  %v2728 = vunpack.c.l.b16 %v1381
  %v2729 = vunpack.c.l.b16 %v1382
  %v2730 = vunpack.c.l.b16 %v1383
  %v2731 = vunpack.c.l.b16 %v1384
  %v2732 = vunpack.c.l.b16 %v1385
  %v2733 = vunpack.c.l.b16 %v1386
  %v2734 = vunpack.c.l.b16 %v1387
  %v2735 = vunpack.c.l.b16 %v1388
  %v2736 = vunpack.c.l.b16 %v1389
  %v2737 = vunpack.c.l.b16 %v1390
  %v2738 = vunpack.c.l.b16 %v1391
  %v2739 = vunpack.c.l.b16 %v1392
  %v2740 = vunpack.c.l.b16 %v1393
  %v2741 = vunpack.c.l.b16 %v1394
  %v2742 = vunpack.c.l.b16 %v1395
  %v2743 = vunpack.c.l.b16 %v1396
  %v2744 = vunpack.c.l.b16 %v1397
  %v2745 = vunpack.c.l.b16 %v1398
  %v2746 = vunpack.c.l.b16 %v1399
  %v2747 = vpack.c.b16 %v2715, %v2715
  %v2748 = vpack.c.b16 %v2716, %v2716
  %v2749 = vpack.c.b16 %v2717, %v2717
  %v2750 = vpack.c.b16 %v2718, %v2718
  %v2751 = vpack.c.b16 %v2719, %v2719
  %v2752 = vpack.c.b16 %v2720, %v2720
  %v2753 = vpack.c.b16 %v2721, %v2721
  %v2754 = vpack.c.b16 %v2722, %v2722
  %v2755 = vpack.c.b16 %v2723, %v2723
  %v2756 = vpack.c.b16 %v2724, %v2724
  %v2757 = vpack.c.b16 %v2725, %v2725
  %v2758 = vpack.c.b16 %v2726, %v2726
  %v2759 = vpack.c.b16 %v2727, %v2727
  %v2760 = vpack.c.b16 %v2728, %v2728
  %v2761 = vpack.c.b16 %v2729, %v2729
  %v2762 = vpack.c.b16 %v2730, %v2730
  %v2763 = vpack.c.b16 %v2731, %v2731
  %v2764 = vpack.c.b16 %v2732, %v2732
  %v2765 = vpack.c.b16 %v2733, %v2733
  %v2766 = vpack.c.b16 %v2734, %v2734
  %v2767 = vpack.c.b16 %v2735, %v2735
  %v2768 = vpack.c.b16 %v2736, %v2736
  %v2769 = vpack.c.b16 %v2737, %v2737
  %v2770 = vpack.c.b16 %v2738, %v2738
  %v2771 = vpack.c.b16 %v2739, %v2739
  %v2772 = vpack.c.b16 %v2740, %v2740
  %v2773 = vpack.c.b16 %v2741, %v2741
  %v2774 = vpack.c.b16 %v2742, %v2742
  %v2775 = vpack.c.b16 %v2743, %v2743
  %v2776 = vpack.c.b16 %v2744, %v2744
  %v2777 = vpack.c.b16 %v2745, %v2745
  %v2778 = vpack.c.b16 %v2746, %v2746
  %v2780 = vshrl.u32 %v2619, 16
  %v2782 = vshll.u32 %v2619, 16
  %v2784 = vrot.slane %v2782, 1
  %v2785 = vor.u32 %v2780, %v2784
  %v2787 = vshll.u32 %v2747, 16
  %v2789 = vrot.slane %v2787, 1
  %v2790 = vsel %vm1849, %v2785, %v2789
  %v2792 = vshrl.u32 %v2620, 16
  %v2794 = vshll.u32 %v2620, 16
  %v2796 = vrot.slane %v2794, 1
  %v2797 = vor.u32 %v2792, %v2796
  %v2799 = vshll.u32 %v2748, 16
  %v2801 = vrot.slane %v2799, 1
  %v2802 = vsel %vm1849, %v2797, %v2801
  %v2804 = vshrl.u32 %v2621, 16
  %v2806 = vshll.u32 %v2621, 16
  %v2808 = vrot.slane %v2806, 1
  %v2809 = vor.u32 %v2804, %v2808
  %v2811 = vshll.u32 %v2749, 16
  %v2813 = vrot.slane %v2811, 1
  %v2814 = vsel %vm1849, %v2809, %v2813
  %v2816 = vshrl.u32 %v2622, 16
  %v2818 = vshll.u32 %v2622, 16
  %v2820 = vrot.slane %v2818, 1
  %v2821 = vor.u32 %v2816, %v2820
  %v2823 = vshll.u32 %v2750, 16
  %v2825 = vrot.slane %v2823, 1
  %v2826 = vsel %vm1849, %v2821, %v2825
  %v2828 = vshrl.u32 %v2623, 16
  %v2830 = vshll.u32 %v2623, 16
  %v2832 = vrot.slane %v2830, 1
  %v2833 = vor.u32 %v2828, %v2832
  %v2835 = vshll.u32 %v2751, 16
  %v2837 = vrot.slane %v2835, 1
  %v2838 = vsel %vm1849, %v2833, %v2837
  %v2840 = vshrl.u32 %v2624, 16
  %v2842 = vshll.u32 %v2624, 16
  %v2844 = vrot.slane %v2842, 1
  %v2845 = vor.u32 %v2840, %v2844
  %v2847 = vshll.u32 %v2752, 16
  %v2849 = vrot.slane %v2847, 1
  %v2850 = vsel %vm1849, %v2845, %v2849
  %v2852 = vshrl.u32 %v2625, 16
  %v2854 = vshll.u32 %v2625, 16
  %v2856 = vrot.slane %v2854, 1
  %v2857 = vor.u32 %v2852, %v2856
  %v2859 = vshll.u32 %v2753, 16
  %v2861 = vrot.slane %v2859, 1
  %v2862 = vsel %vm1849, %v2857, %v2861
  %v2864 = vshrl.u32 %v2626, 16
  %v2866 = vshll.u32 %v2626, 16
  %v2868 = vrot.slane %v2866, 1
  %v2869 = vor.u32 %v2864, %v2868
  %v2871 = vshll.u32 %v2754, 16
  %v2873 = vrot.slane %v2871, 1
  %v2874 = vsel %vm1849, %v2869, %v2873
  %v2876 = vshrl.u32 %v2627, 16
  %v2878 = vshll.u32 %v2627, 16
  %v2880 = vrot.slane %v2878, 1
  %v2881 = vor.u32 %v2876, %v2880
  %v2883 = vshll.u32 %v2755, 16
  %v2885 = vrot.slane %v2883, 1
  %v2886 = vsel %vm1849, %v2881, %v2885
  %v2888 = vshrl.u32 %v2628, 16
  %v2890 = vshll.u32 %v2628, 16
  %v2892 = vrot.slane %v2890, 1
  %v2893 = vor.u32 %v2888, %v2892
  %v2895 = vshll.u32 %v2756, 16
  %v2897 = vrot.slane %v2895, 1
  %v2898 = vsel %vm1849, %v2893, %v2897
  %v2900 = vshrl.u32 %v2629, 16
  %v2902 = vshll.u32 %v2629, 16
  %v2904 = vrot.slane %v2902, 1
  %v2905 = vor.u32 %v2900, %v2904
  %v2907 = vshll.u32 %v2757, 16
  %v2909 = vrot.slane %v2907, 1
  %v2910 = vsel %vm1849, %v2905, %v2909
  %v2912 = vshrl.u32 %v2630, 16
  %v2914 = vshll.u32 %v2630, 16
  %v2916 = vrot.slane %v2914, 1
  %v2917 = vor.u32 %v2912, %v2916
  %v2919 = vshll.u32 %v2758, 16
  %v2921 = vrot.slane %v2919, 1
  %v2922 = vsel %vm1849, %v2917, %v2921
  %v2924 = vshrl.u32 %v2631, 16
  %v2926 = vshll.u32 %v2631, 16
  %v2928 = vrot.slane %v2926, 1
  %v2929 = vor.u32 %v2924, %v2928
  %v2931 = vshll.u32 %v2759, 16
  %v2933 = vrot.slane %v2931, 1
  %v2934 = vsel %vm1849, %v2929, %v2933
  %v2936 = vshrl.u32 %v2632, 16
  %v2938 = vshll.u32 %v2632, 16
  %v2940 = vrot.slane %v2938, 1
  %v2941 = vor.u32 %v2936, %v2940
  %v2943 = vshll.u32 %v2760, 16
  %v2945 = vrot.slane %v2943, 1
  %v2946 = vsel %vm1849, %v2941, %v2945
  %v2948 = vshrl.u32 %v2633, 16
  %v2950 = vshll.u32 %v2633, 16
  %v2952 = vrot.slane %v2950, 1
  %v2953 = vor.u32 %v2948, %v2952
  %v2955 = vshll.u32 %v2761, 16
  %v2957 = vrot.slane %v2955, 1
  %v2958 = vsel %vm1849, %v2953, %v2957
  %v2960 = vshrl.u32 %v2634, 16
  %v2962 = vshll.u32 %v2634, 16
  %v2964 = vrot.slane %v2962, 1
  %v2965 = vor.u32 %v2960, %v2964
  %v2967 = vshll.u32 %v2762, 16
  %v2969 = vrot.slane %v2967, 1
  %v2970 = vsel %vm1849, %v2965, %v2969
  %v2972 = vshrl.u32 %v2635, 16
  %v2974 = vshll.u32 %v2635, 16
  %v2976 = vrot.slane %v2974, 1
  %v2977 = vor.u32 %v2972, %v2976
  %v2979 = vshll.u32 %v2763, 16
  %v2981 = vrot.slane %v2979, 1
  %v2982 = vsel %vm1849, %v2977, %v2981
  %v2984 = vshrl.u32 %v2636, 16
  %v2986 = vshll.u32 %v2636, 16
  %v2988 = vrot.slane %v2986, 1
  %v2989 = vor.u32 %v2984, %v2988
  %v2991 = vshll.u32 %v2764, 16
  %v2993 = vrot.slane %v2991, 1
  %v2994 = vsel %vm1849, %v2989, %v2993
  %v2996 = vshrl.u32 %v2637, 16
  %v2998 = vshll.u32 %v2637, 16
  %v3000 = vrot.slane %v2998, 1
  %v3001 = vor.u32 %v2996, %v3000
  %v3003 = vshll.u32 %v2765, 16
  %v3005 = vrot.slane %v3003, 1
  %v3006 = vsel %vm1849, %v3001, %v3005
  %v3008 = vshrl.u32 %v2638, 16
  %v3010 = vshll.u32 %v2638, 16
  %v3012 = vrot.slane %v3010, 1
  %v3013 = vor.u32 %v3008, %v3012
  %v3015 = vshll.u32 %v2766, 16
  %v3017 = vrot.slane %v3015, 1
  %v3018 = vsel %vm1849, %v3013, %v3017
  %v3020 = vshrl.u32 %v2639, 16
  %v3022 = vshll.u32 %v2639, 16
  %v3024 = vrot.slane %v3022, 1
  %v3025 = vor.u32 %v3020, %v3024
  %v3027 = vshll.u32 %v2767, 16
  %v3029 = vrot.slane %v3027, 1
  %v3030 = vsel %vm1849, %v3025, %v3029
  %v3032 = vshrl.u32 %v2640, 16
  %v3034 = vshll.u32 %v2640, 16
  %v3036 = vrot.slane %v3034, 1
  %v3037 = vor.u32 %v3032, %v3036
  %v3039 = vshll.u32 %v2768, 16
  %v3041 = vrot.slane %v3039, 1
  %v3042 = vsel %vm1849, %v3037, %v3041
  %v3044 = vshrl.u32 %v2641, 16
  %v3046 = vshll.u32 %v2641, 16
  %v3048 = vrot.slane %v3046, 1
  %v3049 = vor.u32 %v3044, %v3048
  %v3051 = vshll.u32 %v2769, 16
  %v3053 = vrot.slane %v3051, 1
  %v3054 = vsel %vm1849, %v3049, %v3053
  %v3056 = vshrl.u32 %v2642, 16
  %v3058 = vshll.u32 %v2642, 16
  %v3060 = vrot.slane %v3058, 1
  %v3061 = vor.u32 %v3056, %v3060
  %v3063 = vshll.u32 %v2770, 16
  %v3065 = vrot.slane %v3063, 1
  %v3066 = vsel %vm1849, %v3061, %v3065
  %v3068 = vshrl.u32 %v2643, 16
  %v3070 = vshll.u32 %v2643, 16
  %v3072 = vrot.slane %v3070, 1
  %v3073 = vor.u32 %v3068, %v3072
  %v3075 = vshll.u32 %v2771, 16
  %v3077 = vrot.slane %v3075, 1
  %v3078 = vsel %vm1849, %v3073, %v3077
  %v3080 = vshrl.u32 %v2644, 16
  %v3082 = vshll.u32 %v2644, 16
  %v3084 = vrot.slane %v3082, 1
  %v3085 = vor.u32 %v3080, %v3084
  %v3087 = vshll.u32 %v2772, 16
  %v3089 = vrot.slane %v3087, 1
  %v3090 = vsel %vm1849, %v3085, %v3089
  %v3092 = vshrl.u32 %v2645, 16
  %v3094 = vshll.u32 %v2645, 16
  %v3096 = vrot.slane %v3094, 1
  %v3097 = vor.u32 %v3092, %v3096
  %v3099 = vshll.u32 %v2773, 16
  %v3101 = vrot.slane %v3099, 1
  %v3102 = vsel %vm1849, %v3097, %v3101
  %v3104 = vshrl.u32 %v2646, 16
  %v3106 = vshll.u32 %v2646, 16
  %v3108 = vrot.slane %v3106, 1
  %v3109 = vor.u32 %v3104, %v3108
  %v3111 = vshll.u32 %v2774, 16
  %v3113 = vrot.slane %v3111, 1
  %v3114 = vsel %vm1849, %v3109, %v3113
  %v3116 = vshrl.u32 %v2647, 16
  %v3118 = vshll.u32 %v2647, 16
  %v3120 = vrot.slane %v3118, 1
  %v3121 = vor.u32 %v3116, %v3120
  %v3123 = vshll.u32 %v2775, 16
  %v3125 = vrot.slane %v3123, 1
  %v3126 = vsel %vm1849, %v3121, %v3125
  %v3128 = vshrl.u32 %v2648, 16
  %v3130 = vshll.u32 %v2648, 16
  %v3132 = vrot.slane %v3130, 1
  %v3133 = vor.u32 %v3128, %v3132
  %v3135 = vshll.u32 %v2776, 16
  %v3137 = vrot.slane %v3135, 1
  %v3138 = vsel %vm1849, %v3133, %v3137
  %v3140 = vshrl.u32 %v2649, 16
  %v3142 = vshll.u32 %v2649, 16
  %v3144 = vrot.slane %v3142, 1
  %v3145 = vor.u32 %v3140, %v3144
  %v3147 = vshll.u32 %v2777, 16
  %v3149 = vrot.slane %v3147, 1
  %v3150 = vsel %vm1849, %v3145, %v3149
  %v3152 = vshrl.u32 %v2650, 16
  %v3154 = vshll.u32 %v2650, 16
  %v3156 = vrot.slane %v3154, 1
  %v3157 = vor.u32 %v3152, %v3156
  %v3159 = vshll.u32 %v2778, 16
  %v3161 = vrot.slane %v3159, 1
  %v3162 = vsel %vm1849, %v3157, %v3161
  %v3227 = vunpack.c.l.b16 %v1400
  %v3228 = vunpack.c.l.b16 %v1401
  %v3229 = vunpack.c.l.b16 %v1402
  %v3230 = vunpack.c.l.b16 %v1403
  %v3231 = vunpack.c.l.b16 %v1404
  %v3232 = vunpack.c.l.b16 %v1405
  %v3233 = vunpack.c.l.b16 %v1406
  %v3234 = vunpack.c.l.b16 %v1407
  %v3235 = vunpack.c.l.b16 %v1408
  %v3236 = vunpack.c.l.b16 %v1409
  %v3237 = vunpack.c.l.b16 %v1410
  %v3238 = vunpack.c.l.b16 %v1411
  %v3239 = vunpack.c.l.b16 %v1412
  %v3240 = vunpack.c.l.b16 %v1413
  %v3241 = vunpack.c.l.b16 %v1414
  %v3242 = vunpack.c.l.b16 %v1415
  %v3243 = vunpack.c.l.b16 %v1416
  %v3244 = vunpack.c.l.b16 %v1417
  %v3245 = vunpack.c.l.b16 %v1418
  %v3246 = vunpack.c.l.b16 %v1419
  %v3247 = vunpack.c.l.b16 %v1420
  %v3248 = vunpack.c.l.b16 %v1421
  %v3249 = vunpack.c.l.b16 %v1422
  %v3250 = vunpack.c.l.b16 %v1423
  %v3251 = vunpack.c.l.b16 %v1424
  %v3252 = vunpack.c.l.b16 %v1425
  %v3253 = vunpack.c.l.b16 %v1426
  %v3254 = vunpack.c.l.b16 %v1427
  %v3255 = vunpack.c.l.b16 %v1428
  %v3256 = vunpack.c.l.b16 %v1429
  %v3257 = vunpack.c.l.b16 %v1430
  %v3258 = vunpack.c.l.b16 %v1431
  %v3259 = vpack.c.b16 %v2556, %v3227
  %v3260 = vpack.c.b16 %v2558, %v3228
  %v3261 = vpack.c.b16 %v2560, %v3229
  %v3262 = vpack.c.b16 %v2562, %v3230
  %v3263 = vpack.c.b16 %v2564, %v3231
  %v3264 = vpack.c.b16 %v2566, %v3232
  %v3265 = vpack.c.b16 %v2568, %v3233
  %v3266 = vpack.c.b16 %v2570, %v3234
  %v3267 = vpack.c.b16 %v2572, %v3235
  %v3268 = vpack.c.b16 %v2574, %v3236
  %v3269 = vpack.c.b16 %v2576, %v3237
  %v3270 = vpack.c.b16 %v2578, %v3238
  %v3271 = vpack.c.b16 %v2580, %v3239
  %v3272 = vpack.c.b16 %v2582, %v3240
  %v3273 = vpack.c.b16 %v2584, %v3241
  %v3274 = vpack.c.b16 %v2586, %v3242
  %v3275 = vpack.c.b16 %v2588, %v3243
  %v3276 = vpack.c.b16 %v2590, %v3244
  %v3277 = vpack.c.b16 %v2592, %v3245
  %v3278 = vpack.c.b16 %v2594, %v3246
  %v3279 = vpack.c.b16 %v2596, %v3247
  %v3280 = vpack.c.b16 %v2598, %v3248
  %v3281 = vpack.c.b16 %v2600, %v3249
  %v3282 = vpack.c.b16 %v2602, %v3250
  %v3283 = vpack.c.b16 %v2604, %v3251
  %v3284 = vpack.c.b16 %v2606, %v3252
  %v3285 = vpack.c.b16 %v2608, %v3253
  %v3286 = vpack.c.b16 %v2610, %v3254
  %v3287 = vpack.c.b16 %v2612, %v3255
  %v3288 = vpack.c.b16 %v2614, %v3256
  %v3289 = vpack.c.b16 %v2616, %v3257
  %v3290 = vpack.c.b16 %v2618, %v3258
  %v3291 = vrot.slane %v3259, 1
  %v3292 = vrot.slane %v2747, 1
  %v3293 = vsel %vm2362, %v3291, %v3292
  %v3294 = vrot.slane %v3260, 1
  %v3295 = vrot.slane %v2748, 1
  %v3296 = vsel %vm2362, %v3294, %v3295
  %v3297 = vrot.slane %v3261, 1
  %v3298 = vrot.slane %v2749, 1
  %v3299 = vsel %vm2362, %v3297, %v3298
  %v3300 = vrot.slane %v3262, 1
  %v3301 = vrot.slane %v2750, 1
  %v3302 = vsel %vm2362, %v3300, %v3301
  %v3303 = vrot.slane %v3263, 1
  %v3304 = vrot.slane %v2751, 1
  %v3305 = vsel %vm2362, %v3303, %v3304
  %v3306 = vrot.slane %v3264, 1
  %v3307 = vrot.slane %v2752, 1
  %v3308 = vsel %vm2362, %v3306, %v3307
  %v3309 = vrot.slane %v3265, 1
  %v3310 = vrot.slane %v2753, 1
  %v3311 = vsel %vm2362, %v3309, %v3310
  %v3312 = vrot.slane %v3266, 1
  %v3313 = vrot.slane %v2754, 1
  %v3314 = vsel %vm2362, %v3312, %v3313
  %v3315 = vrot.slane %v3267, 1
  %v3316 = vrot.slane %v2755, 1
  %v3317 = vsel %vm2362, %v3315, %v3316
  %v3318 = vrot.slane %v3268, 1
  %v3319 = vrot.slane %v2756, 1
  %v3320 = vsel %vm2362, %v3318, %v3319
  %v3321 = vrot.slane %v3269, 1
  %v3322 = vrot.slane %v2757, 1
  %v3323 = vsel %vm2362, %v3321, %v3322
  %v3324 = vrot.slane %v3270, 1
  %v3325 = vrot.slane %v2758, 1
  %v3326 = vsel %vm2362, %v3324, %v3325
  %v3327 = vrot.slane %v3271, 1
  %v3328 = vrot.slane %v2759, 1
  %v3329 = vsel %vm2362, %v3327, %v3328
  %v3330 = vrot.slane %v3272, 1
  %v3331 = vrot.slane %v2760, 1
  %v3332 = vsel %vm2362, %v3330, %v3331
  %v3333 = vrot.slane %v3273, 1
  %v3334 = vrot.slane %v2761, 1
  %v3335 = vsel %vm2362, %v3333, %v3334
  %v3336 = vrot.slane %v3274, 1
  %v3337 = vrot.slane %v2762, 1
  %v3338 = vsel %vm2362, %v3336, %v3337
  %v3339 = vrot.slane %v3275, 1
  %v3340 = vrot.slane %v2763, 1
  %v3341 = vsel %vm2362, %v3339, %v3340
  %v3342 = vrot.slane %v3276, 1
  %v3343 = vrot.slane %v2764, 1
  %v3344 = vsel %vm2362, %v3342, %v3343
  %v3345 = vrot.slane %v3277, 1
  %v3346 = vrot.slane %v2765, 1
  %v3347 = vsel %vm2362, %v3345, %v3346
  %v3348 = vrot.slane %v3278, 1
  %v3349 = vrot.slane %v2766, 1
  %v3350 = vsel %vm2362, %v3348, %v3349
  %v3351 = vrot.slane %v3279, 1
  %v3352 = vrot.slane %v2767, 1
  %v3353 = vsel %vm2362, %v3351, %v3352
  %v3354 = vrot.slane %v3280, 1
  %v3355 = vrot.slane %v2768, 1
  %v3356 = vsel %vm2362, %v3354, %v3355
  %v3357 = vrot.slane %v3281, 1
  %v3358 = vrot.slane %v2769, 1
  %v3359 = vsel %vm2362, %v3357, %v3358
  %v3360 = vrot.slane %v3282, 1
  %v3361 = vrot.slane %v2770, 1
  %v3362 = vsel %vm2362, %v3360, %v3361
  %v3363 = vrot.slane %v3283, 1
  %v3364 = vrot.slane %v2771, 1
  %v3365 = vsel %vm2362, %v3363, %v3364
  %v3366 = vrot.slane %v3284, 1
  %v3367 = vrot.slane %v2772, 1
  %v3368 = vsel %vm2362, %v3366, %v3367
  %v3369 = vrot.slane %v3285, 1
  %v3370 = vrot.slane %v2773, 1
  %v3371 = vsel %vm2362, %v3369, %v3370
  %v3372 = vrot.slane %v3286, 1
  %v3373 = vrot.slane %v2774, 1
  %v3374 = vsel %vm2362, %v3372, %v3373
  %v3375 = vrot.slane %v3287, 1
  %v3376 = vrot.slane %v2775, 1
  %v3377 = vsel %vm2362, %v3375, %v3376
  %v3378 = vrot.slane %v3288, 1
  %v3379 = vrot.slane %v2776, 1
  %v3380 = vsel %vm2362, %v3378, %v3379
  %v3381 = vrot.slane %v3289, 1
  %v3382 = vrot.slane %v2777, 1
  %v3383 = vsel %vm2362, %v3381, %v3382
  %v3384 = vrot.slane %v3290, 1
  %v3385 = vrot.slane %v2778, 1
  %v3386 = vsel %vm2362, %v3384, %v3385
  %v3483 = vunpack.c.l.b16 %v1433
  %v3484 = vunpack.c.l.b16 %v1434
  %v3485 = vunpack.c.l.b16 %v1435
  %v3486 = vunpack.c.l.b16 %v1436
  %v3487 = vunpack.c.l.b16 %v1437
  %v3488 = vunpack.c.l.b16 %v1438
  %v3489 = vunpack.c.l.b16 %v1439
  %v3490 = vunpack.c.l.b16 %v1440
  %v3491 = vunpack.c.l.b16 %v1441
  %v3492 = vunpack.c.l.b16 %v1442
  %v3493 = vunpack.c.l.b16 %v1443
  %v3494 = vunpack.c.l.b16 %v1444
  %v3495 = vunpack.c.l.b16 %v1445
  %v3496 = vunpack.c.l.b16 %v1446
  %v3497 = vunpack.c.l.b16 %v1447
  %v3498 = vunpack.c.l.b16 %v1448
  %v3499 = vunpack.c.l.b16 %v1449
  %v3500 = vunpack.c.l.b16 %v1450
  %v3501 = vunpack.c.l.b16 %v1451
  %v3502 = vunpack.c.l.b16 %v1452
  %v3503 = vunpack.c.l.b16 %v1453
  %v3504 = vunpack.c.l.b16 %v1454
  %v3505 = vunpack.c.l.b16 %v1455
  %v3506 = vunpack.c.l.b16 %v1456
  %v3507 = vunpack.c.l.b16 %v1457
  %v3508 = vunpack.c.l.b16 %v1458
  %v3509 = vunpack.c.l.b16 %v1459
  %v3510 = vunpack.c.l.b16 %v1460
  %v3511 = vunpack.c.l.b16 %v1461
  %v3512 = vunpack.c.l.b16 %v1462
  %v3513 = vunpack.c.l.b16 %v1463
  %v3514 = vunpack.c.l.b16 %v1464
  %v3515 = vunpack.c.l.b16 %v1465
  %v3516 = vunpack.c.l.b16 %v1466
  %v3517 = vunpack.c.l.b16 %v1467
  %v3518 = vunpack.c.l.b16 %v1468
  %v3519 = vunpack.c.l.b16 %v1469
  %v3520 = vunpack.c.l.b16 %v1470
  %v3521 = vunpack.c.l.b16 %v1471
  %v3522 = vunpack.c.l.b16 %v1472
  %v3523 = vunpack.c.l.b16 %v1473
  %v3524 = vunpack.c.l.b16 %v1474
  %v3525 = vunpack.c.l.b16 %v1475
  %v3526 = vunpack.c.l.b16 %v1476
  %v3527 = vunpack.c.l.b16 %v1477
  %v3528 = vunpack.c.l.b16 %v1478
  %v3529 = vunpack.c.l.b16 %v1479
  %v3530 = vunpack.c.l.b16 %v1480
  %v3531 = vunpack.c.l.b16 %v1481
  %v3532 = vunpack.c.l.b16 %v1482
  %v3533 = vunpack.c.l.b16 %v1483
  %v3534 = vunpack.c.l.b16 %v1484
  %v3535 = vunpack.c.l.b16 %v1485
  %v3536 = vunpack.c.l.b16 %v1486
  %v3537 = vunpack.c.l.b16 %v1487
  %v3538 = vunpack.c.l.b16 %v1488
  %v3539 = vunpack.c.l.b16 %v1489
  %v3540 = vunpack.c.l.b16 %v1490
  %v3541 = vunpack.c.l.b16 %v1491
  %v3542 = vunpack.c.l.b16 %v1492
  %v3543 = vunpack.c.l.b16 %v1493
  %v3544 = vunpack.c.l.b16 %v1494
  %v3545 = vunpack.c.l.b16 %v1495
  %v3546 = vunpack.c.l.b16 %v1496
  %v3547 = vpack.c.b16 %v3484, %v3483
  %v3548 = vpack.c.b16 %v3486, %v3485
  %v3549 = vpack.c.b16 %v3488, %v3487
  %v3550 = vpack.c.b16 %v3490, %v3489
  %v3551 = vpack.c.b16 %v3492, %v3491
  %v3552 = vpack.c.b16 %v3494, %v3493
  %v3553 = vpack.c.b16 %v3496, %v3495
  %v3554 = vpack.c.b16 %v3498, %v3497
  %v3555 = vpack.c.b16 %v3500, %v3499
  %v3556 = vpack.c.b16 %v3502, %v3501
  %v3557 = vpack.c.b16 %v3504, %v3503
  %v3558 = vpack.c.b16 %v3506, %v3505
  %v3559 = vpack.c.b16 %v3508, %v3507
  %v3560 = vpack.c.b16 %v3510, %v3509
  %v3561 = vpack.c.b16 %v3512, %v3511
  %v3562 = vpack.c.b16 %v3514, %v3513
  %v3563 = vpack.c.b16 %v3516, %v3515
  %v3564 = vpack.c.b16 %v3518, %v3517
  %v3565 = vpack.c.b16 %v3520, %v3519
  %v3566 = vpack.c.b16 %v3522, %v3521
  %v3567 = vpack.c.b16 %v3524, %v3523
  %v3568 = vpack.c.b16 %v3526, %v3525
  %v3569 = vpack.c.b16 %v3528, %v3527
  %v3570 = vpack.c.b16 %v3530, %v3529
  %v3571 = vpack.c.b16 %v3532, %v3531
  %v3572 = vpack.c.b16 %v3534, %v3533
  %v3573 = vpack.c.b16 %v3536, %v3535
  %v3574 = vpack.c.b16 %v3538, %v3537
  %v3575 = vpack.c.b16 %v3540, %v3539
  %v3576 = vpack.c.b16 %v3542, %v3541
  %v3577 = vpack.c.b16 %v3544, %v3543
  %v3578 = vpack.c.b16 %v3546, %v3545
  %v3643 = vunpack.c.l.b16 %v1497
  %v3644 = vunpack.c.l.b16 %v1498
  %v3645 = vunpack.c.l.b16 %v1499
  %v3646 = vunpack.c.l.b16 %v1500
  %v3647 = vunpack.c.l.b16 %v1501
  %v3648 = vunpack.c.l.b16 %v1502
  %v3649 = vunpack.c.l.b16 %v1503
  %v3650 = vunpack.c.l.b16 %v1504
  %v3651 = vunpack.c.l.b16 %v1505
  %v3652 = vunpack.c.l.b16 %v1506
  %v3653 = vunpack.c.l.b16 %v1507
  %v3654 = vunpack.c.l.b16 %v1508
  %v3655 = vunpack.c.l.b16 %v1509
  %v3656 = vunpack.c.l.b16 %v1510
  %v3657 = vunpack.c.l.b16 %v1511
  %v3658 = vunpack.c.l.b16 %v1512
  %v3659 = vunpack.c.l.b16 %v1513
  %v3660 = vunpack.c.l.b16 %v1514
  %v3661 = vunpack.c.l.b16 %v1515
  %v3662 = vunpack.c.l.b16 %v1516
  %v3663 = vunpack.c.l.b16 %v1517
  %v3664 = vunpack.c.l.b16 %v1518
  %v3665 = vunpack.c.l.b16 %v1519
  %v3666 = vunpack.c.l.b16 %v1520
  %v3667 = vunpack.c.l.b16 %v1521
  %v3668 = vunpack.c.l.b16 %v1522
  %v3669 = vunpack.c.l.b16 %v1523
  %v3670 = vunpack.c.l.b16 %v1524
  %v3671 = vunpack.c.l.b16 %v1525
  %v3672 = vunpack.c.l.b16 %v1526
  %v3673 = vunpack.c.l.b16 %v1527
  %v3674 = vunpack.c.l.b16 %v1528
  %v3675 = vpack.c.b16 %v3643, %v3643
  %v3676 = vpack.c.b16 %v3644, %v3644
  %v3677 = vpack.c.b16 %v3645, %v3645
  %v3678 = vpack.c.b16 %v3646, %v3646
  %v3679 = vpack.c.b16 %v3647, %v3647
  %v3680 = vpack.c.b16 %v3648, %v3648
  %v3681 = vpack.c.b16 %v3649, %v3649
  %v3682 = vpack.c.b16 %v3650, %v3650
  %v3683 = vpack.c.b16 %v3651, %v3651
  %v3684 = vpack.c.b16 %v3652, %v3652
  %v3685 = vpack.c.b16 %v3653, %v3653
  %v3686 = vpack.c.b16 %v3654, %v3654
  %v3687 = vpack.c.b16 %v3655, %v3655
  %v3688 = vpack.c.b16 %v3656, %v3656
  %v3689 = vpack.c.b16 %v3657, %v3657
  %v3690 = vpack.c.b16 %v3658, %v3658
  %v3691 = vpack.c.b16 %v3659, %v3659
  %v3692 = vpack.c.b16 %v3660, %v3660
  %v3693 = vpack.c.b16 %v3661, %v3661
  %v3694 = vpack.c.b16 %v3662, %v3662
  %v3695 = vpack.c.b16 %v3663, %v3663
  %v3696 = vpack.c.b16 %v3664, %v3664
  %v3697 = vpack.c.b16 %v3665, %v3665
  %v3698 = vpack.c.b16 %v3666, %v3666
  %v3699 = vpack.c.b16 %v3667, %v3667
  %v3700 = vpack.c.b16 %v3668, %v3668
  %v3701 = vpack.c.b16 %v3669, %v3669
  %v3702 = vpack.c.b16 %v3670, %v3670
  %v3703 = vpack.c.b16 %v3671, %v3671
  %v3704 = vpack.c.b16 %v3672, %v3672
  %v3705 = vpack.c.b16 %v3673, %v3673
  %v3706 = vpack.c.b16 %v3674, %v3674
  %v3708 = vshrl.u32 %v3547, 16
  %v3710 = vshll.u32 %v3547, 16
  %v3712 = vrot.slane %v3710, 1
  %v3713 = vor.u32 %v3708, %v3712
  %v3715 = vshll.u32 %v3675, 16
  %v3717 = vrot.slane %v3715, 1
  %v3718 = vsel %vm1849, %v3713, %v3717
  %v3720 = vshrl.u32 %v3548, 16
  %v3722 = vshll.u32 %v3548, 16
  %v3724 = vrot.slane %v3722, 1
  %v3725 = vor.u32 %v3720, %v3724
  %v3727 = vshll.u32 %v3676, 16
  %v3729 = vrot.slane %v3727, 1
  %v3730 = vsel %vm1849, %v3725, %v3729
  %v3732 = vshrl.u32 %v3549, 16
  %v3734 = vshll.u32 %v3549, 16
  %v3736 = vrot.slane %v3734, 1
  %v3737 = vor.u32 %v3732, %v3736
  %v3739 = vshll.u32 %v3677, 16
  %v3741 = vrot.slane %v3739, 1
  %v3742 = vsel %vm1849, %v3737, %v3741
  %v3744 = vshrl.u32 %v3550, 16
  %v3746 = vshll.u32 %v3550, 16
  %v3748 = vrot.slane %v3746, 1
  %v3749 = vor.u32 %v3744, %v3748
  %v3751 = vshll.u32 %v3678, 16
  %v3753 = vrot.slane %v3751, 1
  %v3754 = vsel %vm1849, %v3749, %v3753
  %v3756 = vshrl.u32 %v3551, 16
  %v3758 = vshll.u32 %v3551, 16
  %v3760 = vrot.slane %v3758, 1
  %v3761 = vor.u32 %v3756, %v3760
  %v3763 = vshll.u32 %v3679, 16
  %v3765 = vrot.slane %v3763, 1
  %v3766 = vsel %vm1849, %v3761, %v3765
  %v3768 = vshrl.u32 %v3552, 16
  %v3770 = vshll.u32 %v3552, 16
  %v3772 = vrot.slane %v3770, 1
  %v3773 = vor.u32 %v3768, %v3772
  %v3775 = vshll.u32 %v3680, 16
  %v3777 = vrot.slane %v3775, 1
  %v3778 = vsel %vm1849, %v3773, %v3777
  %v3780 = vshrl.u32 %v3553, 16
  %v3782 = vshll.u32 %v3553, 16
  %v3784 = vrot.slane %v3782, 1
  %v3785 = vor.u32 %v3780, %v3784
  %v3787 = vshll.u32 %v3681, 16
  %v3789 = vrot.slane %v3787, 1
  %v3790 = vsel %vm1849, %v3785, %v3789
  %v3792 = vshrl.u32 %v3554, 16
  %v3794 = vshll.u32 %v3554, 16
  %v3796 = vrot.slane %v3794, 1
  %v3797 = vor.u32 %v3792, %v3796
  %v3799 = vshll.u32 %v3682, 16
  %v3801 = vrot.slane %v3799, 1
  %v3802 = vsel %vm1849, %v3797, %v3801
  %v3804 = vshrl.u32 %v3555, 16
  %v3806 = vshll.u32 %v3555, 16
  %v3808 = vrot.slane %v3806, 1
  %v3809 = vor.u32 %v3804, %v3808
  %v3811 = vshll.u32 %v3683, 16
  %v3813 = vrot.slane %v3811, 1
  %v3814 = vsel %vm1849, %v3809, %v3813
  %v3816 = vshrl.u32 %v3556, 16
  %v3818 = vshll.u32 %v3556, 16
  %v3820 = vrot.slane %v3818, 1
  %v3821 = vor.u32 %v3816, %v3820
  %v3823 = vshll.u32 %v3684, 16
  %v3825 = vrot.slane %v3823, 1
  %v3826 = vsel %vm1849, %v3821, %v3825
  %v3828 = vshrl.u32 %v3557, 16
  %v3830 = vshll.u32 %v3557, 16
  %v3832 = vrot.slane %v3830, 1
  %v3833 = vor.u32 %v3828, %v3832
  %v3835 = vshll.u32 %v3685, 16
  %v3837 = vrot.slane %v3835, 1
  %v3838 = vsel %vm1849, %v3833, %v3837
  %v3840 = vshrl.u32 %v3558, 16
  %v3842 = vshll.u32 %v3558, 16
  %v3844 = vrot.slane %v3842, 1
  %v3845 = vor.u32 %v3840, %v3844
  %v3847 = vshll.u32 %v3686, 16
  %v3849 = vrot.slane %v3847, 1
  %v3850 = vsel %vm1849, %v3845, %v3849
  %v3852 = vshrl.u32 %v3559, 16
  %v3854 = vshll.u32 %v3559, 16
  %v3856 = vrot.slane %v3854, 1
  %v3857 = vor.u32 %v3852, %v3856
  %v3859 = vshll.u32 %v3687, 16
  %v3861 = vrot.slane %v3859, 1
  %v3862 = vsel %vm1849, %v3857, %v3861
  %v3864 = vshrl.u32 %v3560, 16
  %v3866 = vshll.u32 %v3560, 16
  %v3868 = vrot.slane %v3866, 1
  %v3869 = vor.u32 %v3864, %v3868
  %v3871 = vshll.u32 %v3688, 16
  %v3873 = vrot.slane %v3871, 1
  %v3874 = vsel %vm1849, %v3869, %v3873
  %v3876 = vshrl.u32 %v3561, 16
  %v3878 = vshll.u32 %v3561, 16
  %v3880 = vrot.slane %v3878, 1
  %v3881 = vor.u32 %v3876, %v3880
  %v3883 = vshll.u32 %v3689, 16
  %v3885 = vrot.slane %v3883, 1
  %v3886 = vsel %vm1849, %v3881, %v3885
  %v3888 = vshrl.u32 %v3562, 16
  %v3890 = vshll.u32 %v3562, 16
  %v3892 = vrot.slane %v3890, 1
  %v3893 = vor.u32 %v3888, %v3892
  %v3895 = vshll.u32 %v3690, 16
  %v3897 = vrot.slane %v3895, 1
  %v3898 = vsel %vm1849, %v3893, %v3897
  %v3900 = vshrl.u32 %v3563, 16
  %v3902 = vshll.u32 %v3563, 16
  %v3904 = vrot.slane %v3902, 1
  %v3905 = vor.u32 %v3900, %v3904
  %v3907 = vshll.u32 %v3691, 16
  %v3909 = vrot.slane %v3907, 1
  %v3910 = vsel %vm1849, %v3905, %v3909
  %v3912 = vshrl.u32 %v3564, 16
  %v3914 = vshll.u32 %v3564, 16
  %v3916 = vrot.slane %v3914, 1
  %v3917 = vor.u32 %v3912, %v3916
  %v3919 = vshll.u32 %v3692, 16
  %v3921 = vrot.slane %v3919, 1
  %v3922 = vsel %vm1849, %v3917, %v3921
  %v3924 = vshrl.u32 %v3565, 16
  %v3926 = vshll.u32 %v3565, 16
  %v3928 = vrot.slane %v3926, 1
  %v3929 = vor.u32 %v3924, %v3928
  %v3931 = vshll.u32 %v3693, 16
  %v3933 = vrot.slane %v3931, 1
  %v3934 = vsel %vm1849, %v3929, %v3933
  %v3936 = vshrl.u32 %v3566, 16
  %v3938 = vshll.u32 %v3566, 16
  %v3940 = vrot.slane %v3938, 1
  %v3941 = vor.u32 %v3936, %v3940
  %v3943 = vshll.u32 %v3694, 16
  %v3945 = vrot.slane %v3943, 1
  %v3946 = vsel %vm1849, %v3941, %v3945
  %v3948 = vshrl.u32 %v3567, 16
  %v3950 = vshll.u32 %v3567, 16
  %v3952 = vrot.slane %v3950, 1
  %v3953 = vor.u32 %v3948, %v3952
  %v3955 = vshll.u32 %v3695, 16
  %v3957 = vrot.slane %v3955, 1
  %v3958 = vsel %vm1849, %v3953, %v3957
  %v3960 = vshrl.u32 %v3568, 16
  %v3962 = vshll.u32 %v3568, 16
  %v3964 = vrot.slane %v3962, 1
  %v3965 = vor.u32 %v3960, %v3964
  %v3967 = vshll.u32 %v3696, 16
  %v3969 = vrot.slane %v3967, 1
  %v3970 = vsel %vm1849, %v3965, %v3969
  %v3972 = vshrl.u32 %v3569, 16
  %v3974 = vshll.u32 %v3569, 16
  %v3976 = vrot.slane %v3974, 1
  %v3977 = vor.u32 %v3972, %v3976
  %v3979 = vshll.u32 %v3697, 16
  %v3981 = vrot.slane %v3979, 1
  %v3982 = vsel %vm1849, %v3977, %v3981
  %v3984 = vshrl.u32 %v3570, 16
  %v3986 = vshll.u32 %v3570, 16
  %v3988 = vrot.slane %v3986, 1
  %v3989 = vor.u32 %v3984, %v3988
  %v3991 = vshll.u32 %v3698, 16
  %v3993 = vrot.slane %v3991, 1
  %v3994 = vsel %vm1849, %v3989, %v3993
  %v3996 = vshrl.u32 %v3571, 16
  %v3998 = vshll.u32 %v3571, 16
  %v4000 = vrot.slane %v3998, 1
  %v4001 = vor.u32 %v3996, %v4000
  %v4003 = vshll.u32 %v3699, 16
  %v4005 = vrot.slane %v4003, 1
  %v4006 = vsel %vm1849, %v4001, %v4005
  %v4008 = vshrl.u32 %v3572, 16
  %v4010 = vshll.u32 %v3572, 16
  %v4012 = vrot.slane %v4010, 1
  %v4013 = vor.u32 %v4008, %v4012
  %v4015 = vshll.u32 %v3700, 16
  %v4017 = vrot.slane %v4015, 1
  %v4018 = vsel %vm1849, %v4013, %v4017
  %v4020 = vshrl.u32 %v3573, 16
  %v4022 = vshll.u32 %v3573, 16
  %v4024 = vrot.slane %v4022, 1
  %v4025 = vor.u32 %v4020, %v4024
  %v4027 = vshll.u32 %v3701, 16
  %v4029 = vrot.slane %v4027, 1
  %v4030 = vsel %vm1849, %v4025, %v4029
  %v4032 = vshrl.u32 %v3574, 16
  %v4034 = vshll.u32 %v3574, 16
  %v4036 = vrot.slane %v4034, 1
  %v4037 = vor.u32 %v4032, %v4036
  %v4039 = vshll.u32 %v3702, 16
  %v4041 = vrot.slane %v4039, 1
  %v4042 = vsel %vm1849, %v4037, %v4041
  %v4044 = vshrl.u32 %v3575, 16
  %v4046 = vshll.u32 %v3575, 16
  %v4048 = vrot.slane %v4046, 1
  %v4049 = vor.u32 %v4044, %v4048
  %v4051 = vshll.u32 %v3703, 16
  %v4053 = vrot.slane %v4051, 1
  %v4054 = vsel %vm1849, %v4049, %v4053
  %v4056 = vshrl.u32 %v3576, 16
  %v4058 = vshll.u32 %v3576, 16
  %v4060 = vrot.slane %v4058, 1
  %v4061 = vor.u32 %v4056, %v4060
  %v4063 = vshll.u32 %v3704, 16
  %v4065 = vrot.slane %v4063, 1
  %v4066 = vsel %vm1849, %v4061, %v4065
  %v4068 = vshrl.u32 %v3577, 16
  %v4070 = vshll.u32 %v3577, 16
  %v4072 = vrot.slane %v4070, 1
  %v4073 = vor.u32 %v4068, %v4072
  %v4075 = vshll.u32 %v3705, 16
  %v4077 = vrot.slane %v4075, 1
  %v4078 = vsel %vm1849, %v4073, %v4077
  %v4080 = vshrl.u32 %v3578, 16
  %v4082 = vshll.u32 %v3578, 16
  %v4084 = vrot.slane %v4082, 1
  %v4085 = vor.u32 %v4080, %v4084
  %v4087 = vshll.u32 %v3706, 16
  %v4089 = vrot.slane %v4087, 1
  %v4090 = vsel %vm1849, %v4085, %v4089
  %v4155 = vunpack.c.l.b16 %v1529
  %v4156 = vunpack.c.l.b16 %v1530
  %v4157 = vunpack.c.l.b16 %v1531
  %v4158 = vunpack.c.l.b16 %v1532
  %v4159 = vunpack.c.l.b16 %v1533
  %v4160 = vunpack.c.l.b16 %v1534
  %v4161 = vunpack.c.l.b16 %v1535
  %v4162 = vunpack.c.l.b16 %v1536
  %v4163 = vunpack.c.l.b16 %v1537
  %v4164 = vunpack.c.l.b16 %v1538
  %v4165 = vunpack.c.l.b16 %v1539
  %v4166 = vunpack.c.l.b16 %v1540
  %v4167 = vunpack.c.l.b16 %v1541
  %v4168 = vunpack.c.l.b16 %v1542
  %v4169 = vunpack.c.l.b16 %v1543
  %v4170 = vunpack.c.l.b16 %v1544
  %v4171 = vunpack.c.l.b16 %v1545
  %v4172 = vunpack.c.l.b16 %v1546
  %v4173 = vunpack.c.l.b16 %v1547
  %v4174 = vunpack.c.l.b16 %v1548
  %v4175 = vunpack.c.l.b16 %v1549
  %v4176 = vunpack.c.l.b16 %v1550
  %v4177 = vunpack.c.l.b16 %v1551
  %v4178 = vunpack.c.l.b16 %v1552
  %v4179 = vunpack.c.l.b16 %v1553
  %v4180 = vunpack.c.l.b16 %v1554
  %v4181 = vunpack.c.l.b16 %v1555
  %v4182 = vunpack.c.l.b16 %v1556
  %v4183 = vunpack.c.l.b16 %v1557
  %v4184 = vunpack.c.l.b16 %v1558
  %v4185 = vunpack.c.l.b16 %v1559
  %v4186 = vunpack.c.l.b16 %v1560
  %v4187 = vpack.c.b16 %v3484, %v4155
  %v4188 = vpack.c.b16 %v3486, %v4156
  %v4189 = vpack.c.b16 %v3488, %v4157
  %v4190 = vpack.c.b16 %v3490, %v4158
  %v4191 = vpack.c.b16 %v3492, %v4159
  %v4192 = vpack.c.b16 %v3494, %v4160
  %v4193 = vpack.c.b16 %v3496, %v4161
  %v4194 = vpack.c.b16 %v3498, %v4162
  %v4195 = vpack.c.b16 %v3500, %v4163
  %v4196 = vpack.c.b16 %v3502, %v4164
  %v4197 = vpack.c.b16 %v3504, %v4165
  %v4198 = vpack.c.b16 %v3506, %v4166
  %v4199 = vpack.c.b16 %v3508, %v4167
  %v4200 = vpack.c.b16 %v3510, %v4168
  %v4201 = vpack.c.b16 %v3512, %v4169
  %v4202 = vpack.c.b16 %v3514, %v4170
  %v4203 = vpack.c.b16 %v3516, %v4171
  %v4204 = vpack.c.b16 %v3518, %v4172
  %v4205 = vpack.c.b16 %v3520, %v4173
  %v4206 = vpack.c.b16 %v3522, %v4174
  %v4207 = vpack.c.b16 %v3524, %v4175
  %v4208 = vpack.c.b16 %v3526, %v4176
  %v4209 = vpack.c.b16 %v3528, %v4177
  %v4210 = vpack.c.b16 %v3530, %v4178
  %v4211 = vpack.c.b16 %v3532, %v4179
  %v4212 = vpack.c.b16 %v3534, %v4180
  %v4213 = vpack.c.b16 %v3536, %v4181
  %v4214 = vpack.c.b16 %v3538, %v4182
  %v4215 = vpack.c.b16 %v3540, %v4183
  %v4216 = vpack.c.b16 %v3542, %v4184
  %v4217 = vpack.c.b16 %v3544, %v4185
  %v4218 = vpack.c.b16 %v3546, %v4186
  %v4219 = vrot.slane %v4187, 1
  %v4220 = vrot.slane %v3675, 1
  %v4221 = vsel %vm2362, %v4219, %v4220
  %v4222 = vrot.slane %v4188, 1
  %v4223 = vrot.slane %v3676, 1
  %v4224 = vsel %vm2362, %v4222, %v4223
  %v4225 = vrot.slane %v4189, 1
  %v4226 = vrot.slane %v3677, 1
  %v4227 = vsel %vm2362, %v4225, %v4226
  %v4228 = vrot.slane %v4190, 1
  %v4229 = vrot.slane %v3678, 1
  %v4230 = vsel %vm2362, %v4228, %v4229
  %v4231 = vrot.slane %v4191, 1
  %v4232 = vrot.slane %v3679, 1
  %v4233 = vsel %vm2362, %v4231, %v4232
  %v4234 = vrot.slane %v4192, 1
  %v4235 = vrot.slane %v3680, 1
  %v4236 = vsel %vm2362, %v4234, %v4235
  %v4237 = vrot.slane %v4193, 1
  %v4238 = vrot.slane %v3681, 1
  %v4239 = vsel %vm2362, %v4237, %v4238
  %v4240 = vrot.slane %v4194, 1
  %v4241 = vrot.slane %v3682, 1
  %v4242 = vsel %vm2362, %v4240, %v4241
  %v4243 = vrot.slane %v4195, 1
  %v4244 = vrot.slane %v3683, 1
  %v4245 = vsel %vm2362, %v4243, %v4244
  %v4246 = vrot.slane %v4196, 1
  %v4247 = vrot.slane %v3684, 1
  %v4248 = vsel %vm2362, %v4246, %v4247
  %v4249 = vrot.slane %v4197, 1
  %v4250 = vrot.slane %v3685, 1
  %v4251 = vsel %vm2362, %v4249, %v4250
  %v4252 = vrot.slane %v4198, 1
  %v4253 = vrot.slane %v3686, 1
  %v4254 = vsel %vm2362, %v4252, %v4253
  %v4255 = vrot.slane %v4199, 1
  %v4256 = vrot.slane %v3687, 1
  %v4257 = vsel %vm2362, %v4255, %v4256
  %v4258 = vrot.slane %v4200, 1
  %v4259 = vrot.slane %v3688, 1
  %v4260 = vsel %vm2362, %v4258, %v4259
  %v4261 = vrot.slane %v4201, 1
  %v4262 = vrot.slane %v3689, 1
  %v4263 = vsel %vm2362, %v4261, %v4262
  %v4264 = vrot.slane %v4202, 1
  %v4265 = vrot.slane %v3690, 1
  %v4266 = vsel %vm2362, %v4264, %v4265
  %v4267 = vrot.slane %v4203, 1
  %v4268 = vrot.slane %v3691, 1
  %v4269 = vsel %vm2362, %v4267, %v4268
  %v4270 = vrot.slane %v4204, 1
  %v4271 = vrot.slane %v3692, 1
  %v4272 = vsel %vm2362, %v4270, %v4271
  %v4273 = vrot.slane %v4205, 1
  %v4274 = vrot.slane %v3693, 1
  %v4275 = vsel %vm2362, %v4273, %v4274
  %v4276 = vrot.slane %v4206, 1
  %v4277 = vrot.slane %v3694, 1
  %v4278 = vsel %vm2362, %v4276, %v4277
  %v4279 = vrot.slane %v4207, 1
  %v4280 = vrot.slane %v3695, 1
  %v4281 = vsel %vm2362, %v4279, %v4280
  %v4282 = vrot.slane %v4208, 1
  %v4283 = vrot.slane %v3696, 1
  %v4284 = vsel %vm2362, %v4282, %v4283
  %v4285 = vrot.slane %v4209, 1
  %v4286 = vrot.slane %v3697, 1
  %v4287 = vsel %vm2362, %v4285, %v4286
  %v4288 = vrot.slane %v4210, 1
  %v4289 = vrot.slane %v3698, 1
  %v4290 = vsel %vm2362, %v4288, %v4289
  %v4291 = vrot.slane %v4211, 1
  %v4292 = vrot.slane %v3699, 1
  %v4293 = vsel %vm2362, %v4291, %v4292
  %v4294 = vrot.slane %v4212, 1
  %v4295 = vrot.slane %v3700, 1
  %v4296 = vsel %vm2362, %v4294, %v4295
  %v4297 = vrot.slane %v4213, 1
  %v4298 = vrot.slane %v3701, 1
  %v4299 = vsel %vm2362, %v4297, %v4298
  %v4300 = vrot.slane %v4214, 1
  %v4301 = vrot.slane %v3702, 1
  %v4302 = vsel %vm2362, %v4300, %v4301
  %v4303 = vrot.slane %v4215, 1
  %v4304 = vrot.slane %v3703, 1
  %v4305 = vsel %vm2362, %v4303, %v4304
  %v4306 = vrot.slane %v4216, 1
  %v4307 = vrot.slane %v3704, 1
  %v4308 = vsel %vm2362, %v4306, %v4307
  %v4309 = vrot.slane %v4217, 1
  %v4310 = vrot.slane %v3705, 1
  %v4311 = vsel %vm2362, %v4309, %v4310
  %v4312 = vrot.slane %v4218, 1
  %v4313 = vrot.slane %v3706, 1
  %v4314 = vsel %vm2362, %v4312, %v4313
  %v4347 = vld [vmem:[%s1] sm:$0xf]
  %v4348 = vld [vmem:[%s1 + $0x4] sm:$0xf]
  %v4349 = vld [vmem:[%s1 + $0x8] sm:$0xf]
  %v4350 = vld [vmem:[%s1 + $0xc] sm:$0xf]
  %v4351 = vld [vmem:[%s1 + $0x10] sm:$0xf]
  %v4352 = vld [vmem:[%s1 + $0x14] sm:$0xf]
  %v4353 = vld [vmem:[%s1 + $0x18] sm:$0xf]
  %v4354 = vld [vmem:[%s1 + $0x1c] sm:$0xf]
  %v4355 = vld [vmem:[%s1 + $0x20] sm:$0xf]
  %v4356 = vld [vmem:[%s1 + $0x24] sm:$0xf]
  %v4357 = vld [vmem:[%s1 + $0x28] sm:$0xf]
  %v4358 = vld [vmem:[%s1 + $0x2c] sm:$0xf]
  %v4359 = vld [vmem:[%s1 + $0x30] sm:$0xf]
  %v4360 = vld [vmem:[%s1 + $0x34] sm:$0xf]
  %v4361 = vld [vmem:[%s1 + $0x38] sm:$0xf]
  %v4362 = vld [vmem:[%s1 + $0x3c] sm:$0xf]
  %v4363 = vld [vmem:[%s1 + $0x40] sm:$0xf]
  %v4364 = vld [vmem:[%s1 + $0x44] sm:$0xf]
  %v4365 = vld [vmem:[%s1 + $0x48] sm:$0xf]
  %v4366 = vld [vmem:[%s1 + $0x4c] sm:$0xf]
  %v4367 = vld [vmem:[%s1 + $0x50] sm:$0xf]
  %v4368 = vld [vmem:[%s1 + $0x54] sm:$0xf]
  %v4369 = vld [vmem:[%s1 + $0x58] sm:$0xf]
  %v4370 = vld [vmem:[%s1 + $0x5c] sm:$0xf]
  %v4371 = vld [vmem:[%s1 + $0x60] sm:$0xf]
  %v4372 = vld [vmem:[%s1 + $0x64] sm:$0xf]
  %v4373 = vld [vmem:[%s1 + $0x68] sm:$0xf]
  %v4374 = vld [vmem:[%s1 + $0x6c] sm:$0xf]
  %v4375 = vld [vmem:[%s1 + $0x70] sm:$0xf]
  %v4376 = vld [vmem:[%s1 + $0x74] sm:$0xf]
  %v4377 = vld [vmem:[%s1 + $0x78] sm:$0xf]
  %v4378 = vld [vmem:[%s1 + $0x7c] sm:$0xf]
  %v4379 = vld [vmem:[%s1 + $0x80] sm:$0xf]
  %v4380 = vld [vmem:[%s1 + $0x84] sm:$0xf]
  %v4381 = vld [vmem:[%s1 + $0x88] sm:$0xf]
  %v4382 = vld [vmem:[%s1 + $0x8c] sm:$0xf]
  %v4383 = vld [vmem:[%s1 + $0x90] sm:$0xf]
  %v4384 = vld [vmem:[%s1 + $0x94] sm:$0xf]
  %v4385 = vld [vmem:[%s1 + $0x98] sm:$0xf]
  %v4386 = vld [vmem:[%s1 + $0x9c] sm:$0xf]
  %v4387 = vld [vmem:[%s1 + $0xa0] sm:$0xf]
  %v4388 = vld [vmem:[%s1 + $0xa4] sm:$0xf]
  %v4389 = vld [vmem:[%s1 + $0xa8] sm:$0xf]
  %v4390 = vld [vmem:[%s1 + $0xac] sm:$0xf]
  %v4391 = vld [vmem:[%s1 + $0xb0] sm:$0xf]
  %v4392 = vld [vmem:[%s1 + $0xb4] sm:$0xf]
  %v4393 = vld [vmem:[%s1 + $0xb8] sm:$0xf]
  %v4394 = vld [vmem:[%s1 + $0xbc] sm:$0xf]
  %v4395 = vld [vmem:[%s1 + $0xc0] sm:$0xf]
  %v4396 = vld [vmem:[%s1 + $0xc4] sm:$0xf]
  %v4397 = vld [vmem:[%s1 + $0xc8] sm:$0xf]
  %v4398 = vld [vmem:[%s1 + $0xcc] sm:$0xf]
  %v4399 = vld [vmem:[%s1 + $0xd0] sm:$0xf]
  %v4400 = vld [vmem:[%s1 + $0xd4] sm:$0xf]
  %v4401 = vld [vmem:[%s1 + $0xd8] sm:$0xf]
  %v4402 = vld [vmem:[%s1 + $0xdc] sm:$0xf]
  %v4403 = vld [vmem:[%s1 + $0xe0] sm:$0xf]
  %v4404 = vld [vmem:[%s1 + $0xe4] sm:$0xf]
  %v4405 = vld [vmem:[%s1 + $0xe8] sm:$0xf]
  %v4406 = vld [vmem:[%s1 + $0xec] sm:$0xf]
  %v4407 = vld [vmem:[%s1 + $0xf0] sm:$0xf]
  %v4408 = vld [vmem:[%s1 + $0xf4] sm:$0xf]
  %v4409 = vld [vmem:[%s1 + $0xf8] sm:$0xf]
  %v4410 = vld [vmem:[%s1 + $0xfc] sm:$0xf]
  %v4411 = vld [vmem:[%s1 + $0x100] sm:$0xf]
  %v4412 = vld [vmem:[%s1 + $0x104] sm:$0xf]
  %v4413 = vld [vmem:[%s1 + $0x108] sm:$0xf]
  %v4414 = vld [vmem:[%s1 + $0x10c] sm:$0xf]
  %v4415 = vld [vmem:[%s1 + $0x110] sm:$0xf]
  %v4416 = vld [vmem:[%s1 + $0x114] sm:$0xf]
  %v4417 = vld [vmem:[%s1 + $0x118] sm:$0xf]
  %v4418 = vld [vmem:[%s1 + $0x11c] sm:$0xf]
  %v4419 = vld [vmem:[%s1 + $0x120] sm:$0xf]
  %v4420 = vld [vmem:[%s1 + $0x124] sm:$0xf]
  %v4421 = vld [vmem:[%s1 + $0x128] sm:$0xf]
  %v4422 = vld [vmem:[%s1 + $0x12c] sm:$0xf]
  %v4423 = vld [vmem:[%s1 + $0x130] sm:$0xf]
  %v4424 = vld [vmem:[%s1 + $0x134] sm:$0xf]
  %v4425 = vld [vmem:[%s1 + $0x138] sm:$0xf]
  %v4426 = vld [vmem:[%s1 + $0x13c] sm:$0xf]
  %v4427 = vld [vmem:[%s1 + $0x140] sm:$0xf]
  %v4428 = vld [vmem:[%s1 + $0x144] sm:$0xf]
  %v4429 = vld [vmem:[%s1 + $0x148] sm:$0xf]
  %v4430 = vld [vmem:[%s1 + $0x14c] sm:$0xf]
  %v4431 = vld [vmem:[%s1 + $0x150] sm:$0xf]
  %v4432 = vld [vmem:[%s1 + $0x154] sm:$0xf]
  %v4433 = vld [vmem:[%s1 + $0x158] sm:$0xf]
  %v4434 = vld [vmem:[%s1 + $0x15c] sm:$0xf]
  %v4435 = vld [vmem:[%s1 + $0x160] sm:$0xf]
  %v4436 = vld [vmem:[%s1 + $0x164] sm:$0xf]
  %v4437 = vld [vmem:[%s1 + $0x168] sm:$0xf]
  %v4438 = vld [vmem:[%s1 + $0x16c] sm:$0xf]
  %v4439 = vld [vmem:[%s1 + $0x170] sm:$0xf]
  %v4440 = vld [vmem:[%s1 + $0x174] sm:$0xf]
  %v4441 = vld [vmem:[%s1 + $0x178] sm:$0xf]
  %v4442 = vld [vmem:[%s1 + $0x17c] sm:$0xf]
  %v4443 = vld [vmem:[%s1 + $0x180] sm:$0xf]
  %v4444 = vld [vmem:[%s1 + $0x184] sm:$0xf]
  %v4445 = vld [vmem:[%s1 + $0x188] sm:$0xf]
  %v4446 = vld [vmem:[%s1 + $0x18c] sm:$0xf]
  %v4447 = vld [vmem:[%s1 + $0x190] sm:$0xf]
  %v4448 = vld [vmem:[%s1 + $0x194] sm:$0xf]
  %v4449 = vld [vmem:[%s1 + $0x198] sm:$0xf]
  %v4450 = vld [vmem:[%s1 + $0x19c] sm:$0xf]
  %v4451 = vld [vmem:[%s1 + $0x1a0] sm:$0xf]
  %v4452 = vld [vmem:[%s1 + $0x1a4] sm:$0xf]
  %v4453 = vld [vmem:[%s1 + $0x1a8] sm:$0xf]
  %v4454 = vld [vmem:[%s1 + $0x1ac] sm:$0xf]
  %v4455 = vld [vmem:[%s1 + $0x1b0] sm:$0xf]
  %v4456 = vld [vmem:[%s1 + $0x1b4] sm:$0xf]
  %v4457 = vld [vmem:[%s1 + $0x1b8] sm:$0xf]
  %v4458 = vld [vmem:[%s1 + $0x1bc] sm:$0xf]
  %v4459 = vld [vmem:[%s1 + $0x1c0] sm:$0xf]
  %v4460 = vld [vmem:[%s1 + $0x1c4] sm:$0xf]
  %v4461 = vld [vmem:[%s1 + $0x1c8] sm:$0xf]
  %v4462 = vld [vmem:[%s1 + $0x1cc] sm:$0xf]
  %v4463 = vld [vmem:[%s1 + $0x1d0] sm:$0xf]
  %v4464 = vld [vmem:[%s1 + $0x1d4] sm:$0xf]
  %v4465 = vld [vmem:[%s1 + $0x1d8] sm:$0xf]
  %v4466 = vld [vmem:[%s1 + $0x1dc] sm:$0xf]
  %v4467 = vld [vmem:[%s1 + $0x1e0] sm:$0xf]
  %v4468 = vld [vmem:[%s1 + $0x1e4] sm:$0xf]
  %v4469 = vld [vmem:[%s1 + $0x1e8] sm:$0xf]
  %v4470 = vld [vmem:[%s1 + $0x1ec] sm:$0xf]
  %v4471 = vld [vmem:[%s1 + $0x1f0] sm:$0xf]
  %v4472 = vld [vmem:[%s1 + $0x1f4] sm:$0xf]
  %v4473 = vld [vmem:[%s1 + $0x1f8] sm:$0xf]
  %v4474 = vld [vmem:[%s1 + $0x1fc] sm:$0xf]
  %v4475 = vld [vmem:[%s1 + $0x200] sm:$0xf]
  %v4476 = vld [vmem:[%s1 + $0x204] sm:$0xf]
  %v4477 = vld [vmem:[%s1 + $0x208] sm:$0xf]
  %v4478 = vld [vmem:[%s1 + $0x20c] sm:$0xf]
  %v4479 = vld [vmem:[%s1 + $0x210] sm:$0xf]
  %v4480 = vld [vmem:[%s1 + $0x214] sm:$0xf]
  %v4481 = vld [vmem:[%s1 + $0x218] sm:$0xf]
  %v4482 = vld [vmem:[%s1 + $0x21c] sm:$0xf]
  %v4483 = vld [vmem:[%s1 + $0x220] sm:$0xf]
  %v4484 = vld [vmem:[%s1 + $0x224] sm:$0xf]
  %v4485 = vld [vmem:[%s1 + $0x228] sm:$0xf]
  %v4486 = vld [vmem:[%s1 + $0x22c] sm:$0xf]
  %v4487 = vld [vmem:[%s1 + $0x230] sm:$0xf]
  %v4488 = vld [vmem:[%s1 + $0x234] sm:$0xf]
  %v4489 = vld [vmem:[%s1 + $0x238] sm:$0xf]
  %v4490 = vld [vmem:[%s1 + $0x23c] sm:$0xf]
  %v4635 = vunpack.c.l.b16 %v4347
  %v4636 = vunpack.c.l.b16 %v4348
  %v4637 = vunpack.c.l.b16 %v4349
  %v4638 = vunpack.c.l.b16 %v4350
  %v4639 = vunpack.c.l.b16 %v4351
  %v4640 = vunpack.c.l.b16 %v4352
  %v4641 = vunpack.c.l.b16 %v4353
  %v4642 = vunpack.c.l.b16 %v4354
  %v4643 = vunpack.c.l.b16 %v4355
  %v4644 = vunpack.c.l.b16 %v4356
  %v4645 = vunpack.c.l.b16 %v4357
  %v4646 = vunpack.c.l.b16 %v4358
  %v4647 = vunpack.c.l.b16 %v4359
  %v4648 = vunpack.c.l.b16 %v4360
  %v4649 = vunpack.c.l.b16 %v4361
  %v4650 = vunpack.c.l.b16 %v4362
  %v4651 = vunpack.c.l.b16 %v4363
  %v4652 = vunpack.c.l.b16 %v4364
  %v4653 = vunpack.c.l.b16 %v4365
  %v4654 = vunpack.c.l.b16 %v4366
  %v4655 = vunpack.c.l.b16 %v4367
  %v4656 = vunpack.c.l.b16 %v4368
  %v4657 = vunpack.c.l.b16 %v4369
  %v4658 = vunpack.c.l.b16 %v4370
  %v4659 = vunpack.c.l.b16 %v4371
  %v4660 = vunpack.c.l.b16 %v4372
  %v4661 = vunpack.c.l.b16 %v4373
  %v4662 = vunpack.c.l.b16 %v4374
  %v4663 = vunpack.c.l.b16 %v4375
  %v4664 = vunpack.c.l.b16 %v4376
  %v4665 = vunpack.c.l.b16 %v4377
  %v4666 = vunpack.c.l.b16 %v4378
  %v4667 = vunpack.c.l.b16 %v4379
  %v4668 = vunpack.c.l.b16 %v4380
  %v4669 = vunpack.c.l.b16 %v4381
  %v4670 = vunpack.c.l.b16 %v4382
  %v4671 = vunpack.c.l.b16 %v4383
  %v4672 = vunpack.c.l.b16 %v4384
  %v4673 = vunpack.c.l.b16 %v4385
  %v4674 = vunpack.c.l.b16 %v4386
  %v4675 = vunpack.c.l.b16 %v4387
  %v4676 = vunpack.c.l.b16 %v4388
  %v4677 = vunpack.c.l.b16 %v4389
  %v4678 = vunpack.c.l.b16 %v4390
  %v4679 = vunpack.c.l.b16 %v4391
  %v4680 = vunpack.c.l.b16 %v4392
  %v4681 = vunpack.c.l.b16 %v4393
  %v4682 = vunpack.c.l.b16 %v4394
  %v4683 = vunpack.c.l.b16 %v4395
  %v4684 = vunpack.c.l.b16 %v4396
  %v4685 = vunpack.c.l.b16 %v4397
  %v4686 = vunpack.c.l.b16 %v4398
  %v4687 = vunpack.c.l.b16 %v4399
  %v4688 = vunpack.c.l.b16 %v4400
  %v4689 = vunpack.c.l.b16 %v4401
  %v4690 = vunpack.c.l.b16 %v4402
  %v4691 = vunpack.c.l.b16 %v4403
  %v4692 = vunpack.c.l.b16 %v4404
  %v4693 = vunpack.c.l.b16 %v4405
  %v4694 = vunpack.c.l.b16 %v4406
  %v4695 = vunpack.c.l.b16 %v4407
  %v4696 = vunpack.c.l.b16 %v4408
  %v4697 = vunpack.c.l.b16 %v4409
  %v4698 = vunpack.c.l.b16 %v4410
  %v4699 = vunpack.c.l.b16 %v4411
  %v4700 = vunpack.c.l.b16 %v4412
  %v4701 = vunpack.c.l.b16 %v4413
  %v4702 = vunpack.c.l.b16 %v4414
  %v4703 = vunpack.c.l.b16 %v4415
  %v4704 = vunpack.c.l.b16 %v4416
  %v4705 = vunpack.c.l.b16 %v4417
  %v4706 = vunpack.c.l.b16 %v4418
  %v4707 = vunpack.c.l.b16 %v4419
  %v4708 = vunpack.c.l.b16 %v4420
  %v4709 = vunpack.c.l.b16 %v4421
  %v4710 = vunpack.c.l.b16 %v4422
  %v4711 = vunpack.c.l.b16 %v4423
  %v4712 = vunpack.c.l.b16 %v4424
  %v4713 = vunpack.c.l.b16 %v4425
  %v4714 = vunpack.c.l.b16 %v4426
  %v4715 = vunpack.c.l.b16 %v4427
  %v4716 = vunpack.c.l.b16 %v4428
  %v4717 = vunpack.c.l.b16 %v4429
  %v4718 = vunpack.c.l.b16 %v4430
  %v4719 = vunpack.c.l.b16 %v4431
  %v4720 = vunpack.c.l.b16 %v4432
  %v4721 = vunpack.c.l.b16 %v4433
  %v4722 = vunpack.c.l.b16 %v4434
  %v4723 = vunpack.c.l.b16 %v4435
  %v4724 = vunpack.c.l.b16 %v4436
  %v4725 = vunpack.c.l.b16 %v4437
  %v4726 = vunpack.c.l.b16 %v4438
  %v4727 = vunpack.c.l.b16 %v4439
  %v4728 = vunpack.c.l.b16 %v4440
  %v4729 = vunpack.c.l.b16 %v4441
  %v4730 = vunpack.c.l.b16 %v4442
  %v4731 = vunpack.c.l.b16 %v4443
  %v4732 = vunpack.c.l.b16 %v4444
  %v4733 = vunpack.c.l.b16 %v4445
  %v4734 = vunpack.c.l.b16 %v4446
  %v4735 = vunpack.c.l.b16 %v4447
  %v4736 = vunpack.c.l.b16 %v4448
  %v4737 = vunpack.c.l.b16 %v4449
  %v4738 = vunpack.c.l.b16 %v4450
  %v4739 = vunpack.c.l.b16 %v4451
  %v4740 = vunpack.c.l.b16 %v4452
  %v4741 = vunpack.c.l.b16 %v4453
  %v4742 = vunpack.c.l.b16 %v4454
  %v4743 = vunpack.c.l.b16 %v4455
  %v4744 = vunpack.c.l.b16 %v4456
  %v4745 = vunpack.c.l.b16 %v4457
  %v4746 = vunpack.c.l.b16 %v4458
  %v4747 = vunpack.c.l.b16 %v4459
  %v4748 = vunpack.c.l.b16 %v4460
  %v4749 = vunpack.c.l.b16 %v4461
  %v4750 = vunpack.c.l.b16 %v4462
  %v4751 = vunpack.c.l.b16 %v4463
  %v4752 = vunpack.c.l.b16 %v4464
  %v4753 = vunpack.c.l.b16 %v4465
  %v4754 = vunpack.c.l.b16 %v4466
  %v4755 = vunpack.c.l.b16 %v4467
  %v4756 = vunpack.c.l.b16 %v4468
  %v4757 = vunpack.c.l.b16 %v4469
  %v4758 = vunpack.c.l.b16 %v4470
  %v4759 = vunpack.c.l.b16 %v4471
  %v4760 = vunpack.c.l.b16 %v4472
  %v4761 = vunpack.c.l.b16 %v4473
  %v4762 = vunpack.c.l.b16 %v4474
  %v4763 = vunpack.c.l.b16 %v4475
  %v4764 = vunpack.c.l.b16 %v4476
  %v4765 = vunpack.c.l.b16 %v4477
  %v4766 = vunpack.c.l.b16 %v4478
  %v4767 = vunpack.c.l.b16 %v4479
  %v4768 = vunpack.c.l.b16 %v4480
  %v4769 = vunpack.c.l.b16 %v4481
  %v4770 = vunpack.c.l.b16 %v4482
  %v4771 = vunpack.c.l.b16 %v4483
  %v4772 = vunpack.c.l.b16 %v4484
  %v4773 = vunpack.c.l.b16 %v4485
  %v4774 = vunpack.c.l.b16 %v4486
  %v4775 = vunpack.c.l.b16 %v4487
  %v4776 = vunpack.c.l.b16 %v4488
  %v4777 = vunpack.c.l.b16 %v4489
  %v4778 = vunpack.c.l.b16 %v4490
  %v4779 = vpack.c.b16 %v4636, %v4635
  %v4780 = vpack.c.b16 %v4638, %v4637
  %v4781 = vpack.c.b16 %v4640, %v4639
  %v4782 = vpack.c.b16 %v4642, %v4641
  %v4783 = vpack.c.b16 %v4644, %v4643
  %v4784 = vpack.c.b16 %v4646, %v4645
  %v4785 = vpack.c.b16 %v4648, %v4647
  %v4786 = vpack.c.b16 %v4650, %v4649
  %v4787 = vpack.c.b16 %v4652, %v4651
  %v4788 = vpack.c.b16 %v4654, %v4653
  %v4789 = vpack.c.b16 %v4656, %v4655
  %v4790 = vpack.c.b16 %v4658, %v4657
  %v4791 = vpack.c.b16 %v4660, %v4659
  %v4792 = vpack.c.b16 %v4662, %v4661
  %v4793 = vpack.c.b16 %v4664, %v4663
  %v4794 = vpack.c.b16 %v4666, %v4665
  %v4795 = vpack.c.b16 %v4668, %v4667
  %v4796 = vpack.c.b16 %v4670, %v4669
  %v4797 = vpack.c.b16 %v4672, %v4671
  %v4798 = vpack.c.b16 %v4674, %v4673
  %v4799 = vpack.c.b16 %v4676, %v4675
  %v4800 = vpack.c.b16 %v4678, %v4677
  %v4801 = vpack.c.b16 %v4680, %v4679
  %v4802 = vpack.c.b16 %v4682, %v4681
  %v4803 = vpack.c.b16 %v4684, %v4683
  %v4804 = vpack.c.b16 %v4686, %v4685
  %v4805 = vpack.c.b16 %v4688, %v4687
  %v4806 = vpack.c.b16 %v4690, %v4689
  %v4807 = vpack.c.b16 %v4692, %v4691
  %v4808 = vpack.c.b16 %v4694, %v4693
  %v4809 = vpack.c.b16 %v4696, %v4695
  %v4810 = vpack.c.b16 %v4698, %v4697
  %v4811 = vpack.c.b16 %v4700, %v4699
  %v4812 = vpack.c.b16 %v4702, %v4701
  %v4813 = vpack.c.b16 %v4704, %v4703
  %v4814 = vpack.c.b16 %v4706, %v4705
  %v4815 = vpack.c.b16 %v4708, %v4707
  %v4816 = vpack.c.b16 %v4710, %v4709
  %v4817 = vpack.c.b16 %v4712, %v4711
  %v4818 = vpack.c.b16 %v4714, %v4713
  %v4819 = vpack.c.b16 %v4716, %v4715
  %v4820 = vpack.c.b16 %v4718, %v4717
  %v4821 = vpack.c.b16 %v4720, %v4719
  %v4822 = vpack.c.b16 %v4722, %v4721
  %v4823 = vpack.c.b16 %v4724, %v4723
  %v4824 = vpack.c.b16 %v4726, %v4725
  %v4825 = vpack.c.b16 %v4728, %v4727
  %v4826 = vpack.c.b16 %v4730, %v4729
  %v4827 = vpack.c.b16 %v4732, %v4731
  %v4828 = vpack.c.b16 %v4734, %v4733
  %v4829 = vpack.c.b16 %v4736, %v4735
  %v4830 = vpack.c.b16 %v4738, %v4737
  %v4831 = vpack.c.b16 %v4740, %v4739
  %v4832 = vpack.c.b16 %v4742, %v4741
  %v4833 = vpack.c.b16 %v4744, %v4743
  %v4834 = vpack.c.b16 %v4746, %v4745
  %v4835 = vpack.c.b16 %v4748, %v4747
  %v4836 = vpack.c.b16 %v4750, %v4749
  %v4837 = vpack.c.b16 %v4752, %v4751
  %v4838 = vpack.c.b16 %v4754, %v4753
  %v4839 = vpack.c.b16 %v4756, %v4755
  %v4840 = vpack.c.b16 %v4758, %v4757
  %v4841 = vpack.c.b16 %v4760, %v4759
  %v4842 = vpack.c.b16 %v4762, %v4761
  %v4843 = vpack.c.b16 %v4764, %v4763
  %v4844 = vpack.c.b16 %v4766, %v4765
  %v4845 = vpack.c.b16 %v4768, %v4767
  %v4846 = vpack.c.b16 %v4770, %v4769
  %v4847 = vpack.c.b16 %v4772, %v4771
  %v4848 = vpack.c.b16 %v4774, %v4773
  %v4849 = vpack.c.b16 %v4776, %v4775
  %v4850 = vpack.c.b16 %v4778, %v4777
  %4923 = vmatpush.bf16.msra.mxu0 %v4786
  %4924 = vmatpush.bf16.msra.mxu0 %v4785
  %4925 = vmatpush.bf16.msra.mxu0 %v4784
  %4926 = vmatpush.bf16.msra.mxu0 %v4783
  %4927 = vmatpush.bf16.msra.mxu0 %v4782
  %4928 = vmatpush.bf16.msra.mxu0 %v4781
  %4929 = vmatpush.bf16.msra.mxu0 %v4780
  %4930 = vmatpush.bf16.msra.mxu0 %v4779
  %4931 = vmatmul.bf16.gmra.mxu0 %v1689
  %v4932 = vpop.f32.mrf.mxu0
  %v4933 = vadd.f32 0.0, %v4932
  %v4934 = vpop.f32.mrf.mxu0
  %v4935 = vadd.f32 0.0, %v4934
  %4936 = vmatmul.bf16.gmra.mxu0 %v1690
  %v4937 = vpop.f32.mrf.mxu0
  %v4938 = vadd.f32 0.0, %v4937
  %v4939 = vpop.f32.mrf.mxu0
  %v4940 = vadd.f32 0.0, %v4939
  %4941 = vmatmul.bf16.gmra.mxu0 %v1691
  %v4942 = vpop.f32.mrf.mxu0
  %v4943 = vadd.f32 0.0, %v4942
  %v4944 = vpop.f32.mrf.mxu0
  %v4945 = vadd.f32 0.0, %v4944
  %4946 = vmatmul.bf16.gmra.mxu0 %v1692
  %v4947 = vpop.f32.mrf.mxu0
  %v4948 = vadd.f32 0.0, %v4947
  %v4949 = vpop.f32.mrf.mxu0
  %v4950 = vadd.f32 0.0, %v4949
  %4951 = vmatmul.bf16.gmra.mxu0 %v1693
  %v4952 = vpop.f32.mrf.mxu0
  %v4953 = vadd.f32 0.0, %v4952
  %v4954 = vpop.f32.mrf.mxu0
  %v4955 = vadd.f32 0.0, %v4954
  %4956 = vmatmul.bf16.gmra.mxu0 %v1694
  %v4957 = vpop.f32.mrf.mxu0
  %v4958 = vadd.f32 0.0, %v4957
  %v4959 = vpop.f32.mrf.mxu0
  %v4960 = vadd.f32 0.0, %v4959
  %4961 = vmatmul.bf16.gmra.mxu0 %v1695
  %v4962 = vpop.f32.mrf.mxu0
  %v4963 = vadd.f32 0.0, %v4962
  %v4964 = vpop.f32.mrf.mxu0
  %v4965 = vadd.f32 0.0, %v4964
  %4966 = vmatmul.bf16.gmra.mxu0 %v1696
  %v4967 = vpop.f32.mrf.mxu0
  %v4968 = vadd.f32 0.0, %v4967
  %v4969 = vpop.f32.mrf.mxu0
  %v4970 = vadd.f32 0.0, %v4969
  %4971 = vmatmul.bf16.gmra.mxu0 %v1697
  %v4972 = vpop.f32.mrf.mxu0
  %v4973 = vadd.f32 0.0, %v4972
  %v4974 = vpop.f32.mrf.mxu0
  %v4975 = vadd.f32 0.0, %v4974
  %4976 = vmatmul.bf16.gmra.mxu0 %v1698
  %v4977 = vpop.f32.mrf.mxu0
  %v4978 = vadd.f32 0.0, %v4977
  %v4979 = vpop.f32.mrf.mxu0
  %v4980 = vadd.f32 0.0, %v4979
  %4981 = vmatmul.bf16.gmra.mxu0 %v1699
  %v4982 = vpop.f32.mrf.mxu0
  %v4983 = vadd.f32 0.0, %v4982
  %v4984 = vpop.f32.mrf.mxu0
  %v4985 = vadd.f32 0.0, %v4984
  %4986 = vmatmul.bf16.gmra.mxu0 %v1700
  %v4987 = vpop.f32.mrf.mxu0
  %v4988 = vadd.f32 0.0, %v4987
  %v4989 = vpop.f32.mrf.mxu0
  %v4990 = vadd.f32 0.0, %v4989
  %4991 = vmatmul.bf16.gmra.mxu0 %v1701
  %v4992 = vpop.f32.mrf.mxu0
  %v4993 = vadd.f32 0.0, %v4992
  %v4994 = vpop.f32.mrf.mxu0
  %v4995 = vadd.f32 0.0, %v4994
  %4996 = vmatmul.bf16.gmra.mxu0 %v1702
  %v4997 = vpop.f32.mrf.mxu0
  %v4998 = vadd.f32 0.0, %v4997
  %v4999 = vpop.f32.mrf.mxu0
  %v5000 = vadd.f32 0.0, %v4999
  %5001 = vmatmul.bf16.gmra.mxu0 %v1703
  %v5002 = vpop.f32.mrf.mxu0
  %v5003 = vadd.f32 0.0, %v5002
  %v5004 = vpop.f32.mrf.mxu0
  %v5005 = vadd.f32 0.0, %v5004
  %5006 = vmatmul.bf16.gmra.mxu0 %v1704
  %v5007 = vpop.f32.mrf.mxu0
  %v5008 = vadd.f32 0.0, %v5007
  %v5009 = vpop.f32.mrf.mxu0
  %v5010 = vadd.f32 0.0, %v5009
  %5011 = vmatmul.bf16.gmra.mxu0 %v1705
  %v5012 = vpop.f32.mrf.mxu0
  %v5013 = vadd.f32 0.0, %v5012
  %v5014 = vpop.f32.mrf.mxu0
  %v5015 = vadd.f32 0.0, %v5014
  %5016 = vmatmul.bf16.gmra.mxu0 %v1706
  %v5017 = vpop.f32.mrf.mxu0
  %v5018 = vadd.f32 0.0, %v5017
  %v5019 = vpop.f32.mrf.mxu0
  %v5020 = vadd.f32 0.0, %v5019
  %5021 = vmatmul.bf16.gmra.mxu0 %v1707
  %v5022 = vpop.f32.mrf.mxu0
  %v5023 = vadd.f32 0.0, %v5022
  %v5024 = vpop.f32.mrf.mxu0
  %v5025 = vadd.f32 0.0, %v5024
  %5026 = vmatmul.bf16.gmra.mxu0 %v1708
  %v5027 = vpop.f32.mrf.mxu0
  %v5028 = vadd.f32 0.0, %v5027
  %v5029 = vpop.f32.mrf.mxu0
  %v5030 = vadd.f32 0.0, %v5029
  %5031 = vmatmul.bf16.gmra.mxu0 %v1709
  %v5032 = vpop.f32.mrf.mxu0
  %v5033 = vadd.f32 0.0, %v5032
  %v5034 = vpop.f32.mrf.mxu0
  %v5035 = vadd.f32 0.0, %v5034
  %5036 = vmatmul.bf16.gmra.mxu0 %v1710
  %v5037 = vpop.f32.mrf.mxu0
  %v5038 = vadd.f32 0.0, %v5037
  %v5039 = vpop.f32.mrf.mxu0
  %v5040 = vadd.f32 0.0, %v5039
  %5041 = vmatmul.bf16.gmra.mxu0 %v1711
  %v5042 = vpop.f32.mrf.mxu0
  %v5043 = vadd.f32 0.0, %v5042
  %v5044 = vpop.f32.mrf.mxu0
  %v5045 = vadd.f32 0.0, %v5044
  %5046 = vmatmul.bf16.gmra.mxu0 %v1712
  %v5047 = vpop.f32.mrf.mxu0
  %v5048 = vadd.f32 0.0, %v5047
  %v5049 = vpop.f32.mrf.mxu0
  %v5050 = vadd.f32 0.0, %v5049
  %5051 = vmatmul.bf16.gmra.mxu0 %v1713
  %v5052 = vpop.f32.mrf.mxu0
  %v5053 = vadd.f32 0.0, %v5052
  %v5054 = vpop.f32.mrf.mxu0
  %v5055 = vadd.f32 0.0, %v5054
  %5056 = vmatmul.bf16.gmra.mxu0 %v1714
  %v5057 = vpop.f32.mrf.mxu0
  %v5058 = vadd.f32 0.0, %v5057
  %v5059 = vpop.f32.mrf.mxu0
  %v5060 = vadd.f32 0.0, %v5059
  %5061 = vmatmul.bf16.gmra.mxu0 %v1715
  %v5062 = vpop.f32.mrf.mxu0
  %v5063 = vadd.f32 0.0, %v5062
  %v5064 = vpop.f32.mrf.mxu0
  %v5065 = vadd.f32 0.0, %v5064
  %5066 = vmatmul.bf16.gmra.mxu0 %v1716
  %v5067 = vpop.f32.mrf.mxu0
  %v5068 = vadd.f32 0.0, %v5067
  %v5069 = vpop.f32.mrf.mxu0
  %v5070 = vadd.f32 0.0, %v5069
  %5071 = vmatmul.bf16.gmra.mxu0 %v1717
  %v5072 = vpop.f32.mrf.mxu0
  %v5073 = vadd.f32 0.0, %v5072
  %v5074 = vpop.f32.mrf.mxu0
  %v5075 = vadd.f32 0.0, %v5074
  %5076 = vmatmul.bf16.gmra.mxu0 %v1718
  %v5077 = vpop.f32.mrf.mxu0
  %v5078 = vadd.f32 0.0, %v5077
  %v5079 = vpop.f32.mrf.mxu0
  %v5080 = vadd.f32 0.0, %v5079
  %5081 = vmatmul.bf16.gmra.mxu0 %v1719
  %v5082 = vpop.f32.mrf.mxu0
  %v5083 = vadd.f32 0.0, %v5082
  %v5084 = vpop.f32.mrf.mxu0
  %v5085 = vadd.f32 0.0, %v5084
  %5086 = vmatmul.bf16.gmra.mxu0 %v1720
  %v5087 = vpop.f32.mrf.mxu0
  %v5088 = vadd.f32 0.0, %v5087
  %v5089 = vpop.f32.mrf.mxu0
  %v5090 = vadd.f32 0.0, %v5089
  %5091 = vdwg.mxu0
  %5092 = vmatpush.bf16.msra.mxu0 %v4794
  %5093 = vmatpush.bf16.msra.mxu0 %v4793
  %5094 = vmatpush.bf16.msra.mxu0 %v4792
  %5095 = vmatpush.bf16.msra.mxu0 %v4791
  %5096 = vmatpush.bf16.msra.mxu0 %v4790
  %5097 = vmatpush.bf16.msra.mxu0 %v4789
  %5098 = vmatpush.bf16.msra.mxu0 %v4788
  %5099 = vmatpush.bf16.msra.mxu0 %v4787
  %5100 = vmatmul.bf16.gmra.mxu0 %v1861
  %v5101 = vpop.f32.mrf.mxu0
  %v5102 = vadd.f32 %v4933, %v5101
  %v5103 = vpop.f32.mrf.mxu0
  %v5104 = vadd.f32 %v4935, %v5103
  %5105 = vmatmul.bf16.gmra.mxu0 %v1873
  %v5106 = vpop.f32.mrf.mxu0
  %v5107 = vadd.f32 %v4938, %v5106
  %v5108 = vpop.f32.mrf.mxu0
  %v5109 = vadd.f32 %v4940, %v5108
  %5110 = vmatmul.bf16.gmra.mxu0 %v1885
  %v5111 = vpop.f32.mrf.mxu0
  %v5112 = vadd.f32 %v4943, %v5111
  %v5113 = vpop.f32.mrf.mxu0
  %v5114 = vadd.f32 %v4945, %v5113
  %5115 = vmatmul.bf16.gmra.mxu0 %v1897
  %v5116 = vpop.f32.mrf.mxu0
  %v5117 = vadd.f32 %v4948, %v5116
  %v5118 = vpop.f32.mrf.mxu0
  %v5119 = vadd.f32 %v4950, %v5118
  %5120 = vmatmul.bf16.gmra.mxu0 %v1909
  %v5121 = vpop.f32.mrf.mxu0
  %v5122 = vadd.f32 %v4953, %v5121
  %v5123 = vpop.f32.mrf.mxu0
  %v5124 = vadd.f32 %v4955, %v5123
  %5125 = vmatmul.bf16.gmra.mxu0 %v1921
  %v5126 = vpop.f32.mrf.mxu0
  %v5127 = vadd.f32 %v4958, %v5126
  %v5128 = vpop.f32.mrf.mxu0
  %v5129 = vadd.f32 %v4960, %v5128
  %5130 = vmatmul.bf16.gmra.mxu0 %v1933
  %v5131 = vpop.f32.mrf.mxu0
  %v5132 = vadd.f32 %v4963, %v5131
  %v5133 = vpop.f32.mrf.mxu0
  %v5134 = vadd.f32 %v4965, %v5133
  %5135 = vmatmul.bf16.gmra.mxu0 %v1945
  %v5136 = vpop.f32.mrf.mxu0
  %v5137 = vadd.f32 %v4968, %v5136
  %v5138 = vpop.f32.mrf.mxu0
  %v5139 = vadd.f32 %v4970, %v5138
  %5140 = vmatmul.bf16.gmra.mxu0 %v1957
  %v5141 = vpop.f32.mrf.mxu0
  %v5142 = vadd.f32 %v4973, %v5141
  %v5143 = vpop.f32.mrf.mxu0
  %v5144 = vadd.f32 %v4975, %v5143
  %5145 = vmatmul.bf16.gmra.mxu0 %v1969
  %v5146 = vpop.f32.mrf.mxu0
  %v5147 = vadd.f32 %v4978, %v5146
  %v5148 = vpop.f32.mrf.mxu0
  %v5149 = vadd.f32 %v4980, %v5148
  %5150 = vmatmul.bf16.gmra.mxu0 %v1981
  %v5151 = vpop.f32.mrf.mxu0
  %v5152 = vadd.f32 %v4983, %v5151
  %v5153 = vpop.f32.mrf.mxu0
  %v5154 = vadd.f32 %v4985, %v5153
  %5155 = vmatmul.bf16.gmra.mxu0 %v1993
  %v5156 = vpop.f32.mrf.mxu0
  %v5157 = vadd.f32 %v4988, %v5156
  %v5158 = vpop.f32.mrf.mxu0
  %v5159 = vadd.f32 %v4990, %v5158
  %5160 = vmatmul.bf16.gmra.mxu0 %v2005
  %v5161 = vpop.f32.mrf.mxu0
  %v5162 = vadd.f32 %v4993, %v5161
  %v5163 = vpop.f32.mrf.mxu0
  %v5164 = vadd.f32 %v4995, %v5163
  %5165 = vmatmul.bf16.gmra.mxu0 %v2017
  %v5166 = vpop.f32.mrf.mxu0
  %v5167 = vadd.f32 %v4998, %v5166
  %v5168 = vpop.f32.mrf.mxu0
  %v5169 = vadd.f32 %v5000, %v5168
  %5170 = vmatmul.bf16.gmra.mxu0 %v2029
  %v5171 = vpop.f32.mrf.mxu0
  %v5172 = vadd.f32 %v5003, %v5171
  %v5173 = vpop.f32.mrf.mxu0
  %v5174 = vadd.f32 %v5005, %v5173
  %5175 = vmatmul.bf16.gmra.mxu0 %v2041
  %v5176 = vpop.f32.mrf.mxu0
  %v5177 = vadd.f32 %v5008, %v5176
  %v5178 = vpop.f32.mrf.mxu0
  %v5179 = vadd.f32 %v5010, %v5178
  %5180 = vmatmul.bf16.gmra.mxu0 %v2053
  %v5181 = vpop.f32.mrf.mxu0
  %v5182 = vadd.f32 %v5013, %v5181
  %v5183 = vpop.f32.mrf.mxu0
  %v5184 = vadd.f32 %v5015, %v5183
  %5185 = vmatmul.bf16.gmra.mxu0 %v2065
  %v5186 = vpop.f32.mrf.mxu0
  %v5187 = vadd.f32 %v5018, %v5186
  %v5188 = vpop.f32.mrf.mxu0
  %v5189 = vadd.f32 %v5020, %v5188
  %5190 = vmatmul.bf16.gmra.mxu0 %v2077
  %v5191 = vpop.f32.mrf.mxu0
  %v5192 = vadd.f32 %v5023, %v5191
  %v5193 = vpop.f32.mrf.mxu0
  %v5194 = vadd.f32 %v5025, %v5193
  %5195 = vmatmul.bf16.gmra.mxu0 %v2089
  %v5196 = vpop.f32.mrf.mxu0
  %v5197 = vadd.f32 %v5028, %v5196
  %v5198 = vpop.f32.mrf.mxu0
  %v5199 = vadd.f32 %v5030, %v5198
  %5200 = vmatmul.bf16.gmra.mxu0 %v2101
  %v5201 = vpop.f32.mrf.mxu0
  %v5202 = vadd.f32 %v5033, %v5201
  %v5203 = vpop.f32.mrf.mxu0
  %v5204 = vadd.f32 %v5035, %v5203
  %5205 = vmatmul.bf16.gmra.mxu0 %v2113
  %v5206 = vpop.f32.mrf.mxu0
  %v5207 = vadd.f32 %v5038, %v5206
  %v5208 = vpop.f32.mrf.mxu0
  %v5209 = vadd.f32 %v5040, %v5208
  %5210 = vmatmul.bf16.gmra.mxu0 %v2125
  %v5211 = vpop.f32.mrf.mxu0
  %v5212 = vadd.f32 %v5043, %v5211
  %v5213 = vpop.f32.mrf.mxu0
  %v5214 = vadd.f32 %v5045, %v5213
  %5215 = vmatmul.bf16.gmra.mxu0 %v2137
  %v5216 = vpop.f32.mrf.mxu0
  %v5217 = vadd.f32 %v5048, %v5216
  %v5218 = vpop.f32.mrf.mxu0
  %v5219 = vadd.f32 %v5050, %v5218
  %5220 = vmatmul.bf16.gmra.mxu0 %v2149
  %v5221 = vpop.f32.mrf.mxu0
  %v5222 = vadd.f32 %v5053, %v5221
  %v5223 = vpop.f32.mrf.mxu0
  %v5224 = vadd.f32 %v5055, %v5223
  %5225 = vmatmul.bf16.gmra.mxu0 %v2161
  %v5226 = vpop.f32.mrf.mxu0
  %v5227 = vadd.f32 %v5058, %v5226
  %v5228 = vpop.f32.mrf.mxu0
  %v5229 = vadd.f32 %v5060, %v5228
  %5230 = vmatmul.bf16.gmra.mxu0 %v2173
  %v5231 = vpop.f32.mrf.mxu0
  %v5232 = vadd.f32 %v5063, %v5231
  %v5233 = vpop.f32.mrf.mxu0
  %v5234 = vadd.f32 %v5065, %v5233
  %5235 = vmatmul.bf16.gmra.mxu0 %v2185
  %v5236 = vpop.f32.mrf.mxu0
  %v5237 = vadd.f32 %v5068, %v5236
  %v5238 = vpop.f32.mrf.mxu0
  %v5239 = vadd.f32 %v5070, %v5238
  %5240 = vmatmul.bf16.gmra.mxu0 %v2197
  %v5241 = vpop.f32.mrf.mxu0
  %v5242 = vadd.f32 %v5073, %v5241
  %v5243 = vpop.f32.mrf.mxu0
  %v5244 = vadd.f32 %v5075, %v5243
  %5245 = vmatmul.bf16.gmra.mxu0 %v2209
  %v5246 = vpop.f32.mrf.mxu0
  %v5247 = vadd.f32 %v5078, %v5246
  %v5248 = vpop.f32.mrf.mxu0
  %v5249 = vadd.f32 %v5080, %v5248
  %5250 = vmatmul.bf16.gmra.mxu0 %v2221
  %v5251 = vpop.f32.mrf.mxu0
  %v5252 = vadd.f32 %v5083, %v5251
  %v5253 = vpop.f32.mrf.mxu0
  %v5254 = vadd.f32 %v5085, %v5253
  %5255 = vmatmul.bf16.gmra.mxu0 %v2233
  %v5256 = vpop.f32.mrf.mxu0
  %v5257 = vadd.f32 %v5088, %v5256
  %v5258 = vpop.f32.mrf.mxu0
  %v5259 = vadd.f32 %v5090, %v5258
  %5260 = vdwg.mxu0
  %5261 = vmatpush.bf16.msra.mxu0 %v4802
  %5262 = vmatpush.bf16.msra.mxu0 %v4801
  %5263 = vmatpush.bf16.msra.mxu0 %v4800
  %5264 = vmatpush.bf16.msra.mxu0 %v4799
  %5265 = vmatpush.bf16.msra.mxu0 %v4798
  %5266 = vmatpush.bf16.msra.mxu0 %v4797
  %5267 = vmatpush.bf16.msra.mxu0 %v4796
  %5268 = vmatpush.bf16.msra.mxu0 %v4795
  %5269 = vmatmul.bf16.gmra.mxu0 %v2365
  %v5270 = vpop.f32.mrf.mxu0
  %v5271 = vadd.f32 %v5102, %v5270
  %v5272 = vpop.f32.mrf.mxu0
  %v5273 = vadd.f32 %v5104, %v5272
  %5274 = vmatmul.bf16.gmra.mxu0 %v2368
  %v5275 = vpop.f32.mrf.mxu0
  %v5276 = vadd.f32 %v5107, %v5275
  %v5277 = vpop.f32.mrf.mxu0
  %v5278 = vadd.f32 %v5109, %v5277
  %5279 = vmatmul.bf16.gmra.mxu0 %v2371
  %v5280 = vpop.f32.mrf.mxu0
  %v5281 = vadd.f32 %v5112, %v5280
  %v5282 = vpop.f32.mrf.mxu0
  %v5283 = vadd.f32 %v5114, %v5282
  %5284 = vmatmul.bf16.gmra.mxu0 %v2374
  %v5285 = vpop.f32.mrf.mxu0
  %v5286 = vadd.f32 %v5117, %v5285
  %v5287 = vpop.f32.mrf.mxu0
  %v5288 = vadd.f32 %v5119, %v5287
  %5289 = vmatmul.bf16.gmra.mxu0 %v2377
  %v5290 = vpop.f32.mrf.mxu0
  %v5291 = vadd.f32 %v5122, %v5290
  %v5292 = vpop.f32.mrf.mxu0
  %v5293 = vadd.f32 %v5124, %v5292
  %5294 = vmatmul.bf16.gmra.mxu0 %v2380
  %v5295 = vpop.f32.mrf.mxu0
  %v5296 = vadd.f32 %v5127, %v5295
  %v5297 = vpop.f32.mrf.mxu0
  %v5298 = vadd.f32 %v5129, %v5297
  %5299 = vmatmul.bf16.gmra.mxu0 %v2383
  %v5300 = vpop.f32.mrf.mxu0
  %v5301 = vadd.f32 %v5132, %v5300
  %v5302 = vpop.f32.mrf.mxu0
  %v5303 = vadd.f32 %v5134, %v5302
  %5304 = vmatmul.bf16.gmra.mxu0 %v2386
  %v5305 = vpop.f32.mrf.mxu0
  %v5306 = vadd.f32 %v5137, %v5305
  %v5307 = vpop.f32.mrf.mxu0
  %v5308 = vadd.f32 %v5139, %v5307
  %5309 = vmatmul.bf16.gmra.mxu0 %v2389
  %v5310 = vpop.f32.mrf.mxu0
  %v5311 = vadd.f32 %v5142, %v5310
  %v5312 = vpop.f32.mrf.mxu0
  %v5313 = vadd.f32 %v5144, %v5312
  %5314 = vmatmul.bf16.gmra.mxu0 %v2392
  %v5315 = vpop.f32.mrf.mxu0
  %v5316 = vadd.f32 %v5147, %v5315
  %v5317 = vpop.f32.mrf.mxu0
  %v5318 = vadd.f32 %v5149, %v5317
  %5319 = vmatmul.bf16.gmra.mxu0 %v2395
  %v5320 = vpop.f32.mrf.mxu0
  %v5321 = vadd.f32 %v5152, %v5320
  %v5322 = vpop.f32.mrf.mxu0
  %v5323 = vadd.f32 %v5154, %v5322
  %5324 = vmatmul.bf16.gmra.mxu0 %v2398
  %v5325 = vpop.f32.mrf.mxu0
  %v5326 = vadd.f32 %v5157, %v5325
  %v5327 = vpop.f32.mrf.mxu0
  %v5328 = vadd.f32 %v5159, %v5327
  %5329 = vmatmul.bf16.gmra.mxu0 %v2401
  %v5330 = vpop.f32.mrf.mxu0
  %v5331 = vadd.f32 %v5162, %v5330
  %v5332 = vpop.f32.mrf.mxu0
  %v5333 = vadd.f32 %v5164, %v5332
  %5334 = vmatmul.bf16.gmra.mxu0 %v2404
  %v5335 = vpop.f32.mrf.mxu0
  %v5336 = vadd.f32 %v5167, %v5335
  %v5337 = vpop.f32.mrf.mxu0
  %v5338 = vadd.f32 %v5169, %v5337
  %5339 = vmatmul.bf16.gmra.mxu0 %v2407
  %v5340 = vpop.f32.mrf.mxu0
  %v5341 = vadd.f32 %v5172, %v5340
  %v5342 = vpop.f32.mrf.mxu0
  %v5343 = vadd.f32 %v5174, %v5342
  %5344 = vmatmul.bf16.gmra.mxu0 %v2410
  %v5345 = vpop.f32.mrf.mxu0
  %v5346 = vadd.f32 %v5177, %v5345
  %v5347 = vpop.f32.mrf.mxu0
  %v5348 = vadd.f32 %v5179, %v5347
  %5349 = vmatmul.bf16.gmra.mxu0 %v2413
  %v5350 = vpop.f32.mrf.mxu0
  %v5351 = vadd.f32 %v5182, %v5350
  %v5352 = vpop.f32.mrf.mxu0
  %v5353 = vadd.f32 %v5184, %v5352
  %5354 = vmatmul.bf16.gmra.mxu0 %v2416
  %v5355 = vpop.f32.mrf.mxu0
  %v5356 = vadd.f32 %v5187, %v5355
  %v5357 = vpop.f32.mrf.mxu0
  %v5358 = vadd.f32 %v5189, %v5357
  %5359 = vmatmul.bf16.gmra.mxu0 %v2419
  %v5360 = vpop.f32.mrf.mxu0
  %v5361 = vadd.f32 %v5192, %v5360
  %v5362 = vpop.f32.mrf.mxu0
  %v5363 = vadd.f32 %v5194, %v5362
  %5364 = vmatmul.bf16.gmra.mxu0 %v2422
  %v5365 = vpop.f32.mrf.mxu0
  %v5366 = vadd.f32 %v5197, %v5365
  %v5367 = vpop.f32.mrf.mxu0
  %v5368 = vadd.f32 %v5199, %v5367
  %5369 = vmatmul.bf16.gmra.mxu0 %v2425
  %v5370 = vpop.f32.mrf.mxu0
  %v5371 = vadd.f32 %v5202, %v5370
  %v5372 = vpop.f32.mrf.mxu0
  %v5373 = vadd.f32 %v5204, %v5372
  %5374 = vmatmul.bf16.gmra.mxu0 %v2428
  %v5375 = vpop.f32.mrf.mxu0
  %v5376 = vadd.f32 %v5207, %v5375
  %v5377 = vpop.f32.mrf.mxu0
  %v5378 = vadd.f32 %v5209, %v5377
  %5379 = vmatmul.bf16.gmra.mxu0 %v2431
  %v5380 = vpop.f32.mrf.mxu0
  %v5381 = vadd.f32 %v5212, %v5380
  %v5382 = vpop.f32.mrf.mxu0
  %v5383 = vadd.f32 %v5214, %v5382
  %5384 = vmatmul.bf16.gmra.mxu0 %v2434
  %v5385 = vpop.f32.mrf.mxu0
  %v5386 = vadd.f32 %v5217, %v5385
  %v5387 = vpop.f32.mrf.mxu0
  %v5388 = vadd.f32 %v5219, %v5387
  %5389 = vmatmul.bf16.gmra.mxu0 %v2437
  %v5390 = vpop.f32.mrf.mxu0
  %v5391 = vadd.f32 %v5222, %v5390
  %v5392 = vpop.f32.mrf.mxu0
  %v5393 = vadd.f32 %v5224, %v5392
  %5394 = vmatmul.bf16.gmra.mxu0 %v2440
  %v5395 = vpop.f32.mrf.mxu0
  %v5396 = vadd.f32 %v5227, %v5395
  %v5397 = vpop.f32.mrf.mxu0
  %v5398 = vadd.f32 %v5229, %v5397
  %5399 = vmatmul.bf16.gmra.mxu0 %v2443
  %v5400 = vpop.f32.mrf.mxu0
  %v5401 = vadd.f32 %v5232, %v5400
  %v5402 = vpop.f32.mrf.mxu0
  %v5403 = vadd.f32 %v5234, %v5402
  %5404 = vmatmul.bf16.gmra.mxu0 %v2446
  %v5405 = vpop.f32.mrf.mxu0
  %v5406 = vadd.f32 %v5237, %v5405
  %v5407 = vpop.f32.mrf.mxu0
  %v5408 = vadd.f32 %v5239, %v5407
  %5409 = vmatmul.bf16.gmra.mxu0 %v2449
  %v5410 = vpop.f32.mrf.mxu0
  %v5411 = vadd.f32 %v5242, %v5410
  %v5412 = vpop.f32.mrf.mxu0
  %v5413 = vadd.f32 %v5244, %v5412
  %5414 = vmatmul.bf16.gmra.mxu0 %v2452
  %v5415 = vpop.f32.mrf.mxu0
  %v5416 = vadd.f32 %v5247, %v5415
  %v5417 = vpop.f32.mrf.mxu0
  %v5418 = vadd.f32 %v5249, %v5417
  %5419 = vmatmul.bf16.gmra.mxu0 %v2455
  %v5420 = vpop.f32.mrf.mxu0
  %v5421 = vadd.f32 %v5252, %v5420
  %v5422 = vpop.f32.mrf.mxu0
  %v5423 = vadd.f32 %v5254, %v5422
  %5424 = vmatmul.bf16.gmra.mxu0 %v2458
  %v5425 = vpop.f32.mrf.mxu0
  %v5426 = vadd.f32 %v5257, %v5425
  %v5427 = vpop.f32.mrf.mxu0
  %v5428 = vadd.f32 %v5259, %v5427
  %5429 = vdwg.mxu0
  %5430 = vmatpush.bf16.msra.mxu0 %v4810
  %5431 = vmatpush.bf16.msra.mxu0 %v4809
  %5432 = vmatpush.bf16.msra.mxu0 %v4808
  %5433 = vmatpush.bf16.msra.mxu0 %v4807
  %5434 = vmatpush.bf16.msra.mxu0 %v4806
  %5435 = vmatpush.bf16.msra.mxu0 %v4805
  %5436 = vmatpush.bf16.msra.mxu0 %v4804
  %5437 = vmatpush.bf16.msra.mxu0 %v4803
  %5438 = vmatmul.bf16.gmra.mxu0 %v2619
  %v5439 = vpop.f32.mrf.mxu0
  %v5440 = vadd.f32 %v5271, %v5439
  %v5441 = vpop.f32.mrf.mxu0
  %v5442 = vadd.f32 %v5273, %v5441
  %5443 = vmatmul.bf16.gmra.mxu0 %v2620
  %v5444 = vpop.f32.mrf.mxu0
  %v5445 = vadd.f32 %v5276, %v5444
  %v5446 = vpop.f32.mrf.mxu0
  %v5447 = vadd.f32 %v5278, %v5446
  %5448 = vmatmul.bf16.gmra.mxu0 %v2621
  %v5449 = vpop.f32.mrf.mxu0
  %v5450 = vadd.f32 %v5281, %v5449
  %v5451 = vpop.f32.mrf.mxu0
  %v5452 = vadd.f32 %v5283, %v5451
  %5453 = vmatmul.bf16.gmra.mxu0 %v2622
  %v5454 = vpop.f32.mrf.mxu0
  %v5455 = vadd.f32 %v5286, %v5454
  %v5456 = vpop.f32.mrf.mxu0
  %v5457 = vadd.f32 %v5288, %v5456
  %5458 = vmatmul.bf16.gmra.mxu0 %v2623
  %v5459 = vpop.f32.mrf.mxu0
  %v5460 = vadd.f32 %v5291, %v5459
  %v5461 = vpop.f32.mrf.mxu0
  %v5462 = vadd.f32 %v5293, %v5461
  %5463 = vmatmul.bf16.gmra.mxu0 %v2624
  %v5464 = vpop.f32.mrf.mxu0
  %v5465 = vadd.f32 %v5296, %v5464
  %v5466 = vpop.f32.mrf.mxu0
  %v5467 = vadd.f32 %v5298, %v5466
  %5468 = vmatmul.bf16.gmra.mxu0 %v2625
  %v5469 = vpop.f32.mrf.mxu0
  %v5470 = vadd.f32 %v5301, %v5469
  %v5471 = vpop.f32.mrf.mxu0
  %v5472 = vadd.f32 %v5303, %v5471
  %5473 = vmatmul.bf16.gmra.mxu0 %v2626
  %v5474 = vpop.f32.mrf.mxu0
  %v5475 = vadd.f32 %v5306, %v5474
  %v5476 = vpop.f32.mrf.mxu0
  %v5477 = vadd.f32 %v5308, %v5476
  %5478 = vmatmul.bf16.gmra.mxu0 %v2627
  %v5479 = vpop.f32.mrf.mxu0
  %v5480 = vadd.f32 %v5311, %v5479
  %v5481 = vpop.f32.mrf.mxu0
  %v5482 = vadd.f32 %v5313, %v5481
  %5483 = vmatmul.bf16.gmra.mxu0 %v2628
  %v5484 = vpop.f32.mrf.mxu0
  %v5485 = vadd.f32 %v5316, %v5484
  %v5486 = vpop.f32.mrf.mxu0
  %v5487 = vadd.f32 %v5318, %v5486
  %5488 = vmatmul.bf16.gmra.mxu0 %v2629
  %v5489 = vpop.f32.mrf.mxu0
  %v5490 = vadd.f32 %v5321, %v5489
  %v5491 = vpop.f32.mrf.mxu0
  %v5492 = vadd.f32 %v5323, %v5491
  %5493 = vmatmul.bf16.gmra.mxu0 %v2630
  %v5494 = vpop.f32.mrf.mxu0
  %v5495 = vadd.f32 %v5326, %v5494
  %v5496 = vpop.f32.mrf.mxu0
  %v5497 = vadd.f32 %v5328, %v5496
  %5498 = vmatmul.bf16.gmra.mxu0 %v2631
  %v5499 = vpop.f32.mrf.mxu0
  %v5500 = vadd.f32 %v5331, %v5499
  %v5501 = vpop.f32.mrf.mxu0
  %v5502 = vadd.f32 %v5333, %v5501
  %5503 = vmatmul.bf16.gmra.mxu0 %v2632
  %v5504 = vpop.f32.mrf.mxu0
  %v5505 = vadd.f32 %v5336, %v5504
  %v5506 = vpop.f32.mrf.mxu0
  %v5507 = vadd.f32 %v5338, %v5506
  %5508 = vmatmul.bf16.gmra.mxu0 %v2633
  %v5509 = vpop.f32.mrf.mxu0
  %v5510 = vadd.f32 %v5341, %v5509
  %v5511 = vpop.f32.mrf.mxu0
  %v5512 = vadd.f32 %v5343, %v5511
  %5513 = vmatmul.bf16.gmra.mxu0 %v2634
  %v5514 = vpop.f32.mrf.mxu0
  %v5515 = vadd.f32 %v5346, %v5514
  %v5516 = vpop.f32.mrf.mxu0
  %v5517 = vadd.f32 %v5348, %v5516
  %5518 = vmatmul.bf16.gmra.mxu0 %v2635
  %v5519 = vpop.f32.mrf.mxu0
  %v5520 = vadd.f32 %v5351, %v5519
  %v5521 = vpop.f32.mrf.mxu0
  %v5522 = vadd.f32 %v5353, %v5521
  %5523 = vmatmul.bf16.gmra.mxu0 %v2636
  %v5524 = vpop.f32.mrf.mxu0
  %v5525 = vadd.f32 %v5356, %v5524
  %v5526 = vpop.f32.mrf.mxu0
  %v5527 = vadd.f32 %v5358, %v5526
  %5528 = vmatmul.bf16.gmra.mxu0 %v2637
  %v5529 = vpop.f32.mrf.mxu0
  %v5530 = vadd.f32 %v5361, %v5529
  %v5531 = vpop.f32.mrf.mxu0
  %v5532 = vadd.f32 %v5363, %v5531
  %5533 = vmatmul.bf16.gmra.mxu0 %v2638
  %v5534 = vpop.f32.mrf.mxu0
  %v5535 = vadd.f32 %v5366, %v5534
  %v5536 = vpop.f32.mrf.mxu0
  %v5537 = vadd.f32 %v5368, %v5536
  %5538 = vmatmul.bf16.gmra.mxu0 %v2639
  %v5539 = vpop.f32.mrf.mxu0
  %v5540 = vadd.f32 %v5371, %v5539
  %v5541 = vpop.f32.mrf.mxu0
  %v5542 = vadd.f32 %v5373, %v5541
  %5543 = vmatmul.bf16.gmra.mxu0 %v2640
  %v5544 = vpop.f32.mrf.mxu0
  %v5545 = vadd.f32 %v5376, %v5544
  %v5546 = vpop.f32.mrf.mxu0
  %v5547 = vadd.f32 %v5378, %v5546
  %5548 = vmatmul.bf16.gmra.mxu0 %v2641
  %v5549 = vpop.f32.mrf.mxu0
  %v5550 = vadd.f32 %v5381, %v5549
  %v5551 = vpop.f32.mrf.mxu0
  %v5552 = vadd.f32 %v5383, %v5551
  %5553 = vmatmul.bf16.gmra.mxu0 %v2642
  %v5554 = vpop.f32.mrf.mxu0
  %v5555 = vadd.f32 %v5386, %v5554
  %v5556 = vpop.f32.mrf.mxu0
  %v5557 = vadd.f32 %v5388, %v5556
  %5558 = vmatmul.bf16.gmra.mxu0 %v2643
  %v5559 = vpop.f32.mrf.mxu0
  %v5560 = vadd.f32 %v5391, %v5559
  %v5561 = vpop.f32.mrf.mxu0
  %v5562 = vadd.f32 %v5393, %v5561
  %5563 = vmatmul.bf16.gmra.mxu0 %v2644
  %v5564 = vpop.f32.mrf.mxu0
  %v5565 = vadd.f32 %v5396, %v5564
  %v5566 = vpop.f32.mrf.mxu0
  %v5567 = vadd.f32 %v5398, %v5566
  %5568 = vmatmul.bf16.gmra.mxu0 %v2645
  %v5569 = vpop.f32.mrf.mxu0
  %v5570 = vadd.f32 %v5401, %v5569
  %v5571 = vpop.f32.mrf.mxu0
  %v5572 = vadd.f32 %v5403, %v5571
  %5573 = vmatmul.bf16.gmra.mxu0 %v2646
  %v5574 = vpop.f32.mrf.mxu0
  %v5575 = vadd.f32 %v5406, %v5574
  %v5576 = vpop.f32.mrf.mxu0
  %v5577 = vadd.f32 %v5408, %v5576
  %5578 = vmatmul.bf16.gmra.mxu0 %v2647
  %v5579 = vpop.f32.mrf.mxu0
  %v5580 = vadd.f32 %v5411, %v5579
  %v5581 = vpop.f32.mrf.mxu0
  %v5582 = vadd.f32 %v5413, %v5581
  %5583 = vmatmul.bf16.gmra.mxu0 %v2648
  %v5584 = vpop.f32.mrf.mxu0
  %v5585 = vadd.f32 %v5416, %v5584
  %v5586 = vpop.f32.mrf.mxu0
  %v5587 = vadd.f32 %v5418, %v5586
  %5588 = vmatmul.bf16.gmra.mxu0 %v2649
  %v5589 = vpop.f32.mrf.mxu0
  %v5590 = vadd.f32 %v5421, %v5589
  %v5591 = vpop.f32.mrf.mxu0
  %v5592 = vadd.f32 %v5423, %v5591
  %5593 = vmatmul.bf16.gmra.mxu0 %v2650
  %v5594 = vpop.f32.mrf.mxu0
  %v5595 = vadd.f32 %v5426, %v5594
  %v5596 = vpop.f32.mrf.mxu0
  %v5597 = vadd.f32 %v5428, %v5596
  %5598 = vdwg.mxu0
  %5599 = vmatpush.bf16.msra.mxu0 %v4818
  %5600 = vmatpush.bf16.msra.mxu0 %v4817
  %5601 = vmatpush.bf16.msra.mxu0 %v4816
  %5602 = vmatpush.bf16.msra.mxu0 %v4815
  %5603 = vmatpush.bf16.msra.mxu0 %v4814
  %5604 = vmatpush.bf16.msra.mxu0 %v4813
  %5605 = vmatpush.bf16.msra.mxu0 %v4812
  %5606 = vmatpush.bf16.msra.mxu0 %v4811
  %5607 = vmatmul.bf16.gmra.mxu0 %v2790
  %v5608 = vpop.f32.mrf.mxu0
  %v5609 = vadd.f32 %v5440, %v5608
  %v5610 = vpop.f32.mrf.mxu0
  %v5611 = vadd.f32 %v5442, %v5610
  %5612 = vmatmul.bf16.gmra.mxu0 %v2802
  %v5613 = vpop.f32.mrf.mxu0
  %v5614 = vadd.f32 %v5445, %v5613
  %v5615 = vpop.f32.mrf.mxu0
  %v5616 = vadd.f32 %v5447, %v5615
  %5617 = vmatmul.bf16.gmra.mxu0 %v2814
  %v5618 = vpop.f32.mrf.mxu0
  %v5619 = vadd.f32 %v5450, %v5618
  %v5620 = vpop.f32.mrf.mxu0
  %v5621 = vadd.f32 %v5452, %v5620
  %5622 = vmatmul.bf16.gmra.mxu0 %v2826
  %v5623 = vpop.f32.mrf.mxu0
  %v5624 = vadd.f32 %v5455, %v5623
  %v5625 = vpop.f32.mrf.mxu0
  %v5626 = vadd.f32 %v5457, %v5625
  %5627 = vmatmul.bf16.gmra.mxu0 %v2838
  %v5628 = vpop.f32.mrf.mxu0
  %v5629 = vadd.f32 %v5460, %v5628
  %v5630 = vpop.f32.mrf.mxu0
  %v5631 = vadd.f32 %v5462, %v5630
  %5632 = vmatmul.bf16.gmra.mxu0 %v2850
  %v5633 = vpop.f32.mrf.mxu0
  %v5634 = vadd.f32 %v5465, %v5633
  %v5635 = vpop.f32.mrf.mxu0
  %v5636 = vadd.f32 %v5467, %v5635
  %5637 = vmatmul.bf16.gmra.mxu0 %v2862
  %v5638 = vpop.f32.mrf.mxu0
  %v5639 = vadd.f32 %v5470, %v5638
  %v5640 = vpop.f32.mrf.mxu0
  %v5641 = vadd.f32 %v5472, %v5640
  %5642 = vmatmul.bf16.gmra.mxu0 %v2874
  %v5643 = vpop.f32.mrf.mxu0
  %v5644 = vadd.f32 %v5475, %v5643
  %v5645 = vpop.f32.mrf.mxu0
  %v5646 = vadd.f32 %v5477, %v5645
  %5647 = vmatmul.bf16.gmra.mxu0 %v2886
  %v5648 = vpop.f32.mrf.mxu0
  %v5649 = vadd.f32 %v5480, %v5648
  %v5650 = vpop.f32.mrf.mxu0
  %v5651 = vadd.f32 %v5482, %v5650
  %5652 = vmatmul.bf16.gmra.mxu0 %v2898
  %v5653 = vpop.f32.mrf.mxu0
  %v5654 = vadd.f32 %v5485, %v5653
  %v5655 = vpop.f32.mrf.mxu0
  %v5656 = vadd.f32 %v5487, %v5655
  %5657 = vmatmul.bf16.gmra.mxu0 %v2910
  %v5658 = vpop.f32.mrf.mxu0
  %v5659 = vadd.f32 %v5490, %v5658
  %v5660 = vpop.f32.mrf.mxu0
  %v5661 = vadd.f32 %v5492, %v5660
  %5662 = vmatmul.bf16.gmra.mxu0 %v2922
  %v5663 = vpop.f32.mrf.mxu0
  %v5664 = vadd.f32 %v5495, %v5663
  %v5665 = vpop.f32.mrf.mxu0
  %v5666 = vadd.f32 %v5497, %v5665
  %5667 = vmatmul.bf16.gmra.mxu0 %v2934
  %v5668 = vpop.f32.mrf.mxu0
  %v5669 = vadd.f32 %v5500, %v5668
  %v5670 = vpop.f32.mrf.mxu0
  %v5671 = vadd.f32 %v5502, %v5670
  %5672 = vmatmul.bf16.gmra.mxu0 %v2946
  %v5673 = vpop.f32.mrf.mxu0
  %v5674 = vadd.f32 %v5505, %v5673
  %v5675 = vpop.f32.mrf.mxu0
  %v5676 = vadd.f32 %v5507, %v5675
  %5677 = vmatmul.bf16.gmra.mxu0 %v2958
  %v5678 = vpop.f32.mrf.mxu0
  %v5679 = vadd.f32 %v5510, %v5678
  %v5680 = vpop.f32.mrf.mxu0
  %v5681 = vadd.f32 %v5512, %v5680
  %5682 = vmatmul.bf16.gmra.mxu0 %v2970
  %v5683 = vpop.f32.mrf.mxu0
  %v5684 = vadd.f32 %v5515, %v5683
  %v5685 = vpop.f32.mrf.mxu0
  %v5686 = vadd.f32 %v5517, %v5685
  %5687 = vmatmul.bf16.gmra.mxu0 %v2982
  %v5688 = vpop.f32.mrf.mxu0
  %v5689 = vadd.f32 %v5520, %v5688
  %v5690 = vpop.f32.mrf.mxu0
  %v5691 = vadd.f32 %v5522, %v5690
  %5692 = vmatmul.bf16.gmra.mxu0 %v2994
  %v5693 = vpop.f32.mrf.mxu0
  %v5694 = vadd.f32 %v5525, %v5693
  %v5695 = vpop.f32.mrf.mxu0
  %v5696 = vadd.f32 %v5527, %v5695
  %5697 = vmatmul.bf16.gmra.mxu0 %v3006
  %v5698 = vpop.f32.mrf.mxu0
  %v5699 = vadd.f32 %v5530, %v5698
  %v5700 = vpop.f32.mrf.mxu0
  %v5701 = vadd.f32 %v5532, %v5700
  %5702 = vmatmul.bf16.gmra.mxu0 %v3018
  %v5703 = vpop.f32.mrf.mxu0
  %v5704 = vadd.f32 %v5535, %v5703
  %v5705 = vpop.f32.mrf.mxu0
  %v5706 = vadd.f32 %v5537, %v5705
  %5707 = vmatmul.bf16.gmra.mxu0 %v3030
  %v5708 = vpop.f32.mrf.mxu0
  %v5709 = vadd.f32 %v5540, %v5708
  %v5710 = vpop.f32.mrf.mxu0
  %v5711 = vadd.f32 %v5542, %v5710
  %5712 = vmatmul.bf16.gmra.mxu0 %v3042
  %v5713 = vpop.f32.mrf.mxu0
  %v5714 = vadd.f32 %v5545, %v5713
  %v5715 = vpop.f32.mrf.mxu0
  %v5716 = vadd.f32 %v5547, %v5715
  %5717 = vmatmul.bf16.gmra.mxu0 %v3054
  %v5718 = vpop.f32.mrf.mxu0
  %v5719 = vadd.f32 %v5550, %v5718
  %v5720 = vpop.f32.mrf.mxu0
  %v5721 = vadd.f32 %v5552, %v5720
  %5722 = vmatmul.bf16.gmra.mxu0 %v3066
  %v5723 = vpop.f32.mrf.mxu0
  %v5724 = vadd.f32 %v5555, %v5723
  %v5725 = vpop.f32.mrf.mxu0
  %v5726 = vadd.f32 %v5557, %v5725
  %5727 = vmatmul.bf16.gmra.mxu0 %v3078
  %v5728 = vpop.f32.mrf.mxu0
  %v5729 = vadd.f32 %v5560, %v5728
  %v5730 = vpop.f32.mrf.mxu0
  %v5731 = vadd.f32 %v5562, %v5730
  %5732 = vmatmul.bf16.gmra.mxu0 %v3090
  %v5733 = vpop.f32.mrf.mxu0
  %v5734 = vadd.f32 %v5565, %v5733
  %v5735 = vpop.f32.mrf.mxu0
  %v5736 = vadd.f32 %v5567, %v5735
  %5737 = vmatmul.bf16.gmra.mxu0 %v3102
  %v5738 = vpop.f32.mrf.mxu0
  %v5739 = vadd.f32 %v5570, %v5738
  %v5740 = vpop.f32.mrf.mxu0
  %v5741 = vadd.f32 %v5572, %v5740
  %5742 = vmatmul.bf16.gmra.mxu0 %v3114
  %v5743 = vpop.f32.mrf.mxu0
  %v5744 = vadd.f32 %v5575, %v5743
  %v5745 = vpop.f32.mrf.mxu0
  %v5746 = vadd.f32 %v5577, %v5745
  %5747 = vmatmul.bf16.gmra.mxu0 %v3126
  %v5748 = vpop.f32.mrf.mxu0
  %v5749 = vadd.f32 %v5580, %v5748
  %v5750 = vpop.f32.mrf.mxu0
  %v5751 = vadd.f32 %v5582, %v5750
  %5752 = vmatmul.bf16.gmra.mxu0 %v3138
  %v5753 = vpop.f32.mrf.mxu0
  %v5754 = vadd.f32 %v5585, %v5753
  %v5755 = vpop.f32.mrf.mxu0
  %v5756 = vadd.f32 %v5587, %v5755
  %5757 = vmatmul.bf16.gmra.mxu0 %v3150
  %v5758 = vpop.f32.mrf.mxu0
  %v5759 = vadd.f32 %v5590, %v5758
  %v5760 = vpop.f32.mrf.mxu0
  %v5761 = vadd.f32 %v5592, %v5760
  %5762 = vmatmul.bf16.gmra.mxu0 %v3162
  %v5763 = vpop.f32.mrf.mxu0
  %v5764 = vadd.f32 %v5595, %v5763
  %v5765 = vpop.f32.mrf.mxu0
  %v5766 = vadd.f32 %v5597, %v5765
  %5767 = vdwg.mxu0
  %5768 = vmatpush.bf16.msra.mxu0 %v4826
  %5769 = vmatpush.bf16.msra.mxu0 %v4825
  %5770 = vmatpush.bf16.msra.mxu0 %v4824
  %5771 = vmatpush.bf16.msra.mxu0 %v4823
  %5772 = vmatpush.bf16.msra.mxu0 %v4822
  %5773 = vmatpush.bf16.msra.mxu0 %v4821
  %5774 = vmatpush.bf16.msra.mxu0 %v4820
  %5775 = vmatpush.bf16.msra.mxu0 %v4819
  %5776 = vmatmul.bf16.gmra.mxu0 %v3293
  %v5777 = vpop.f32.mrf.mxu0
  %v5778 = vadd.f32 %v5609, %v5777
  %v5779 = vpop.f32.mrf.mxu0
  %v5780 = vadd.f32 %v5611, %v5779
  %5781 = vmatmul.bf16.gmra.mxu0 %v3296
  %v5782 = vpop.f32.mrf.mxu0
  %v5783 = vadd.f32 %v5614, %v5782
  %v5784 = vpop.f32.mrf.mxu0
  %v5785 = vadd.f32 %v5616, %v5784
  %5786 = vmatmul.bf16.gmra.mxu0 %v3299
  %v5787 = vpop.f32.mrf.mxu0
  %v5788 = vadd.f32 %v5619, %v5787
  %v5789 = vpop.f32.mrf.mxu0
  %v5790 = vadd.f32 %v5621, %v5789
  %5791 = vmatmul.bf16.gmra.mxu0 %v3302
  %v5792 = vpop.f32.mrf.mxu0
  %v5793 = vadd.f32 %v5624, %v5792
  %v5794 = vpop.f32.mrf.mxu0
  %v5795 = vadd.f32 %v5626, %v5794
  %5796 = vmatmul.bf16.gmra.mxu0 %v3305
  %v5797 = vpop.f32.mrf.mxu0
  %v5798 = vadd.f32 %v5629, %v5797
  %v5799 = vpop.f32.mrf.mxu0
  %v5800 = vadd.f32 %v5631, %v5799
  %5801 = vmatmul.bf16.gmra.mxu0 %v3308
  %v5802 = vpop.f32.mrf.mxu0
  %v5803 = vadd.f32 %v5634, %v5802
  %v5804 = vpop.f32.mrf.mxu0
  %v5805 = vadd.f32 %v5636, %v5804
  %5806 = vmatmul.bf16.gmra.mxu0 %v3311
  %v5807 = vpop.f32.mrf.mxu0
  %v5808 = vadd.f32 %v5639, %v5807
  %v5809 = vpop.f32.mrf.mxu0
  %v5810 = vadd.f32 %v5641, %v5809
  %5811 = vmatmul.bf16.gmra.mxu0 %v3314
  %v5812 = vpop.f32.mrf.mxu0
  %v5813 = vadd.f32 %v5644, %v5812
  %v5814 = vpop.f32.mrf.mxu0
  %v5815 = vadd.f32 %v5646, %v5814
  %5816 = vmatmul.bf16.gmra.mxu0 %v3317
  %v5817 = vpop.f32.mrf.mxu0
  %v5818 = vadd.f32 %v5649, %v5817
  %v5819 = vpop.f32.mrf.mxu0
  %v5820 = vadd.f32 %v5651, %v5819
  %5821 = vmatmul.bf16.gmra.mxu0 %v3320
  %v5822 = vpop.f32.mrf.mxu0
  %v5823 = vadd.f32 %v5654, %v5822
  %v5824 = vpop.f32.mrf.mxu0
  %v5825 = vadd.f32 %v5656, %v5824
  %5826 = vmatmul.bf16.gmra.mxu0 %v3323
  %v5827 = vpop.f32.mrf.mxu0
  %v5828 = vadd.f32 %v5659, %v5827
  %v5829 = vpop.f32.mrf.mxu0
  %v5830 = vadd.f32 %v5661, %v5829
  %5831 = vmatmul.bf16.gmra.mxu0 %v3326
  %v5832 = vpop.f32.mrf.mxu0
  %v5833 = vadd.f32 %v5664, %v5832
  %v5834 = vpop.f32.mrf.mxu0
  %v5835 = vadd.f32 %v5666, %v5834
  %5836 = vmatmul.bf16.gmra.mxu0 %v3329
  %v5837 = vpop.f32.mrf.mxu0
  %v5838 = vadd.f32 %v5669, %v5837
  %v5839 = vpop.f32.mrf.mxu0
  %v5840 = vadd.f32 %v5671, %v5839
  %5841 = vmatmul.bf16.gmra.mxu0 %v3332
  %v5842 = vpop.f32.mrf.mxu0
  %v5843 = vadd.f32 %v5674, %v5842
  %v5844 = vpop.f32.mrf.mxu0
  %v5845 = vadd.f32 %v5676, %v5844
  %5846 = vmatmul.bf16.gmra.mxu0 %v3335
  %v5847 = vpop.f32.mrf.mxu0
  %v5848 = vadd.f32 %v5679, %v5847
  %v5849 = vpop.f32.mrf.mxu0
  %v5850 = vadd.f32 %v5681, %v5849
  %5851 = vmatmul.bf16.gmra.mxu0 %v3338
  %v5852 = vpop.f32.mrf.mxu0
  %v5853 = vadd.f32 %v5684, %v5852
  %v5854 = vpop.f32.mrf.mxu0
  %v5855 = vadd.f32 %v5686, %v5854
  %5856 = vmatmul.bf16.gmra.mxu0 %v3341
  %v5857 = vpop.f32.mrf.mxu0
  %v5858 = vadd.f32 %v5689, %v5857
  %v5859 = vpop.f32.mrf.mxu0
  %v5860 = vadd.f32 %v5691, %v5859
  %5861 = vmatmul.bf16.gmra.mxu0 %v3344
  %v5862 = vpop.f32.mrf.mxu0
  %v5863 = vadd.f32 %v5694, %v5862
  %v5864 = vpop.f32.mrf.mxu0
  %v5865 = vadd.f32 %v5696, %v5864
  %5866 = vmatmul.bf16.gmra.mxu0 %v3347
  %v5867 = vpop.f32.mrf.mxu0
  %v5868 = vadd.f32 %v5699, %v5867
  %v5869 = vpop.f32.mrf.mxu0
  %v5870 = vadd.f32 %v5701, %v5869
  %5871 = vmatmul.bf16.gmra.mxu0 %v3350
  %v5872 = vpop.f32.mrf.mxu0
  %v5873 = vadd.f32 %v5704, %v5872
  %v5874 = vpop.f32.mrf.mxu0
  %v5875 = vadd.f32 %v5706, %v5874
  %5876 = vmatmul.bf16.gmra.mxu0 %v3353
  %v5877 = vpop.f32.mrf.mxu0
  %v5878 = vadd.f32 %v5709, %v5877
  %v5879 = vpop.f32.mrf.mxu0
  %v5880 = vadd.f32 %v5711, %v5879
  %5881 = vmatmul.bf16.gmra.mxu0 %v3356
  %v5882 = vpop.f32.mrf.mxu0
  %v5883 = vadd.f32 %v5714, %v5882
  %v5884 = vpop.f32.mrf.mxu0
  %v5885 = vadd.f32 %v5716, %v5884
  %5886 = vmatmul.bf16.gmra.mxu0 %v3359
  %v5887 = vpop.f32.mrf.mxu0
  %v5888 = vadd.f32 %v5719, %v5887
  %v5889 = vpop.f32.mrf.mxu0
  %v5890 = vadd.f32 %v5721, %v5889
  %5891 = vmatmul.bf16.gmra.mxu0 %v3362
  %v5892 = vpop.f32.mrf.mxu0
  %v5893 = vadd.f32 %v5724, %v5892
  %v5894 = vpop.f32.mrf.mxu0
  %v5895 = vadd.f32 %v5726, %v5894
  %5896 = vmatmul.bf16.gmra.mxu0 %v3365
  %v5897 = vpop.f32.mrf.mxu0
  %v5898 = vadd.f32 %v5729, %v5897
  %v5899 = vpop.f32.mrf.mxu0
  %v5900 = vadd.f32 %v5731, %v5899
  %5901 = vmatmul.bf16.gmra.mxu0 %v3368
  %v5902 = vpop.f32.mrf.mxu0
  %v5903 = vadd.f32 %v5734, %v5902
  %v5904 = vpop.f32.mrf.mxu0
  %v5905 = vadd.f32 %v5736, %v5904
  %5906 = vmatmul.bf16.gmra.mxu0 %v3371
  %v5907 = vpop.f32.mrf.mxu0
  %v5908 = vadd.f32 %v5739, %v5907
  %v5909 = vpop.f32.mrf.mxu0
  %v5910 = vadd.f32 %v5741, %v5909
  %5911 = vmatmul.bf16.gmra.mxu0 %v3374
  %v5912 = vpop.f32.mrf.mxu0
  %v5913 = vadd.f32 %v5744, %v5912
  %v5914 = vpop.f32.mrf.mxu0
  %v5915 = vadd.f32 %v5746, %v5914
  %5916 = vmatmul.bf16.gmra.mxu0 %v3377
  %v5917 = vpop.f32.mrf.mxu0
  %v5918 = vadd.f32 %v5749, %v5917
  %v5919 = vpop.f32.mrf.mxu0
  %v5920 = vadd.f32 %v5751, %v5919
  %5921 = vmatmul.bf16.gmra.mxu0 %v3380
  %v5922 = vpop.f32.mrf.mxu0
  %v5923 = vadd.f32 %v5754, %v5922
  %v5924 = vpop.f32.mrf.mxu0
  %v5925 = vadd.f32 %v5756, %v5924
  %5926 = vmatmul.bf16.gmra.mxu0 %v3383
  %v5927 = vpop.f32.mrf.mxu0
  %v5928 = vadd.f32 %v5759, %v5927
  %v5929 = vpop.f32.mrf.mxu0
  %v5930 = vadd.f32 %v5761, %v5929
  %5931 = vmatmul.bf16.gmra.mxu0 %v3386
  %v5932 = vpop.f32.mrf.mxu0
  %v5933 = vadd.f32 %v5764, %v5932
  %v5934 = vpop.f32.mrf.mxu0
  %v5935 = vadd.f32 %v5766, %v5934
  %5936 = vdwg.mxu0
  %5937 = vmatpush.bf16.msra.mxu0 %v4834
  %5938 = vmatpush.bf16.msra.mxu0 %v4833
  %5939 = vmatpush.bf16.msra.mxu0 %v4832
  %5940 = vmatpush.bf16.msra.mxu0 %v4831
  %5941 = vmatpush.bf16.msra.mxu0 %v4830
  %5942 = vmatpush.bf16.msra.mxu0 %v4829
  %5943 = vmatpush.bf16.msra.mxu0 %v4828
  %5944 = vmatpush.bf16.msra.mxu0 %v4827
  %5945 = vmatmul.bf16.gmra.mxu0 %v3547
  %v5946 = vpop.f32.mrf.mxu0
  %v5947 = vadd.f32 %v5778, %v5946
  %v5948 = vpop.f32.mrf.mxu0
  %v5949 = vadd.f32 %v5780, %v5948
  %5950 = vmatmul.bf16.gmra.mxu0 %v3548
  %v5951 = vpop.f32.mrf.mxu0
  %v5952 = vadd.f32 %v5783, %v5951
  %v5953 = vpop.f32.mrf.mxu0
  %v5954 = vadd.f32 %v5785, %v5953
  %5955 = vmatmul.bf16.gmra.mxu0 %v3549
  %v5956 = vpop.f32.mrf.mxu0
  %v5957 = vadd.f32 %v5788, %v5956
  %v5958 = vpop.f32.mrf.mxu0
  %v5959 = vadd.f32 %v5790, %v5958
  %5960 = vmatmul.bf16.gmra.mxu0 %v3550
  %v5961 = vpop.f32.mrf.mxu0
  %v5962 = vadd.f32 %v5793, %v5961
  %v5963 = vpop.f32.mrf.mxu0
  %v5964 = vadd.f32 %v5795, %v5963
  %5965 = vmatmul.bf16.gmra.mxu0 %v3551
  %v5966 = vpop.f32.mrf.mxu0
  %v5967 = vadd.f32 %v5798, %v5966
  %v5968 = vpop.f32.mrf.mxu0
  %v5969 = vadd.f32 %v5800, %v5968
  %5970 = vmatmul.bf16.gmra.mxu0 %v3552
  %v5971 = vpop.f32.mrf.mxu0
  %v5972 = vadd.f32 %v5803, %v5971
  %v5973 = vpop.f32.mrf.mxu0
  %v5974 = vadd.f32 %v5805, %v5973
  %5975 = vmatmul.bf16.gmra.mxu0 %v3553
  %v5976 = vpop.f32.mrf.mxu0
  %v5977 = vadd.f32 %v5808, %v5976
  %v5978 = vpop.f32.mrf.mxu0
  %v5979 = vadd.f32 %v5810, %v5978
  %5980 = vmatmul.bf16.gmra.mxu0 %v3554
  %v5981 = vpop.f32.mrf.mxu0
  %v5982 = vadd.f32 %v5813, %v5981
  %v5983 = vpop.f32.mrf.mxu0
  %v5984 = vadd.f32 %v5815, %v5983
  %5985 = vmatmul.bf16.gmra.mxu0 %v3555
  %v5986 = vpop.f32.mrf.mxu0
  %v5987 = vadd.f32 %v5818, %v5986
  %v5988 = vpop.f32.mrf.mxu0
  %v5989 = vadd.f32 %v5820, %v5988
  %5990 = vmatmul.bf16.gmra.mxu0 %v3556
  %v5991 = vpop.f32.mrf.mxu0
  %v5992 = vadd.f32 %v5823, %v5991
  %v5993 = vpop.f32.mrf.mxu0
  %v5994 = vadd.f32 %v5825, %v5993
  %5995 = vmatmul.bf16.gmra.mxu0 %v3557
  %v5996 = vpop.f32.mrf.mxu0
  %v5997 = vadd.f32 %v5828, %v5996
  %v5998 = vpop.f32.mrf.mxu0
  %v5999 = vadd.f32 %v5830, %v5998
  %6000 = vmatmul.bf16.gmra.mxu0 %v3558
  %v6001 = vpop.f32.mrf.mxu0
  %v6002 = vadd.f32 %v5833, %v6001
  %v6003 = vpop.f32.mrf.mxu0
  %v6004 = vadd.f32 %v5835, %v6003
  %6005 = vmatmul.bf16.gmra.mxu0 %v3559
  %v6006 = vpop.f32.mrf.mxu0
  %v6007 = vadd.f32 %v5838, %v6006
  %v6008 = vpop.f32.mrf.mxu0
  %v6009 = vadd.f32 %v5840, %v6008
  %6010 = vmatmul.bf16.gmra.mxu0 %v3560
  %v6011 = vpop.f32.mrf.mxu0
  %v6012 = vadd.f32 %v5843, %v6011
  %v6013 = vpop.f32.mrf.mxu0
  %v6014 = vadd.f32 %v5845, %v6013
  %6015 = vmatmul.bf16.gmra.mxu0 %v3561
  %v6016 = vpop.f32.mrf.mxu0
  %v6017 = vadd.f32 %v5848, %v6016
  %v6018 = vpop.f32.mrf.mxu0
  %v6019 = vadd.f32 %v5850, %v6018
  %6020 = vmatmul.bf16.gmra.mxu0 %v3562
  %v6021 = vpop.f32.mrf.mxu0
  %v6022 = vadd.f32 %v5853, %v6021
  %v6023 = vpop.f32.mrf.mxu0
  %v6024 = vadd.f32 %v5855, %v6023
  %6025 = vmatmul.bf16.gmra.mxu0 %v3563
  %v6026 = vpop.f32.mrf.mxu0
  %v6027 = vadd.f32 %v5858, %v6026
  %v6028 = vpop.f32.mrf.mxu0
  %v6029 = vadd.f32 %v5860, %v6028
  %6030 = vmatmul.bf16.gmra.mxu0 %v3564
  %v6031 = vpop.f32.mrf.mxu0
  %v6032 = vadd.f32 %v5863, %v6031
  %v6033 = vpop.f32.mrf.mxu0
  %v6034 = vadd.f32 %v5865, %v6033
  %6035 = vmatmul.bf16.gmra.mxu0 %v3565
  %v6036 = vpop.f32.mrf.mxu0
  %v6037 = vadd.f32 %v5868, %v6036
  %v6038 = vpop.f32.mrf.mxu0
  %v6039 = vadd.f32 %v5870, %v6038
  %6040 = vmatmul.bf16.gmra.mxu0 %v3566
  %v6041 = vpop.f32.mrf.mxu0
  %v6042 = vadd.f32 %v5873, %v6041
  %v6043 = vpop.f32.mrf.mxu0
  %v6044 = vadd.f32 %v5875, %v6043
  %6045 = vmatmul.bf16.gmra.mxu0 %v3567
  %v6046 = vpop.f32.mrf.mxu0
  %v6047 = vadd.f32 %v5878, %v6046
  %v6048 = vpop.f32.mrf.mxu0
  %v6049 = vadd.f32 %v5880, %v6048
  %6050 = vmatmul.bf16.gmra.mxu0 %v3568
  %v6051 = vpop.f32.mrf.mxu0
  %v6052 = vadd.f32 %v5883, %v6051
  %v6053 = vpop.f32.mrf.mxu0
  %v6054 = vadd.f32 %v5885, %v6053
  %6055 = vmatmul.bf16.gmra.mxu0 %v3569
  %v6056 = vpop.f32.mrf.mxu0
  %v6057 = vadd.f32 %v5888, %v6056
  %v6058 = vpop.f32.mrf.mxu0
  %v6059 = vadd.f32 %v5890, %v6058
  %6060 = vmatmul.bf16.gmra.mxu0 %v3570
  %v6061 = vpop.f32.mrf.mxu0
  %v6062 = vadd.f32 %v5893, %v6061
  %v6063 = vpop.f32.mrf.mxu0
  %v6064 = vadd.f32 %v5895, %v6063
  %6065 = vmatmul.bf16.gmra.mxu0 %v3571
  %v6066 = vpop.f32.mrf.mxu0
  %v6067 = vadd.f32 %v5898, %v6066
  %v6068 = vpop.f32.mrf.mxu0
  %v6069 = vadd.f32 %v5900, %v6068
  %6070 = vmatmul.bf16.gmra.mxu0 %v3572
  %v6071 = vpop.f32.mrf.mxu0
  %v6072 = vadd.f32 %v5903, %v6071
  %v6073 = vpop.f32.mrf.mxu0
  %v6074 = vadd.f32 %v5905, %v6073
  %6075 = vmatmul.bf16.gmra.mxu0 %v3573
  %v6076 = vpop.f32.mrf.mxu0
  %v6077 = vadd.f32 %v5908, %v6076
  %v6078 = vpop.f32.mrf.mxu0
  %v6079 = vadd.f32 %v5910, %v6078
  %6080 = vmatmul.bf16.gmra.mxu0 %v3574
  %v6081 = vpop.f32.mrf.mxu0
  %v6082 = vadd.f32 %v5913, %v6081
  %v6083 = vpop.f32.mrf.mxu0
  %v6084 = vadd.f32 %v5915, %v6083
  %6085 = vmatmul.bf16.gmra.mxu0 %v3575
  %v6086 = vpop.f32.mrf.mxu0
  %v6087 = vadd.f32 %v5918, %v6086
  %v6088 = vpop.f32.mrf.mxu0
  %v6089 = vadd.f32 %v5920, %v6088
  %6090 = vmatmul.bf16.gmra.mxu0 %v3576
  %v6091 = vpop.f32.mrf.mxu0
  %v6092 = vadd.f32 %v5923, %v6091
  %v6093 = vpop.f32.mrf.mxu0
  %v6094 = vadd.f32 %v5925, %v6093
  %6095 = vmatmul.bf16.gmra.mxu0 %v3577
  %v6096 = vpop.f32.mrf.mxu0
  %v6097 = vadd.f32 %v5928, %v6096
  %v6098 = vpop.f32.mrf.mxu0
  %v6099 = vadd.f32 %v5930, %v6098
  %6100 = vmatmul.bf16.gmra.mxu0 %v3578
  %v6101 = vpop.f32.mrf.mxu0
  %v6102 = vadd.f32 %v5933, %v6101
  %v6103 = vpop.f32.mrf.mxu0
  %v6104 = vadd.f32 %v5935, %v6103
  %6105 = vdwg.mxu0
  %6106 = vmatpush.bf16.msra.mxu0 %v4842
  %6107 = vmatpush.bf16.msra.mxu0 %v4841
  %6108 = vmatpush.bf16.msra.mxu0 %v4840
  %6109 = vmatpush.bf16.msra.mxu0 %v4839
  %6110 = vmatpush.bf16.msra.mxu0 %v4838
  %6111 = vmatpush.bf16.msra.mxu0 %v4837
  %6112 = vmatpush.bf16.msra.mxu0 %v4836
  %6113 = vmatpush.bf16.msra.mxu0 %v4835
  %6114 = vmatmul.bf16.gmra.mxu0 %v3718
  %v6115 = vpop.f32.mrf.mxu0
  %v6116 = vadd.f32 %v5947, %v6115
  %v6117 = vpop.f32.mrf.mxu0
  %v6118 = vadd.f32 %v5949, %v6117
  %6119 = vmatmul.bf16.gmra.mxu0 %v3730
  %v6120 = vpop.f32.mrf.mxu0
  %v6121 = vadd.f32 %v5952, %v6120
  %v6122 = vpop.f32.mrf.mxu0
  %v6123 = vadd.f32 %v5954, %v6122
  %6124 = vmatmul.bf16.gmra.mxu0 %v3742
  %v6125 = vpop.f32.mrf.mxu0
  %v6126 = vadd.f32 %v5957, %v6125
  %v6127 = vpop.f32.mrf.mxu0
  %v6128 = vadd.f32 %v5959, %v6127
  %6129 = vmatmul.bf16.gmra.mxu0 %v3754
  %v6130 = vpop.f32.mrf.mxu0
  %v6131 = vadd.f32 %v5962, %v6130
  %v6132 = vpop.f32.mrf.mxu0
  %v6133 = vadd.f32 %v5964, %v6132
  %6134 = vmatmul.bf16.gmra.mxu0 %v3766
  %v6135 = vpop.f32.mrf.mxu0
  %v6136 = vadd.f32 %v5967, %v6135
  %v6137 = vpop.f32.mrf.mxu0
  %v6138 = vadd.f32 %v5969, %v6137
  %6139 = vmatmul.bf16.gmra.mxu0 %v3778
  %v6140 = vpop.f32.mrf.mxu0
  %v6141 = vadd.f32 %v5972, %v6140
  %v6142 = vpop.f32.mrf.mxu0
  %v6143 = vadd.f32 %v5974, %v6142
  %6144 = vmatmul.bf16.gmra.mxu0 %v3790
  %v6145 = vpop.f32.mrf.mxu0
  %v6146 = vadd.f32 %v5977, %v6145
  %v6147 = vpop.f32.mrf.mxu0
  %v6148 = vadd.f32 %v5979, %v6147
  %6149 = vmatmul.bf16.gmra.mxu0 %v3802
  %v6150 = vpop.f32.mrf.mxu0
  %v6151 = vadd.f32 %v5982, %v6150
  %v6152 = vpop.f32.mrf.mxu0
  %v6153 = vadd.f32 %v5984, %v6152
  %6154 = vmatmul.bf16.gmra.mxu0 %v3814
  %v6155 = vpop.f32.mrf.mxu0
  %v6156 = vadd.f32 %v5987, %v6155
  %v6157 = vpop.f32.mrf.mxu0
  %v6158 = vadd.f32 %v5989, %v6157
  %6159 = vmatmul.bf16.gmra.mxu0 %v3826
  %v6160 = vpop.f32.mrf.mxu0
  %v6161 = vadd.f32 %v5992, %v6160
  %v6162 = vpop.f32.mrf.mxu0
  %v6163 = vadd.f32 %v5994, %v6162
  %6164 = vmatmul.bf16.gmra.mxu0 %v3838
  %v6165 = vpop.f32.mrf.mxu0
  %v6166 = vadd.f32 %v5997, %v6165
  %v6167 = vpop.f32.mrf.mxu0
  %v6168 = vadd.f32 %v5999, %v6167
  %6169 = vmatmul.bf16.gmra.mxu0 %v3850
  %v6170 = vpop.f32.mrf.mxu0
  %v6171 = vadd.f32 %v6002, %v6170
  %v6172 = vpop.f32.mrf.mxu0
  %v6173 = vadd.f32 %v6004, %v6172
  %6174 = vmatmul.bf16.gmra.mxu0 %v3862
  %v6175 = vpop.f32.mrf.mxu0
  %v6176 = vadd.f32 %v6007, %v6175
  %v6177 = vpop.f32.mrf.mxu0
  %v6178 = vadd.f32 %v6009, %v6177
  %6179 = vmatmul.bf16.gmra.mxu0 %v3874
  %v6180 = vpop.f32.mrf.mxu0
  %v6181 = vadd.f32 %v6012, %v6180
  %v6182 = vpop.f32.mrf.mxu0
  %v6183 = vadd.f32 %v6014, %v6182
  %6184 = vmatmul.bf16.gmra.mxu0 %v3886
  %v6185 = vpop.f32.mrf.mxu0
  %v6186 = vadd.f32 %v6017, %v6185
  %v6187 = vpop.f32.mrf.mxu0
  %v6188 = vadd.f32 %v6019, %v6187
  %6189 = vmatmul.bf16.gmra.mxu0 %v3898
  %v6190 = vpop.f32.mrf.mxu0
  %v6191 = vadd.f32 %v6022, %v6190
  %v6192 = vpop.f32.mrf.mxu0
  %v6193 = vadd.f32 %v6024, %v6192
  %6194 = vmatmul.bf16.gmra.mxu0 %v3910
  %v6195 = vpop.f32.mrf.mxu0
  %v6196 = vadd.f32 %v6027, %v6195
  %v6197 = vpop.f32.mrf.mxu0
  %v6198 = vadd.f32 %v6029, %v6197
  %6199 = vmatmul.bf16.gmra.mxu0 %v3922
  %v6200 = vpop.f32.mrf.mxu0
  %v6201 = vadd.f32 %v6032, %v6200
  %v6202 = vpop.f32.mrf.mxu0
  %v6203 = vadd.f32 %v6034, %v6202
  %6204 = vmatmul.bf16.gmra.mxu0 %v3934
  %v6205 = vpop.f32.mrf.mxu0
  %v6206 = vadd.f32 %v6037, %v6205
  %v6207 = vpop.f32.mrf.mxu0
  %v6208 = vadd.f32 %v6039, %v6207
  %6209 = vmatmul.bf16.gmra.mxu0 %v3946
  %v6210 = vpop.f32.mrf.mxu0
  %v6211 = vadd.f32 %v6042, %v6210
  %v6212 = vpop.f32.mrf.mxu0
  %v6213 = vadd.f32 %v6044, %v6212
  %6214 = vmatmul.bf16.gmra.mxu0 %v3958
  %v6215 = vpop.f32.mrf.mxu0
  %v6216 = vadd.f32 %v6047, %v6215
  %v6217 = vpop.f32.mrf.mxu0
  %v6218 = vadd.f32 %v6049, %v6217
  %6219 = vmatmul.bf16.gmra.mxu0 %v3970
  %v6220 = vpop.f32.mrf.mxu0
  %v6221 = vadd.f32 %v6052, %v6220
  %v6222 = vpop.f32.mrf.mxu0
  %v6223 = vadd.f32 %v6054, %v6222
  %6224 = vmatmul.bf16.gmra.mxu0 %v3982
  %v6225 = vpop.f32.mrf.mxu0
  %v6226 = vadd.f32 %v6057, %v6225
  %v6227 = vpop.f32.mrf.mxu0
  %v6228 = vadd.f32 %v6059, %v6227
  %6229 = vmatmul.bf16.gmra.mxu0 %v3994
  %v6230 = vpop.f32.mrf.mxu0
  %v6231 = vadd.f32 %v6062, %v6230
  %v6232 = vpop.f32.mrf.mxu0
  %v6233 = vadd.f32 %v6064, %v6232
  %6234 = vmatmul.bf16.gmra.mxu0 %v4006
  %v6235 = vpop.f32.mrf.mxu0
  %v6236 = vadd.f32 %v6067, %v6235
  %v6237 = vpop.f32.mrf.mxu0
  %v6238 = vadd.f32 %v6069, %v6237
  %6239 = vmatmul.bf16.gmra.mxu0 %v4018
  %v6240 = vpop.f32.mrf.mxu0
  %v6241 = vadd.f32 %v6072, %v6240
  %v6242 = vpop.f32.mrf.mxu0
  %v6243 = vadd.f32 %v6074, %v6242
  %6244 = vmatmul.bf16.gmra.mxu0 %v4030
  %v6245 = vpop.f32.mrf.mxu0
  %v6246 = vadd.f32 %v6077, %v6245
  %v6247 = vpop.f32.mrf.mxu0
  %v6248 = vadd.f32 %v6079, %v6247
  %6249 = vmatmul.bf16.gmra.mxu0 %v4042
  %v6250 = vpop.f32.mrf.mxu0
  %v6251 = vadd.f32 %v6082, %v6250
  %v6252 = vpop.f32.mrf.mxu0
  %v6253 = vadd.f32 %v6084, %v6252
  %6254 = vmatmul.bf16.gmra.mxu0 %v4054
  %v6255 = vpop.f32.mrf.mxu0
  %v6256 = vadd.f32 %v6087, %v6255
  %v6257 = vpop.f32.mrf.mxu0
  %v6258 = vadd.f32 %v6089, %v6257
  %6259 = vmatmul.bf16.gmra.mxu0 %v4066
  %v6260 = vpop.f32.mrf.mxu0
  %v6261 = vadd.f32 %v6092, %v6260
  %v6262 = vpop.f32.mrf.mxu0
  %v6263 = vadd.f32 %v6094, %v6262
  %6264 = vmatmul.bf16.gmra.mxu0 %v4078
  %v6265 = vpop.f32.mrf.mxu0
  %v6266 = vadd.f32 %v6097, %v6265
  %v6267 = vpop.f32.mrf.mxu0
  %v6268 = vadd.f32 %v6099, %v6267
  %6269 = vmatmul.bf16.gmra.mxu0 %v4090
  %v6270 = vpop.f32.mrf.mxu0
  %v6271 = vadd.f32 %v6102, %v6270
  %v6272 = vpop.f32.mrf.mxu0
  %v6273 = vadd.f32 %v6104, %v6272
  %6274 = vdwg.mxu0
  %6275 = vmatpush.bf16.msra.mxu0 %v4850
  %6276 = vmatpush.bf16.msra.mxu0 %v4849
  %6277 = vmatpush.bf16.msra.mxu0 %v4848
  %6278 = vmatpush.bf16.msra.mxu0 %v4847
  %6279 = vmatpush.bf16.msra.mxu0 %v4846
  %6280 = vmatpush.bf16.msra.mxu0 %v4845
  %6281 = vmatpush.bf16.msra.mxu0 %v4844
  %6282 = vmatpush.bf16.msra.mxu0 %v4843
  %6283 = vmatmul.bf16.gmra.mxu0 %v4221
  %v6284 = vpop.f32.mrf.mxu0
  %v6285 = vadd.f32 %v6116, %v6284
  %v6286 = vpop.f32.mrf.mxu0
  %v6287 = vadd.f32 %v6118, %v6286
  %6288 = vmatmul.bf16.gmra.mxu0 %v4224
  %v6289 = vpop.f32.mrf.mxu0
  %v6290 = vadd.f32 %v6121, %v6289
  %v6291 = vpop.f32.mrf.mxu0
  %v6292 = vadd.f32 %v6123, %v6291
  %6293 = vmatmul.bf16.gmra.mxu0 %v4227
  %v6294 = vpop.f32.mrf.mxu0
  %v6295 = vadd.f32 %v6126, %v6294
  %v6296 = vpop.f32.mrf.mxu0
  %v6297 = vadd.f32 %v6128, %v6296
  %6298 = vmatmul.bf16.gmra.mxu0 %v4230
  %v6299 = vpop.f32.mrf.mxu0
  %v6300 = vadd.f32 %v6131, %v6299
  %v6301 = vpop.f32.mrf.mxu0
  %v6302 = vadd.f32 %v6133, %v6301
  %6303 = vmatmul.bf16.gmra.mxu0 %v4233
  %v6304 = vpop.f32.mrf.mxu0
  %v6305 = vadd.f32 %v6136, %v6304
  %v6306 = vpop.f32.mrf.mxu0
  %v6307 = vadd.f32 %v6138, %v6306
  %6308 = vmatmul.bf16.gmra.mxu0 %v4236
  %v6309 = vpop.f32.mrf.mxu0
  %v6310 = vadd.f32 %v6141, %v6309
  %v6311 = vpop.f32.mrf.mxu0
  %v6312 = vadd.f32 %v6143, %v6311
  %6313 = vmatmul.bf16.gmra.mxu0 %v4239
  %v6314 = vpop.f32.mrf.mxu0
  %v6315 = vadd.f32 %v6146, %v6314
  %v6316 = vpop.f32.mrf.mxu0
  %v6317 = vadd.f32 %v6148, %v6316
  %6318 = vmatmul.bf16.gmra.mxu0 %v4242
  %v6319 = vpop.f32.mrf.mxu0
  %v6320 = vadd.f32 %v6151, %v6319
  %v6321 = vpop.f32.mrf.mxu0
  %v6322 = vadd.f32 %v6153, %v6321
  %6323 = vmatmul.bf16.gmra.mxu0 %v4245
  %v6324 = vpop.f32.mrf.mxu0
  %v6325 = vadd.f32 %v6156, %v6324
  %v6326 = vpop.f32.mrf.mxu0
  %v6327 = vadd.f32 %v6158, %v6326
  %6328 = vmatmul.bf16.gmra.mxu0 %v4248
  %v6329 = vpop.f32.mrf.mxu0
  %v6330 = vadd.f32 %v6161, %v6329
  %v6331 = vpop.f32.mrf.mxu0
  %v6332 = vadd.f32 %v6163, %v6331
  %6333 = vmatmul.bf16.gmra.mxu0 %v4251
  %v6334 = vpop.f32.mrf.mxu0
  %v6335 = vadd.f32 %v6166, %v6334
  %v6336 = vpop.f32.mrf.mxu0
  %v6337 = vadd.f32 %v6168, %v6336
  %6338 = vmatmul.bf16.gmra.mxu0 %v4254
  %v6339 = vpop.f32.mrf.mxu0
  %v6340 = vadd.f32 %v6171, %v6339
  %v6341 = vpop.f32.mrf.mxu0
  %v6342 = vadd.f32 %v6173, %v6341
  %6343 = vmatmul.bf16.gmra.mxu0 %v4257
  %v6344 = vpop.f32.mrf.mxu0
  %v6345 = vadd.f32 %v6176, %v6344
  %v6346 = vpop.f32.mrf.mxu0
  %v6347 = vadd.f32 %v6178, %v6346
  %6348 = vmatmul.bf16.gmra.mxu0 %v4260
  %v6349 = vpop.f32.mrf.mxu0
  %v6350 = vadd.f32 %v6181, %v6349
  %v6351 = vpop.f32.mrf.mxu0
  %v6352 = vadd.f32 %v6183, %v6351
  %6353 = vmatmul.bf16.gmra.mxu0 %v4263
  %v6354 = vpop.f32.mrf.mxu0
  %v6355 = vadd.f32 %v6186, %v6354
  %v6356 = vpop.f32.mrf.mxu0
  %v6357 = vadd.f32 %v6188, %v6356
  %6358 = vmatmul.bf16.gmra.mxu0 %v4266
  %v6359 = vpop.f32.mrf.mxu0
  %v6360 = vadd.f32 %v6191, %v6359
  %v6361 = vpop.f32.mrf.mxu0
  %v6362 = vadd.f32 %v6193, %v6361
  %6363 = vmatmul.bf16.gmra.mxu0 %v4269
  %v6364 = vpop.f32.mrf.mxu0
  %v6365 = vadd.f32 %v6196, %v6364
  %v6366 = vpop.f32.mrf.mxu0
  %v6367 = vadd.f32 %v6198, %v6366
  %6368 = vmatmul.bf16.gmra.mxu0 %v4272
  %v6369 = vpop.f32.mrf.mxu0
  %v6370 = vadd.f32 %v6201, %v6369
  %v6371 = vpop.f32.mrf.mxu0
  %v6372 = vadd.f32 %v6203, %v6371
  %6373 = vmatmul.bf16.gmra.mxu0 %v4275
  %v6374 = vpop.f32.mrf.mxu0
  %v6375 = vadd.f32 %v6206, %v6374
  %v6376 = vpop.f32.mrf.mxu0
  %v6377 = vadd.f32 %v6208, %v6376
  %6378 = vmatmul.bf16.gmra.mxu0 %v4278
  %v6379 = vpop.f32.mrf.mxu0
  %v6380 = vadd.f32 %v6211, %v6379
  %v6381 = vpop.f32.mrf.mxu0
  %v6382 = vadd.f32 %v6213, %v6381
  %6383 = vmatmul.bf16.gmra.mxu0 %v4281
  %v6384 = vpop.f32.mrf.mxu0
  %v6385 = vadd.f32 %v6216, %v6384
  %v6386 = vpop.f32.mrf.mxu0
  %v6387 = vadd.f32 %v6218, %v6386
  %6388 = vmatmul.bf16.gmra.mxu0 %v4284
  %v6389 = vpop.f32.mrf.mxu0
  %v6390 = vadd.f32 %v6221, %v6389
  %v6391 = vpop.f32.mrf.mxu0
  %v6392 = vadd.f32 %v6223, %v6391
  %6393 = vmatmul.bf16.gmra.mxu0 %v4287
  %v6394 = vpop.f32.mrf.mxu0
  %v6395 = vadd.f32 %v6226, %v6394
  %v6396 = vpop.f32.mrf.mxu0
  %v6397 = vadd.f32 %v6228, %v6396
  %6398 = vmatmul.bf16.gmra.mxu0 %v4290
  %v6399 = vpop.f32.mrf.mxu0
  %v6400 = vadd.f32 %v6231, %v6399
  %v6401 = vpop.f32.mrf.mxu0
  %v6402 = vadd.f32 %v6233, %v6401
  %6403 = vmatmul.bf16.gmra.mxu0 %v4293
  %v6404 = vpop.f32.mrf.mxu0
  %v6405 = vadd.f32 %v6236, %v6404
  %v6406 = vpop.f32.mrf.mxu0
  %v6407 = vadd.f32 %v6238, %v6406
  %6408 = vmatmul.bf16.gmra.mxu0 %v4296
  %v6409 = vpop.f32.mrf.mxu0
  %v6410 = vadd.f32 %v6241, %v6409
  %v6411 = vpop.f32.mrf.mxu0
  %v6412 = vadd.f32 %v6243, %v6411
  %6413 = vmatmul.bf16.gmra.mxu0 %v4299
  %v6414 = vpop.f32.mrf.mxu0
  %v6415 = vadd.f32 %v6246, %v6414
  %v6416 = vpop.f32.mrf.mxu0
  %v6417 = vadd.f32 %v6248, %v6416
  %6418 = vmatmul.bf16.gmra.mxu0 %v4302
  %v6419 = vpop.f32.mrf.mxu0
  %v6420 = vadd.f32 %v6251, %v6419
  %v6421 = vpop.f32.mrf.mxu0
  %v6422 = vadd.f32 %v6253, %v6421
  %6423 = vmatmul.bf16.gmra.mxu0 %v4305
  %v6424 = vpop.f32.mrf.mxu0
  %v6425 = vadd.f32 %v6256, %v6424
  %v6426 = vpop.f32.mrf.mxu0
  %v6427 = vadd.f32 %v6258, %v6426
  %6428 = vmatmul.bf16.gmra.mxu0 %v4308
  %v6429 = vpop.f32.mrf.mxu0
  %v6430 = vadd.f32 %v6261, %v6429
  %v6431 = vpop.f32.mrf.mxu0
  %v6432 = vadd.f32 %v6263, %v6431
  %6433 = vmatmul.bf16.gmra.mxu0 %v4311
  %v6434 = vpop.f32.mrf.mxu0
  %v6435 = vadd.f32 %v6266, %v6434
  %v6436 = vpop.f32.mrf.mxu0
  %v6437 = vadd.f32 %v6268, %v6436
  %6438 = vmatmul.bf16.gmra.mxu0 %v4314
  %v6439 = vpop.f32.mrf.mxu0
  %v6440 = vadd.f32 %v6271, %v6439
  %v6441 = vpop.f32.mrf.mxu0
  %v6442 = vadd.f32 %v6273, %v6441
  %6443 = vdwg.mxu0
  %v6444 = vld [vmem:[%s2] sm:$0x1]
  %v6445 = vld [vmem:[%s3] sm:$0x1]
  %v6446 = vadd.f32 %v6285, %v6287
  %v6447 = vadd.f32 %v6446, %v6290
  %v6448 = vadd.f32 %v6447, %v6292
  %v6449 = vadd.f32 %v6448, %v6295
  %v6450 = vadd.f32 %v6449, %v6297
  %v6451 = vadd.f32 %v6450, %v6300
  %v6452 = vadd.f32 %v6451, %v6302
  %v6453 = vadd.f32 %v6452, %v6305
  %v6454 = vadd.f32 %v6453, %v6307
  %v6455 = vadd.f32 %v6454, %v6310
  %v6456 = vadd.f32 %v6455, %v6312
  %v6457 = vadd.f32 %v6456, %v6315
  %v6458 = vadd.f32 %v6457, %v6317
  %v6459 = vadd.f32 %v6458, %v6320
  %v6460 = vadd.f32 %v6459, %v6322
  %v6461 = vadd.f32 %v6460, %v6325
  %v6462 = vadd.f32 %v6461, %v6327
  %v6463 = vadd.f32 %v6462, %v6330
  %v6464 = vadd.f32 %v6463, %v6332
  %v6465 = vadd.f32 %v6464, %v6335
  %v6466 = vadd.f32 %v6465, %v6337
  %v6467 = vadd.f32 %v6466, %v6340
  %v6468 = vadd.f32 %v6467, %v6342
  %v6469 = vadd.f32 %v6468, %v6345
  %v6470 = vadd.f32 %v6469, %v6347
  %v6471 = vadd.f32 %v6470, %v6350
  %v6472 = vadd.f32 %v6471, %v6352
  %v6473 = vadd.f32 %v6472, %v6355
  %v6474 = vadd.f32 %v6473, %v6357
  %v6475 = vadd.f32 %v6474, %v6360
  %v6476 = vadd.f32 %v6475, %v6362
  %v6477 = vadd.f32 %v6476, %v6365
  %v6478 = vadd.f32 %v6477, %v6367
  %v6479 = vadd.f32 %v6478, %v6370
  %v6480 = vadd.f32 %v6479, %v6372
  %v6481 = vadd.f32 %v6480, %v6375
  %v6482 = vadd.f32 %v6481, %v6377
  %v6483 = vadd.f32 %v6482, %v6380
  %v6484 = vadd.f32 %v6483, %v6382
  %v6485 = vadd.f32 %v6484, %v6385
  %v6486 = vadd.f32 %v6485, %v6387
  %v6487 = vadd.f32 %v6486, %v6390
  %v6488 = vadd.f32 %v6487, %v6392
  %v6489 = vadd.f32 %v6488, %v6395
  %v6490 = vadd.f32 %v6489, %v6397
  %v6491 = vadd.f32 %v6490, %v6400
  %v6492 = vadd.f32 %v6491, %v6402
  %v6493 = vadd.f32 %v6492, %v6405
  %v6494 = vadd.f32 %v6493, %v6407
  %v6495 = vadd.f32 %v6494, %v6410
  %v6496 = vadd.f32 %v6495, %v6412
  %v6497 = vadd.f32 %v6496, %v6415
  %v6498 = vadd.f32 %v6497, %v6417
  %v6499 = vadd.f32 %v6498, %v6420
  %v6500 = vadd.f32 %v6499, %v6422
  %v6501 = vadd.f32 %v6500, %v6425
  %v6502 = vadd.f32 %v6501, %v6427
  %v6503 = vadd.f32 %v6502, %v6430
  %v6504 = vadd.f32 %v6503, %v6432
  %v6505 = vadd.f32 %v6504, %v6435
  %v6506 = vadd.f32 %v6505, %v6437
  %v6507 = vadd.f32 %v6506, %v6440
  %v6508 = vadd.f32 %v6507, %v6442
  %v6509 = vrot.slane %v6508, 4
  %v6510 = vadd.f32 %v6508, %v6509
  %v6511 = vrot.slane %v6510, 2
  %v6512 = vadd.f32 %v6510, %v6511
  %v6513 = vrot.slane %v6512, 1
  %v6514 = vadd.f32 %v6512, %v6513
  %v6515 = vmul.f32 %v6285, %v6285
  %v6516 = vmul.f32 %v6287, %v6287
  %v6517 = vmul.f32 %v6290, %v6290
  %v6518 = vmul.f32 %v6292, %v6292
  %v6519 = vmul.f32 %v6295, %v6295
  %v6520 = vmul.f32 %v6297, %v6297
  %v6521 = vmul.f32 %v6300, %v6300
  %v6522 = vmul.f32 %v6302, %v6302
  %v6523 = vmul.f32 %v6305, %v6305
  %v6524 = vmul.f32 %v6307, %v6307
  %v6525 = vmul.f32 %v6310, %v6310
  %v6526 = vmul.f32 %v6312, %v6312
  %v6527 = vmul.f32 %v6315, %v6315
  %v6528 = vmul.f32 %v6317, %v6317
  %v6529 = vmul.f32 %v6320, %v6320
  %v6530 = vmul.f32 %v6322, %v6322
  %v6531 = vmul.f32 %v6325, %v6325
  %v6532 = vmul.f32 %v6327, %v6327
  %v6533 = vmul.f32 %v6330, %v6330
  %v6534 = vmul.f32 %v6332, %v6332
  %v6535 = vmul.f32 %v6335, %v6335
  %v6536 = vmul.f32 %v6337, %v6337
  %v6537 = vmul.f32 %v6340, %v6340
  %v6538 = vmul.f32 %v6342, %v6342
  %v6539 = vmul.f32 %v6345, %v6345
  %v6540 = vmul.f32 %v6347, %v6347
  %v6541 = vmul.f32 %v6350, %v6350
  %v6542 = vmul.f32 %v6352, %v6352
  %v6543 = vmul.f32 %v6355, %v6355
  %v6544 = vmul.f32 %v6357, %v6357
  %v6545 = vmul.f32 %v6360, %v6360
  %v6546 = vmul.f32 %v6362, %v6362
  %v6547 = vmul.f32 %v6365, %v6365
  %v6548 = vmul.f32 %v6367, %v6367
  %v6549 = vmul.f32 %v6370, %v6370
  %v6550 = vmul.f32 %v6372, %v6372
  %v6551 = vmul.f32 %v6375, %v6375
  %v6552 = vmul.f32 %v6377, %v6377
  %v6553 = vmul.f32 %v6380, %v6380
  %v6554 = vmul.f32 %v6382, %v6382
  %v6555 = vmul.f32 %v6385, %v6385
  %v6556 = vmul.f32 %v6387, %v6387
  %v6557 = vmul.f32 %v6390, %v6390
  %v6558 = vmul.f32 %v6392, %v6392
  %v6559 = vmul.f32 %v6395, %v6395
  %v6560 = vmul.f32 %v6397, %v6397
  %v6561 = vmul.f32 %v6400, %v6400
  %v6562 = vmul.f32 %v6402, %v6402
  %v6563 = vmul.f32 %v6405, %v6405
  %v6564 = vmul.f32 %v6407, %v6407
  %v6565 = vmul.f32 %v6410, %v6410
  %v6566 = vmul.f32 %v6412, %v6412
  %v6567 = vmul.f32 %v6415, %v6415
  %v6568 = vmul.f32 %v6417, %v6417
  %v6569 = vmul.f32 %v6420, %v6420
  %v6570 = vmul.f32 %v6422, %v6422
  %v6571 = vmul.f32 %v6425, %v6425
  %v6572 = vmul.f32 %v6427, %v6427
  %v6573 = vmul.f32 %v6430, %v6430
  %v6574 = vmul.f32 %v6432, %v6432
  %v6575 = vmul.f32 %v6435, %v6435
  %v6576 = vmul.f32 %v6437, %v6437
  %v6577 = vmul.f32 %v6440, %v6440
  %v6578 = vmul.f32 %v6442, %v6442
  %v6579 = vadd.f32 %v6515, %v6516
  %v6580 = vadd.f32 %v6579, %v6517
  %v6581 = vadd.f32 %v6580, %v6518
  %v6582 = vadd.f32 %v6581, %v6519
  %v6583 = vadd.f32 %v6582, %v6520
  %v6584 = vadd.f32 %v6583, %v6521
  %v6585 = vadd.f32 %v6584, %v6522
  %v6586 = vadd.f32 %v6585, %v6523
  %v6587 = vadd.f32 %v6586, %v6524
  %v6588 = vadd.f32 %v6587, %v6525
  %v6589 = vadd.f32 %v6588, %v6526
  %v6590 = vadd.f32 %v6589, %v6527
  %v6591 = vadd.f32 %v6590, %v6528
  %v6592 = vadd.f32 %v6591, %v6529
  %v6593 = vadd.f32 %v6592, %v6530
  %v6594 = vadd.f32 %v6593, %v6531
  %v6595 = vadd.f32 %v6594, %v6532
  %v6596 = vadd.f32 %v6595, %v6533
  %v6597 = vadd.f32 %v6596, %v6534
  %v6598 = vadd.f32 %v6597, %v6535
  %v6599 = vadd.f32 %v6598, %v6536
  %v6600 = vadd.f32 %v6599, %v6537
  %v6601 = vadd.f32 %v6600, %v6538
  %v6602 = vadd.f32 %v6601, %v6539
  %v6603 = vadd.f32 %v6602, %v6540
  %v6604 = vadd.f32 %v6603, %v6541
  %v6605 = vadd.f32 %v6604, %v6542
  %v6606 = vadd.f32 %v6605, %v6543
  %v6607 = vadd.f32 %v6606, %v6544
  %v6608 = vadd.f32 %v6607, %v6545
  %v6609 = vadd.f32 %v6608, %v6546
  %v6610 = vadd.f32 %v6609, %v6547
  %v6611 = vadd.f32 %v6610, %v6548
  %v6612 = vadd.f32 %v6611, %v6549
  %v6613 = vadd.f32 %v6612, %v6550
  %v6614 = vadd.f32 %v6613, %v6551
  %v6615 = vadd.f32 %v6614, %v6552
  %v6616 = vadd.f32 %v6615, %v6553
  %v6617 = vadd.f32 %v6616, %v6554
  %v6618 = vadd.f32 %v6617, %v6555
  %v6619 = vadd.f32 %v6618, %v6556
  %v6620 = vadd.f32 %v6619, %v6557
  %v6621 = vadd.f32 %v6620, %v6558
  %v6622 = vadd.f32 %v6621, %v6559
  %v6623 = vadd.f32 %v6622, %v6560
  %v6624 = vadd.f32 %v6623, %v6561
  %v6625 = vadd.f32 %v6624, %v6562
  %v6626 = vadd.f32 %v6625, %v6563
  %v6627 = vadd.f32 %v6626, %v6564
  %v6628 = vadd.f32 %v6627, %v6565
  %v6629 = vadd.f32 %v6628, %v6566
  %v6630 = vadd.f32 %v6629, %v6567
  %v6631 = vadd.f32 %v6630, %v6568
  %v6632 = vadd.f32 %v6631, %v6569
  %v6633 = vadd.f32 %v6632, %v6570
  %v6634 = vadd.f32 %v6633, %v6571
  %v6635 = vadd.f32 %v6634, %v6572
  %v6636 = vadd.f32 %v6635, %v6573
  %v6637 = vadd.f32 %v6636, %v6574
  %v6638 = vadd.f32 %v6637, %v6575
  %v6639 = vadd.f32 %v6638, %v6576
  %v6640 = vadd.f32 %v6639, %v6577
  %v6641 = vadd.f32 %v6640, %v6578
  %v6642 = vrot.slane %v6641, 4
  %v6643 = vadd.f32 %v6641, %v6642
  %v6644 = vrot.slane %v6643, 2
  %v6645 = vadd.f32 %v6643, %v6644
  %v6646 = vrot.slane %v6645, 1
  %v6647 = vadd.f32 %v6645, %v6646
  %v6648 = vmul.f32 %v6514, 0.001953125
  %v6649 = vmul.f32 %v6647, 0.001953125
  %v6650 = vmul.f32 %v6648, %v6648
  %v6651 = vsub.f32 %v6649, %v6650
  %v6652 = vmax.f32 %v6651, 0.0
  %v6653 = vadd.f32 %v6652, 1e-05
  %v6654 = vrsqrt.pop %v6653
  %v6655 = vmul.f32 %v6654, %v6653
  %v6656 = vmul.f32 %v6655, %v6654
  %v6657 = vmul.f32 0.5, %v6656
  %v6658 = vsub.f32 1.5, %v6657
  %v6659 = vmul.f32 %v6654, %v6658
  %vm6660 = vweird.f32 %v6653
  %vm6661 = vweird.f32 %v6654
  %vm6662 = vmor %vm6660, %vm6661
  %v6663 = vsel %vm6662, %v6654, %v6659
  %v6664 = vmul.f32 %v6444, %v6663
  %v6665 = vmul.f32 %v6648, %v6664
  %v6666 = vsub.f32 %v6445, %v6665
  %v6668 = vperm.slane %v6664, 0
  %v6670 = vmul.f32 %v6285, %v6668
  %v6671 = vmul.f32 %v6287, %v6668
  %v6672 = vmul.f32 %v6290, %v6668
  %v6673 = vmul.f32 %v6292, %v6668
  %v6674 = vmul.f32 %v6295, %v6668
  %v6675 = vmul.f32 %v6297, %v6668
  %v6676 = vmul.f32 %v6300, %v6668
  %v6677 = vmul.f32 %v6302, %v6668
  %v6678 = vmul.f32 %v6305, %v6668
  %v6679 = vmul.f32 %v6307, %v6668
  %v6680 = vmul.f32 %v6310, %v6668
  %v6681 = vmul.f32 %v6312, %v6668
  %v6682 = vmul.f32 %v6315, %v6668
  %v6683 = vmul.f32 %v6317, %v6668
  %v6684 = vmul.f32 %v6320, %v6668
  %v6685 = vmul.f32 %v6322, %v6668
  %v6686 = vmul.f32 %v6325, %v6668
  %v6687 = vmul.f32 %v6327, %v6668
  %v6688 = vmul.f32 %v6330, %v6668
  %v6689 = vmul.f32 %v6332, %v6668
  %v6690 = vmul.f32 %v6335, %v6668
  %v6691 = vmul.f32 %v6337, %v6668
  %v6692 = vmul.f32 %v6340, %v6668
  %v6693 = vmul.f32 %v6342, %v6668
  %v6694 = vmul.f32 %v6345, %v6668
  %v6695 = vmul.f32 %v6347, %v6668
  %v6696 = vmul.f32 %v6350, %v6668
  %v6697 = vmul.f32 %v6352, %v6668
  %v6698 = vmul.f32 %v6355, %v6668
  %v6699 = vmul.f32 %v6357, %v6668
  %v6700 = vmul.f32 %v6360, %v6668
  %v6701 = vmul.f32 %v6362, %v6668
  %v6702 = vmul.f32 %v6365, %v6668
  %v6703 = vmul.f32 %v6367, %v6668
  %v6704 = vmul.f32 %v6370, %v6668
  %v6705 = vmul.f32 %v6372, %v6668
  %v6706 = vmul.f32 %v6375, %v6668
  %v6707 = vmul.f32 %v6377, %v6668
  %v6708 = vmul.f32 %v6380, %v6668
  %v6709 = vmul.f32 %v6382, %v6668
  %v6710 = vmul.f32 %v6385, %v6668
  %v6711 = vmul.f32 %v6387, %v6668
  %v6712 = vmul.f32 %v6390, %v6668
  %v6713 = vmul.f32 %v6392, %v6668
  %v6714 = vmul.f32 %v6395, %v6668
  %v6715 = vmul.f32 %v6397, %v6668
  %v6716 = vmul.f32 %v6400, %v6668
  %v6717 = vmul.f32 %v6402, %v6668
  %v6718 = vmul.f32 %v6405, %v6668
  %v6719 = vmul.f32 %v6407, %v6668
  %v6720 = vmul.f32 %v6410, %v6668
  %v6721 = vmul.f32 %v6412, %v6668
  %v6722 = vmul.f32 %v6415, %v6668
  %v6723 = vmul.f32 %v6417, %v6668
  %v6724 = vmul.f32 %v6420, %v6668
  %v6725 = vmul.f32 %v6422, %v6668
  %v6726 = vmul.f32 %v6425, %v6668
  %v6727 = vmul.f32 %v6427, %v6668
  %v6728 = vmul.f32 %v6430, %v6668
  %v6729 = vmul.f32 %v6432, %v6668
  %v6730 = vmul.f32 %v6435, %v6668
  %v6731 = vmul.f32 %v6437, %v6668
  %v6732 = vmul.f32 %v6440, %v6668
  %v6733 = vmul.f32 %v6442, %v6668
  %v6735 = vperm.slane %v6666, 0
  %v6737 = vadd.f32 %v6670, %v6735
  %v6738 = vadd.f32 %v6671, %v6735
  %v6739 = vadd.f32 %v6672, %v6735
  %v6740 = vadd.f32 %v6673, %v6735
  %v6741 = vadd.f32 %v6674, %v6735
  %v6742 = vadd.f32 %v6675, %v6735
  %v6743 = vadd.f32 %v6676, %v6735
  %v6744 = vadd.f32 %v6677, %v6735
  %v6745 = vadd.f32 %v6678, %v6735
  %v6746 = vadd.f32 %v6679, %v6735
  %v6747 = vadd.f32 %v6680, %v6735
  %v6748 = vadd.f32 %v6681, %v6735
  %v6749 = vadd.f32 %v6682, %v6735
  %v6750 = vadd.f32 %v6683, %v6735
  %v6751 = vadd.f32 %v6684, %v6735
  %v6752 = vadd.f32 %v6685, %v6735
  %v6753 = vadd.f32 %v6686, %v6735
  %v6754 = vadd.f32 %v6687, %v6735
  %v6755 = vadd.f32 %v6688, %v6735
  %v6756 = vadd.f32 %v6689, %v6735
  %v6757 = vadd.f32 %v6690, %v6735
  %v6758 = vadd.f32 %v6691, %v6735
  %v6759 = vadd.f32 %v6692, %v6735
  %v6760 = vadd.f32 %v6693, %v6735
  %v6761 = vadd.f32 %v6694, %v6735
  %v6762 = vadd.f32 %v6695, %v6735
  %v6763 = vadd.f32 %v6696, %v6735
  %v6764 = vadd.f32 %v6697, %v6735
  %v6765 = vadd.f32 %v6698, %v6735
  %v6766 = vadd.f32 %v6699, %v6735
  %v6767 = vadd.f32 %v6700, %v6735
  %v6768 = vadd.f32 %v6701, %v6735
  %v6769 = vadd.f32 %v6702, %v6735
  %v6770 = vadd.f32 %v6703, %v6735
  %v6771 = vadd.f32 %v6704, %v6735
  %v6772 = vadd.f32 %v6705, %v6735
  %v6773 = vadd.f32 %v6706, %v6735
  %v6774 = vadd.f32 %v6707, %v6735
  %v6775 = vadd.f32 %v6708, %v6735
  %v6776 = vadd.f32 %v6709, %v6735
  %v6777 = vadd.f32 %v6710, %v6735
  %v6778 = vadd.f32 %v6711, %v6735
  %v6779 = vadd.f32 %v6712, %v6735
  %v6780 = vadd.f32 %v6713, %v6735
  %v6781 = vadd.f32 %v6714, %v6735
  %v6782 = vadd.f32 %v6715, %v6735
  %v6783 = vadd.f32 %v6716, %v6735
  %v6784 = vadd.f32 %v6717, %v6735
  %v6785 = vadd.f32 %v6718, %v6735
  %v6786 = vadd.f32 %v6719, %v6735
  %v6787 = vadd.f32 %v6720, %v6735
  %v6788 = vadd.f32 %v6721, %v6735
  %v6789 = vadd.f32 %v6722, %v6735
  %v6790 = vadd.f32 %v6723, %v6735
  %v6791 = vadd.f32 %v6724, %v6735
  %v6792 = vadd.f32 %v6725, %v6735
  %v6793 = vadd.f32 %v6726, %v6735
  %v6794 = vadd.f32 %v6727, %v6735
  %v6795 = vadd.f32 %v6728, %v6735
  %v6796 = vadd.f32 %v6729, %v6735
  %v6797 = vadd.f32 %v6730, %v6735
  %v6798 = vadd.f32 %v6731, %v6735
  %v6799 = vadd.f32 %v6732, %v6735
  %v6800 = vadd.f32 %v6733, %v6735
  %v6801 = vmax.f32 %v6737, 0.0
  %v6802 = vmax.f32 %v6738, 0.0
  %v6803 = vmax.f32 %v6739, 0.0
  %v6804 = vmax.f32 %v6740, 0.0
  %v6805 = vmax.f32 %v6741, 0.0
  %v6806 = vmax.f32 %v6742, 0.0
  %v6807 = vmax.f32 %v6743, 0.0
  %v6808 = vmax.f32 %v6744, 0.0
  %v6809 = vmax.f32 %v6745, 0.0
  %v6810 = vmax.f32 %v6746, 0.0
  %v6811 = vmax.f32 %v6747, 0.0
  %v6812 = vmax.f32 %v6748, 0.0
  %v6813 = vmax.f32 %v6749, 0.0
  %v6814 = vmax.f32 %v6750, 0.0
  %v6815 = vmax.f32 %v6751, 0.0
  %v6816 = vmax.f32 %v6752, 0.0
  %v6817 = vmax.f32 %v6753, 0.0
  %v6818 = vmax.f32 %v6754, 0.0
  %v6819 = vmax.f32 %v6755, 0.0
  %v6820 = vmax.f32 %v6756, 0.0
  %v6821 = vmax.f32 %v6757, 0.0
  %v6822 = vmax.f32 %v6758, 0.0
  %v6823 = vmax.f32 %v6759, 0.0
  %v6824 = vmax.f32 %v6760, 0.0
  %v6825 = vmax.f32 %v6761, 0.0
  %v6826 = vmax.f32 %v6762, 0.0
  %v6827 = vmax.f32 %v6763, 0.0
  %v6828 = vmax.f32 %v6764, 0.0
  %v6829 = vmax.f32 %v6765, 0.0
  %v6830 = vmax.f32 %v6766, 0.0
  %v6831 = vmax.f32 %v6767, 0.0
  %v6832 = vmax.f32 %v6768, 0.0
  %v6833 = vmax.f32 %v6769, 0.0
  %v6834 = vmax.f32 %v6770, 0.0
  %v6835 = vmax.f32 %v6771, 0.0
  %v6836 = vmax.f32 %v6772, 0.0
  %v6837 = vmax.f32 %v6773, 0.0
  %v6838 = vmax.f32 %v6774, 0.0
  %v6839 = vmax.f32 %v6775, 0.0
  %v6840 = vmax.f32 %v6776, 0.0
  %v6841 = vmax.f32 %v6777, 0.0
  %v6842 = vmax.f32 %v6778, 0.0
  %v6843 = vmax.f32 %v6779, 0.0
  %v6844 = vmax.f32 %v6780, 0.0
  %v6845 = vmax.f32 %v6781, 0.0
  %v6846 = vmax.f32 %v6782, 0.0
  %v6847 = vmax.f32 %v6783, 0.0
  %v6848 = vmax.f32 %v6784, 0.0
  %v6849 = vmax.f32 %v6785, 0.0
  %v6850 = vmax.f32 %v6786, 0.0
  %v6851 = vmax.f32 %v6787, 0.0
  %v6852 = vmax.f32 %v6788, 0.0
  %v6853 = vmax.f32 %v6789, 0.0
  %v6854 = vmax.f32 %v6790, 0.0
  %v6855 = vmax.f32 %v6791, 0.0
  %v6856 = vmax.f32 %v6792, 0.0
  %v6857 = vmax.f32 %v6793, 0.0
  %v6858 = vmax.f32 %v6794, 0.0
  %v6859 = vmax.f32 %v6795, 0.0
  %v6860 = vmax.f32 %v6796, 0.0
  %v6861 = vmax.f32 %v6797, 0.0
  %v6862 = vmax.f32 %v6798, 0.0
  %v6863 = vmax.f32 %v6799, 0.0
  %v6864 = vmax.f32 %v6800, 0.0
  %v6865 = vpack.c.bf16 %v6801, %v6801
  %v6866 = vpack.c.bf16 %v6802, %v6802
  %v6867 = vpack.c.bf16 %v6803, %v6803
  %v6868 = vpack.c.bf16 %v6804, %v6804
  %v6869 = vpack.c.bf16 %v6805, %v6805
  %v6870 = vpack.c.bf16 %v6806, %v6806
  %v6871 = vpack.c.bf16 %v6807, %v6807
  %v6872 = vpack.c.bf16 %v6808, %v6808
  %v6873 = vpack.c.bf16 %v6809, %v6809
  %v6874 = vpack.c.bf16 %v6810, %v6810
  %v6875 = vpack.c.bf16 %v6811, %v6811
  %v6876 = vpack.c.bf16 %v6812, %v6812
  %v6877 = vpack.c.bf16 %v6813, %v6813
  %v6878 = vpack.c.bf16 %v6814, %v6814
  %v6879 = vpack.c.bf16 %v6815, %v6815
  %v6880 = vpack.c.bf16 %v6816, %v6816
  %v6881 = vpack.c.bf16 %v6817, %v6817
  %v6882 = vpack.c.bf16 %v6818, %v6818
  %v6883 = vpack.c.bf16 %v6819, %v6819
  %v6884 = vpack.c.bf16 %v6820, %v6820
  %v6885 = vpack.c.bf16 %v6821, %v6821
  %v6886 = vpack.c.bf16 %v6822, %v6822
  %v6887 = vpack.c.bf16 %v6823, %v6823
  %v6888 = vpack.c.bf16 %v6824, %v6824
  %v6889 = vpack.c.bf16 %v6825, %v6825
  %v6890 = vpack.c.bf16 %v6826, %v6826
  %v6891 = vpack.c.bf16 %v6827, %v6827
  %v6892 = vpack.c.bf16 %v6828, %v6828
  %v6893 = vpack.c.bf16 %v6829, %v6829
  %v6894 = vpack.c.bf16 %v6830, %v6830
  %v6895 = vpack.c.bf16 %v6831, %v6831
  %v6896 = vpack.c.bf16 %v6832, %v6832
  %v6897 = vpack.c.bf16 %v6833, %v6833
  %v6898 = vpack.c.bf16 %v6834, %v6834
  %v6899 = vpack.c.bf16 %v6835, %v6835
  %v6900 = vpack.c.bf16 %v6836, %v6836
  %v6901 = vpack.c.bf16 %v6837, %v6837
  %v6902 = vpack.c.bf16 %v6838, %v6838
  %v6903 = vpack.c.bf16 %v6839, %v6839
  %v6904 = vpack.c.bf16 %v6840, %v6840
  %v6905 = vpack.c.bf16 %v6841, %v6841
  %v6906 = vpack.c.bf16 %v6842, %v6842
  %v6907 = vpack.c.bf16 %v6843, %v6843
  %v6908 = vpack.c.bf16 %v6844, %v6844
  %v6909 = vpack.c.bf16 %v6845, %v6845
  %v6910 = vpack.c.bf16 %v6846, %v6846
  %v6911 = vpack.c.bf16 %v6847, %v6847
  %v6912 = vpack.c.bf16 %v6848, %v6848
  %v6913 = vpack.c.bf16 %v6849, %v6849
  %v6914 = vpack.c.bf16 %v6850, %v6850
  %v6915 = vpack.c.bf16 %v6851, %v6851
  %v6916 = vpack.c.bf16 %v6852, %v6852
  %v6917 = vpack.c.bf16 %v6853, %v6853
  %v6918 = vpack.c.bf16 %v6854, %v6854
  %v6919 = vpack.c.bf16 %v6855, %v6855
  %v6920 = vpack.c.bf16 %v6856, %v6856
  %v6921 = vpack.c.bf16 %v6857, %v6857
  %v6922 = vpack.c.bf16 %v6858, %v6858
  %v6923 = vpack.c.bf16 %v6859, %v6859
  %v6924 = vpack.c.bf16 %v6860, %v6860
  %v6925 = vpack.c.bf16 %v6861, %v6861
  %v6926 = vpack.c.bf16 %v6862, %v6862
  %v6927 = vpack.c.bf16 %v6863, %v6863
  %v6928 = vpack.c.bf16 %v6864, %v6864
  %6929 = vst [vmem:[#allocation3] sm:$0xf] 0
  %6930 = vst [vmem:[#allocation3 + $0x4] sm:$0xf] 0
  %6931 = vst [vmem:[#allocation3 + $0x8] sm:$0x1] 0
  %6932 = vst [vmem:[#allocation3 + $0xd8] sm:$0xf] 0
  %6933 = vst [vmem:[#allocation3 + $0xdc] sm:$0xf] 0
  %6934 = vst [vmem:[#allocation3 + $0xe0] sm:$0x1] 0
  %s6935 = scalar_lea.vmem [#allocation3], 204
  %6936 = vst [vmem:[%s6935] sm:$0xf] 0
  %6937 = vst [vmem:[%s6935 + $0x4] sm:$0xf] 0
  %6938 = vst [vmem:[%s6935 + $0x8] sm:$0x1] 0
  %6939 = vst [vmem:[%s6935 + $0xd8] sm:$0xf] 0
  %6940 = vst [vmem:[%s6935 + $0xdc] sm:$0xf] 0
  %6941 = vst [vmem:[%s6935 + $0xe0] sm:$0x1] 0
  %s6942 = scalar_lea.vmem [#allocation3], 12
  %v6943 = vld [vmem:[%s6942] sm:$0x1]
  %v6944 = vsel %vm113, 0, %v6943
  %6945 = vst [vmem:[%s6942] sm:$0x1] %v6944
  %v6946 = vld [vmem:[%s6942 + $0xc] sm:$0x1]
  %v6947 = vsel %vm113, 0, %v6946
  %6948 = vst [vmem:[%s6942 + $0xc] sm:$0x1] %v6947
  %v6949 = vld [vmem:[%s6942 + $0x18] sm:$0x1]
  %v6950 = vsel %vm113, 0, %v6949
  %6951 = vst [vmem:[%s6942 + $0x18] sm:$0x1] %v6950
  %v6952 = vld [vmem:[%s6942 + $0x24] sm:$0x1]
  %v6953 = vsel %vm113, 0, %v6952
  %6954 = vst [vmem:[%s6942 + $0x24] sm:$0x1] %v6953
  %v6955 = vld [vmem:[%s6942 + $0x30] sm:$0x1]
  %v6956 = vsel %vm113, 0, %v6955
  %6957 = vst [vmem:[%s6942 + $0x30] sm:$0x1] %v6956
  %v6958 = vld [vmem:[%s6942 + $0x3c] sm:$0x1]
  %v6959 = vsel %vm113, 0, %v6958
  %6960 = vst [vmem:[%s6942 + $0x3c] sm:$0x1] %v6959
  %v6961 = vld [vmem:[%s6942 + $0x48] sm:$0x1]
  %v6962 = vsel %vm113, 0, %v6961
  %6963 = vst [vmem:[%s6942 + $0x48] sm:$0x1] %v6962
  %v6964 = vld [vmem:[%s6942 + $0x54] sm:$0x1]
  %v6965 = vsel %vm113, 0, %v6964
  %6966 = vst [vmem:[%s6942 + $0x54] sm:$0x1] %v6965
  %v6967 = vld [vmem:[%s6942 + $0x60] sm:$0x1]
  %v6968 = vsel %vm113, 0, %v6967
  %6969 = vst [vmem:[%s6942 + $0x60] sm:$0x1] %v6968
  %v6970 = vld [vmem:[%s6942 + $0x6c] sm:$0x1]
  %v6971 = vsel %vm113, 0, %v6970
  %6972 = vst [vmem:[%s6942 + $0x6c] sm:$0x1] %v6971
  %v6973 = vld [vmem:[%s6942 + $0x78] sm:$0x1]
  %v6974 = vsel %vm113, 0, %v6973
  %6975 = vst [vmem:[%s6942 + $0x78] sm:$0x1] %v6974
  %v6976 = vld [vmem:[%s6942 + $0x84] sm:$0x1]
  %v6977 = vsel %vm113, 0, %v6976
  %6978 = vst [vmem:[%s6942 + $0x84] sm:$0x1] %v6977
  %v6979 = vld [vmem:[%s6942 + $0x90] sm:$0x1]
  %v6980 = vsel %vm113, 0, %v6979
  %6981 = vst [vmem:[%s6942 + $0x90] sm:$0x1] %v6980
  %v6982 = vld [vmem:[%s6942 + $0x9c] sm:$0x1]
  %v6983 = vsel %vm113, 0, %v6982
  %6984 = vst [vmem:[%s6942 + $0x9c] sm:$0x1] %v6983
  %v6985 = vld [vmem:[%s6942 + $0xa8] sm:$0x1]
  %v6986 = vsel %vm113, 0, %v6985
  %6987 = vst [vmem:[%s6942 + $0xa8] sm:$0x1] %v6986
  %v6988 = vld [vmem:[%s6942 + $0xb4] sm:$0x1]
  %v6989 = vsel %vm113, 0, %v6988
  %6990 = vst [vmem:[%s6942 + $0xb4] sm:$0x1] %v6989
  %v6991 = vld [vmem:[%s6942 + $0xd8] sm:$0x1]
  %v6992 = vsel %vm113, 0, %v6991
  %6993 = vst [vmem:[%s6942 + $0xd8] sm:$0x1] %v6992
  %v6994 = vld [vmem:[%s6942 + $0xe4] sm:$0x1]
  %v6995 = vsel %vm113, 0, %v6994
  %6996 = vst [vmem:[%s6942 + $0xe4] sm:$0x1] %v6995
  %v6997 = vld [vmem:[%s6942 + $0xf0] sm:$0x1]
  %v6998 = vsel %vm113, 0, %v6997
  %6999 = vst [vmem:[%s6942 + $0xf0] sm:$0x1] %v6998
  %v7000 = vld [vmem:[%s6942 + $0xfc] sm:$0x1]
  %v7001 = vsel %vm113, 0, %v7000
  %7002 = vst [vmem:[%s6942 + $0xfc] sm:$0x1] %v7001
  %v7003 = vld [vmem:[%s6942 + $0x108] sm:$0x1]
  %v7004 = vsel %vm113, 0, %v7003
  %7005 = vst [vmem:[%s6942 + $0x108] sm:$0x1] %v7004
  %v7006 = vld [vmem:[%s6942 + $0x114] sm:$0x1]
  %v7007 = vsel %vm113, 0, %v7006
  %7008 = vst [vmem:[%s6942 + $0x114] sm:$0x1] %v7007
  %v7009 = vld [vmem:[%s6942 + $0x120] sm:$0x1]
  %v7010 = vsel %vm113, 0, %v7009
  %7011 = vst [vmem:[%s6942 + $0x120] sm:$0x1] %v7010
  %v7012 = vld [vmem:[%s6942 + $0x12c] sm:$0x1]
  %v7013 = vsel %vm113, 0, %v7012
  %7014 = vst [vmem:[%s6942 + $0x12c] sm:$0x1] %v7013
  %v7015 = vld [vmem:[%s6942 + $0x138] sm:$0x1]
  %v7016 = vsel %vm113, 0, %v7015
  %7017 = vst [vmem:[%s6942 + $0x138] sm:$0x1] %v7016
  %v7018 = vld [vmem:[%s6942 + $0x144] sm:$0x1]
  %v7019 = vsel %vm113, 0, %v7018
  %7020 = vst [vmem:[%s6942 + $0x144] sm:$0x1] %v7019
  %v7021 = vld [vmem:[%s6942 + $0x150] sm:$0x1]
  %v7022 = vsel %vm113, 0, %v7021
  %7023 = vst [vmem:[%s6942 + $0x150] sm:$0x1] %v7022
  %v7024 = vld [vmem:[%s6942 + $0x15c] sm:$0x1]
  %v7025 = vsel %vm113, 0, %v7024
  %7026 = vst [vmem:[%s6942 + $0x15c] sm:$0x1] %v7025
  %v7027 = vld [vmem:[%s6942 + $0x168] sm:$0x1]
  %v7028 = vsel %vm113, 0, %v7027
  %7029 = vst [vmem:[%s6942 + $0x168] sm:$0x1] %v7028
  %v7030 = vld [vmem:[%s6942 + $0x174] sm:$0x1]
  %v7031 = vsel %vm113, 0, %v7030
  %7032 = vst [vmem:[%s6942 + $0x174] sm:$0x1] %v7031
  %v7033 = vld [vmem:[%s6942 + $0x180] sm:$0x1]
  %v7034 = vsel %vm113, 0, %v7033
  %7035 = vst [vmem:[%s6942 + $0x180] sm:$0x1] %v7034
  %v7036 = vld [vmem:[%s6942 + $0x18c] sm:$0x1]
  %v7037 = vsel %vm113, 0, %v7036
  %7038 = vst [vmem:[%s6942 + $0x18c] sm:$0x1] %v7037
  %v7039 = vld [vmem:[%s6942 + $0x8] sm:$0x1]
  %v7040 = vsel %vm211, 0, %v7039
  %7041 = vst [vmem:[%s6942 + $0x8] sm:$0x1] %v7040
  %v7042 = vld [vmem:[%s6942 + $0x14] sm:$0x1]
  %v7043 = vsel %vm211, 0, %v7042
  %7044 = vst [vmem:[%s6942 + $0x14] sm:$0x1] %v7043
  %v7045 = vld [vmem:[%s6942 + $0x20] sm:$0x1]
  %v7046 = vsel %vm211, 0, %v7045
  %7047 = vst [vmem:[%s6942 + $0x20] sm:$0x1] %v7046
  %v7048 = vld [vmem:[%s6942 + $0x2c] sm:$0x1]
  %v7049 = vsel %vm211, 0, %v7048
  %7050 = vst [vmem:[%s6942 + $0x2c] sm:$0x1] %v7049
  %v7051 = vld [vmem:[%s6942 + $0x38] sm:$0x1]
  %v7052 = vsel %vm211, 0, %v7051
  %7053 = vst [vmem:[%s6942 + $0x38] sm:$0x1] %v7052
  %v7054 = vld [vmem:[%s6942 + $0x44] sm:$0x1]
  %v7055 = vsel %vm211, 0, %v7054
  %7056 = vst [vmem:[%s6942 + $0x44] sm:$0x1] %v7055
  %v7057 = vld [vmem:[%s6942 + $0x50] sm:$0x1]
  %v7058 = vsel %vm211, 0, %v7057
  %7059 = vst [vmem:[%s6942 + $0x50] sm:$0x1] %v7058
  %v7060 = vld [vmem:[%s6942 + $0x5c] sm:$0x1]
  %v7061 = vsel %vm211, 0, %v7060
  %7062 = vst [vmem:[%s6942 + $0x5c] sm:$0x1] %v7061
  %v7063 = vld [vmem:[%s6942 + $0x68] sm:$0x1]
  %v7064 = vsel %vm211, 0, %v7063
  %7065 = vst [vmem:[%s6942 + $0x68] sm:$0x1] %v7064
  %v7066 = vld [vmem:[%s6942 + $0x74] sm:$0x1]
  %v7067 = vsel %vm211, 0, %v7066
  %7068 = vst [vmem:[%s6942 + $0x74] sm:$0x1] %v7067
  %v7069 = vld [vmem:[%s6942 + $0x80] sm:$0x1]
  %v7070 = vsel %vm211, 0, %v7069
  %7071 = vst [vmem:[%s6942 + $0x80] sm:$0x1] %v7070
  %v7072 = vld [vmem:[%s6942 + $0x8c] sm:$0x1]
  %v7073 = vsel %vm211, 0, %v7072
  %7074 = vst [vmem:[%s6942 + $0x8c] sm:$0x1] %v7073
  %v7075 = vld [vmem:[%s6942 + $0x98] sm:$0x1]
  %v7076 = vsel %vm211, 0, %v7075
  %7077 = vst [vmem:[%s6942 + $0x98] sm:$0x1] %v7076
  %v7078 = vld [vmem:[%s6942 + $0xa4] sm:$0x1]
  %v7079 = vsel %vm211, 0, %v7078
  %7080 = vst [vmem:[%s6942 + $0xa4] sm:$0x1] %v7079
  %v7081 = vld [vmem:[%s6942 + $0xb0] sm:$0x1]
  %v7082 = vsel %vm211, 0, %v7081
  %7083 = vst [vmem:[%s6942 + $0xb0] sm:$0x1] %v7082
  %v7084 = vld [vmem:[%s6942 + $0xbc] sm:$0x1]
  %v7085 = vsel %vm211, 0, %v7084
  %7086 = vst [vmem:[%s6942 + $0xbc] sm:$0x1] %v7085
  %v7087 = vld [vmem:[%s6942 + $0xe0] sm:$0x1]
  %v7088 = vsel %vm211, 0, %v7087
  %7089 = vst [vmem:[%s6942 + $0xe0] sm:$0x1] %v7088
  %v7090 = vld [vmem:[%s6942 + $0xec] sm:$0x1]
  %v7091 = vsel %vm211, 0, %v7090
  %7092 = vst [vmem:[%s6942 + $0xec] sm:$0x1] %v7091
  %v7093 = vld [vmem:[%s6942 + $0xf8] sm:$0x1]
  %v7094 = vsel %vm211, 0, %v7093
  %7095 = vst [vmem:[%s6942 + $0xf8] sm:$0x1] %v7094
  %v7096 = vld [vmem:[%s6942 + $0x104] sm:$0x1]
  %v7097 = vsel %vm211, 0, %v7096
  %7098 = vst [vmem:[%s6942 + $0x104] sm:$0x1] %v7097
  %v7099 = vld [vmem:[%s6942 + $0x110] sm:$0x1]
  %v7100 = vsel %vm211, 0, %v7099
  %7101 = vst [vmem:[%s6942 + $0x110] sm:$0x1] %v7100
  %v7102 = vld [vmem:[%s6942 + $0x11c] sm:$0x1]
  %v7103 = vsel %vm211, 0, %v7102
  %7104 = vst [vmem:[%s6942 + $0x11c] sm:$0x1] %v7103
  %v7105 = vld [vmem:[%s6942 + $0x128] sm:$0x1]
  %v7106 = vsel %vm211, 0, %v7105
  %7107 = vst [vmem:[%s6942 + $0x128] sm:$0x1] %v7106
  %v7108 = vld [vmem:[%s6942 + $0x134] sm:$0x1]
  %v7109 = vsel %vm211, 0, %v7108
  %7110 = vst [vmem:[%s6942 + $0x134] sm:$0x1] %v7109
  %v7111 = vld [vmem:[%s6942 + $0x140] sm:$0x1]
  %v7112 = vsel %vm211, 0, %v7111
  %7113 = vst [vmem:[%s6942 + $0x140] sm:$0x1] %v7112
  %v7114 = vld [vmem:[%s6942 + $0x14c] sm:$0x1]
  %v7115 = vsel %vm211, 0, %v7114
  %7116 = vst [vmem:[%s6942 + $0x14c] sm:$0x1] %v7115
  %v7117 = vld [vmem:[%s6942 + $0x158] sm:$0x1]
  %v7118 = vsel %vm211, 0, %v7117
  %7119 = vst [vmem:[%s6942 + $0x158] sm:$0x1] %v7118
  %v7120 = vld [vmem:[%s6942 + $0x164] sm:$0x1]
  %v7121 = vsel %vm211, 0, %v7120
  %7122 = vst [vmem:[%s6942 + $0x164] sm:$0x1] %v7121
  %v7123 = vld [vmem:[%s6942 + $0x170] sm:$0x1]
  %v7124 = vsel %vm211, 0, %v7123
  %7125 = vst [vmem:[%s6942 + $0x170] sm:$0x1] %v7124
  %v7126 = vld [vmem:[%s6942 + $0x17c] sm:$0x1]
  %v7127 = vsel %vm211, 0, %v7126
  %7128 = vst [vmem:[%s6942 + $0x17c] sm:$0x1] %v7127
  %v7129 = vld [vmem:[%s6942 + $0x188] sm:$0x1]
  %v7130 = vsel %vm211, 0, %v7129
  %7131 = vst [vmem:[%s6942 + $0x188] sm:$0x1] %v7130
  %v7132 = vld [vmem:[%s6942 + $0x194] sm:$0x1]
  %v7133 = vsel %vm211, 0, %v7132
  %7134 = vst [vmem:[%s6942 + $0x194] sm:$0x1] %v7133
  %v7136 = vshrl.u32 %v6865, 16
  %v7138 = vrot.slane %v7136, 7
  %v7139 = vshll.u32 %v6865, 16
  %v7141 = vor.u32 %v7138, %v7139
  %v7142 = vrot.slane %v7138, 4
  %v7144 = vshrl.u32 %v6866, 16
  %v7146 = vrot.slane %v7144, 7
  %v7147 = vshll.u32 %v6866, 16
  %v7149 = vor.u32 %v7146, %v7147
  %v7150 = vsel %vm309, %v7142, %v7149
  %v7151 = vrot.slane %v7146, 4
  %v7153 = vshrl.u32 %v6867, 16
  %v7155 = vrot.slane %v7153, 7
  %v7156 = vshll.u32 %v6867, 16
  %v7158 = vor.u32 %v7155, %v7156
  %v7159 = vrot.slane %v7155, 4
  %v7161 = vshrl.u32 %v6868, 16
  %v7163 = vrot.slane %v7161, 7
  %v7164 = vshll.u32 %v6868, 16
  %v7166 = vor.u32 %v7163, %v7164
  %v7167 = vsel %vm309, %v7159, %v7166
  %v7168 = vrot.slane %v7163, 4
  %v7170 = vshrl.u32 %v6869, 16
  %v7172 = vrot.slane %v7170, 7
  %v7173 = vshll.u32 %v6869, 16
  %v7175 = vor.u32 %v7172, %v7173
  %v7176 = vrot.slane %v7172, 4
  %v7178 = vshrl.u32 %v6870, 16
  %v7180 = vrot.slane %v7178, 7
  %v7181 = vshll.u32 %v6870, 16
  %v7183 = vor.u32 %v7180, %v7181
  %v7184 = vsel %vm309, %v7176, %v7183
  %v7185 = vrot.slane %v7180, 4
  %v7187 = vshrl.u32 %v6871, 16
  %v7189 = vrot.slane %v7187, 7
  %v7190 = vshll.u32 %v6871, 16
  %v7192 = vor.u32 %v7189, %v7190
  %v7193 = vrot.slane %v7189, 4
  %v7195 = vshrl.u32 %v6872, 16
  %v7197 = vrot.slane %v7195, 7
  %v7198 = vshll.u32 %v6872, 16
  %v7200 = vor.u32 %v7197, %v7198
  %v7201 = vsel %vm309, %v7193, %v7200
  %v7202 = vrot.slane %v7197, 4
  %v7204 = vshrl.u32 %v6873, 16
  %v7206 = vrot.slane %v7204, 7
  %v7207 = vshll.u32 %v6873, 16
  %v7209 = vor.u32 %v7206, %v7207
  %v7210 = vrot.slane %v7206, 4
  %v7212 = vshrl.u32 %v6874, 16
  %v7214 = vrot.slane %v7212, 7
  %v7215 = vshll.u32 %v6874, 16
  %v7217 = vor.u32 %v7214, %v7215
  %v7218 = vsel %vm309, %v7210, %v7217
  %v7219 = vrot.slane %v7214, 4
  %v7221 = vshrl.u32 %v6875, 16
  %v7223 = vrot.slane %v7221, 7
  %v7224 = vshll.u32 %v6875, 16
  %v7226 = vor.u32 %v7223, %v7224
  %v7227 = vrot.slane %v7223, 4
  %v7229 = vshrl.u32 %v6876, 16
  %v7231 = vrot.slane %v7229, 7
  %v7232 = vshll.u32 %v6876, 16
  %v7234 = vor.u32 %v7231, %v7232
  %v7235 = vsel %vm309, %v7227, %v7234
  %v7236 = vrot.slane %v7231, 4
  %v7238 = vshrl.u32 %v6877, 16
  %v7240 = vrot.slane %v7238, 7
  %v7241 = vshll.u32 %v6877, 16
  %v7243 = vor.u32 %v7240, %v7241
  %v7244 = vrot.slane %v7240, 4
  %v7246 = vshrl.u32 %v6878, 16
  %v7248 = vrot.slane %v7246, 7
  %v7249 = vshll.u32 %v6878, 16
  %v7251 = vor.u32 %v7248, %v7249
  %v7252 = vsel %vm309, %v7244, %v7251
  %v7253 = vrot.slane %v7248, 4
  %v7255 = vshrl.u32 %v6879, 16
  %v7257 = vrot.slane %v7255, 7
  %v7258 = vshll.u32 %v6879, 16
  %v7260 = vor.u32 %v7257, %v7258
  %v7261 = vrot.slane %v7257, 4
  %v7263 = vshrl.u32 %v6880, 16
  %v7265 = vrot.slane %v7263, 7
  %v7266 = vshll.u32 %v6880, 16
  %v7268 = vor.u32 %v7265, %v7266
  %v7269 = vsel %vm309, %v7261, %v7268
  %v7270 = vrot.slane %v7265, 4
  %v7272 = vshrl.u32 %v6881, 16
  %v7274 = vrot.slane %v7272, 7
  %v7275 = vshll.u32 %v6881, 16
  %v7277 = vor.u32 %v7274, %v7275
  %v7278 = vrot.slane %v7274, 4
  %v7280 = vshrl.u32 %v6882, 16
  %v7282 = vrot.slane %v7280, 7
  %v7283 = vshll.u32 %v6882, 16
  %v7285 = vor.u32 %v7282, %v7283
  %v7286 = vsel %vm309, %v7278, %v7285
  %v7287 = vrot.slane %v7282, 4
  %v7289 = vshrl.u32 %v6883, 16
  %v7291 = vrot.slane %v7289, 7
  %v7292 = vshll.u32 %v6883, 16
  %v7294 = vor.u32 %v7291, %v7292
  %v7295 = vrot.slane %v7291, 4
  %v7297 = vshrl.u32 %v6884, 16
  %v7299 = vrot.slane %v7297, 7
  %v7300 = vshll.u32 %v6884, 16
  %v7302 = vor.u32 %v7299, %v7300
  %v7303 = vsel %vm309, %v7295, %v7302
  %v7304 = vrot.slane %v7299, 4
  %v7306 = vshrl.u32 %v6885, 16
  %v7308 = vrot.slane %v7306, 7
  %v7309 = vshll.u32 %v6885, 16
  %v7311 = vor.u32 %v7308, %v7309
  %v7312 = vrot.slane %v7308, 4
  %v7314 = vshrl.u32 %v6886, 16
  %v7316 = vrot.slane %v7314, 7
  %v7317 = vshll.u32 %v6886, 16
  %v7319 = vor.u32 %v7316, %v7317
  %v7320 = vsel %vm309, %v7312, %v7319
  %v7321 = vrot.slane %v7316, 4
  %v7323 = vshrl.u32 %v6887, 16
  %v7325 = vrot.slane %v7323, 7
  %v7326 = vshll.u32 %v6887, 16
  %v7328 = vor.u32 %v7325, %v7326
  %v7329 = vrot.slane %v7325, 4
  %v7331 = vshrl.u32 %v6888, 16
  %v7333 = vrot.slane %v7331, 7
  %v7334 = vshll.u32 %v6888, 16
  %v7336 = vor.u32 %v7333, %v7334
  %v7337 = vsel %vm309, %v7329, %v7336
  %v7338 = vrot.slane %v7333, 4
  %v7340 = vshrl.u32 %v6889, 16
  %v7342 = vrot.slane %v7340, 7
  %v7343 = vshll.u32 %v6889, 16
  %v7345 = vor.u32 %v7342, %v7343
  %v7346 = vrot.slane %v7342, 4
  %v7348 = vshrl.u32 %v6890, 16
  %v7350 = vrot.slane %v7348, 7
  %v7351 = vshll.u32 %v6890, 16
  %v7353 = vor.u32 %v7350, %v7351
  %v7354 = vsel %vm309, %v7346, %v7353
  %v7355 = vrot.slane %v7350, 4
  %v7357 = vshrl.u32 %v6891, 16
  %v7359 = vrot.slane %v7357, 7
  %v7360 = vshll.u32 %v6891, 16
  %v7362 = vor.u32 %v7359, %v7360
  %v7363 = vrot.slane %v7359, 4
  %v7365 = vshrl.u32 %v6892, 16
  %v7367 = vrot.slane %v7365, 7
  %v7368 = vshll.u32 %v6892, 16
  %v7370 = vor.u32 %v7367, %v7368
  %v7371 = vsel %vm309, %v7363, %v7370
  %v7372 = vrot.slane %v7367, 4
  %v7374 = vshrl.u32 %v6893, 16
  %v7376 = vrot.slane %v7374, 7
  %v7377 = vshll.u32 %v6893, 16
  %v7379 = vor.u32 %v7376, %v7377
  %v7380 = vrot.slane %v7376, 4
  %v7382 = vshrl.u32 %v6894, 16
  %v7384 = vrot.slane %v7382, 7
  %v7385 = vshll.u32 %v6894, 16
  %v7387 = vor.u32 %v7384, %v7385
  %v7388 = vsel %vm309, %v7380, %v7387
  %v7389 = vrot.slane %v7384, 4
  %v7391 = vshrl.u32 %v6895, 16
  %v7393 = vrot.slane %v7391, 7
  %v7394 = vshll.u32 %v6895, 16
  %v7396 = vor.u32 %v7393, %v7394
  %v7397 = vrot.slane %v7393, 4
  %v7399 = vshrl.u32 %v6896, 16
  %v7401 = vrot.slane %v7399, 7
  %v7402 = vshll.u32 %v6896, 16
  %v7404 = vor.u32 %v7401, %v7402
  %v7405 = vsel %vm309, %v7397, %v7404
  %v7406 = vrot.slane %v7401, 4
  %v7408 = vshrl.u32 %v6897, 16
  %v7410 = vrot.slane %v7408, 7
  %v7411 = vshll.u32 %v6897, 16
  %v7413 = vor.u32 %v7410, %v7411
  %v7414 = vrot.slane %v7410, 4
  %v7416 = vshrl.u32 %v6898, 16
  %v7418 = vrot.slane %v7416, 7
  %v7419 = vshll.u32 %v6898, 16
  %v7421 = vor.u32 %v7418, %v7419
  %v7422 = vsel %vm309, %v7414, %v7421
  %v7423 = vrot.slane %v7418, 4
  %v7425 = vshrl.u32 %v6899, 16
  %v7427 = vrot.slane %v7425, 7
  %v7428 = vshll.u32 %v6899, 16
  %v7430 = vor.u32 %v7427, %v7428
  %v7431 = vrot.slane %v7427, 4
  %v7433 = vshrl.u32 %v6900, 16
  %v7435 = vrot.slane %v7433, 7
  %v7436 = vshll.u32 %v6900, 16
  %v7438 = vor.u32 %v7435, %v7436
  %v7439 = vsel %vm309, %v7431, %v7438
  %v7440 = vrot.slane %v7435, 4
  %v7442 = vshrl.u32 %v6901, 16
  %v7444 = vrot.slane %v7442, 7
  %v7445 = vshll.u32 %v6901, 16
  %v7447 = vor.u32 %v7444, %v7445
  %v7448 = vrot.slane %v7444, 4
  %v7450 = vshrl.u32 %v6902, 16
  %v7452 = vrot.slane %v7450, 7
  %v7453 = vshll.u32 %v6902, 16
  %v7455 = vor.u32 %v7452, %v7453
  %v7456 = vsel %vm309, %v7448, %v7455
  %v7457 = vrot.slane %v7452, 4
  %v7459 = vshrl.u32 %v6903, 16
  %v7461 = vrot.slane %v7459, 7
  %v7462 = vshll.u32 %v6903, 16
  %v7464 = vor.u32 %v7461, %v7462
  %v7465 = vrot.slane %v7461, 4
  %v7467 = vshrl.u32 %v6904, 16
  %v7469 = vrot.slane %v7467, 7
  %v7470 = vshll.u32 %v6904, 16
  %v7472 = vor.u32 %v7469, %v7470
  %v7473 = vsel %vm309, %v7465, %v7472
  %v7474 = vrot.slane %v7469, 4
  %v7476 = vshrl.u32 %v6905, 16
  %v7478 = vrot.slane %v7476, 7
  %v7479 = vshll.u32 %v6905, 16
  %v7481 = vor.u32 %v7478, %v7479
  %v7482 = vrot.slane %v7478, 4
  %v7484 = vshrl.u32 %v6906, 16
  %v7486 = vrot.slane %v7484, 7
  %v7487 = vshll.u32 %v6906, 16
  %v7489 = vor.u32 %v7486, %v7487
  %v7490 = vsel %vm309, %v7482, %v7489
  %v7491 = vrot.slane %v7486, 4
  %v7493 = vshrl.u32 %v6907, 16
  %v7495 = vrot.slane %v7493, 7
  %v7496 = vshll.u32 %v6907, 16
  %v7498 = vor.u32 %v7495, %v7496
  %v7499 = vrot.slane %v7495, 4
  %v7501 = vshrl.u32 %v6908, 16
  %v7503 = vrot.slane %v7501, 7
  %v7504 = vshll.u32 %v6908, 16
  %v7506 = vor.u32 %v7503, %v7504
  %v7507 = vsel %vm309, %v7499, %v7506
  %v7508 = vrot.slane %v7503, 4
  %v7510 = vshrl.u32 %v6909, 16
  %v7512 = vrot.slane %v7510, 7
  %v7513 = vshll.u32 %v6909, 16
  %v7515 = vor.u32 %v7512, %v7513
  %v7516 = vrot.slane %v7512, 4
  %v7518 = vshrl.u32 %v6910, 16
  %v7520 = vrot.slane %v7518, 7
  %v7521 = vshll.u32 %v6910, 16
  %v7523 = vor.u32 %v7520, %v7521
  %v7524 = vsel %vm309, %v7516, %v7523
  %v7525 = vrot.slane %v7520, 4
  %v7527 = vshrl.u32 %v6911, 16
  %v7529 = vrot.slane %v7527, 7
  %v7530 = vshll.u32 %v6911, 16
  %v7532 = vor.u32 %v7529, %v7530
  %v7533 = vrot.slane %v7529, 4
  %v7535 = vshrl.u32 %v6912, 16
  %v7537 = vrot.slane %v7535, 7
  %v7538 = vshll.u32 %v6912, 16
  %v7540 = vor.u32 %v7537, %v7538
  %v7541 = vsel %vm309, %v7533, %v7540
  %v7542 = vrot.slane %v7537, 4
  %v7544 = vshrl.u32 %v6913, 16
  %v7546 = vrot.slane %v7544, 7
  %v7547 = vshll.u32 %v6913, 16
  %v7549 = vor.u32 %v7546, %v7547
  %v7550 = vrot.slane %v7546, 4
  %v7552 = vshrl.u32 %v6914, 16
  %v7554 = vrot.slane %v7552, 7
  %v7555 = vshll.u32 %v6914, 16
  %v7557 = vor.u32 %v7554, %v7555
  %v7558 = vsel %vm309, %v7550, %v7557
  %v7559 = vrot.slane %v7554, 4
  %v7561 = vshrl.u32 %v6915, 16
  %v7563 = vrot.slane %v7561, 7
  %v7564 = vshll.u32 %v6915, 16
  %v7566 = vor.u32 %v7563, %v7564
  %v7567 = vrot.slane %v7563, 4
  %v7569 = vshrl.u32 %v6916, 16
  %v7571 = vrot.slane %v7569, 7
  %v7572 = vshll.u32 %v6916, 16
  %v7574 = vor.u32 %v7571, %v7572
  %v7575 = vsel %vm309, %v7567, %v7574
  %v7576 = vrot.slane %v7571, 4
  %v7578 = vshrl.u32 %v6917, 16
  %v7580 = vrot.slane %v7578, 7
  %v7581 = vshll.u32 %v6917, 16
  %v7583 = vor.u32 %v7580, %v7581
  %v7584 = vrot.slane %v7580, 4
  %v7586 = vshrl.u32 %v6918, 16
  %v7588 = vrot.slane %v7586, 7
  %v7589 = vshll.u32 %v6918, 16
  %v7591 = vor.u32 %v7588, %v7589
  %v7592 = vsel %vm309, %v7584, %v7591
  %v7593 = vrot.slane %v7588, 4
  %v7595 = vshrl.u32 %v6919, 16
  %v7597 = vrot.slane %v7595, 7
  %v7598 = vshll.u32 %v6919, 16
  %v7600 = vor.u32 %v7597, %v7598
  %v7601 = vrot.slane %v7597, 4
  %v7603 = vshrl.u32 %v6920, 16
  %v7605 = vrot.slane %v7603, 7
  %v7606 = vshll.u32 %v6920, 16
  %v7608 = vor.u32 %v7605, %v7606
  %v7609 = vsel %vm309, %v7601, %v7608
  %v7610 = vrot.slane %v7605, 4
  %v7612 = vshrl.u32 %v6921, 16
  %v7614 = vrot.slane %v7612, 7
  %v7615 = vshll.u32 %v6921, 16
  %v7617 = vor.u32 %v7614, %v7615
  %v7618 = vrot.slane %v7614, 4
  %v7620 = vshrl.u32 %v6922, 16
  %v7622 = vrot.slane %v7620, 7
  %v7623 = vshll.u32 %v6922, 16
  %v7625 = vor.u32 %v7622, %v7623
  %v7626 = vsel %vm309, %v7618, %v7625
  %v7627 = vrot.slane %v7622, 4
  %v7629 = vshrl.u32 %v6923, 16
  %v7631 = vrot.slane %v7629, 7
  %v7632 = vshll.u32 %v6923, 16
  %v7634 = vor.u32 %v7631, %v7632
  %v7635 = vrot.slane %v7631, 4
  %v7637 = vshrl.u32 %v6924, 16
  %v7639 = vrot.slane %v7637, 7
  %v7640 = vshll.u32 %v6924, 16
  %v7642 = vor.u32 %v7639, %v7640
  %v7643 = vsel %vm309, %v7635, %v7642
  %v7644 = vrot.slane %v7639, 4
  %v7646 = vshrl.u32 %v6925, 16
  %v7648 = vrot.slane %v7646, 7
  %v7649 = vshll.u32 %v6925, 16
  %v7651 = vor.u32 %v7648, %v7649
  %v7652 = vrot.slane %v7648, 4
  %v7654 = vshrl.u32 %v6926, 16
  %v7656 = vrot.slane %v7654, 7
  %v7657 = vshll.u32 %v6926, 16
  %v7659 = vor.u32 %v7656, %v7657
  %v7660 = vsel %vm309, %v7652, %v7659
  %v7661 = vrot.slane %v7656, 4
  %v7663 = vshrl.u32 %v6927, 16
  %v7665 = vrot.slane %v7663, 7
  %v7666 = vshll.u32 %v6927, 16
  %v7668 = vor.u32 %v7665, %v7666
  %v7669 = vrot.slane %v7665, 4
  %v7671 = vshrl.u32 %v6928, 16
  %v7673 = vrot.slane %v7671, 7
  %v7674 = vshll.u32 %v6928, 16
  %v7676 = vor.u32 %v7673, %v7674
  %v7677 = vsel %vm309, %v7669, %v7676
  %v7678 = vrot.slane %v7673, 4
  %v7775 = vld [vmem:[%s6942] sm:$0xf]
  %v7776 = vsel %vm951, %v7141, %v7775
  %7777 = vst [vmem:[%s6942] sm:$0xf] %v7776
  %7778 = vst [vmem:[%s6942 + $0x4] sm:$0xf] %v7150
  %v7779 = vld [vmem:[%s6942 + $0x8] sm:$0x1]
  %v7780 = vsel %vm113, %v7151, %v7779
  %7781 = vst [vmem:[%s6942 + $0x8] sm:$0x1] %v7780
  %v7782 = vld [vmem:[%s6942 + $0xc] sm:$0xf]
  %v7783 = vsel %vm951, %v7158, %v7782
  %7784 = vst [vmem:[%s6942 + $0xc] sm:$0xf] %v7783
  %7785 = vst [vmem:[%s6942 + $0x10] sm:$0xf] %v7167
  %v7786 = vld [vmem:[%s6942 + $0x14] sm:$0x1]
  %v7787 = vsel %vm113, %v7168, %v7786
  %7788 = vst [vmem:[%s6942 + $0x14] sm:$0x1] %v7787
  %v7789 = vld [vmem:[%s6942 + $0x18] sm:$0xf]
  %v7790 = vsel %vm951, %v7175, %v7789
  %7791 = vst [vmem:[%s6942 + $0x18] sm:$0xf] %v7790
  %7792 = vst [vmem:[%s6942 + $0x1c] sm:$0xf] %v7184
  %v7793 = vld [vmem:[%s6942 + $0x20] sm:$0x1]
  %v7794 = vsel %vm113, %v7185, %v7793
  %7795 = vst [vmem:[%s6942 + $0x20] sm:$0x1] %v7794
  %v7796 = vld [vmem:[%s6942 + $0x24] sm:$0xf]
  %v7797 = vsel %vm951, %v7192, %v7796
  %7798 = vst [vmem:[%s6942 + $0x24] sm:$0xf] %v7797
  %7799 = vst [vmem:[%s6942 + $0x28] sm:$0xf] %v7201
  %v7800 = vld [vmem:[%s6942 + $0x2c] sm:$0x1]
  %v7801 = vsel %vm113, %v7202, %v7800
  %7802 = vst [vmem:[%s6942 + $0x2c] sm:$0x1] %v7801
  %v7803 = vld [vmem:[%s6942 + $0x30] sm:$0xf]
  %v7804 = vsel %vm951, %v7209, %v7803
  %7805 = vst [vmem:[%s6942 + $0x30] sm:$0xf] %v7804
  %7806 = vst [vmem:[%s6942 + $0x34] sm:$0xf] %v7218
  %v7807 = vld [vmem:[%s6942 + $0x38] sm:$0x1]
  %v7808 = vsel %vm113, %v7219, %v7807
  %7809 = vst [vmem:[%s6942 + $0x38] sm:$0x1] %v7808
  %v7810 = vld [vmem:[%s6942 + $0x3c] sm:$0xf]
  %v7811 = vsel %vm951, %v7226, %v7810
  %7812 = vst [vmem:[%s6942 + $0x3c] sm:$0xf] %v7811
  %7813 = vst [vmem:[%s6942 + $0x40] sm:$0xf] %v7235
  %v7814 = vld [vmem:[%s6942 + $0x44] sm:$0x1]
  %v7815 = vsel %vm113, %v7236, %v7814
  %7816 = vst [vmem:[%s6942 + $0x44] sm:$0x1] %v7815
  %v7817 = vld [vmem:[%s6942 + $0x48] sm:$0xf]
  %v7818 = vsel %vm951, %v7243, %v7817
  %7819 = vst [vmem:[%s6942 + $0x48] sm:$0xf] %v7818
  %7820 = vst [vmem:[%s6942 + $0x4c] sm:$0xf] %v7252
  %v7821 = vld [vmem:[%s6942 + $0x50] sm:$0x1]
  %v7822 = vsel %vm113, %v7253, %v7821
  %7823 = vst [vmem:[%s6942 + $0x50] sm:$0x1] %v7822
  %v7824 = vld [vmem:[%s6942 + $0x54] sm:$0xf]
  %v7825 = vsel %vm951, %v7260, %v7824
  %7826 = vst [vmem:[%s6942 + $0x54] sm:$0xf] %v7825
  %7827 = vst [vmem:[%s6942 + $0x58] sm:$0xf] %v7269
  %v7828 = vld [vmem:[%s6942 + $0x5c] sm:$0x1]
  %v7829 = vsel %vm113, %v7270, %v7828
  %7830 = vst [vmem:[%s6942 + $0x5c] sm:$0x1] %v7829
  %v7831 = vld [vmem:[%s6942 + $0x60] sm:$0xf]
  %v7832 = vsel %vm951, %v7277, %v7831
  %7833 = vst [vmem:[%s6942 + $0x60] sm:$0xf] %v7832
  %7834 = vst [vmem:[%s6942 + $0x64] sm:$0xf] %v7286
  %v7835 = vld [vmem:[%s6942 + $0x68] sm:$0x1]
  %v7836 = vsel %vm113, %v7287, %v7835
  %7837 = vst [vmem:[%s6942 + $0x68] sm:$0x1] %v7836
  %v7838 = vld [vmem:[%s6942 + $0x6c] sm:$0xf]
  %v7839 = vsel %vm951, %v7294, %v7838
  %7840 = vst [vmem:[%s6942 + $0x6c] sm:$0xf] %v7839
  %7841 = vst [vmem:[%s6942 + $0x70] sm:$0xf] %v7303
  %v7842 = vld [vmem:[%s6942 + $0x74] sm:$0x1]
  %v7843 = vsel %vm113, %v7304, %v7842
  %7844 = vst [vmem:[%s6942 + $0x74] sm:$0x1] %v7843
  %v7845 = vld [vmem:[%s6942 + $0x78] sm:$0xf]
  %v7846 = vsel %vm951, %v7311, %v7845
  %7847 = vst [vmem:[%s6942 + $0x78] sm:$0xf] %v7846
  %7848 = vst [vmem:[%s6942 + $0x7c] sm:$0xf] %v7320
  %v7849 = vld [vmem:[%s6942 + $0x80] sm:$0x1]
  %v7850 = vsel %vm113, %v7321, %v7849
  %7851 = vst [vmem:[%s6942 + $0x80] sm:$0x1] %v7850
  %v7852 = vld [vmem:[%s6942 + $0x84] sm:$0xf]
  %v7853 = vsel %vm951, %v7328, %v7852
  %7854 = vst [vmem:[%s6942 + $0x84] sm:$0xf] %v7853
  %7855 = vst [vmem:[%s6942 + $0x88] sm:$0xf] %v7337
  %v7856 = vld [vmem:[%s6942 + $0x8c] sm:$0x1]
  %v7857 = vsel %vm113, %v7338, %v7856
  %7858 = vst [vmem:[%s6942 + $0x8c] sm:$0x1] %v7857
  %v7859 = vld [vmem:[%s6942 + $0x90] sm:$0xf]
  %v7860 = vsel %vm951, %v7345, %v7859
  %7861 = vst [vmem:[%s6942 + $0x90] sm:$0xf] %v7860
  %7862 = vst [vmem:[%s6942 + $0x94] sm:$0xf] %v7354
  %v7863 = vld [vmem:[%s6942 + $0x98] sm:$0x1]
  %v7864 = vsel %vm113, %v7355, %v7863
  %7865 = vst [vmem:[%s6942 + $0x98] sm:$0x1] %v7864
  %v7866 = vld [vmem:[%s6942 + $0x9c] sm:$0xf]
  %v7867 = vsel %vm951, %v7362, %v7866
  %7868 = vst [vmem:[%s6942 + $0x9c] sm:$0xf] %v7867
  %7869 = vst [vmem:[%s6942 + $0xa0] sm:$0xf] %v7371
  %v7870 = vld [vmem:[%s6942 + $0xa4] sm:$0x1]
  %v7871 = vsel %vm113, %v7372, %v7870
  %7872 = vst [vmem:[%s6942 + $0xa4] sm:$0x1] %v7871
  %v7873 = vld [vmem:[%s6942 + $0xa8] sm:$0xf]
  %v7874 = vsel %vm951, %v7379, %v7873
  %7875 = vst [vmem:[%s6942 + $0xa8] sm:$0xf] %v7874
  %7876 = vst [vmem:[%s6942 + $0xac] sm:$0xf] %v7388
  %v7877 = vld [vmem:[%s6942 + $0xb0] sm:$0x1]
  %v7878 = vsel %vm113, %v7389, %v7877
  %7879 = vst [vmem:[%s6942 + $0xb0] sm:$0x1] %v7878
  %v7880 = vld [vmem:[%s6942 + $0xb4] sm:$0xf]
  %v7881 = vsel %vm951, %v7396, %v7880
  %7882 = vst [vmem:[%s6942 + $0xb4] sm:$0xf] %v7881
  %7883 = vst [vmem:[%s6942 + $0xb8] sm:$0xf] %v7405
  %v7884 = vld [vmem:[%s6942 + $0xbc] sm:$0x1]
  %v7885 = vsel %vm113, %v7406, %v7884
  %7886 = vst [vmem:[%s6942 + $0xbc] sm:$0x1] %v7885
  %v7887 = vld [vmem:[%s6942 + $0xd8] sm:$0xf]
  %v7888 = vsel %vm951, %v7413, %v7887
  %7889 = vst [vmem:[%s6942 + $0xd8] sm:$0xf] %v7888
  %7890 = vst [vmem:[%s6942 + $0xdc] sm:$0xf] %v7422
  %v7891 = vld [vmem:[%s6942 + $0xe0] sm:$0x1]
  %v7892 = vsel %vm113, %v7423, %v7891
  %7893 = vst [vmem:[%s6942 + $0xe0] sm:$0x1] %v7892
  %v7894 = vld [vmem:[%s6942 + $0xe4] sm:$0xf]
  %v7895 = vsel %vm951, %v7430, %v7894
  %7896 = vst [vmem:[%s6942 + $0xe4] sm:$0xf] %v7895
  %7897 = vst [vmem:[%s6942 + $0xe8] sm:$0xf] %v7439
  %v7898 = vld [vmem:[%s6942 + $0xec] sm:$0x1]
  %v7899 = vsel %vm113, %v7440, %v7898
  %7900 = vst [vmem:[%s6942 + $0xec] sm:$0x1] %v7899
  %v7901 = vld [vmem:[%s6942 + $0xf0] sm:$0xf]
  %v7902 = vsel %vm951, %v7447, %v7901
  %7903 = vst [vmem:[%s6942 + $0xf0] sm:$0xf] %v7902
  %7904 = vst [vmem:[%s6942 + $0xf4] sm:$0xf] %v7456
  %v7905 = vld [vmem:[%s6942 + $0xf8] sm:$0x1]
  %v7906 = vsel %vm113, %v7457, %v7905
  %7907 = vst [vmem:[%s6942 + $0xf8] sm:$0x1] %v7906
  %v7908 = vld [vmem:[%s6942 + $0xfc] sm:$0xf]
  %v7909 = vsel %vm951, %v7464, %v7908
  %7910 = vst [vmem:[%s6942 + $0xfc] sm:$0xf] %v7909
  %7911 = vst [vmem:[%s6942 + $0x100] sm:$0xf] %v7473
  %v7912 = vld [vmem:[%s6942 + $0x104] sm:$0x1]
  %v7913 = vsel %vm113, %v7474, %v7912
  %7914 = vst [vmem:[%s6942 + $0x104] sm:$0x1] %v7913
  %v7915 = vld [vmem:[%s6942 + $0x108] sm:$0xf]
  %v7916 = vsel %vm951, %v7481, %v7915
  %7917 = vst [vmem:[%s6942 + $0x108] sm:$0xf] %v7916
  %7918 = vst [vmem:[%s6942 + $0x10c] sm:$0xf] %v7490
  %v7919 = vld [vmem:[%s6942 + $0x110] sm:$0x1]
  %v7920 = vsel %vm113, %v7491, %v7919
  %7921 = vst [vmem:[%s6942 + $0x110] sm:$0x1] %v7920
  %v7922 = vld [vmem:[%s6942 + $0x114] sm:$0xf]
  %v7923 = vsel %vm951, %v7498, %v7922
  %7924 = vst [vmem:[%s6942 + $0x114] sm:$0xf] %v7923
  %7925 = vst [vmem:[%s6942 + $0x118] sm:$0xf] %v7507
  %v7926 = vld [vmem:[%s6942 + $0x11c] sm:$0x1]
  %v7927 = vsel %vm113, %v7508, %v7926
  %7928 = vst [vmem:[%s6942 + $0x11c] sm:$0x1] %v7927
  %v7929 = vld [vmem:[%s6942 + $0x120] sm:$0xf]
  %v7930 = vsel %vm951, %v7515, %v7929
  %7931 = vst [vmem:[%s6942 + $0x120] sm:$0xf] %v7930
  %7932 = vst [vmem:[%s6942 + $0x124] sm:$0xf] %v7524
  %v7933 = vld [vmem:[%s6942 + $0x128] sm:$0x1]
  %v7934 = vsel %vm113, %v7525, %v7933
  %7935 = vst [vmem:[%s6942 + $0x128] sm:$0x1] %v7934
  %v7936 = vld [vmem:[%s6942 + $0x12c] sm:$0xf]
  %v7937 = vsel %vm951, %v7532, %v7936
  %7938 = vst [vmem:[%s6942 + $0x12c] sm:$0xf] %v7937
  %7939 = vst [vmem:[%s6942 + $0x130] sm:$0xf] %v7541
  %v7940 = vld [vmem:[%s6942 + $0x134] sm:$0x1]
  %v7941 = vsel %vm113, %v7542, %v7940
  %7942 = vst [vmem:[%s6942 + $0x134] sm:$0x1] %v7941
  %v7943 = vld [vmem:[%s6942 + $0x138] sm:$0xf]
  %v7944 = vsel %vm951, %v7549, %v7943
  %7945 = vst [vmem:[%s6942 + $0x138] sm:$0xf] %v7944
  %7946 = vst [vmem:[%s6942 + $0x13c] sm:$0xf] %v7558
  %v7947 = vld [vmem:[%s6942 + $0x140] sm:$0x1]
  %v7948 = vsel %vm113, %v7559, %v7947
  %7949 = vst [vmem:[%s6942 + $0x140] sm:$0x1] %v7948
  %v7950 = vld [vmem:[%s6942 + $0x144] sm:$0xf]
  %v7951 = vsel %vm951, %v7566, %v7950
  %7952 = vst [vmem:[%s6942 + $0x144] sm:$0xf] %v7951
  %7953 = vst [vmem:[%s6942 + $0x148] sm:$0xf] %v7575
  %v7954 = vld [vmem:[%s6942 + $0x14c] sm:$0x1]
  %v7955 = vsel %vm113, %v7576, %v7954
  %7956 = vst [vmem:[%s6942 + $0x14c] sm:$0x1] %v7955
  %v7957 = vld [vmem:[%s6942 + $0x150] sm:$0xf]
  %v7958 = vsel %vm951, %v7583, %v7957
  %7959 = vst [vmem:[%s6942 + $0x150] sm:$0xf] %v7958
  %7960 = vst [vmem:[%s6942 + $0x154] sm:$0xf] %v7592
  %v7961 = vld [vmem:[%s6942 + $0x158] sm:$0x1]
  %v7962 = vsel %vm113, %v7593, %v7961
  %7963 = vst [vmem:[%s6942 + $0x158] sm:$0x1] %v7962
  %v7964 = vld [vmem:[%s6942 + $0x15c] sm:$0xf]
  %v7965 = vsel %vm951, %v7600, %v7964
  %7966 = vst [vmem:[%s6942 + $0x15c] sm:$0xf] %v7965
  %7967 = vst [vmem:[%s6942 + $0x160] sm:$0xf] %v7609
  %v7968 = vld [vmem:[%s6942 + $0x164] sm:$0x1]
  %v7969 = vsel %vm113, %v7610, %v7968
  %7970 = vst [vmem:[%s6942 + $0x164] sm:$0x1] %v7969
  %v7971 = vld [vmem:[%s6942 + $0x168] sm:$0xf]
  %v7972 = vsel %vm951, %v7617, %v7971
  %7973 = vst [vmem:[%s6942 + $0x168] sm:$0xf] %v7972
  %7974 = vst [vmem:[%s6942 + $0x16c] sm:$0xf] %v7626
  %v7975 = vld [vmem:[%s6942 + $0x170] sm:$0x1]
  %v7976 = vsel %vm113, %v7627, %v7975
  %7977 = vst [vmem:[%s6942 + $0x170] sm:$0x1] %v7976
  %v7978 = vld [vmem:[%s6942 + $0x174] sm:$0xf]
  %v7979 = vsel %vm951, %v7634, %v7978
  %7980 = vst [vmem:[%s6942 + $0x174] sm:$0xf] %v7979
  %7981 = vst [vmem:[%s6942 + $0x178] sm:$0xf] %v7643
  %v7982 = vld [vmem:[%s6942 + $0x17c] sm:$0x1]
  %v7983 = vsel %vm113, %v7644, %v7982
  %7984 = vst [vmem:[%s6942 + $0x17c] sm:$0x1] %v7983
  %v7985 = vld [vmem:[%s6942 + $0x180] sm:$0xf]
  %v7986 = vsel %vm951, %v7651, %v7985
  %7987 = vst [vmem:[%s6942 + $0x180] sm:$0xf] %v7986
  %7988 = vst [vmem:[%s6942 + $0x184] sm:$0xf] %v7660
  %v7989 = vld [vmem:[%s6942 + $0x188] sm:$0x1]
  %v7990 = vsel %vm113, %v7661, %v7989
  %7991 = vst [vmem:[%s6942 + $0x188] sm:$0x1] %v7990
  %v7992 = vld [vmem:[%s6942 + $0x18c] sm:$0xf]
  %v7993 = vsel %vm951, %v7668, %v7992
  %7994 = vst [vmem:[%s6942 + $0x18c] sm:$0xf] %v7993
  %7995 = vst [vmem:[%s6942 + $0x190] sm:$0xf] %v7677
  %v7996 = vld [vmem:[%s6942 + $0x194] sm:$0x1]
  %v7997 = vsel %vm113, %v7678, %v7996
  %7998 = vst [vmem:[%s6942 + $0x194] sm:$0x1] %v7997
  %v7999 = vld [vmem:[#allocation3] sm:$0xf]
  %v8000 = vld [vmem:[#allocation3 + $0x4] sm:$0xf]
  %v8001 = vld [vmem:[#allocation3 + $0xc] sm:$0xf]
  %v8002 = vld [vmem:[#allocation3 + $0x10] sm:$0xf]
  %v8003 = vld [vmem:[#allocation3 + $0x18] sm:$0xf]
  %v8004 = vld [vmem:[#allocation3 + $0x1c] sm:$0xf]
  %v8005 = vld [vmem:[#allocation3 + $0x24] sm:$0xf]
  %v8006 = vld [vmem:[#allocation3 + $0x28] sm:$0xf]
  %v8007 = vld [vmem:[#allocation3 + $0x30] sm:$0xf]
  %v8008 = vld [vmem:[#allocation3 + $0x34] sm:$0xf]
  %v8009 = vld [vmem:[#allocation3 + $0x3c] sm:$0xf]
  %v8010 = vld [vmem:[#allocation3 + $0x40] sm:$0xf]
  %v8011 = vld [vmem:[#allocation3 + $0x48] sm:$0xf]
  %v8012 = vld [vmem:[#allocation3 + $0x4c] sm:$0xf]
  %v8013 = vld [vmem:[#allocation3 + $0x54] sm:$0xf]
  %v8014 = vld [vmem:[#allocation3 + $0x58] sm:$0xf]
  %v8015 = vld [vmem:[#allocation3 + $0x60] sm:$0xf]
  %v8016 = vld [vmem:[#allocation3 + $0x64] sm:$0xf]
  %v8017 = vld [vmem:[#allocation3 + $0x6c] sm:$0xf]
  %v8018 = vld [vmem:[#allocation3 + $0x70] sm:$0xf]
  %v8019 = vld [vmem:[#allocation3 + $0x78] sm:$0xf]
  %v8020 = vld [vmem:[#allocation3 + $0x7c] sm:$0xf]
  %v8021 = vld [vmem:[#allocation3 + $0x84] sm:$0xf]
  %v8022 = vld [vmem:[#allocation3 + $0x88] sm:$0xf]
  %v8023 = vld [vmem:[#allocation3 + $0x90] sm:$0xf]
  %v8024 = vld [vmem:[#allocation3 + $0x94] sm:$0xf]
  %v8025 = vld [vmem:[#allocation3 + $0x9c] sm:$0xf]
  %v8026 = vld [vmem:[#allocation3 + $0xa0] sm:$0xf]
  %v8027 = vld [vmem:[#allocation3 + $0xa8] sm:$0xf]
  %v8028 = vld [vmem:[#allocation3 + $0xac] sm:$0xf]
  %v8029 = vld [vmem:[#allocation3 + $0xb4] sm:$0xf]
  %v8030 = vld [vmem:[#allocation3 + $0xb8] sm:$0xf]
  %v8031 = vld [vmem:[#allocation3 + $0xd8] sm:$0xf]
  %v8032 = vld [vmem:[#allocation3 + $0xdc] sm:$0xf]
  %v8033 = vld [vmem:[#allocation3 + $0xe4] sm:$0xf]
  %v8034 = vld [vmem:[#allocation3 + $0xe8] sm:$0xf]
  %v8035 = vld [vmem:[#allocation3 + $0xf0] sm:$0xf]
  %v8036 = vld [vmem:[#allocation3 + $0xf4] sm:$0xf]
  %v8037 = vld [vmem:[#allocation3 + $0xfc] sm:$0xf]
  %v8038 = vld [vmem:[#allocation3 + $0x100] sm:$0xf]
  %v8039 = vld [vmem:[#allocation3 + $0x108] sm:$0xf]
  %v8040 = vld [vmem:[#allocation3 + $0x10c] sm:$0xf]
  %v8041 = vld [vmem:[#allocation3 + $0x114] sm:$0xf]
  %v8042 = vld [vmem:[#allocation3 + $0x118] sm:$0xf]
  %v8043 = vld [vmem:[#allocation3 + $0x120] sm:$0xf]
  %v8044 = vld [vmem:[#allocation3 + $0x124] sm:$0xf]
  %v8045 = vld [vmem:[#allocation3 + $0x12c] sm:$0xf]
  %v8046 = vld [vmem:[#allocation3 + $0x130] sm:$0xf]
  %v8047 = vld [vmem:[#allocation3 + $0x138] sm:$0xf]
  %v8048 = vld [vmem:[#allocation3 + $0x13c] sm:$0xf]
  %v8049 = vld [vmem:[#allocation3 + $0x144] sm:$0xf]
  %v8050 = vld [vmem:[#allocation3 + $0x148] sm:$0xf]
  %v8051 = vld [vmem:[#allocation3 + $0x150] sm:$0xf]
  %v8052 = vld [vmem:[#allocation3 + $0x154] sm:$0xf]
  %v8053 = vld [vmem:[#allocation3 + $0x15c] sm:$0xf]
  %v8054 = vld [vmem:[#allocation3 + $0x160] sm:$0xf]
  %v8055 = vld [vmem:[#allocation3 + $0x168] sm:$0xf]
  %v8056 = vld [vmem:[#allocation3 + $0x16c] sm:$0xf]
  %v8057 = vld [vmem:[#allocation3 + $0x174] sm:$0xf]
  %v8058 = vld [vmem:[#allocation3 + $0x178] sm:$0xf]
  %v8059 = vld [vmem:[#allocation3 + $0x180] sm:$0xf]
  %v8060 = vld [vmem:[#allocation3 + $0x184] sm:$0xf]
  %v8061 = vld [vmem:[#allocation3 + $0x18c] sm:$0xf]
  %v8062 = vld [vmem:[#allocation3 + $0x190] sm:$0xf]
  %v8063 = vld [vmem:[#allocation3 + $0x8] sm:$0x1]
  %v8064 = vld [vmem:[#allocation3 + $0x14] sm:$0x1]
  %v8065 = vld [vmem:[#allocation3 + $0x20] sm:$0x1]
  %v8066 = vld [vmem:[#allocation3 + $0x2c] sm:$0x1]
  %v8067 = vld [vmem:[#allocation3 + $0x38] sm:$0x1]
  %v8068 = vld [vmem:[#allocation3 + $0x44] sm:$0x1]
  %v8069 = vld [vmem:[#allocation3 + $0x50] sm:$0x1]
  %v8070 = vld [vmem:[#allocation3 + $0x5c] sm:$0x1]
  %v8071 = vld [vmem:[#allocation3 + $0x68] sm:$0x1]
  %v8072 = vld [vmem:[#allocation3 + $0x74] sm:$0x1]
  %v8073 = vld [vmem:[#allocation3 + $0x80] sm:$0x1]
  %v8074 = vld [vmem:[#allocation3 + $0x8c] sm:$0x1]
  %v8075 = vld [vmem:[#allocation3 + $0x98] sm:$0x1]
  %v8076 = vld [vmem:[#allocation3 + $0xa4] sm:$0x1]
  %v8077 = vld [vmem:[#allocation3 + $0xb0] sm:$0x1]
  %v8078 = vld [vmem:[#allocation3 + $0xbc] sm:$0x1]
  %v8079 = vld [vmem:[#allocation3 + $0xe0] sm:$0x1]
  %v8080 = vld [vmem:[#allocation3 + $0xec] sm:$0x1]
  %v8081 = vld [vmem:[#allocation3 + $0xf8] sm:$0x1]
  %v8082 = vld [vmem:[#allocation3 + $0x104] sm:$0x1]
  %v8083 = vld [vmem:[#allocation3 + $0x110] sm:$0x1]
  %v8084 = vld [vmem:[#allocation3 + $0x11c] sm:$0x1]
  %v8085 = vld [vmem:[#allocation3 + $0x128] sm:$0x1]
  %v8086 = vld [vmem:[#allocation3 + $0x134] sm:$0x1]
  %v8087 = vld [vmem:[#allocation3 + $0x140] sm:$0x1]
  %v8088 = vld [vmem:[#allocation3 + $0x14c] sm:$0x1]
  %v8089 = vld [vmem:[#allocation3 + $0x158] sm:$0x1]
  %v8090 = vld [vmem:[#allocation3 + $0x164] sm:$0x1]
  %v8091 = vld [vmem:[#allocation3 + $0x170] sm:$0x1]
  %v8092 = vld [vmem:[#allocation3 + $0x17c] sm:$0x1]
  %v8093 = vld [vmem:[#allocation3 + $0x188] sm:$0x1]
  %v8094 = vld [vmem:[#allocation3 + $0x194] sm:$0x1]
  %v8095 = vld [vmem:[#allocation3] sm:$0xe]
  %v8096 = vld [vmem:[#allocation3 + $0xc] sm:$0xe]
  %v8097 = vld [vmem:[#allocation3 + $0x18] sm:$0xe]
  %v8098 = vld [vmem:[#allocation3 + $0x24] sm:$0xe]
  %v8099 = vld [vmem:[#allocation3 + $0x30] sm:$0xe]
  %v8100 = vld [vmem:[#allocation3 + $0x3c] sm:$0xe]
  %v8101 = vld [vmem:[#allocation3 + $0x48] sm:$0xe]
  %v8102 = vld [vmem:[#allocation3 + $0x54] sm:$0xe]
  %v8103 = vld [vmem:[#allocation3 + $0x60] sm:$0xe]
  %v8104 = vld [vmem:[#allocation3 + $0x6c] sm:$0xe]
  %v8105 = vld [vmem:[#allocation3 + $0x78] sm:$0xe]
  %v8106 = vld [vmem:[#allocation3 + $0x84] sm:$0xe]
  %v8107 = vld [vmem:[#allocation3 + $0x90] sm:$0xe]
  %v8108 = vld [vmem:[#allocation3 + $0x9c] sm:$0xe]
  %v8109 = vld [vmem:[#allocation3 + $0xa8] sm:$0xe]
  %v8110 = vld [vmem:[#allocation3 + $0xb4] sm:$0xe]
  %v8111 = vld [vmem:[#allocation3 + $0xd8] sm:$0xe]
  %v8112 = vld [vmem:[#allocation3 + $0xe4] sm:$0xe]
  %v8113 = vld [vmem:[#allocation3 + $0xf0] sm:$0xe]
  %v8114 = vld [vmem:[#allocation3 + $0xfc] sm:$0xe]
  %v8115 = vld [vmem:[#allocation3 + $0x108] sm:$0xe]
  %v8116 = vld [vmem:[#allocation3 + $0x114] sm:$0xe]
  %v8117 = vld [vmem:[#allocation3 + $0x120] sm:$0xe]
  %v8118 = vld [vmem:[#allocation3 + $0x12c] sm:$0xe]
  %v8119 = vld [vmem:[#allocation3 + $0x138] sm:$0xe]
  %v8120 = vld [vmem:[#allocation3 + $0x144] sm:$0xe]
  %v8121 = vld [vmem:[#allocation3 + $0x150] sm:$0xe]
  %v8122 = vld [vmem:[#allocation3 + $0x15c] sm:$0xe]
  %v8123 = vld [vmem:[#allocation3 + $0x168] sm:$0xe]
  %v8124 = vld [vmem:[#allocation3 + $0x174] sm:$0xe]
  %v8125 = vld [vmem:[#allocation3 + $0x180] sm:$0xe]
  %v8126 = vld [vmem:[#allocation3 + $0x18c] sm:$0xe]
  %v8127 = vld [vmem:[%s6942] sm:$0xf]
  %v8128 = vld [vmem:[%s6942 + $0x4] sm:$0xf]
  %v8129 = vld [vmem:[%s6942 + $0xc] sm:$0xf]
  %v8130 = vld [vmem:[%s6942 + $0x10] sm:$0xf]
  %v8131 = vld [vmem:[%s6942 + $0x18] sm:$0xf]
  %v8132 = vld [vmem:[%s6942 + $0x1c] sm:$0xf]
  %v8133 = vld [vmem:[%s6942 + $0x24] sm:$0xf]
  %v8134 = vld [vmem:[%s6942 + $0x28] sm:$0xf]
  %v8135 = vld [vmem:[%s6942 + $0x30] sm:$0xf]
  %v8136 = vld [vmem:[%s6942 + $0x34] sm:$0xf]
  %v8137 = vld [vmem:[%s6942 + $0x3c] sm:$0xf]
  %v8138 = vld [vmem:[%s6942 + $0x40] sm:$0xf]
  %v8139 = vld [vmem:[%s6942 + $0x48] sm:$0xf]
  %v8140 = vld [vmem:[%s6942 + $0x4c] sm:$0xf]
  %v8141 = vld [vmem:[%s6942 + $0x54] sm:$0xf]
  %v8142 = vld [vmem:[%s6942 + $0x58] sm:$0xf]
  %v8143 = vld [vmem:[%s6942 + $0x60] sm:$0xf]
  %v8144 = vld [vmem:[%s6942 + $0x64] sm:$0xf]
  %v8145 = vld [vmem:[%s6942 + $0x6c] sm:$0xf]
  %v8146 = vld [vmem:[%s6942 + $0x70] sm:$0xf]
  %v8147 = vld [vmem:[%s6942 + $0x78] sm:$0xf]
  %v8148 = vld [vmem:[%s6942 + $0x7c] sm:$0xf]
  %v8149 = vld [vmem:[%s6942 + $0x84] sm:$0xf]
  %v8150 = vld [vmem:[%s6942 + $0x88] sm:$0xf]
  %v8151 = vld [vmem:[%s6942 + $0x90] sm:$0xf]
  %v8152 = vld [vmem:[%s6942 + $0x94] sm:$0xf]
  %v8153 = vld [vmem:[%s6942 + $0x9c] sm:$0xf]
  %v8154 = vld [vmem:[%s6942 + $0xa0] sm:$0xf]
  %v8155 = vld [vmem:[%s6942 + $0xa8] sm:$0xf]
  %v8156 = vld [vmem:[%s6942 + $0xac] sm:$0xf]
  %v8157 = vld [vmem:[%s6942 + $0xb4] sm:$0xf]
  %v8158 = vld [vmem:[%s6942 + $0xb8] sm:$0xf]
  %v8159 = vld [vmem:[%s6942 + $0xd8] sm:$0xf]
  %v8160 = vld [vmem:[%s6942 + $0xdc] sm:$0xf]
  %v8161 = vld [vmem:[%s6942 + $0xe4] sm:$0xf]
  %v8162 = vld [vmem:[%s6942 + $0xe8] sm:$0xf]
  %v8163 = vld [vmem:[%s6942 + $0xf0] sm:$0xf]
  %v8164 = vld [vmem:[%s6942 + $0xf4] sm:$0xf]
  %v8165 = vld [vmem:[%s6942 + $0xfc] sm:$0xf]
  %v8166 = vld [vmem:[%s6942 + $0x100] sm:$0xf]
  %v8167 = vld [vmem:[%s6942 + $0x108] sm:$0xf]
  %v8168 = vld [vmem:[%s6942 + $0x10c] sm:$0xf]
  %v8169 = vld [vmem:[%s6942 + $0x114] sm:$0xf]
  %v8170 = vld [vmem:[%s6942 + $0x118] sm:$0xf]
  %v8171 = vld [vmem:[%s6942 + $0x120] sm:$0xf]
  %v8172 = vld [vmem:[%s6942 + $0x124] sm:$0xf]
  %v8173 = vld [vmem:[%s6942 + $0x12c] sm:$0xf]
  %v8174 = vld [vmem:[%s6942 + $0x130] sm:$0xf]
  %v8175 = vld [vmem:[%s6942 + $0x138] sm:$0xf]
  %v8176 = vld [vmem:[%s6942 + $0x13c] sm:$0xf]
  %v8177 = vld [vmem:[%s6942 + $0x144] sm:$0xf]
  %v8178 = vld [vmem:[%s6942 + $0x148] sm:$0xf]
  %v8179 = vld [vmem:[%s6942 + $0x150] sm:$0xf]
  %v8180 = vld [vmem:[%s6942 + $0x154] sm:$0xf]
  %v8181 = vld [vmem:[%s6942 + $0x15c] sm:$0xf]
  %v8182 = vld [vmem:[%s6942 + $0x160] sm:$0xf]
  %v8183 = vld [vmem:[%s6942 + $0x168] sm:$0xf]
  %v8184 = vld [vmem:[%s6942 + $0x16c] sm:$0xf]
  %v8185 = vld [vmem:[%s6942 + $0x174] sm:$0xf]
  %v8186 = vld [vmem:[%s6942 + $0x178] sm:$0xf]
  %v8187 = vld [vmem:[%s6942 + $0x180] sm:$0xf]
  %v8188 = vld [vmem:[%s6942 + $0x184] sm:$0xf]
  %v8189 = vld [vmem:[%s6942 + $0x18c] sm:$0xf]
  %v8190 = vld [vmem:[%s6942 + $0x190] sm:$0xf]
  %v8191 = vld [vmem:[%s6942 + $0x8] sm:$0x1]
  %v8192 = vld [vmem:[%s6942 + $0x14] sm:$0x1]
  %v8193 = vld [vmem:[%s6942 + $0x20] sm:$0x1]
  %v8194 = vld [vmem:[%s6942 + $0x2c] sm:$0x1]
  %v8195 = vld [vmem:[%s6942 + $0x38] sm:$0x1]
  %v8196 = vld [vmem:[%s6942 + $0x44] sm:$0x1]
  %v8197 = vld [vmem:[%s6942 + $0x50] sm:$0x1]
  %v8198 = vld [vmem:[%s6942 + $0x5c] sm:$0x1]
  %v8199 = vld [vmem:[%s6942 + $0x68] sm:$0x1]
  %v8200 = vld [vmem:[%s6942 + $0x74] sm:$0x1]
  %v8201 = vld [vmem:[%s6942 + $0x80] sm:$0x1]
  %v8202 = vld [vmem:[%s6942 + $0x8c] sm:$0x1]
  %v8203 = vld [vmem:[%s6942 + $0x98] sm:$0x1]
  %v8204 = vld [vmem:[%s6942 + $0xa4] sm:$0x1]
  %v8205 = vld [vmem:[%s6942 + $0xb0] sm:$0x1]
  %v8206 = vld [vmem:[%s6942 + $0xbc] sm:$0x1]
  %v8207 = vld [vmem:[%s6942 + $0xe0] sm:$0x1]
  %v8208 = vld [vmem:[%s6942 + $0xec] sm:$0x1]
  %v8209 = vld [vmem:[%s6942 + $0xf8] sm:$0x1]
  %v8210 = vld [vmem:[%s6942 + $0x104] sm:$0x1]
  %v8211 = vld [vmem:[%s6942 + $0x110] sm:$0x1]
  %v8212 = vld [vmem:[%s6942 + $0x11c] sm:$0x1]
  %v8213 = vld [vmem:[%s6942 + $0x128] sm:$0x1]
  %v8214 = vld [vmem:[%s6942 + $0x134] sm:$0x1]
  %v8215 = vld [vmem:[%s6942 + $0x140] sm:$0x1]
  %v8216 = vld [vmem:[%s6942 + $0x14c] sm:$0x1]
  %v8217 = vld [vmem:[%s6942 + $0x158] sm:$0x1]
  %v8218 = vld [vmem:[%s6942 + $0x164] sm:$0x1]
  %v8219 = vld [vmem:[%s6942 + $0x170] sm:$0x1]
  %v8220 = vld [vmem:[%s6942 + $0x17c] sm:$0x1]
  %v8221 = vld [vmem:[%s6942 + $0x188] sm:$0x1]
  %v8222 = vld [vmem:[%s6942 + $0x194] sm:$0x1]
  %v8223 = vld [vmem:[%s6942] sm:$0xe]
  %v8224 = vld [vmem:[%s6942 + $0xc] sm:$0xe]
  %v8225 = vld [vmem:[%s6942 + $0x18] sm:$0xe]
  %v8226 = vld [vmem:[%s6942 + $0x24] sm:$0xe]
  %v8227 = vld [vmem:[%s6942 + $0x30] sm:$0xe]
  %v8228 = vld [vmem:[%s6942 + $0x3c] sm:$0xe]
  %v8229 = vld [vmem:[%s6942 + $0x48] sm:$0xe]
  %v8230 = vld [vmem:[%s6942 + $0x54] sm:$0xe]
  %v8231 = vld [vmem:[%s6942 + $0x60] sm:$0xe]
  %v8232 = vld [vmem:[%s6942 + $0x6c] sm:$0xe]
  %v8233 = vld [vmem:[%s6942 + $0x78] sm:$0xe]
  %v8234 = vld [vmem:[%s6942 + $0x84] sm:$0xe]
  %v8235 = vld [vmem:[%s6942 + $0x90] sm:$0xe]
  %v8236 = vld [vmem:[%s6942 + $0x9c] sm:$0xe]
  %v8237 = vld [vmem:[%s6942 + $0xa8] sm:$0xe]
  %v8238 = vld [vmem:[%s6942 + $0xb4] sm:$0xe]
  %v8239 = vld [vmem:[%s6942 + $0xd8] sm:$0xe]
  %v8240 = vld [vmem:[%s6942 + $0xe4] sm:$0xe]
  %v8241 = vld [vmem:[%s6942 + $0xf0] sm:$0xe]
  %v8242 = vld [vmem:[%s6942 + $0xfc] sm:$0xe]
  %v8243 = vld [vmem:[%s6942 + $0x108] sm:$0xe]
  %v8244 = vld [vmem:[%s6942 + $0x114] sm:$0xe]
  %v8245 = vld [vmem:[%s6942 + $0x120] sm:$0xe]
  %v8246 = vld [vmem:[%s6942 + $0x12c] sm:$0xe]
  %v8247 = vld [vmem:[%s6942 + $0x138] sm:$0xe]
  %v8248 = vld [vmem:[%s6942 + $0x144] sm:$0xe]
  %v8249 = vld [vmem:[%s6942 + $0x150] sm:$0xe]
  %v8250 = vld [vmem:[%s6942 + $0x15c] sm:$0xe]
  %v8251 = vld [vmem:[%s6942 + $0x168] sm:$0xe]
  %v8252 = vld [vmem:[%s6942 + $0x174] sm:$0xe]
  %v8253 = vld [vmem:[%s6942 + $0x180] sm:$0xe]
  %v8254 = vld [vmem:[%s6942 + $0x18c] sm:$0xe]
  %s8255 = scalar_lea.vmem [#allocation3], 24
  %v8256 = vld [vmem:[%s8255] sm:$0xf]
  %v8257 = vld [vmem:[%s8255 + $0x4] sm:$0xf]
  %v8258 = vld [vmem:[%s8255 + $0xc] sm:$0xf]
  %v8259 = vld [vmem:[%s8255 + $0x10] sm:$0xf]
  %v8260 = vld [vmem:[%s8255 + $0x18] sm:$0xf]
  %v8261 = vld [vmem:[%s8255 + $0x1c] sm:$0xf]
  %v8262 = vld [vmem:[%s8255 + $0x24] sm:$0xf]
  %v8263 = vld [vmem:[%s8255 + $0x28] sm:$0xf]
  %v8264 = vld [vmem:[%s8255 + $0x30] sm:$0xf]
  %v8265 = vld [vmem:[%s8255 + $0x34] sm:$0xf]
  %v8266 = vld [vmem:[%s8255 + $0x3c] sm:$0xf]
  %v8267 = vld [vmem:[%s8255 + $0x40] sm:$0xf]
  %v8268 = vld [vmem:[%s8255 + $0x48] sm:$0xf]
  %v8269 = vld [vmem:[%s8255 + $0x4c] sm:$0xf]
  %v8270 = vld [vmem:[%s8255 + $0x54] sm:$0xf]
  %v8271 = vld [vmem:[%s8255 + $0x58] sm:$0xf]
  %v8272 = vld [vmem:[%s8255 + $0x60] sm:$0xf]
  %v8273 = vld [vmem:[%s8255 + $0x64] sm:$0xf]
  %v8274 = vld [vmem:[%s8255 + $0x6c] sm:$0xf]
  %v8275 = vld [vmem:[%s8255 + $0x70] sm:$0xf]
  %v8276 = vld [vmem:[%s8255 + $0x78] sm:$0xf]
  %v8277 = vld [vmem:[%s8255 + $0x7c] sm:$0xf]
  %v8278 = vld [vmem:[%s8255 + $0x84] sm:$0xf]
  %v8279 = vld [vmem:[%s8255 + $0x88] sm:$0xf]
  %v8280 = vld [vmem:[%s8255 + $0x90] sm:$0xf]
  %v8281 = vld [vmem:[%s8255 + $0x94] sm:$0xf]
  %v8282 = vld [vmem:[%s8255 + $0x9c] sm:$0xf]
  %v8283 = vld [vmem:[%s8255 + $0xa0] sm:$0xf]
  %v8284 = vld [vmem:[%s8255 + $0xa8] sm:$0xf]
  %v8285 = vld [vmem:[%s8255 + $0xac] sm:$0xf]
  %v8286 = vld [vmem:[%s8255 + $0xb4] sm:$0xf]
  %v8287 = vld [vmem:[%s8255 + $0xb8] sm:$0xf]
  %v8288 = vld [vmem:[%s8255 + $0xd8] sm:$0xf]
  %v8289 = vld [vmem:[%s8255 + $0xdc] sm:$0xf]
  %v8290 = vld [vmem:[%s8255 + $0xe4] sm:$0xf]
  %v8291 = vld [vmem:[%s8255 + $0xe8] sm:$0xf]
  %v8292 = vld [vmem:[%s8255 + $0xf0] sm:$0xf]
  %v8293 = vld [vmem:[%s8255 + $0xf4] sm:$0xf]
  %v8294 = vld [vmem:[%s8255 + $0xfc] sm:$0xf]
  %v8295 = vld [vmem:[%s8255 + $0x100] sm:$0xf]
  %v8296 = vld [vmem:[%s8255 + $0x108] sm:$0xf]
  %v8297 = vld [vmem:[%s8255 + $0x10c] sm:$0xf]
  %v8298 = vld [vmem:[%s8255 + $0x114] sm:$0xf]
  %v8299 = vld [vmem:[%s8255 + $0x118] sm:$0xf]
  %v8300 = vld [vmem:[%s8255 + $0x120] sm:$0xf]
  %v8301 = vld [vmem:[%s8255 + $0x124] sm:$0xf]
  %v8302 = vld [vmem:[%s8255 + $0x12c] sm:$0xf]
  %v8303 = vld [vmem:[%s8255 + $0x130] sm:$0xf]
  %v8304 = vld [vmem:[%s8255 + $0x138] sm:$0xf]
  %v8305 = vld [vmem:[%s8255 + $0x13c] sm:$0xf]
  %v8306 = vld [vmem:[%s8255 + $0x144] sm:$0xf]
  %v8307 = vld [vmem:[%s8255 + $0x148] sm:$0xf]
  %v8308 = vld [vmem:[%s8255 + $0x150] sm:$0xf]
  %v8309 = vld [vmem:[%s8255 + $0x154] sm:$0xf]
  %v8310 = vld [vmem:[%s8255 + $0x15c] sm:$0xf]
  %v8311 = vld [vmem:[%s8255 + $0x160] sm:$0xf]
  %v8312 = vld [vmem:[%s8255 + $0x168] sm:$0xf]
  %v8313 = vld [vmem:[%s8255 + $0x16c] sm:$0xf]
  %v8314 = vld [vmem:[%s8255 + $0x174] sm:$0xf]
  %v8315 = vld [vmem:[%s8255 + $0x178] sm:$0xf]
  %v8316 = vld [vmem:[%s8255 + $0x180] sm:$0xf]
  %v8317 = vld [vmem:[%s8255 + $0x184] sm:$0xf]
  %v8318 = vld [vmem:[%s8255 + $0x18c] sm:$0xf]
  %v8319 = vld [vmem:[%s8255 + $0x190] sm:$0xf]
  %v8320 = vld [vmem:[%s8255 + $0x8] sm:$0x1]
  %v8321 = vld [vmem:[%s8255 + $0x14] sm:$0x1]
  %v8322 = vld [vmem:[%s8255 + $0x20] sm:$0x1]
  %v8323 = vld [vmem:[%s8255 + $0x2c] sm:$0x1]
  %v8324 = vld [vmem:[%s8255 + $0x38] sm:$0x1]
  %v8325 = vld [vmem:[%s8255 + $0x44] sm:$0x1]
  %v8326 = vld [vmem:[%s8255 + $0x50] sm:$0x1]
  %v8327 = vld [vmem:[%s8255 + $0x5c] sm:$0x1]
  %v8328 = vld [vmem:[%s8255 + $0x68] sm:$0x1]
  %v8329 = vld [vmem:[%s8255 + $0x74] sm:$0x1]
  %v8330 = vld [vmem:[%s8255 + $0x80] sm:$0x1]
  %v8331 = vld [vmem:[%s8255 + $0x8c] sm:$0x1]
  %v8332 = vld [vmem:[%s8255 + $0x98] sm:$0x1]
  %v8333 = vld [vmem:[%s8255 + $0xa4] sm:$0x1]
  %v8334 = vld [vmem:[%s8255 + $0xb0] sm:$0x1]
  %v8335 = vld [vmem:[%s8255 + $0xbc] sm:$0x1]
  %v8336 = vld [vmem:[%s8255 + $0xe0] sm:$0x1]
  %v8337 = vld [vmem:[%s8255 + $0xec] sm:$0x1]
  %v8338 = vld [vmem:[%s8255 + $0xf8] sm:$0x1]
  %v8339 = vld [vmem:[%s8255 + $0x104] sm:$0x1]
  %v8340 = vld [vmem:[%s8255 + $0x110] sm:$0x1]
  %v8341 = vld [vmem:[%s8255 + $0x11c] sm:$0x1]
  %v8342 = vld [vmem:[%s8255 + $0x128] sm:$0x1]
  %v8343 = vld [vmem:[%s8255 + $0x134] sm:$0x1]
  %v8344 = vld [vmem:[%s8255 + $0x140] sm:$0x1]
  %v8345 = vld [vmem:[%s8255 + $0x14c] sm:$0x1]
  %v8346 = vld [vmem:[%s8255 + $0x158] sm:$0x1]
  %v8347 = vld [vmem:[%s8255 + $0x164] sm:$0x1]
  %v8348 = vld [vmem:[%s8255 + $0x170] sm:$0x1]
  %v8349 = vld [vmem:[%s8255 + $0x17c] sm:$0x1]
  %v8350 = vld [vmem:[%s8255 + $0x188] sm:$0x1]
  %v8351 = vld [vmem:[%s8255 + $0x194] sm:$0x1]
  %v8352 = vld [vmem:[%s8255] sm:$0xe]
  %v8353 = vld [vmem:[%s8255 + $0xc] sm:$0xe]
  %v8354 = vld [vmem:[%s8255 + $0x18] sm:$0xe]
  %v8355 = vld [vmem:[%s8255 + $0x24] sm:$0xe]
  %v8356 = vld [vmem:[%s8255 + $0x30] sm:$0xe]
  %v8357 = vld [vmem:[%s8255 + $0x3c] sm:$0xe]
  %v8358 = vld [vmem:[%s8255 + $0x48] sm:$0xe]
  %v8359 = vld [vmem:[%s8255 + $0x54] sm:$0xe]
  %v8360 = vld [vmem:[%s8255 + $0x60] sm:$0xe]
  %v8361 = vld [vmem:[%s8255 + $0x6c] sm:$0xe]
  %v8362 = vld [vmem:[%s8255 + $0x78] sm:$0xe]
  %v8363 = vld [vmem:[%s8255 + $0x84] sm:$0xe]
  %v8364 = vld [vmem:[%s8255 + $0x90] sm:$0xe]
  %v8365 = vld [vmem:[%s8255 + $0x9c] sm:$0xe]
  %v8366 = vld [vmem:[%s8255 + $0xa8] sm:$0xe]
  %v8367 = vld [vmem:[%s8255 + $0xb4] sm:$0xe]
  %v8368 = vld [vmem:[%s8255 + $0xd8] sm:$0xe]
  %v8369 = vld [vmem:[%s8255 + $0xe4] sm:$0xe]
  %v8370 = vld [vmem:[%s8255 + $0xf0] sm:$0xe]
  %v8371 = vld [vmem:[%s8255 + $0xfc] sm:$0xe]
  %v8372 = vld [vmem:[%s8255 + $0x108] sm:$0xe]
  %v8373 = vld [vmem:[%s8255 + $0x114] sm:$0xe]
  %v8374 = vld [vmem:[%s8255 + $0x120] sm:$0xe]
  %v8375 = vld [vmem:[%s8255 + $0x12c] sm:$0xe]
  %v8376 = vld [vmem:[%s8255 + $0x138] sm:$0xe]
  %v8377 = vld [vmem:[%s8255 + $0x144] sm:$0xe]
  %v8378 = vld [vmem:[%s8255 + $0x150] sm:$0xe]
  %v8379 = vld [vmem:[%s8255 + $0x15c] sm:$0xe]
  %v8380 = vld [vmem:[%s8255 + $0x168] sm:$0xe]
  %v8381 = vld [vmem:[%s8255 + $0x174] sm:$0xe]
  %v8382 = vld [vmem:[%s8255 + $0x180] sm:$0xe]
  %v8383 = vld [vmem:[%s8255 + $0x18c] sm:$0xe]
  %v8448 = vunpack.c.l.b16 %v7999
  %v8449 = vunpack.c.l.b16 %v8000
  %v8450 = vunpack.c.l.b16 %v8001
  %v8451 = vunpack.c.l.b16 %v8002
  %v8452 = vunpack.c.l.b16 %v8003
  %v8453 = vunpack.c.l.b16 %v8004
  %v8454 = vunpack.c.l.b16 %v8005
  %v8455 = vunpack.c.l.b16 %v8006
  %v8456 = vunpack.c.l.b16 %v8007
  %v8457 = vunpack.c.l.b16 %v8008
  %v8458 = vunpack.c.l.b16 %v8009
  %v8459 = vunpack.c.l.b16 %v8010
  %v8460 = vunpack.c.l.b16 %v8011
  %v8461 = vunpack.c.l.b16 %v8012
  %v8462 = vunpack.c.l.b16 %v8013
  %v8463 = vunpack.c.l.b16 %v8014
  %v8464 = vunpack.c.l.b16 %v8015
  %v8465 = vunpack.c.l.b16 %v8016
  %v8466 = vunpack.c.l.b16 %v8017
  %v8467 = vunpack.c.l.b16 %v8018
  %v8468 = vunpack.c.l.b16 %v8019
  %v8469 = vunpack.c.l.b16 %v8020
  %v8470 = vunpack.c.l.b16 %v8021
  %v8471 = vunpack.c.l.b16 %v8022
  %v8472 = vunpack.c.l.b16 %v8023
  %v8473 = vunpack.c.l.b16 %v8024
  %v8474 = vunpack.c.l.b16 %v8025
  %v8475 = vunpack.c.l.b16 %v8026
  %v8476 = vunpack.c.l.b16 %v8027
  %v8477 = vunpack.c.l.b16 %v8028
  %v8478 = vunpack.c.l.b16 %v8029
  %v8479 = vunpack.c.l.b16 %v8030
  %v8480 = vunpack.c.l.b16 %v8031
  %v8481 = vunpack.c.l.b16 %v8032
  %v8482 = vunpack.c.l.b16 %v8033
  %v8483 = vunpack.c.l.b16 %v8034
  %v8484 = vunpack.c.l.b16 %v8035
  %v8485 = vunpack.c.l.b16 %v8036
  %v8486 = vunpack.c.l.b16 %v8037
  %v8487 = vunpack.c.l.b16 %v8038
  %v8488 = vunpack.c.l.b16 %v8039
  %v8489 = vunpack.c.l.b16 %v8040
  %v8490 = vunpack.c.l.b16 %v8041
  %v8491 = vunpack.c.l.b16 %v8042
  %v8492 = vunpack.c.l.b16 %v8043
  %v8493 = vunpack.c.l.b16 %v8044
  %v8494 = vunpack.c.l.b16 %v8045
  %v8495 = vunpack.c.l.b16 %v8046
  %v8496 = vunpack.c.l.b16 %v8047
  %v8497 = vunpack.c.l.b16 %v8048
  %v8498 = vunpack.c.l.b16 %v8049
  %v8499 = vunpack.c.l.b16 %v8050
  %v8500 = vunpack.c.l.b16 %v8051
  %v8501 = vunpack.c.l.b16 %v8052
  %v8502 = vunpack.c.l.b16 %v8053
  %v8503 = vunpack.c.l.b16 %v8054
  %v8504 = vunpack.c.l.b16 %v8055
  %v8505 = vunpack.c.l.b16 %v8056
  %v8506 = vunpack.c.l.b16 %v8057
  %v8507 = vunpack.c.l.b16 %v8058
  %v8508 = vunpack.c.l.b16 %v8059
  %v8509 = vunpack.c.l.b16 %v8060
  %v8510 = vunpack.c.l.b16 %v8061
  %v8511 = vunpack.c.l.b16 %v8062
  %v8512 = vpack.c.b16 %v8449, %v8448
  %v8513 = vpack.c.b16 %v8451, %v8450
  %v8514 = vpack.c.b16 %v8453, %v8452
  %v8515 = vpack.c.b16 %v8455, %v8454
  %v8516 = vpack.c.b16 %v8457, %v8456
  %v8517 = vpack.c.b16 %v8459, %v8458
  %v8518 = vpack.c.b16 %v8461, %v8460
  %v8519 = vpack.c.b16 %v8463, %v8462
  %v8520 = vpack.c.b16 %v8465, %v8464
  %v8521 = vpack.c.b16 %v8467, %v8466
  %v8522 = vpack.c.b16 %v8469, %v8468
  %v8523 = vpack.c.b16 %v8471, %v8470
  %v8524 = vpack.c.b16 %v8473, %v8472
  %v8525 = vpack.c.b16 %v8475, %v8474
  %v8526 = vpack.c.b16 %v8477, %v8476
  %v8527 = vpack.c.b16 %v8479, %v8478
  %v8528 = vpack.c.b16 %v8481, %v8480
  %v8529 = vpack.c.b16 %v8483, %v8482
  %v8530 = vpack.c.b16 %v8485, %v8484
  %v8531 = vpack.c.b16 %v8487, %v8486
  %v8532 = vpack.c.b16 %v8489, %v8488
  %v8533 = vpack.c.b16 %v8491, %v8490
  %v8534 = vpack.c.b16 %v8493, %v8492
  %v8535 = vpack.c.b16 %v8495, %v8494
  %v8536 = vpack.c.b16 %v8497, %v8496
  %v8537 = vpack.c.b16 %v8499, %v8498
  %v8538 = vpack.c.b16 %v8501, %v8500
  %v8539 = vpack.c.b16 %v8503, %v8502
  %v8540 = vpack.c.b16 %v8505, %v8504
  %v8541 = vpack.c.b16 %v8507, %v8506
  %v8542 = vpack.c.b16 %v8509, %v8508
  %v8543 = vpack.c.b16 %v8511, %v8510
  %v8608 = vunpack.c.l.b16 %v8063
  %v8609 = vunpack.c.l.b16 %v8064
  %v8610 = vunpack.c.l.b16 %v8065
  %v8611 = vunpack.c.l.b16 %v8066
  %v8612 = vunpack.c.l.b16 %v8067
  %v8613 = vunpack.c.l.b16 %v8068
  %v8614 = vunpack.c.l.b16 %v8069
  %v8615 = vunpack.c.l.b16 %v8070
  %v8616 = vunpack.c.l.b16 %v8071
  %v8617 = vunpack.c.l.b16 %v8072
  %v8618 = vunpack.c.l.b16 %v8073
  %v8619 = vunpack.c.l.b16 %v8074
  %v8620 = vunpack.c.l.b16 %v8075
  %v8621 = vunpack.c.l.b16 %v8076
  %v8622 = vunpack.c.l.b16 %v8077
  %v8623 = vunpack.c.l.b16 %v8078
  %v8624 = vunpack.c.l.b16 %v8079
  %v8625 = vunpack.c.l.b16 %v8080
  %v8626 = vunpack.c.l.b16 %v8081
  %v8627 = vunpack.c.l.b16 %v8082
  %v8628 = vunpack.c.l.b16 %v8083
  %v8629 = vunpack.c.l.b16 %v8084
  %v8630 = vunpack.c.l.b16 %v8085
  %v8631 = vunpack.c.l.b16 %v8086
  %v8632 = vunpack.c.l.b16 %v8087
  %v8633 = vunpack.c.l.b16 %v8088
  %v8634 = vunpack.c.l.b16 %v8089
  %v8635 = vunpack.c.l.b16 %v8090
  %v8636 = vunpack.c.l.b16 %v8091
  %v8637 = vunpack.c.l.b16 %v8092
  %v8638 = vunpack.c.l.b16 %v8093
  %v8639 = vunpack.c.l.b16 %v8094
  %v8640 = vpack.c.b16 %v8608, %v8608
  %v8641 = vpack.c.b16 %v8609, %v8609
  %v8642 = vpack.c.b16 %v8610, %v8610
  %v8643 = vpack.c.b16 %v8611, %v8611
  %v8644 = vpack.c.b16 %v8612, %v8612
  %v8645 = vpack.c.b16 %v8613, %v8613
  %v8646 = vpack.c.b16 %v8614, %v8614
  %v8647 = vpack.c.b16 %v8615, %v8615
  %v8648 = vpack.c.b16 %v8616, %v8616
  %v8649 = vpack.c.b16 %v8617, %v8617
  %v8650 = vpack.c.b16 %v8618, %v8618
  %v8651 = vpack.c.b16 %v8619, %v8619
  %v8652 = vpack.c.b16 %v8620, %v8620
  %v8653 = vpack.c.b16 %v8621, %v8621
  %v8654 = vpack.c.b16 %v8622, %v8622
  %v8655 = vpack.c.b16 %v8623, %v8623
  %v8656 = vpack.c.b16 %v8624, %v8624
  %v8657 = vpack.c.b16 %v8625, %v8625
  %v8658 = vpack.c.b16 %v8626, %v8626
  %v8659 = vpack.c.b16 %v8627, %v8627
  %v8660 = vpack.c.b16 %v8628, %v8628
  %v8661 = vpack.c.b16 %v8629, %v8629
  %v8662 = vpack.c.b16 %v8630, %v8630
  %v8663 = vpack.c.b16 %v8631, %v8631
  %v8664 = vpack.c.b16 %v8632, %v8632
  %v8665 = vpack.c.b16 %v8633, %v8633
  %v8666 = vpack.c.b16 %v8634, %v8634
  %v8667 = vpack.c.b16 %v8635, %v8635
  %v8668 = vpack.c.b16 %v8636, %v8636
  %v8669 = vpack.c.b16 %v8637, %v8637
  %v8670 = vpack.c.b16 %v8638, %v8638
  %v8671 = vpack.c.b16 %v8639, %v8639
  %v8673 = vshrl.u32 %v8512, 16
  %v8675 = vshll.u32 %v8512, 16
  %v8677 = vrot.slane %v8675, 1
  %v8678 = vor.u32 %v8673, %v8677
  %v8680 = vshll.u32 %v8640, 16
  %v8682 = vrot.slane %v8680, 1
  %v8683 = vsel %vm1849, %v8678, %v8682
  %v8685 = vshrl.u32 %v8513, 16
  %v8687 = vshll.u32 %v8513, 16
  %v8689 = vrot.slane %v8687, 1
  %v8690 = vor.u32 %v8685, %v8689
  %v8692 = vshll.u32 %v8641, 16
  %v8694 = vrot.slane %v8692, 1
  %v8695 = vsel %vm1849, %v8690, %v8694
  %v8697 = vshrl.u32 %v8514, 16
  %v8699 = vshll.u32 %v8514, 16
  %v8701 = vrot.slane %v8699, 1
  %v8702 = vor.u32 %v8697, %v8701
  %v8704 = vshll.u32 %v8642, 16
  %v8706 = vrot.slane %v8704, 1
  %v8707 = vsel %vm1849, %v8702, %v8706
  %v8709 = vshrl.u32 %v8515, 16
  %v8711 = vshll.u32 %v8515, 16
  %v8713 = vrot.slane %v8711, 1
  %v8714 = vor.u32 %v8709, %v8713
  %v8716 = vshll.u32 %v8643, 16
  %v8718 = vrot.slane %v8716, 1
  %v8719 = vsel %vm1849, %v8714, %v8718
  %v8721 = vshrl.u32 %v8516, 16
  %v8723 = vshll.u32 %v8516, 16
  %v8725 = vrot.slane %v8723, 1
  %v8726 = vor.u32 %v8721, %v8725
  %v8728 = vshll.u32 %v8644, 16
  %v8730 = vrot.slane %v8728, 1
  %v8731 = vsel %vm1849, %v8726, %v8730
  %v8733 = vshrl.u32 %v8517, 16
  %v8735 = vshll.u32 %v8517, 16
  %v8737 = vrot.slane %v8735, 1
  %v8738 = vor.u32 %v8733, %v8737
  %v8740 = vshll.u32 %v8645, 16
  %v8742 = vrot.slane %v8740, 1
  %v8743 = vsel %vm1849, %v8738, %v8742
  %v8745 = vshrl.u32 %v8518, 16
  %v8747 = vshll.u32 %v8518, 16
  %v8749 = vrot.slane %v8747, 1
  %v8750 = vor.u32 %v8745, %v8749
  %v8752 = vshll.u32 %v8646, 16
  %v8754 = vrot.slane %v8752, 1
  %v8755 = vsel %vm1849, %v8750, %v8754
  %v8757 = vshrl.u32 %v8519, 16
  %v8759 = vshll.u32 %v8519, 16
  %v8761 = vrot.slane %v8759, 1
  %v8762 = vor.u32 %v8757, %v8761
  %v8764 = vshll.u32 %v8647, 16
  %v8766 = vrot.slane %v8764, 1
  %v8767 = vsel %vm1849, %v8762, %v8766
  %v8769 = vshrl.u32 %v8520, 16
  %v8771 = vshll.u32 %v8520, 16
  %v8773 = vrot.slane %v8771, 1
  %v8774 = vor.u32 %v8769, %v8773
  %v8776 = vshll.u32 %v8648, 16
  %v8778 = vrot.slane %v8776, 1
  %v8779 = vsel %vm1849, %v8774, %v8778
  %v8781 = vshrl.u32 %v8521, 16
  %v8783 = vshll.u32 %v8521, 16
  %v8785 = vrot.slane %v8783, 1
  %v8786 = vor.u32 %v8781, %v8785
  %v8788 = vshll.u32 %v8649, 16
  %v8790 = vrot.slane %v8788, 1
  %v8791 = vsel %vm1849, %v8786, %v8790
  %v8793 = vshrl.u32 %v8522, 16
  %v8795 = vshll.u32 %v8522, 16
  %v8797 = vrot.slane %v8795, 1
  %v8798 = vor.u32 %v8793, %v8797
  %v8800 = vshll.u32 %v8650, 16
  %v8802 = vrot.slane %v8800, 1
  %v8803 = vsel %vm1849, %v8798, %v8802
  %v8805 = vshrl.u32 %v8523, 16
  %v8807 = vshll.u32 %v8523, 16
  %v8809 = vrot.slane %v8807, 1
  %v8810 = vor.u32 %v8805, %v8809
  %v8812 = vshll.u32 %v8651, 16
  %v8814 = vrot.slane %v8812, 1
  %v8815 = vsel %vm1849, %v8810, %v8814
  %v8817 = vshrl.u32 %v8524, 16
  %v8819 = vshll.u32 %v8524, 16
  %v8821 = vrot.slane %v8819, 1
  %v8822 = vor.u32 %v8817, %v8821
  %v8824 = vshll.u32 %v8652, 16
  %v8826 = vrot.slane %v8824, 1
  %v8827 = vsel %vm1849, %v8822, %v8826
  %v8829 = vshrl.u32 %v8525, 16
  %v8831 = vshll.u32 %v8525, 16
  %v8833 = vrot.slane %v8831, 1
  %v8834 = vor.u32 %v8829, %v8833
  %v8836 = vshll.u32 %v8653, 16
  %v8838 = vrot.slane %v8836, 1
  %v8839 = vsel %vm1849, %v8834, %v8838
  %v8841 = vshrl.u32 %v8526, 16
  %v8843 = vshll.u32 %v8526, 16
  %v8845 = vrot.slane %v8843, 1
  %v8846 = vor.u32 %v8841, %v8845
  %v8848 = vshll.u32 %v8654, 16
  %v8850 = vrot.slane %v8848, 1
  %v8851 = vsel %vm1849, %v8846, %v8850
  %v8853 = vshrl.u32 %v8527, 16
  %v8855 = vshll.u32 %v8527, 16
  %v8857 = vrot.slane %v8855, 1
  %v8858 = vor.u32 %v8853, %v8857
  %v8860 = vshll.u32 %v8655, 16
  %v8862 = vrot.slane %v8860, 1
  %v8863 = vsel %vm1849, %v8858, %v8862
  %v8865 = vshrl.u32 %v8528, 16
  %v8867 = vshll.u32 %v8528, 16
  %v8869 = vrot.slane %v8867, 1
  %v8870 = vor.u32 %v8865, %v8869
  %v8872 = vshll.u32 %v8656, 16
  %v8874 = vrot.slane %v8872, 1
  %v8875 = vsel %vm1849, %v8870, %v8874
  %v8877 = vshrl.u32 %v8529, 16
  %v8879 = vshll.u32 %v8529, 16
  %v8881 = vrot.slane %v8879, 1
  %v8882 = vor.u32 %v8877, %v8881
  %v8884 = vshll.u32 %v8657, 16
  %v8886 = vrot.slane %v8884, 1
  %v8887 = vsel %vm1849, %v8882, %v8886
  %v8889 = vshrl.u32 %v8530, 16
  %v8891 = vshll.u32 %v8530, 16
  %v8893 = vrot.slane %v8891, 1
  %v8894 = vor.u32 %v8889, %v8893
  %v8896 = vshll.u32 %v8658, 16
  %v8898 = vrot.slane %v8896, 1
  %v8899 = vsel %vm1849, %v8894, %v8898
  %v8901 = vshrl.u32 %v8531, 16
  %v8903 = vshll.u32 %v8531, 16
  %v8905 = vrot.slane %v8903, 1
  %v8906 = vor.u32 %v8901, %v8905
  %v8908 = vshll.u32 %v8659, 16
  %v8910 = vrot.slane %v8908, 1
  %v8911 = vsel %vm1849, %v8906, %v8910
  %v8913 = vshrl.u32 %v8532, 16
  %v8915 = vshll.u32 %v8532, 16
  %v8917 = vrot.slane %v8915, 1
  %v8918 = vor.u32 %v8913, %v8917
  %v8920 = vshll.u32 %v8660, 16
  %v8922 = vrot.slane %v8920, 1
  %v8923 = vsel %vm1849, %v8918, %v8922
  %v8925 = vshrl.u32 %v8533, 16
  %v8927 = vshll.u32 %v8533, 16
  %v8929 = vrot.slane %v8927, 1
  %v8930 = vor.u32 %v8925, %v8929
  %v8932 = vshll.u32 %v8661, 16
  %v8934 = vrot.slane %v8932, 1
  %v8935 = vsel %vm1849, %v8930, %v8934
  %v8937 = vshrl.u32 %v8534, 16
  %v8939 = vshll.u32 %v8534, 16
  %v8941 = vrot.slane %v8939, 1
  %v8942 = vor.u32 %v8937, %v8941
  %v8944 = vshll.u32 %v8662, 16
  %v8946 = vrot.slane %v8944, 1
  %v8947 = vsel %vm1849, %v8942, %v8946
  %v8949 = vshrl.u32 %v8535, 16
  %v8951 = vshll.u32 %v8535, 16
  %v8953 = vrot.slane %v8951, 1
  %v8954 = vor.u32 %v8949, %v8953
  %v8956 = vshll.u32 %v8663, 16
  %v8958 = vrot.slane %v8956, 1
  %v8959 = vsel %vm1849, %v8954, %v8958
  %v8961 = vshrl.u32 %v8536, 16
  %v8963 = vshll.u32 %v8536, 16
  %v8965 = vrot.slane %v8963, 1
  %v8966 = vor.u32 %v8961, %v8965
  %v8968 = vshll.u32 %v8664, 16
  %v8970 = vrot.slane %v8968, 1
  %v8971 = vsel %vm1849, %v8966, %v8970
  %v8973 = vshrl.u32 %v8537, 16
  %v8975 = vshll.u32 %v8537, 16
  %v8977 = vrot.slane %v8975, 1
  %v8978 = vor.u32 %v8973, %v8977
  %v8980 = vshll.u32 %v8665, 16
  %v8982 = vrot.slane %v8980, 1
  %v8983 = vsel %vm1849, %v8978, %v8982
  %v8985 = vshrl.u32 %v8538, 16
  %v8987 = vshll.u32 %v8538, 16
  %v8989 = vrot.slane %v8987, 1
  %v8990 = vor.u32 %v8985, %v8989
  %v8992 = vshll.u32 %v8666, 16
  %v8994 = vrot.slane %v8992, 1
  %v8995 = vsel %vm1849, %v8990, %v8994
  %v8997 = vshrl.u32 %v8539, 16
  %v8999 = vshll.u32 %v8539, 16
  %v9001 = vrot.slane %v8999, 1
  %v9002 = vor.u32 %v8997, %v9001
  %v9004 = vshll.u32 %v8667, 16
  %v9006 = vrot.slane %v9004, 1
  %v9007 = vsel %vm1849, %v9002, %v9006
  %v9009 = vshrl.u32 %v8540, 16
  %v9011 = vshll.u32 %v8540, 16
  %v9013 = vrot.slane %v9011, 1
  %v9014 = vor.u32 %v9009, %v9013
  %v9016 = vshll.u32 %v8668, 16
  %v9018 = vrot.slane %v9016, 1
  %v9019 = vsel %vm1849, %v9014, %v9018
  %v9021 = vshrl.u32 %v8541, 16
  %v9023 = vshll.u32 %v8541, 16
  %v9025 = vrot.slane %v9023, 1
  %v9026 = vor.u32 %v9021, %v9025
  %v9028 = vshll.u32 %v8669, 16
  %v9030 = vrot.slane %v9028, 1
  %v9031 = vsel %vm1849, %v9026, %v9030
  %v9033 = vshrl.u32 %v8542, 16
  %v9035 = vshll.u32 %v8542, 16
  %v9037 = vrot.slane %v9035, 1
  %v9038 = vor.u32 %v9033, %v9037
  %v9040 = vshll.u32 %v8670, 16
  %v9042 = vrot.slane %v9040, 1
  %v9043 = vsel %vm1849, %v9038, %v9042
  %v9045 = vshrl.u32 %v8543, 16
  %v9047 = vshll.u32 %v8543, 16
  %v9049 = vrot.slane %v9047, 1
  %v9050 = vor.u32 %v9045, %v9049
  %v9052 = vshll.u32 %v8671, 16
  %v9054 = vrot.slane %v9052, 1
  %v9055 = vsel %vm1849, %v9050, %v9054
  %v9120 = vunpack.c.l.b16 %v8095
  %v9121 = vunpack.c.l.b16 %v8096
  %v9122 = vunpack.c.l.b16 %v8097
  %v9123 = vunpack.c.l.b16 %v8098
  %v9124 = vunpack.c.l.b16 %v8099
  %v9125 = vunpack.c.l.b16 %v8100
  %v9126 = vunpack.c.l.b16 %v8101
  %v9127 = vunpack.c.l.b16 %v8102
  %v9128 = vunpack.c.l.b16 %v8103
  %v9129 = vunpack.c.l.b16 %v8104
  %v9130 = vunpack.c.l.b16 %v8105
  %v9131 = vunpack.c.l.b16 %v8106
  %v9132 = vunpack.c.l.b16 %v8107
  %v9133 = vunpack.c.l.b16 %v8108
  %v9134 = vunpack.c.l.b16 %v8109
  %v9135 = vunpack.c.l.b16 %v8110
  %v9136 = vunpack.c.l.b16 %v8111
  %v9137 = vunpack.c.l.b16 %v8112
  %v9138 = vunpack.c.l.b16 %v8113
  %v9139 = vunpack.c.l.b16 %v8114
  %v9140 = vunpack.c.l.b16 %v8115
  %v9141 = vunpack.c.l.b16 %v8116
  %v9142 = vunpack.c.l.b16 %v8117
  %v9143 = vunpack.c.l.b16 %v8118
  %v9144 = vunpack.c.l.b16 %v8119
  %v9145 = vunpack.c.l.b16 %v8120
  %v9146 = vunpack.c.l.b16 %v8121
  %v9147 = vunpack.c.l.b16 %v8122
  %v9148 = vunpack.c.l.b16 %v8123
  %v9149 = vunpack.c.l.b16 %v8124
  %v9150 = vunpack.c.l.b16 %v8125
  %v9151 = vunpack.c.l.b16 %v8126
  %v9152 = vpack.c.b16 %v8449, %v9120
  %v9153 = vpack.c.b16 %v8451, %v9121
  %v9154 = vpack.c.b16 %v8453, %v9122
  %v9155 = vpack.c.b16 %v8455, %v9123
  %v9156 = vpack.c.b16 %v8457, %v9124
  %v9157 = vpack.c.b16 %v8459, %v9125
  %v9158 = vpack.c.b16 %v8461, %v9126
  %v9159 = vpack.c.b16 %v8463, %v9127
  %v9160 = vpack.c.b16 %v8465, %v9128
  %v9161 = vpack.c.b16 %v8467, %v9129
  %v9162 = vpack.c.b16 %v8469, %v9130
  %v9163 = vpack.c.b16 %v8471, %v9131
  %v9164 = vpack.c.b16 %v8473, %v9132
  %v9165 = vpack.c.b16 %v8475, %v9133
  %v9166 = vpack.c.b16 %v8477, %v9134
  %v9167 = vpack.c.b16 %v8479, %v9135
  %v9168 = vpack.c.b16 %v8481, %v9136
  %v9169 = vpack.c.b16 %v8483, %v9137
  %v9170 = vpack.c.b16 %v8485, %v9138
  %v9171 = vpack.c.b16 %v8487, %v9139
  %v9172 = vpack.c.b16 %v8489, %v9140
  %v9173 = vpack.c.b16 %v8491, %v9141
  %v9174 = vpack.c.b16 %v8493, %v9142
  %v9175 = vpack.c.b16 %v8495, %v9143
  %v9176 = vpack.c.b16 %v8497, %v9144
  %v9177 = vpack.c.b16 %v8499, %v9145
  %v9178 = vpack.c.b16 %v8501, %v9146
  %v9179 = vpack.c.b16 %v8503, %v9147
  %v9180 = vpack.c.b16 %v8505, %v9148
  %v9181 = vpack.c.b16 %v8507, %v9149
  %v9182 = vpack.c.b16 %v8509, %v9150
  %v9183 = vpack.c.b16 %v8511, %v9151
  %v9184 = vrot.slane %v9152, 1
  %v9185 = vrot.slane %v8640, 1
  %v9186 = vsel %vm2362, %v9184, %v9185
  %v9187 = vrot.slane %v9153, 1
  %v9188 = vrot.slane %v8641, 1
  %v9189 = vsel %vm2362, %v9187, %v9188
  %v9190 = vrot.slane %v9154, 1
  %v9191 = vrot.slane %v8642, 1
  %v9192 = vsel %vm2362, %v9190, %v9191
  %v9193 = vrot.slane %v9155, 1
  %v9194 = vrot.slane %v8643, 1
  %v9195 = vsel %vm2362, %v9193, %v9194
  %v9196 = vrot.slane %v9156, 1
  %v9197 = vrot.slane %v8644, 1
  %v9198 = vsel %vm2362, %v9196, %v9197
  %v9199 = vrot.slane %v9157, 1
  %v9200 = vrot.slane %v8645, 1
  %v9201 = vsel %vm2362, %v9199, %v9200
  %v9202 = vrot.slane %v9158, 1
  %v9203 = vrot.slane %v8646, 1
  %v9204 = vsel %vm2362, %v9202, %v9203
  %v9205 = vrot.slane %v9159, 1
  %v9206 = vrot.slane %v8647, 1
  %v9207 = vsel %vm2362, %v9205, %v9206
  %v9208 = vrot.slane %v9160, 1
  %v9209 = vrot.slane %v8648, 1
  %v9210 = vsel %vm2362, %v9208, %v9209
  %v9211 = vrot.slane %v9161, 1
  %v9212 = vrot.slane %v8649, 1
  %v9213 = vsel %vm2362, %v9211, %v9212
  %v9214 = vrot.slane %v9162, 1
  %v9215 = vrot.slane %v8650, 1
  %v9216 = vsel %vm2362, %v9214, %v9215
  %v9217 = vrot.slane %v9163, 1
  %v9218 = vrot.slane %v8651, 1
  %v9219 = vsel %vm2362, %v9217, %v9218
  %v9220 = vrot.slane %v9164, 1
  %v9221 = vrot.slane %v8652, 1
  %v9222 = vsel %vm2362, %v9220, %v9221
  %v9223 = vrot.slane %v9165, 1
  %v9224 = vrot.slane %v8653, 1
  %v9225 = vsel %vm2362, %v9223, %v9224
  %v9226 = vrot.slane %v9166, 1
  %v9227 = vrot.slane %v8654, 1
  %v9228 = vsel %vm2362, %v9226, %v9227
  %v9229 = vrot.slane %v9167, 1
  %v9230 = vrot.slane %v8655, 1
  %v9231 = vsel %vm2362, %v9229, %v9230
  %v9232 = vrot.slane %v9168, 1
  %v9233 = vrot.slane %v8656, 1
  %v9234 = vsel %vm2362, %v9232, %v9233
  %v9235 = vrot.slane %v9169, 1
  %v9236 = vrot.slane %v8657, 1
  %v9237 = vsel %vm2362, %v9235, %v9236
  %v9238 = vrot.slane %v9170, 1
  %v9239 = vrot.slane %v8658, 1
  %v9240 = vsel %vm2362, %v9238, %v9239
  %v9241 = vrot.slane %v9171, 1
  %v9242 = vrot.slane %v8659, 1
  %v9243 = vsel %vm2362, %v9241, %v9242
  %v9244 = vrot.slane %v9172, 1
  %v9245 = vrot.slane %v8660, 1
  %v9246 = vsel %vm2362, %v9244, %v9245
  %v9247 = vrot.slane %v9173, 1
  %v9248 = vrot.slane %v8661, 1
  %v9249 = vsel %vm2362, %v9247, %v9248
  %v9250 = vrot.slane %v9174, 1
  %v9251 = vrot.slane %v8662, 1
  %v9252 = vsel %vm2362, %v9250, %v9251
  %v9253 = vrot.slane %v9175, 1
  %v9254 = vrot.slane %v8663, 1
  %v9255 = vsel %vm2362, %v9253, %v9254
  %v9256 = vrot.slane %v9176, 1
  %v9257 = vrot.slane %v8664, 1
  %v9258 = vsel %vm2362, %v9256, %v9257
  %v9259 = vrot.slane %v9177, 1
  %v9260 = vrot.slane %v8665, 1
  %v9261 = vsel %vm2362, %v9259, %v9260
  %v9262 = vrot.slane %v9178, 1
  %v9263 = vrot.slane %v8666, 1
  %v9264 = vsel %vm2362, %v9262, %v9263
  %v9265 = vrot.slane %v9179, 1
  %v9266 = vrot.slane %v8667, 1
  %v9267 = vsel %vm2362, %v9265, %v9266
  %v9268 = vrot.slane %v9180, 1
  %v9269 = vrot.slane %v8668, 1
  %v9270 = vsel %vm2362, %v9268, %v9269
  %v9271 = vrot.slane %v9181, 1
  %v9272 = vrot.slane %v8669, 1
  %v9273 = vsel %vm2362, %v9271, %v9272
  %v9274 = vrot.slane %v9182, 1
  %v9275 = vrot.slane %v8670, 1
  %v9276 = vsel %vm2362, %v9274, %v9275
  %v9277 = vrot.slane %v9183, 1
  %v9278 = vrot.slane %v8671, 1
  %v9279 = vsel %vm2362, %v9277, %v9278
  %v9376 = vunpack.c.l.b16 %v8127
  %v9377 = vunpack.c.l.b16 %v8128
  %v9378 = vunpack.c.l.b16 %v8129
  %v9379 = vunpack.c.l.b16 %v8130
  %v9380 = vunpack.c.l.b16 %v8131
  %v9381 = vunpack.c.l.b16 %v8132
  %v9382 = vunpack.c.l.b16 %v8133
  %v9383 = vunpack.c.l.b16 %v8134
  %v9384 = vunpack.c.l.b16 %v8135
  %v9385 = vunpack.c.l.b16 %v8136
  %v9386 = vunpack.c.l.b16 %v8137
  %v9387 = vunpack.c.l.b16 %v8138
  %v9388 = vunpack.c.l.b16 %v8139
  %v9389 = vunpack.c.l.b16 %v8140
  %v9390 = vunpack.c.l.b16 %v8141
  %v9391 = vunpack.c.l.b16 %v8142
  %v9392 = vunpack.c.l.b16 %v8143
  %v9393 = vunpack.c.l.b16 %v8144
  %v9394 = vunpack.c.l.b16 %v8145
  %v9395 = vunpack.c.l.b16 %v8146
  %v9396 = vunpack.c.l.b16 %v8147
  %v9397 = vunpack.c.l.b16 %v8148
  %v9398 = vunpack.c.l.b16 %v8149
  %v9399 = vunpack.c.l.b16 %v8150
  %v9400 = vunpack.c.l.b16 %v8151
  %v9401 = vunpack.c.l.b16 %v8152
  %v9402 = vunpack.c.l.b16 %v8153
  %v9403 = vunpack.c.l.b16 %v8154
  %v9404 = vunpack.c.l.b16 %v8155
  %v9405 = vunpack.c.l.b16 %v8156
  %v9406 = vunpack.c.l.b16 %v8157
  %v9407 = vunpack.c.l.b16 %v8158
  %v9408 = vunpack.c.l.b16 %v8159
  %v9409 = vunpack.c.l.b16 %v8160
  %v9410 = vunpack.c.l.b16 %v8161
  %v9411 = vunpack.c.l.b16 %v8162
  %v9412 = vunpack.c.l.b16 %v8163
  %v9413 = vunpack.c.l.b16 %v8164
  %v9414 = vunpack.c.l.b16 %v8165
  %v9415 = vunpack.c.l.b16 %v8166
  %v9416 = vunpack.c.l.b16 %v8167
  %v9417 = vunpack.c.l.b16 %v8168
  %v9418 = vunpack.c.l.b16 %v8169
  %v9419 = vunpack.c.l.b16 %v8170
  %v9420 = vunpack.c.l.b16 %v8171
  %v9421 = vunpack.c.l.b16 %v8172
  %v9422 = vunpack.c.l.b16 %v8173
  %v9423 = vunpack.c.l.b16 %v8174
  %v9424 = vunpack.c.l.b16 %v8175
  %v9425 = vunpack.c.l.b16 %v8176
  %v9426 = vunpack.c.l.b16 %v8177
  %v9427 = vunpack.c.l.b16 %v8178
  %v9428 = vunpack.c.l.b16 %v8179
  %v9429 = vunpack.c.l.b16 %v8180
  %v9430 = vunpack.c.l.b16 %v8181
  %v9431 = vunpack.c.l.b16 %v8182
  %v9432 = vunpack.c.l.b16 %v8183
  %v9433 = vunpack.c.l.b16 %v8184
  %v9434 = vunpack.c.l.b16 %v8185
  %v9435 = vunpack.c.l.b16 %v8186
  %v9436 = vunpack.c.l.b16 %v8187
  %v9437 = vunpack.c.l.b16 %v8188
  %v9438 = vunpack.c.l.b16 %v8189
  %v9439 = vunpack.c.l.b16 %v8190
  %v9440 = vpack.c.b16 %v9377, %v9376
  %v9441 = vpack.c.b16 %v9379, %v9378
  %v9442 = vpack.c.b16 %v9381, %v9380
  %v9443 = vpack.c.b16 %v9383, %v9382
  %v9444 = vpack.c.b16 %v9385, %v9384
  %v9445 = vpack.c.b16 %v9387, %v9386
  %v9446 = vpack.c.b16 %v9389, %v9388
  %v9447 = vpack.c.b16 %v9391, %v9390
  %v9448 = vpack.c.b16 %v9393, %v9392
  %v9449 = vpack.c.b16 %v9395, %v9394
  %v9450 = vpack.c.b16 %v9397, %v9396
  %v9451 = vpack.c.b16 %v9399, %v9398
  %v9452 = vpack.c.b16 %v9401, %v9400
  %v9453 = vpack.c.b16 %v9403, %v9402
  %v9454 = vpack.c.b16 %v9405, %v9404
  %v9455 = vpack.c.b16 %v9407, %v9406
  %v9456 = vpack.c.b16 %v9409, %v9408
  %v9457 = vpack.c.b16 %v9411, %v9410
  %v9458 = vpack.c.b16 %v9413, %v9412
  %v9459 = vpack.c.b16 %v9415, %v9414
  %v9460 = vpack.c.b16 %v9417, %v9416
  %v9461 = vpack.c.b16 %v9419, %v9418
  %v9462 = vpack.c.b16 %v9421, %v9420
  %v9463 = vpack.c.b16 %v9423, %v9422
  %v9464 = vpack.c.b16 %v9425, %v9424
  %v9465 = vpack.c.b16 %v9427, %v9426
  %v9466 = vpack.c.b16 %v9429, %v9428
  %v9467 = vpack.c.b16 %v9431, %v9430
  %v9468 = vpack.c.b16 %v9433, %v9432
  %v9469 = vpack.c.b16 %v9435, %v9434
  %v9470 = vpack.c.b16 %v9437, %v9436
  %v9471 = vpack.c.b16 %v9439, %v9438
  %v9536 = vunpack.c.l.b16 %v8191
  %v9537 = vunpack.c.l.b16 %v8192
  %v9538 = vunpack.c.l.b16 %v8193
  %v9539 = vunpack.c.l.b16 %v8194
  %v9540 = vunpack.c.l.b16 %v8195
  %v9541 = vunpack.c.l.b16 %v8196
  %v9542 = vunpack.c.l.b16 %v8197
  %v9543 = vunpack.c.l.b16 %v8198
  %v9544 = vunpack.c.l.b16 %v8199
  %v9545 = vunpack.c.l.b16 %v8200
  %v9546 = vunpack.c.l.b16 %v8201
  %v9547 = vunpack.c.l.b16 %v8202
  %v9548 = vunpack.c.l.b16 %v8203
  %v9549 = vunpack.c.l.b16 %v8204
  %v9550 = vunpack.c.l.b16 %v8205
  %v9551 = vunpack.c.l.b16 %v8206
  %v9552 = vunpack.c.l.b16 %v8207
  %v9553 = vunpack.c.l.b16 %v8208
  %v9554 = vunpack.c.l.b16 %v8209
  %v9555 = vunpack.c.l.b16 %v8210
  %v9556 = vunpack.c.l.b16 %v8211
  %v9557 = vunpack.c.l.b16 %v8212
  %v9558 = vunpack.c.l.b16 %v8213
  %v9559 = vunpack.c.l.b16 %v8214
  %v9560 = vunpack.c.l.b16 %v8215
  %v9561 = vunpack.c.l.b16 %v8216
  %v9562 = vunpack.c.l.b16 %v8217
  %v9563 = vunpack.c.l.b16 %v8218
  %v9564 = vunpack.c.l.b16 %v8219
  %v9565 = vunpack.c.l.b16 %v8220
  %v9566 = vunpack.c.l.b16 %v8221
  %v9567 = vunpack.c.l.b16 %v8222
  %v9568 = vpack.c.b16 %v9536, %v9536
  %v9569 = vpack.c.b16 %v9537, %v9537
  %v9570 = vpack.c.b16 %v9538, %v9538
  %v9571 = vpack.c.b16 %v9539, %v9539
  %v9572 = vpack.c.b16 %v9540, %v9540
  %v9573 = vpack.c.b16 %v9541, %v9541
  %v9574 = vpack.c.b16 %v9542, %v9542
  %v9575 = vpack.c.b16 %v9543, %v9543
  %v9576 = vpack.c.b16 %v9544, %v9544
  %v9577 = vpack.c.b16 %v9545, %v9545
  %v9578 = vpack.c.b16 %v9546, %v9546
  %v9579 = vpack.c.b16 %v9547, %v9547
  %v9580 = vpack.c.b16 %v9548, %v9548
  %v9581 = vpack.c.b16 %v9549, %v9549
  %v9582 = vpack.c.b16 %v9550, %v9550
  %v9583 = vpack.c.b16 %v9551, %v9551
  %v9584 = vpack.c.b16 %v9552, %v9552
  %v9585 = vpack.c.b16 %v9553, %v9553
  %v9586 = vpack.c.b16 %v9554, %v9554
  %v9587 = vpack.c.b16 %v9555, %v9555
  %v9588 = vpack.c.b16 %v9556, %v9556
  %v9589 = vpack.c.b16 %v9557, %v9557
  %v9590 = vpack.c.b16 %v9558, %v9558
  %v9591 = vpack.c.b16 %v9559, %v9559
  %v9592 = vpack.c.b16 %v9560, %v9560
  %v9593 = vpack.c.b16 %v9561, %v9561
  %v9594 = vpack.c.b16 %v9562, %v9562
  %v9595 = vpack.c.b16 %v9563, %v9563
  %v9596 = vpack.c.b16 %v9564, %v9564
  %v9597 = vpack.c.b16 %v9565, %v9565
  %v9598 = vpack.c.b16 %v9566, %v9566
  %v9599 = vpack.c.b16 %v9567, %v9567
  %v9601 = vshrl.u32 %v9440, 16
  %v9603 = vshll.u32 %v9440, 16
  %v9605 = vrot.slane %v9603, 1
  %v9606 = vor.u32 %v9601, %v9605
  %v9608 = vshll.u32 %v9568, 16
  %v9610 = vrot.slane %v9608, 1
  %v9611 = vsel %vm1849, %v9606, %v9610
  %v9613 = vshrl.u32 %v9441, 16
  %v9615 = vshll.u32 %v9441, 16
  %v9617 = vrot.slane %v9615, 1
  %v9618 = vor.u32 %v9613, %v9617
  %v9620 = vshll.u32 %v9569, 16
  %v9622 = vrot.slane %v9620, 1
  %v9623 = vsel %vm1849, %v9618, %v9622
  %v9625 = vshrl.u32 %v9442, 16
  %v9627 = vshll.u32 %v9442, 16
  %v9629 = vrot.slane %v9627, 1
  %v9630 = vor.u32 %v9625, %v9629
  %v9632 = vshll.u32 %v9570, 16
  %v9634 = vrot.slane %v9632, 1
  %v9635 = vsel %vm1849, %v9630, %v9634
  %v9637 = vshrl.u32 %v9443, 16
  %v9639 = vshll.u32 %v9443, 16
  %v9641 = vrot.slane %v9639, 1
  %v9642 = vor.u32 %v9637, %v9641
  %v9644 = vshll.u32 %v9571, 16
  %v9646 = vrot.slane %v9644, 1
  %v9647 = vsel %vm1849, %v9642, %v9646
  %v9649 = vshrl.u32 %v9444, 16
  %v9651 = vshll.u32 %v9444, 16
  %v9653 = vrot.slane %v9651, 1
  %v9654 = vor.u32 %v9649, %v9653
  %v9656 = vshll.u32 %v9572, 16
  %v9658 = vrot.slane %v9656, 1
  %v9659 = vsel %vm1849, %v9654, %v9658
  %v9661 = vshrl.u32 %v9445, 16
  %v9663 = vshll.u32 %v9445, 16
  %v9665 = vrot.slane %v9663, 1
  %v9666 = vor.u32 %v9661, %v9665
  %v9668 = vshll.u32 %v9573, 16
  %v9670 = vrot.slane %v9668, 1
  %v9671 = vsel %vm1849, %v9666, %v9670
  %v9673 = vshrl.u32 %v9446, 16
  %v9675 = vshll.u32 %v9446, 16
  %v9677 = vrot.slane %v9675, 1
  %v9678 = vor.u32 %v9673, %v9677
  %v9680 = vshll.u32 %v9574, 16
  %v9682 = vrot.slane %v9680, 1
  %v9683 = vsel %vm1849, %v9678, %v9682
  %v9685 = vshrl.u32 %v9447, 16
  %v9687 = vshll.u32 %v9447, 16
  %v9689 = vrot.slane %v9687, 1
  %v9690 = vor.u32 %v9685, %v9689
  %v9692 = vshll.u32 %v9575, 16
  %v9694 = vrot.slane %v9692, 1
  %v9695 = vsel %vm1849, %v9690, %v9694
  %v9697 = vshrl.u32 %v9448, 16
  %v9699 = vshll.u32 %v9448, 16
  %v9701 = vrot.slane %v9699, 1
  %v9702 = vor.u32 %v9697, %v9701
  %v9704 = vshll.u32 %v9576, 16
  %v9706 = vrot.slane %v9704, 1
  %v9707 = vsel %vm1849, %v9702, %v9706
  %v9709 = vshrl.u32 %v9449, 16
  %v9711 = vshll.u32 %v9449, 16
  %v9713 = vrot.slane %v9711, 1
  %v9714 = vor.u32 %v9709, %v9713
  %v9716 = vshll.u32 %v9577, 16
  %v9718 = vrot.slane %v9716, 1
  %v9719 = vsel %vm1849, %v9714, %v9718
  %v9721 = vshrl.u32 %v9450, 16
  %v9723 = vshll.u32 %v9450, 16
  %v9725 = vrot.slane %v9723, 1
  %v9726 = vor.u32 %v9721, %v9725
  %v9728 = vshll.u32 %v9578, 16
  %v9730 = vrot.slane %v9728, 1
  %v9731 = vsel %vm1849, %v9726, %v9730
  %v9733 = vshrl.u32 %v9451, 16
  %v9735 = vshll.u32 %v9451, 16
  %v9737 = vrot.slane %v9735, 1
  %v9738 = vor.u32 %v9733, %v9737
  %v9740 = vshll.u32 %v9579, 16
  %v9742 = vrot.slane %v9740, 1
  %v9743 = vsel %vm1849, %v9738, %v9742
  %v9745 = vshrl.u32 %v9452, 16
  %v9747 = vshll.u32 %v9452, 16
  %v9749 = vrot.slane %v9747, 1
  %v9750 = vor.u32 %v9745, %v9749
  %v9752 = vshll.u32 %v9580, 16
  %v9754 = vrot.slane %v9752, 1
  %v9755 = vsel %vm1849, %v9750, %v9754
  %v9757 = vshrl.u32 %v9453, 16
  %v9759 = vshll.u32 %v9453, 16
  %v9761 = vrot.slane %v9759, 1
  %v9762 = vor.u32 %v9757, %v9761
  %v9764 = vshll.u32 %v9581, 16
  %v9766 = vrot.slane %v9764, 1
  %v9767 = vsel %vm1849, %v9762, %v9766
  %v9769 = vshrl.u32 %v9454, 16
  %v9771 = vshll.u32 %v9454, 16
  %v9773 = vrot.slane %v9771, 1
  %v9774 = vor.u32 %v9769, %v9773
  %v9776 = vshll.u32 %v9582, 16
  %v9778 = vrot.slane %v9776, 1
  %v9779 = vsel %vm1849, %v9774, %v9778
  %v9781 = vshrl.u32 %v9455, 16
  %v9783 = vshll.u32 %v9455, 16
  %v9785 = vrot.slane %v9783, 1
  %v9786 = vor.u32 %v9781, %v9785
  %v9788 = vshll.u32 %v9583, 16
  %v9790 = vrot.slane %v9788, 1
  %v9791 = vsel %vm1849, %v9786, %v9790
  %v9793 = vshrl.u32 %v9456, 16
  %v9795 = vshll.u32 %v9456, 16
  %v9797 = vrot.slane %v9795, 1
  %v9798 = vor.u32 %v9793, %v9797
  %v9800 = vshll.u32 %v9584, 16
  %v9802 = vrot.slane %v9800, 1
  %v9803 = vsel %vm1849, %v9798, %v9802
  %v9805 = vshrl.u32 %v9457, 16
  %v9807 = vshll.u32 %v9457, 16
  %v9809 = vrot.slane %v9807, 1
  %v9810 = vor.u32 %v9805, %v9809
  %v9812 = vshll.u32 %v9585, 16
  %v9814 = vrot.slane %v9812, 1
  %v9815 = vsel %vm1849, %v9810, %v9814
  %v9817 = vshrl.u32 %v9458, 16
  %v9819 = vshll.u32 %v9458, 16
  %v9821 = vrot.slane %v9819, 1
  %v9822 = vor.u32 %v9817, %v9821
  %v9824 = vshll.u32 %v9586, 16
  %v9826 = vrot.slane %v9824, 1
  %v9827 = vsel %vm1849, %v9822, %v9826
  %v9829 = vshrl.u32 %v9459, 16
  %v9831 = vshll.u32 %v9459, 16
  %v9833 = vrot.slane %v9831, 1
  %v9834 = vor.u32 %v9829, %v9833
  %v9836 = vshll.u32 %v9587, 16
  %v9838 = vrot.slane %v9836, 1
  %v9839 = vsel %vm1849, %v9834, %v9838
  %v9841 = vshrl.u32 %v9460, 16
  %v9843 = vshll.u32 %v9460, 16
  %v9845 = vrot.slane %v9843, 1
  %v9846 = vor.u32 %v9841, %v9845
  %v9848 = vshll.u32 %v9588, 16
  %v9850 = vrot.slane %v9848, 1
  %v9851 = vsel %vm1849, %v9846, %v9850
  %v9853 = vshrl.u32 %v9461, 16
  %v9855 = vshll.u32 %v9461, 16
  %v9857 = vrot.slane %v9855, 1
  %v9858 = vor.u32 %v9853, %v9857
  %v9860 = vshll.u32 %v9589, 16
  %v9862 = vrot.slane %v9860, 1
  %v9863 = vsel %vm1849, %v9858, %v9862
  %v9865 = vshrl.u32 %v9462, 16
  %v9867 = vshll.u32 %v9462, 16
  %v9869 = vrot.slane %v9867, 1
  %v9870 = vor.u32 %v9865, %v9869
  %v9872 = vshll.u32 %v9590, 16
  %v9874 = vrot.slane %v9872, 1
  %v9875 = vsel %vm1849, %v9870, %v9874
  %v9877 = vshrl.u32 %v9463, 16
  %v9879 = vshll.u32 %v9463, 16
  %v9881 = vrot.slane %v9879, 1
  %v9882 = vor.u32 %v9877, %v9881
  %v9884 = vshll.u32 %v9591, 16
  %v9886 = vrot.slane %v9884, 1
  %v9887 = vsel %vm1849, %v9882, %v9886
  %v9889 = vshrl.u32 %v9464, 16
  %v9891 = vshll.u32 %v9464, 16
  %v9893 = vrot.slane %v9891, 1
  %v9894 = vor.u32 %v9889, %v9893
  %v9896 = vshll.u32 %v9592, 16
  %v9898 = vrot.slane %v9896, 1
  %v9899 = vsel %vm1849, %v9894, %v9898
  %v9901 = vshrl.u32 %v9465, 16
  %v9903 = vshll.u32 %v9465, 16
  %v9905 = vrot.slane %v9903, 1
  %v9906 = vor.u32 %v9901, %v9905
  %v9908 = vshll.u32 %v9593, 16
  %v9910 = vrot.slane %v9908, 1
  %v9911 = vsel %vm1849, %v9906, %v9910
  %v9913 = vshrl.u32 %v9466, 16
  %v9915 = vshll.u32 %v9466, 16
  %v9917 = vrot.slane %v9915, 1
  %v9918 = vor.u32 %v9913, %v9917
  %v9920 = vshll.u32 %v9594, 16
  %v9922 = vrot.slane %v9920, 1
  %v9923 = vsel %vm1849, %v9918, %v9922
  %v9925 = vshrl.u32 %v9467, 16
  %v9927 = vshll.u32 %v9467, 16
  %v9929 = vrot.slane %v9927, 1
  %v9930 = vor.u32 %v9925, %v9929
  %v9932 = vshll.u32 %v9595, 16
  %v9934 = vrot.slane %v9932, 1
  %v9935 = vsel %vm1849, %v9930, %v9934
  %v9937 = vshrl.u32 %v9468, 16
  %v9939 = vshll.u32 %v9468, 16
  %v9941 = vrot.slane %v9939, 1
  %v9942 = vor.u32 %v9937, %v9941
  %v9944 = vshll.u32 %v9596, 16
  %v9946 = vrot.slane %v9944, 1
  %v9947 = vsel %vm1849, %v9942, %v9946
  %v9949 = vshrl.u32 %v9469, 16
  %v9951 = vshll.u32 %v9469, 16
  %v9953 = vrot.slane %v9951, 1
  %v9954 = vor.u32 %v9949, %v9953
  %v9956 = vshll.u32 %v9597, 16
  %v9958 = vrot.slane %v9956, 1
  %v9959 = vsel %vm1849, %v9954, %v9958
  %v9961 = vshrl.u32 %v9470, 16
  %v9963 = vshll.u32 %v9470, 16
  %v9965 = vrot.slane %v9963, 1
  %v9966 = vor.u32 %v9961, %v9965
  %v9968 = vshll.u32 %v9598, 16
  %v9970 = vrot.slane %v9968, 1
  %v9971 = vsel %vm1849, %v9966, %v9970
  %v9973 = vshrl.u32 %v9471, 16
  %v9975 = vshll.u32 %v9471, 16
  %v9977 = vrot.slane %v9975, 1
  %v9978 = vor.u32 %v9973, %v9977
  %v9980 = vshll.u32 %v9599, 16
  %v9982 = vrot.slane %v9980, 1
  %v9983 = vsel %vm1849, %v9978, %v9982
  %v10048 = vunpack.c.l.b16 %v8223
  %v10049 = vunpack.c.l.b16 %v8224
  %v10050 = vunpack.c.l.b16 %v8225
  %v10051 = vunpack.c.l.b16 %v8226
  %v10052 = vunpack.c.l.b16 %v8227
  %v10053 = vunpack.c.l.b16 %v8228
  %v10054 = vunpack.c.l.b16 %v8229
  %v10055 = vunpack.c.l.b16 %v8230
  %v10056 = vunpack.c.l.b16 %v8231
  %v10057 = vunpack.c.l.b16 %v8232
  %v10058 = vunpack.c.l.b16 %v8233
  %v10059 = vunpack.c.l.b16 %v8234
  %v10060 = vunpack.c.l.b16 %v8235
  %v10061 = vunpack.c.l.b16 %v8236
  %v10062 = vunpack.c.l.b16 %v8237
  %v10063 = vunpack.c.l.b16 %v8238
  %v10064 = vunpack.c.l.b16 %v8239
  %v10065 = vunpack.c.l.b16 %v8240
  %v10066 = vunpack.c.l.b16 %v8241
  %v10067 = vunpack.c.l.b16 %v8242
  %v10068 = vunpack.c.l.b16 %v8243
  %v10069 = vunpack.c.l.b16 %v8244
  %v10070 = vunpack.c.l.b16 %v8245
  %v10071 = vunpack.c.l.b16 %v8246
  %v10072 = vunpack.c.l.b16 %v8247
  %v10073 = vunpack.c.l.b16 %v8248
  %v10074 = vunpack.c.l.b16 %v8249
  %v10075 = vunpack.c.l.b16 %v8250
  %v10076 = vunpack.c.l.b16 %v8251
  %v10077 = vunpack.c.l.b16 %v8252
  %v10078 = vunpack.c.l.b16 %v8253
  %v10079 = vunpack.c.l.b16 %v8254
  %v10080 = vpack.c.b16 %v9377, %v10048
  %v10081 = vpack.c.b16 %v9379, %v10049
  %v10082 = vpack.c.b16 %v9381, %v10050
  %v10083 = vpack.c.b16 %v9383, %v10051
  %v10084 = vpack.c.b16 %v9385, %v10052
  %v10085 = vpack.c.b16 %v9387, %v10053
  %v10086 = vpack.c.b16 %v9389, %v10054
  %v10087 = vpack.c.b16 %v9391, %v10055
  %v10088 = vpack.c.b16 %v9393, %v10056
  %v10089 = vpack.c.b16 %v9395, %v10057
  %v10090 = vpack.c.b16 %v9397, %v10058
  %v10091 = vpack.c.b16 %v9399, %v10059
  %v10092 = vpack.c.b16 %v9401, %v10060
  %v10093 = vpack.c.b16 %v9403, %v10061
  %v10094 = vpack.c.b16 %v9405, %v10062
  %v10095 = vpack.c.b16 %v9407, %v10063
  %v10096 = vpack.c.b16 %v9409, %v10064
  %v10097 = vpack.c.b16 %v9411, %v10065
  %v10098 = vpack.c.b16 %v9413, %v10066
  %v10099 = vpack.c.b16 %v9415, %v10067
  %v10100 = vpack.c.b16 %v9417, %v10068
  %v10101 = vpack.c.b16 %v9419, %v10069
  %v10102 = vpack.c.b16 %v9421, %v10070
  %v10103 = vpack.c.b16 %v9423, %v10071
  %v10104 = vpack.c.b16 %v9425, %v10072
  %v10105 = vpack.c.b16 %v9427, %v10073
  %v10106 = vpack.c.b16 %v9429, %v10074
  %v10107 = vpack.c.b16 %v9431, %v10075
  %v10108 = vpack.c.b16 %v9433, %v10076
  %v10109 = vpack.c.b16 %v9435, %v10077
  %v10110 = vpack.c.b16 %v9437, %v10078
  %v10111 = vpack.c.b16 %v9439, %v10079
  %v10112 = vrot.slane %v10080, 1
  %v10113 = vrot.slane %v9568, 1
  %v10114 = vsel %vm2362, %v10112, %v10113
  %v10115 = vrot.slane %v10081, 1
  %v10116 = vrot.slane %v9569, 1
  %v10117 = vsel %vm2362, %v10115, %v10116
  %v10118 = vrot.slane %v10082, 1
  %v10119 = vrot.slane %v9570, 1
  %v10120 = vsel %vm2362, %v10118, %v10119
  %v10121 = vrot.slane %v10083, 1
  %v10122 = vrot.slane %v9571, 1
  %v10123 = vsel %vm2362, %v10121, %v10122
  %v10124 = vrot.slane %v10084, 1
  %v10125 = vrot.slane %v9572, 1
  %v10126 = vsel %vm2362, %v10124, %v10125
  %v10127 = vrot.slane %v10085, 1
  %v10128 = vrot.slane %v9573, 1
  %v10129 = vsel %vm2362, %v10127, %v10128
  %v10130 = vrot.slane %v10086, 1
  %v10131 = vrot.slane %v9574, 1
  %v10132 = vsel %vm2362, %v10130, %v10131
  %v10133 = vrot.slane %v10087, 1
  %v10134 = vrot.slane %v9575, 1
  %v10135 = vsel %vm2362, %v10133, %v10134
  %v10136 = vrot.slane %v10088, 1
  %v10137 = vrot.slane %v9576, 1
  %v10138 = vsel %vm2362, %v10136, %v10137
  %v10139 = vrot.slane %v10089, 1
  %v10140 = vrot.slane %v9577, 1
  %v10141 = vsel %vm2362, %v10139, %v10140
  %v10142 = vrot.slane %v10090, 1
  %v10143 = vrot.slane %v9578, 1
  %v10144 = vsel %vm2362, %v10142, %v10143
  %v10145 = vrot.slane %v10091, 1
  %v10146 = vrot.slane %v9579, 1
  %v10147 = vsel %vm2362, %v10145, %v10146
  %v10148 = vrot.slane %v10092, 1
  %v10149 = vrot.slane %v9580, 1
  %v10150 = vsel %vm2362, %v10148, %v10149
  %v10151 = vrot.slane %v10093, 1
  %v10152 = vrot.slane %v9581, 1
  %v10153 = vsel %vm2362, %v10151, %v10152
  %v10154 = vrot.slane %v10094, 1
  %v10155 = vrot.slane %v9582, 1
  %v10156 = vsel %vm2362, %v10154, %v10155
  %v10157 = vrot.slane %v10095, 1
  %v10158 = vrot.slane %v9583, 1
  %v10159 = vsel %vm2362, %v10157, %v10158
  %v10160 = vrot.slane %v10096, 1
  %v10161 = vrot.slane %v9584, 1
  %v10162 = vsel %vm2362, %v10160, %v10161
  %v10163 = vrot.slane %v10097, 1
  %v10164 = vrot.slane %v9585, 1
  %v10165 = vsel %vm2362, %v10163, %v10164
  %v10166 = vrot.slane %v10098, 1
  %v10167 = vrot.slane %v9586, 1
  %v10168 = vsel %vm2362, %v10166, %v10167
  %v10169 = vrot.slane %v10099, 1
  %v10170 = vrot.slane %v9587, 1
  %v10171 = vsel %vm2362, %v10169, %v10170
  %v10172 = vrot.slane %v10100, 1
  %v10173 = vrot.slane %v9588, 1
  %v10174 = vsel %vm2362, %v10172, %v10173
  %v10175 = vrot.slane %v10101, 1
  %v10176 = vrot.slane %v9589, 1
  %v10177 = vsel %vm2362, %v10175, %v10176
  %v10178 = vrot.slane %v10102, 1
  %v10179 = vrot.slane %v9590, 1
  %v10180 = vsel %vm2362, %v10178, %v10179
  %v10181 = vrot.slane %v10103, 1
  %v10182 = vrot.slane %v9591, 1
  %v10183 = vsel %vm2362, %v10181, %v10182
  %v10184 = vrot.slane %v10104, 1
  %v10185 = vrot.slane %v9592, 1
  %v10186 = vsel %vm2362, %v10184, %v10185
  %v10187 = vrot.slane %v10105, 1
  %v10188 = vrot.slane %v9593, 1
  %v10189 = vsel %vm2362, %v10187, %v10188
  %v10190 = vrot.slane %v10106, 1
  %v10191 = vrot.slane %v9594, 1
  %v10192 = vsel %vm2362, %v10190, %v10191
  %v10193 = vrot.slane %v10107, 1
  %v10194 = vrot.slane %v9595, 1
  %v10195 = vsel %vm2362, %v10193, %v10194
  %v10196 = vrot.slane %v10108, 1
  %v10197 = vrot.slane %v9596, 1
  %v10198 = vsel %vm2362, %v10196, %v10197
  %v10199 = vrot.slane %v10109, 1
  %v10200 = vrot.slane %v9597, 1
  %v10201 = vsel %vm2362, %v10199, %v10200
  %v10202 = vrot.slane %v10110, 1
  %v10203 = vrot.slane %v9598, 1
  %v10204 = vsel %vm2362, %v10202, %v10203
  %v10205 = vrot.slane %v10111, 1
  %v10206 = vrot.slane %v9599, 1
  %v10207 = vsel %vm2362, %v10205, %v10206
  %v10304 = vunpack.c.l.b16 %v8256
  %v10305 = vunpack.c.l.b16 %v8257
  %v10306 = vunpack.c.l.b16 %v8258
  %v10307 = vunpack.c.l.b16 %v8259
  %v10308 = vunpack.c.l.b16 %v8260
  %v10309 = vunpack.c.l.b16 %v8261
  %v10310 = vunpack.c.l.b16 %v8262
  %v10311 = vunpack.c.l.b16 %v8263
  %v10312 = vunpack.c.l.b16 %v8264
  %v10313 = vunpack.c.l.b16 %v8265
  %v10314 = vunpack.c.l.b16 %v8266
  %v10315 = vunpack.c.l.b16 %v8267
  %v10316 = vunpack.c.l.b16 %v8268
  %v10317 = vunpack.c.l.b16 %v8269
  %v10318 = vunpack.c.l.b16 %v8270
  %v10319 = vunpack.c.l.b16 %v8271
  %v10320 = vunpack.c.l.b16 %v8272
  %v10321 = vunpack.c.l.b16 %v8273
  %v10322 = vunpack.c.l.b16 %v8274
  %v10323 = vunpack.c.l.b16 %v8275
  %v10324 = vunpack.c.l.b16 %v8276
  %v10325 = vunpack.c.l.b16 %v8277
  %v10326 = vunpack.c.l.b16 %v8278
  %v10327 = vunpack.c.l.b16 %v8279
  %v10328 = vunpack.c.l.b16 %v8280
  %v10329 = vunpack.c.l.b16 %v8281
  %v10330 = vunpack.c.l.b16 %v8282
  %v10331 = vunpack.c.l.b16 %v8283
  %v10332 = vunpack.c.l.b16 %v8284
  %v10333 = vunpack.c.l.b16 %v8285
  %v10334 = vunpack.c.l.b16 %v8286
  %v10335 = vunpack.c.l.b16 %v8287
  %v10336 = vunpack.c.l.b16 %v8288
  %v10337 = vunpack.c.l.b16 %v8289
  %v10338 = vunpack.c.l.b16 %v8290
  %v10339 = vunpack.c.l.b16 %v8291
  %v10340 = vunpack.c.l.b16 %v8292
  %v10341 = vunpack.c.l.b16 %v8293
  %v10342 = vunpack.c.l.b16 %v8294
  %v10343 = vunpack.c.l.b16 %v8295
  %v10344 = vunpack.c.l.b16 %v8296
  %v10345 = vunpack.c.l.b16 %v8297
  %v10346 = vunpack.c.l.b16 %v8298
  %v10347 = vunpack.c.l.b16 %v8299
  %v10348 = vunpack.c.l.b16 %v8300
  %v10349 = vunpack.c.l.b16 %v8301
  %v10350 = vunpack.c.l.b16 %v8302
  %v10351 = vunpack.c.l.b16 %v8303
  %v10352 = vunpack.c.l.b16 %v8304
  %v10353 = vunpack.c.l.b16 %v8305
  %v10354 = vunpack.c.l.b16 %v8306
  %v10355 = vunpack.c.l.b16 %v8307
  %v10356 = vunpack.c.l.b16 %v8308
  %v10357 = vunpack.c.l.b16 %v8309
  %v10358 = vunpack.c.l.b16 %v8310
  %v10359 = vunpack.c.l.b16 %v8311
  %v10360 = vunpack.c.l.b16 %v8312
  %v10361 = vunpack.c.l.b16 %v8313
  %v10362 = vunpack.c.l.b16 %v8314
  %v10363 = vunpack.c.l.b16 %v8315
  %v10364 = vunpack.c.l.b16 %v8316
  %v10365 = vunpack.c.l.b16 %v8317
  %v10366 = vunpack.c.l.b16 %v8318
  %v10367 = vunpack.c.l.b16 %v8319
  %v10368 = vpack.c.b16 %v10305, %v10304
  %v10369 = vpack.c.b16 %v10307, %v10306
  %v10370 = vpack.c.b16 %v10309, %v10308
  %v10371 = vpack.c.b16 %v10311, %v10310
  %v10372 = vpack.c.b16 %v10313, %v10312
  %v10373 = vpack.c.b16 %v10315, %v10314
  %v10374 = vpack.c.b16 %v10317, %v10316
  %v10375 = vpack.c.b16 %v10319, %v10318
  %v10376 = vpack.c.b16 %v10321, %v10320
  %v10377 = vpack.c.b16 %v10323, %v10322
  %v10378 = vpack.c.b16 %v10325, %v10324
  %v10379 = vpack.c.b16 %v10327, %v10326
  %v10380 = vpack.c.b16 %v10329, %v10328
  %v10381 = vpack.c.b16 %v10331, %v10330
  %v10382 = vpack.c.b16 %v10333, %v10332
  %v10383 = vpack.c.b16 %v10335, %v10334
  %v10384 = vpack.c.b16 %v10337, %v10336
  %v10385 = vpack.c.b16 %v10339, %v10338
  %v10386 = vpack.c.b16 %v10341, %v10340
  %v10387 = vpack.c.b16 %v10343, %v10342
  %v10388 = vpack.c.b16 %v10345, %v10344
  %v10389 = vpack.c.b16 %v10347, %v10346
  %v10390 = vpack.c.b16 %v10349, %v10348
  %v10391 = vpack.c.b16 %v10351, %v10350
  %v10392 = vpack.c.b16 %v10353, %v10352
  %v10393 = vpack.c.b16 %v10355, %v10354
  %v10394 = vpack.c.b16 %v10357, %v10356
  %v10395 = vpack.c.b16 %v10359, %v10358
  %v10396 = vpack.c.b16 %v10361, %v10360
  %v10397 = vpack.c.b16 %v10363, %v10362
  %v10398 = vpack.c.b16 %v10365, %v10364
  %v10399 = vpack.c.b16 %v10367, %v10366
  %v10464 = vunpack.c.l.b16 %v8320
  %v10465 = vunpack.c.l.b16 %v8321
  %v10466 = vunpack.c.l.b16 %v8322
  %v10467 = vunpack.c.l.b16 %v8323
  %v10468 = vunpack.c.l.b16 %v8324
  %v10469 = vunpack.c.l.b16 %v8325
  %v10470 = vunpack.c.l.b16 %v8326
  %v10471 = vunpack.c.l.b16 %v8327
  %v10472 = vunpack.c.l.b16 %v8328
  %v10473 = vunpack.c.l.b16 %v8329
  %v10474 = vunpack.c.l.b16 %v8330
  %v10475 = vunpack.c.l.b16 %v8331
  %v10476 = vunpack.c.l.b16 %v8332
  %v10477 = vunpack.c.l.b16 %v8333
  %v10478 = vunpack.c.l.b16 %v8334
  %v10479 = vunpack.c.l.b16 %v8335
  %v10480 = vunpack.c.l.b16 %v8336
  %v10481 = vunpack.c.l.b16 %v8337
  %v10482 = vunpack.c.l.b16 %v8338
  %v10483 = vunpack.c.l.b16 %v8339
  %v10484 = vunpack.c.l.b16 %v8340
  %v10485 = vunpack.c.l.b16 %v8341
  %v10486 = vunpack.c.l.b16 %v8342
  %v10487 = vunpack.c.l.b16 %v8343
  %v10488 = vunpack.c.l.b16 %v8344
  %v10489 = vunpack.c.l.b16 %v8345
  %v10490 = vunpack.c.l.b16 %v8346
  %v10491 = vunpack.c.l.b16 %v8347
  %v10492 = vunpack.c.l.b16 %v8348
  %v10493 = vunpack.c.l.b16 %v8349
  %v10494 = vunpack.c.l.b16 %v8350
  %v10495 = vunpack.c.l.b16 %v8351
  %v10496 = vpack.c.b16 %v10464, %v10464
  %v10497 = vpack.c.b16 %v10465, %v10465
  %v10498 = vpack.c.b16 %v10466, %v10466
  %v10499 = vpack.c.b16 %v10467, %v10467
  %v10500 = vpack.c.b16 %v10468, %v10468
  %v10501 = vpack.c.b16 %v10469, %v10469
  %v10502 = vpack.c.b16 %v10470, %v10470
  %v10503 = vpack.c.b16 %v10471, %v10471
  %v10504 = vpack.c.b16 %v10472, %v10472
  %v10505 = vpack.c.b16 %v10473, %v10473
  %v10506 = vpack.c.b16 %v10474, %v10474
  %v10507 = vpack.c.b16 %v10475, %v10475
  %v10508 = vpack.c.b16 %v10476, %v10476
  %v10509 = vpack.c.b16 %v10477, %v10477
  %v10510 = vpack.c.b16 %v10478, %v10478
  %v10511 = vpack.c.b16 %v10479, %v10479
  %v10512 = vpack.c.b16 %v10480, %v10480
  %v10513 = vpack.c.b16 %v10481, %v10481
  %v10514 = vpack.c.b16 %v10482, %v10482
  %v10515 = vpack.c.b16 %v10483, %v10483
  %v10516 = vpack.c.b16 %v10484, %v10484
  %v10517 = vpack.c.b16 %v10485, %v10485
  %v10518 = vpack.c.b16 %v10486, %v10486
  %v10519 = vpack.c.b16 %v10487, %v10487
  %v10520 = vpack.c.b16 %v10488, %v10488
  %v10521 = vpack.c.b16 %v10489, %v10489
  %v10522 = vpack.c.b16 %v10490, %v10490
  %v10523 = vpack.c.b16 %v10491, %v10491
  %v10524 = vpack.c.b16 %v10492, %v10492
  %v10525 = vpack.c.b16 %v10493, %v10493
  %v10526 = vpack.c.b16 %v10494, %v10494
  %v10527 = vpack.c.b16 %v10495, %v10495
  %v10529 = vshrl.u32 %v10368, 16
  %v10531 = vshll.u32 %v10368, 16
  %v10533 = vrot.slane %v10531, 1
  %v10534 = vor.u32 %v10529, %v10533
  %v10536 = vshll.u32 %v10496, 16
  %v10538 = vrot.slane %v10536, 1
  %v10539 = vsel %vm1849, %v10534, %v10538
  %v10541 = vshrl.u32 %v10369, 16
  %v10543 = vshll.u32 %v10369, 16
  %v10545 = vrot.slane %v10543, 1
  %v10546 = vor.u32 %v10541, %v10545
  %v10548 = vshll.u32 %v10497, 16
  %v10550 = vrot.slane %v10548, 1
  %v10551 = vsel %vm1849, %v10546, %v10550
  %v10553 = vshrl.u32 %v10370, 16
  %v10555 = vshll.u32 %v10370, 16
  %v10557 = vrot.slane %v10555, 1
  %v10558 = vor.u32 %v10553, %v10557
  %v10560 = vshll.u32 %v10498, 16
  %v10562 = vrot.slane %v10560, 1
  %v10563 = vsel %vm1849, %v10558, %v10562
  %v10565 = vshrl.u32 %v10371, 16
  %v10567 = vshll.u32 %v10371, 16
  %v10569 = vrot.slane %v10567, 1
  %v10570 = vor.u32 %v10565, %v10569
  %v10572 = vshll.u32 %v10499, 16
  %v10574 = vrot.slane %v10572, 1
  %v10575 = vsel %vm1849, %v10570, %v10574
  %v10577 = vshrl.u32 %v10372, 16
  %v10579 = vshll.u32 %v10372, 16
  %v10581 = vrot.slane %v10579, 1
  %v10582 = vor.u32 %v10577, %v10581
  %v10584 = vshll.u32 %v10500, 16
  %v10586 = vrot.slane %v10584, 1
  %v10587 = vsel %vm1849, %v10582, %v10586
  %v10589 = vshrl.u32 %v10373, 16
  %v10591 = vshll.u32 %v10373, 16
  %v10593 = vrot.slane %v10591, 1
  %v10594 = vor.u32 %v10589, %v10593
  %v10596 = vshll.u32 %v10501, 16
  %v10598 = vrot.slane %v10596, 1
  %v10599 = vsel %vm1849, %v10594, %v10598
  %v10601 = vshrl.u32 %v10374, 16
  %v10603 = vshll.u32 %v10374, 16
  %v10605 = vrot.slane %v10603, 1
  %v10606 = vor.u32 %v10601, %v10605
  %v10608 = vshll.u32 %v10502, 16
  %v10610 = vrot.slane %v10608, 1
  %v10611 = vsel %vm1849, %v10606, %v10610
  %v10613 = vshrl.u32 %v10375, 16
  %v10615 = vshll.u32 %v10375, 16
  %v10617 = vrot.slane %v10615, 1
  %v10618 = vor.u32 %v10613, %v10617
  %v10620 = vshll.u32 %v10503, 16
  %v10622 = vrot.slane %v10620, 1
  %v10623 = vsel %vm1849, %v10618, %v10622
  %v10625 = vshrl.u32 %v10376, 16
  %v10627 = vshll.u32 %v10376, 16
  %v10629 = vrot.slane %v10627, 1
  %v10630 = vor.u32 %v10625, %v10629
  %v10632 = vshll.u32 %v10504, 16
  %v10634 = vrot.slane %v10632, 1
  %v10635 = vsel %vm1849, %v10630, %v10634
  %v10637 = vshrl.u32 %v10377, 16
  %v10639 = vshll.u32 %v10377, 16
  %v10641 = vrot.slane %v10639, 1
  %v10642 = vor.u32 %v10637, %v10641
  %v10644 = vshll.u32 %v10505, 16
  %v10646 = vrot.slane %v10644, 1
  %v10647 = vsel %vm1849, %v10642, %v10646
  %v10649 = vshrl.u32 %v10378, 16
  %v10651 = vshll.u32 %v10378, 16
  %v10653 = vrot.slane %v10651, 1
  %v10654 = vor.u32 %v10649, %v10653
  %v10656 = vshll.u32 %v10506, 16
  %v10658 = vrot.slane %v10656, 1
  %v10659 = vsel %vm1849, %v10654, %v10658
  %v10661 = vshrl.u32 %v10379, 16
  %v10663 = vshll.u32 %v10379, 16
  %v10665 = vrot.slane %v10663, 1
  %v10666 = vor.u32 %v10661, %v10665
  %v10668 = vshll.u32 %v10507, 16
  %v10670 = vrot.slane %v10668, 1
  %v10671 = vsel %vm1849, %v10666, %v10670
  %v10673 = vshrl.u32 %v10380, 16
  %v10675 = vshll.u32 %v10380, 16
  %v10677 = vrot.slane %v10675, 1
  %v10678 = vor.u32 %v10673, %v10677
  %v10680 = vshll.u32 %v10508, 16
  %v10682 = vrot.slane %v10680, 1
  %v10683 = vsel %vm1849, %v10678, %v10682
  %v10685 = vshrl.u32 %v10381, 16
  %v10687 = vshll.u32 %v10381, 16
  %v10689 = vrot.slane %v10687, 1
  %v10690 = vor.u32 %v10685, %v10689
  %v10692 = vshll.u32 %v10509, 16
  %v10694 = vrot.slane %v10692, 1
  %v10695 = vsel %vm1849, %v10690, %v10694
  %v10697 = vshrl.u32 %v10382, 16
  %v10699 = vshll.u32 %v10382, 16
  %v10701 = vrot.slane %v10699, 1
  %v10702 = vor.u32 %v10697, %v10701
  %v10704 = vshll.u32 %v10510, 16
  %v10706 = vrot.slane %v10704, 1
  %v10707 = vsel %vm1849, %v10702, %v10706
  %v10709 = vshrl.u32 %v10383, 16
  %v10711 = vshll.u32 %v10383, 16
  %v10713 = vrot.slane %v10711, 1
  %v10714 = vor.u32 %v10709, %v10713
  %v10716 = vshll.u32 %v10511, 16
  %v10718 = vrot.slane %v10716, 1
  %v10719 = vsel %vm1849, %v10714, %v10718
  %v10721 = vshrl.u32 %v10384, 16
  %v10723 = vshll.u32 %v10384, 16
  %v10725 = vrot.slane %v10723, 1
  %v10726 = vor.u32 %v10721, %v10725
  %v10728 = vshll.u32 %v10512, 16
  %v10730 = vrot.slane %v10728, 1
  %v10731 = vsel %vm1849, %v10726, %v10730
  %v10733 = vshrl.u32 %v10385, 16
  %v10735 = vshll.u32 %v10385, 16
  %v10737 = vrot.slane %v10735, 1
  %v10738 = vor.u32 %v10733, %v10737
  %v10740 = vshll.u32 %v10513, 16
  %v10742 = vrot.slane %v10740, 1
  %v10743 = vsel %vm1849, %v10738, %v10742
  %v10745 = vshrl.u32 %v10386, 16
  %v10747 = vshll.u32 %v10386, 16
  %v10749 = vrot.slane %v10747, 1
  %v10750 = vor.u32 %v10745, %v10749
  %v10752 = vshll.u32 %v10514, 16
  %v10754 = vrot.slane %v10752, 1
  %v10755 = vsel %vm1849, %v10750, %v10754
  %v10757 = vshrl.u32 %v10387, 16
  %v10759 = vshll.u32 %v10387, 16
  %v10761 = vrot.slane %v10759, 1
  %v10762 = vor.u32 %v10757, %v10761
  %v10764 = vshll.u32 %v10515, 16
  %v10766 = vrot.slane %v10764, 1
  %v10767 = vsel %vm1849, %v10762, %v10766
  %v10769 = vshrl.u32 %v10388, 16
  %v10771 = vshll.u32 %v10388, 16
  %v10773 = vrot.slane %v10771, 1
  %v10774 = vor.u32 %v10769, %v10773
  %v10776 = vshll.u32 %v10516, 16
  %v10778 = vrot.slane %v10776, 1
  %v10779 = vsel %vm1849, %v10774, %v10778
  %v10781 = vshrl.u32 %v10389, 16
  %v10783 = vshll.u32 %v10389, 16
  %v10785 = vrot.slane %v10783, 1
  %v10786 = vor.u32 %v10781, %v10785
  %v10788 = vshll.u32 %v10517, 16
  %v10790 = vrot.slane %v10788, 1
  %v10791 = vsel %vm1849, %v10786, %v10790
  %v10793 = vshrl.u32 %v10390, 16
  %v10795 = vshll.u32 %v10390, 16
  %v10797 = vrot.slane %v10795, 1
  %v10798 = vor.u32 %v10793, %v10797
  %v10800 = vshll.u32 %v10518, 16
  %v10802 = vrot.slane %v10800, 1
  %v10803 = vsel %vm1849, %v10798, %v10802
  %v10805 = vshrl.u32 %v10391, 16
  %v10807 = vshll.u32 %v10391, 16
  %v10809 = vrot.slane %v10807, 1
  %v10810 = vor.u32 %v10805, %v10809
  %v10812 = vshll.u32 %v10519, 16
  %v10814 = vrot.slane %v10812, 1
  %v10815 = vsel %vm1849, %v10810, %v10814
  %v10817 = vshrl.u32 %v10392, 16
  %v10819 = vshll.u32 %v10392, 16
  %v10821 = vrot.slane %v10819, 1
  %v10822 = vor.u32 %v10817, %v10821
  %v10824 = vshll.u32 %v10520, 16
  %v10826 = vrot.slane %v10824, 1
  %v10827 = vsel %vm1849, %v10822, %v10826
  %v10829 = vshrl.u32 %v10393, 16
  %v10831 = vshll.u32 %v10393, 16
  %v10833 = vrot.slane %v10831, 1
  %v10834 = vor.u32 %v10829, %v10833
  %v10836 = vshll.u32 %v10521, 16
  %v10838 = vrot.slane %v10836, 1
  %v10839 = vsel %vm1849, %v10834, %v10838
  %v10841 = vshrl.u32 %v10394, 16
  %v10843 = vshll.u32 %v10394, 16
  %v10845 = vrot.slane %v10843, 1
  %v10846 = vor.u32 %v10841, %v10845
  %v10848 = vshll.u32 %v10522, 16
  %v10850 = vrot.slane %v10848, 1
  %v10851 = vsel %vm1849, %v10846, %v10850
  %v10853 = vshrl.u32 %v10395, 16
  %v10855 = vshll.u32 %v10395, 16
  %v10857 = vrot.slane %v10855, 1
  %v10858 = vor.u32 %v10853, %v10857
  %v10860 = vshll.u32 %v10523, 16
  %v10862 = vrot.slane %v10860, 1
  %v10863 = vsel %vm1849, %v10858, %v10862
  %v10865 = vshrl.u32 %v10396, 16
  %v10867 = vshll.u32 %v10396, 16
  %v10869 = vrot.slane %v10867, 1
  %v10870 = vor.u32 %v10865, %v10869
  %v10872 = vshll.u32 %v10524, 16
  %v10874 = vrot.slane %v10872, 1
  %v10875 = vsel %vm1849, %v10870, %v10874
  %v10877 = vshrl.u32 %v10397, 16
  %v10879 = vshll.u32 %v10397, 16
  %v10881 = vrot.slane %v10879, 1
  %v10882 = vor.u32 %v10877, %v10881
  %v10884 = vshll.u32 %v10525, 16
  %v10886 = vrot.slane %v10884, 1
  %v10887 = vsel %vm1849, %v10882, %v10886
  %v10889 = vshrl.u32 %v10398, 16
  %v10891 = vshll.u32 %v10398, 16
  %v10893 = vrot.slane %v10891, 1
  %v10894 = vor.u32 %v10889, %v10893
  %v10896 = vshll.u32 %v10526, 16
  %v10898 = vrot.slane %v10896, 1
  %v10899 = vsel %vm1849, %v10894, %v10898
  %v10901 = vshrl.u32 %v10399, 16
  %v10903 = vshll.u32 %v10399, 16
  %v10905 = vrot.slane %v10903, 1
  %v10906 = vor.u32 %v10901, %v10905
  %v10908 = vshll.u32 %v10527, 16
  %v10910 = vrot.slane %v10908, 1
  %v10911 = vsel %vm1849, %v10906, %v10910
  %v10976 = vunpack.c.l.b16 %v8352
  %v10977 = vunpack.c.l.b16 %v8353
  %v10978 = vunpack.c.l.b16 %v8354
  %v10979 = vunpack.c.l.b16 %v8355
  %v10980 = vunpack.c.l.b16 %v8356
  %v10981 = vunpack.c.l.b16 %v8357
  %v10982 = vunpack.c.l.b16 %v8358
  %v10983 = vunpack.c.l.b16 %v8359
  %v10984 = vunpack.c.l.b16 %v8360
  %v10985 = vunpack.c.l.b16 %v8361
  %v10986 = vunpack.c.l.b16 %v8362
  %v10987 = vunpack.c.l.b16 %v8363
  %v10988 = vunpack.c.l.b16 %v8364
  %v10989 = vunpack.c.l.b16 %v8365
  %v10990 = vunpack.c.l.b16 %v8366
  %v10991 = vunpack.c.l.b16 %v8367
  %v10992 = vunpack.c.l.b16 %v8368
  %v10993 = vunpack.c.l.b16 %v8369
  %v10994 = vunpack.c.l.b16 %v8370
  %v10995 = vunpack.c.l.b16 %v8371
  %v10996 = vunpack.c.l.b16 %v8372
  %v10997 = vunpack.c.l.b16 %v8373
  %v10998 = vunpack.c.l.b16 %v8374
  %v10999 = vunpack.c.l.b16 %v8375
  %v11000 = vunpack.c.l.b16 %v8376
  %v11001 = vunpack.c.l.b16 %v8377
  %v11002 = vunpack.c.l.b16 %v8378
  %v11003 = vunpack.c.l.b16 %v8379
  %v11004 = vunpack.c.l.b16 %v8380
  %v11005 = vunpack.c.l.b16 %v8381
  %v11006 = vunpack.c.l.b16 %v8382
  %v11007 = vunpack.c.l.b16 %v8383
  %v11008 = vpack.c.b16 %v10305, %v10976
  %v11009 = vpack.c.b16 %v10307, %v10977
  %v11010 = vpack.c.b16 %v10309, %v10978
  %v11011 = vpack.c.b16 %v10311, %v10979
  %v11012 = vpack.c.b16 %v10313, %v10980
  %v11013 = vpack.c.b16 %v10315, %v10981
  %v11014 = vpack.c.b16 %v10317, %v10982
  %v11015 = vpack.c.b16 %v10319, %v10983
  %v11016 = vpack.c.b16 %v10321, %v10984
  %v11017 = vpack.c.b16 %v10323, %v10985
  %v11018 = vpack.c.b16 %v10325, %v10986
  %v11019 = vpack.c.b16 %v10327, %v10987
  %v11020 = vpack.c.b16 %v10329, %v10988
  %v11021 = vpack.c.b16 %v10331, %v10989
  %v11022 = vpack.c.b16 %v10333, %v10990
  %v11023 = vpack.c.b16 %v10335, %v10991
  %v11024 = vpack.c.b16 %v10337, %v10992
  %v11025 = vpack.c.b16 %v10339, %v10993
  %v11026 = vpack.c.b16 %v10341, %v10994
  %v11027 = vpack.c.b16 %v10343, %v10995
  %v11028 = vpack.c.b16 %v10345, %v10996
  %v11029 = vpack.c.b16 %v10347, %v10997
  %v11030 = vpack.c.b16 %v10349, %v10998
  %v11031 = vpack.c.b16 %v10351, %v10999
  %v11032 = vpack.c.b16 %v10353, %v11000
  %v11033 = vpack.c.b16 %v10355, %v11001
  %v11034 = vpack.c.b16 %v10357, %v11002
  %v11035 = vpack.c.b16 %v10359, %v11003
  %v11036 = vpack.c.b16 %v10361, %v11004
  %v11037 = vpack.c.b16 %v10363, %v11005
  %v11038 = vpack.c.b16 %v10365, %v11006
  %v11039 = vpack.c.b16 %v10367, %v11007
  %v11040 = vrot.slane %v11008, 1
  %v11041 = vrot.slane %v10496, 1
  %v11042 = vsel %vm2362, %v11040, %v11041
  %v11043 = vrot.slane %v11009, 1
  %v11044 = vrot.slane %v10497, 1
  %v11045 = vsel %vm2362, %v11043, %v11044
  %v11046 = vrot.slane %v11010, 1
  %v11047 = vrot.slane %v10498, 1
  %v11048 = vsel %vm2362, %v11046, %v11047
  %v11049 = vrot.slane %v11011, 1
  %v11050 = vrot.slane %v10499, 1
  %v11051 = vsel %vm2362, %v11049, %v11050
  %v11052 = vrot.slane %v11012, 1
  %v11053 = vrot.slane %v10500, 1
  %v11054 = vsel %vm2362, %v11052, %v11053
  %v11055 = vrot.slane %v11013, 1
  %v11056 = vrot.slane %v10501, 1
  %v11057 = vsel %vm2362, %v11055, %v11056
  %v11058 = vrot.slane %v11014, 1
  %v11059 = vrot.slane %v10502, 1
  %v11060 = vsel %vm2362, %v11058, %v11059
  %v11061 = vrot.slane %v11015, 1
  %v11062 = vrot.slane %v10503, 1
  %v11063 = vsel %vm2362, %v11061, %v11062
  %v11064 = vrot.slane %v11016, 1
  %v11065 = vrot.slane %v10504, 1
  %v11066 = vsel %vm2362, %v11064, %v11065
  %v11067 = vrot.slane %v11017, 1
  %v11068 = vrot.slane %v10505, 1
  %v11069 = vsel %vm2362, %v11067, %v11068
  %v11070 = vrot.slane %v11018, 1
  %v11071 = vrot.slane %v10506, 1
  %v11072 = vsel %vm2362, %v11070, %v11071
  %v11073 = vrot.slane %v11019, 1
  %v11074 = vrot.slane %v10507, 1
  %v11075 = vsel %vm2362, %v11073, %v11074
  %v11076 = vrot.slane %v11020, 1
  %v11077 = vrot.slane %v10508, 1
  %v11078 = vsel %vm2362, %v11076, %v11077
  %v11079 = vrot.slane %v11021, 1
  %v11080 = vrot.slane %v10509, 1
  %v11081 = vsel %vm2362, %v11079, %v11080
  %v11082 = vrot.slane %v11022, 1
  %v11083 = vrot.slane %v10510, 1
  %v11084 = vsel %vm2362, %v11082, %v11083
  %v11085 = vrot.slane %v11023, 1
  %v11086 = vrot.slane %v10511, 1
  %v11087 = vsel %vm2362, %v11085, %v11086
  %v11088 = vrot.slane %v11024, 1
  %v11089 = vrot.slane %v10512, 1
  %v11090 = vsel %vm2362, %v11088, %v11089
  %v11091 = vrot.slane %v11025, 1
  %v11092 = vrot.slane %v10513, 1
  %v11093 = vsel %vm2362, %v11091, %v11092
  %v11094 = vrot.slane %v11026, 1
  %v11095 = vrot.slane %v10514, 1
  %v11096 = vsel %vm2362, %v11094, %v11095
  %v11097 = vrot.slane %v11027, 1
  %v11098 = vrot.slane %v10515, 1
  %v11099 = vsel %vm2362, %v11097, %v11098
  %v11100 = vrot.slane %v11028, 1
  %v11101 = vrot.slane %v10516, 1
  %v11102 = vsel %vm2362, %v11100, %v11101
  %v11103 = vrot.slane %v11029, 1
  %v11104 = vrot.slane %v10517, 1
  %v11105 = vsel %vm2362, %v11103, %v11104
  %v11106 = vrot.slane %v11030, 1
  %v11107 = vrot.slane %v10518, 1
  %v11108 = vsel %vm2362, %v11106, %v11107
  %v11109 = vrot.slane %v11031, 1
  %v11110 = vrot.slane %v10519, 1
  %v11111 = vsel %vm2362, %v11109, %v11110
  %v11112 = vrot.slane %v11032, 1
  %v11113 = vrot.slane %v10520, 1
  %v11114 = vsel %vm2362, %v11112, %v11113
  %v11115 = vrot.slane %v11033, 1
  %v11116 = vrot.slane %v10521, 1
  %v11117 = vsel %vm2362, %v11115, %v11116
  %v11118 = vrot.slane %v11034, 1
  %v11119 = vrot.slane %v10522, 1
  %v11120 = vsel %vm2362, %v11118, %v11119
  %v11121 = vrot.slane %v11035, 1
  %v11122 = vrot.slane %v10523, 1
  %v11123 = vsel %vm2362, %v11121, %v11122
  %v11124 = vrot.slane %v11036, 1
  %v11125 = vrot.slane %v10524, 1
  %v11126 = vsel %vm2362, %v11124, %v11125
  %v11127 = vrot.slane %v11037, 1
  %v11128 = vrot.slane %v10525, 1
  %v11129 = vsel %vm2362, %v11127, %v11128
  %v11130 = vrot.slane %v11038, 1
  %v11131 = vrot.slane %v10526, 1
  %v11132 = vsel %vm2362, %v11130, %v11131
  %v11133 = vrot.slane %v11039, 1
  %v11134 = vrot.slane %v10527, 1
  %v11135 = vsel %vm2362, %v11133, %v11134
  %v11168 = vld [vmem:[%s4] sm:$0xf]
  %v11169 = vld [vmem:[%s4 + $0x4] sm:$0xf]
  %v11170 = vld [vmem:[%s4 + $0x8] sm:$0xf]
  %v11171 = vld [vmem:[%s4 + $0xc] sm:$0xf]
  %v11172 = vld [vmem:[%s4 + $0x10] sm:$0xf]
  %v11173 = vld [vmem:[%s4 + $0x14] sm:$0xf]
  %v11174 = vld [vmem:[%s4 + $0x18] sm:$0xf]
  %v11175 = vld [vmem:[%s4 + $0x1c] sm:$0xf]
  %v11176 = vld [vmem:[%s4 + $0x20] sm:$0xf]
  %v11177 = vld [vmem:[%s4 + $0x24] sm:$0xf]
  %v11178 = vld [vmem:[%s4 + $0x28] sm:$0xf]
  %v11179 = vld [vmem:[%s4 + $0x2c] sm:$0xf]
  %v11180 = vld [vmem:[%s4 + $0x30] sm:$0xf]
  %v11181 = vld [vmem:[%s4 + $0x34] sm:$0xf]
  %v11182 = vld [vmem:[%s4 + $0x38] sm:$0xf]
  %v11183 = vld [vmem:[%s4 + $0x3c] sm:$0xf]
  %v11184 = vld [vmem:[%s4 + $0x40] sm:$0xf]
  %v11185 = vld [vmem:[%s4 + $0x44] sm:$0xf]
  %v11186 = vld [vmem:[%s4 + $0x48] sm:$0xf]
  %v11187 = vld [vmem:[%s4 + $0x4c] sm:$0xf]
  %v11188 = vld [vmem:[%s4 + $0x50] sm:$0xf]
  %v11189 = vld [vmem:[%s4 + $0x54] sm:$0xf]
  %v11190 = vld [vmem:[%s4 + $0x58] sm:$0xf]
  %v11191 = vld [vmem:[%s4 + $0x5c] sm:$0xf]
  %v11192 = vld [vmem:[%s4 + $0x60] sm:$0xf]
  %v11193 = vld [vmem:[%s4 + $0x64] sm:$0xf]
  %v11194 = vld [vmem:[%s4 + $0x68] sm:$0xf]
  %v11195 = vld [vmem:[%s4 + $0x6c] sm:$0xf]
  %v11196 = vld [vmem:[%s4 + $0x70] sm:$0xf]
  %v11197 = vld [vmem:[%s4 + $0x74] sm:$0xf]
  %v11198 = vld [vmem:[%s4 + $0x78] sm:$0xf]
  %v11199 = vld [vmem:[%s4 + $0x7c] sm:$0xf]
  %v11200 = vld [vmem:[%s4 + $0x80] sm:$0xf]
  %v11201 = vld [vmem:[%s4 + $0x84] sm:$0xf]
  %v11202 = vld [vmem:[%s4 + $0x88] sm:$0xf]
  %v11203 = vld [vmem:[%s4 + $0x8c] sm:$0xf]
  %v11204 = vld [vmem:[%s4 + $0x90] sm:$0xf]
  %v11205 = vld [vmem:[%s4 + $0x94] sm:$0xf]
  %v11206 = vld [vmem:[%s4 + $0x98] sm:$0xf]
  %v11207 = vld [vmem:[%s4 + $0x9c] sm:$0xf]
  %v11208 = vld [vmem:[%s4 + $0xa0] sm:$0xf]
  %v11209 = vld [vmem:[%s4 + $0xa4] sm:$0xf]
  %v11210 = vld [vmem:[%s4 + $0xa8] sm:$0xf]
  %v11211 = vld [vmem:[%s4 + $0xac] sm:$0xf]
  %v11212 = vld [vmem:[%s4 + $0xb0] sm:$0xf]
  %v11213 = vld [vmem:[%s4 + $0xb4] sm:$0xf]
  %v11214 = vld [vmem:[%s4 + $0xb8] sm:$0xf]
  %v11215 = vld [vmem:[%s4 + $0xbc] sm:$0xf]
  %v11216 = vld [vmem:[%s4 + $0xc0] sm:$0xf]
  %v11217 = vld [vmem:[%s4 + $0xc4] sm:$0xf]
  %v11218 = vld [vmem:[%s4 + $0xc8] sm:$0xf]
  %v11219 = vld [vmem:[%s4 + $0xcc] sm:$0xf]
  %v11220 = vld [vmem:[%s4 + $0xd0] sm:$0xf]
  %v11221 = vld [vmem:[%s4 + $0xd4] sm:$0xf]
  %v11222 = vld [vmem:[%s4 + $0xd8] sm:$0xf]
  %v11223 = vld [vmem:[%s4 + $0xdc] sm:$0xf]
  %v11224 = vld [vmem:[%s4 + $0xe0] sm:$0xf]
  %v11225 = vld [vmem:[%s4 + $0xe4] sm:$0xf]
  %v11226 = vld [vmem:[%s4 + $0xe8] sm:$0xf]
  %v11227 = vld [vmem:[%s4 + $0xec] sm:$0xf]
  %v11228 = vld [vmem:[%s4 + $0xf0] sm:$0xf]
  %v11229 = vld [vmem:[%s4 + $0xf4] sm:$0xf]
  %v11230 = vld [vmem:[%s4 + $0xf8] sm:$0xf]
  %v11231 = vld [vmem:[%s4 + $0xfc] sm:$0xf]
  %v11232 = vld [vmem:[%s4 + $0x100] sm:$0xf]
  %v11233 = vld [vmem:[%s4 + $0x104] sm:$0xf]
  %v11234 = vld [vmem:[%s4 + $0x108] sm:$0xf]
  %v11235 = vld [vmem:[%s4 + $0x10c] sm:$0xf]
  %v11236 = vld [vmem:[%s4 + $0x110] sm:$0xf]
  %v11237 = vld [vmem:[%s4 + $0x114] sm:$0xf]
  %v11238 = vld [vmem:[%s4 + $0x118] sm:$0xf]
  %v11239 = vld [vmem:[%s4 + $0x11c] sm:$0xf]
  %v11240 = vld [vmem:[%s4 + $0x120] sm:$0xf]
  %v11241 = vld [vmem:[%s4 + $0x124] sm:$0xf]
  %v11242 = vld [vmem:[%s4 + $0x128] sm:$0xf]
  %v11243 = vld [vmem:[%s4 + $0x12c] sm:$0xf]
  %v11244 = vld [vmem:[%s4 + $0x130] sm:$0xf]
  %v11245 = vld [vmem:[%s4 + $0x134] sm:$0xf]
  %v11246 = vld [vmem:[%s4 + $0x138] sm:$0xf]
  %v11247 = vld [vmem:[%s4 + $0x13c] sm:$0xf]
  %v11248 = vld [vmem:[%s4 + $0x140] sm:$0xf]
  %v11249 = vld [vmem:[%s4 + $0x144] sm:$0xf]
  %v11250 = vld [vmem:[%s4 + $0x148] sm:$0xf]
  %v11251 = vld [vmem:[%s4 + $0x14c] sm:$0xf]
  %v11252 = vld [vmem:[%s4 + $0x150] sm:$0xf]
  %v11253 = vld [vmem:[%s4 + $0x154] sm:$0xf]
  %v11254 = vld [vmem:[%s4 + $0x158] sm:$0xf]
  %v11255 = vld [vmem:[%s4 + $0x15c] sm:$0xf]
  %v11256 = vld [vmem:[%s4 + $0x160] sm:$0xf]
  %v11257 = vld [vmem:[%s4 + $0x164] sm:$0xf]
  %v11258 = vld [vmem:[%s4 + $0x168] sm:$0xf]
  %v11259 = vld [vmem:[%s4 + $0x16c] sm:$0xf]
  %v11260 = vld [vmem:[%s4 + $0x170] sm:$0xf]
  %v11261 = vld [vmem:[%s4 + $0x174] sm:$0xf]
  %v11262 = vld [vmem:[%s4 + $0x178] sm:$0xf]
  %v11263 = vld [vmem:[%s4 + $0x17c] sm:$0xf]
  %v11264 = vld [vmem:[%s4 + $0x180] sm:$0xf]
  %v11265 = vld [vmem:[%s4 + $0x184] sm:$0xf]
  %v11266 = vld [vmem:[%s4 + $0x188] sm:$0xf]
  %v11267 = vld [vmem:[%s4 + $0x18c] sm:$0xf]
  %v11268 = vld [vmem:[%s4 + $0x190] sm:$0xf]
  %v11269 = vld [vmem:[%s4 + $0x194] sm:$0xf]
  %v11270 = vld [vmem:[%s4 + $0x198] sm:$0xf]
  %v11271 = vld [vmem:[%s4 + $0x19c] sm:$0xf]
  %v11272 = vld [vmem:[%s4 + $0x1a0] sm:$0xf]
  %v11273 = vld [vmem:[%s4 + $0x1a4] sm:$0xf]
  %v11274 = vld [vmem:[%s4 + $0x1a8] sm:$0xf]
  %v11275 = vld [vmem:[%s4 + $0x1ac] sm:$0xf]
  %v11276 = vld [vmem:[%s4 + $0x1b0] sm:$0xf]
  %v11277 = vld [vmem:[%s4 + $0x1b4] sm:$0xf]
  %v11278 = vld [vmem:[%s4 + $0x1b8] sm:$0xf]
  %v11279 = vld [vmem:[%s4 + $0x1bc] sm:$0xf]
  %v11280 = vld [vmem:[%s4 + $0x1c0] sm:$0xf]
  %v11281 = vld [vmem:[%s4 + $0x1c4] sm:$0xf]
  %v11282 = vld [vmem:[%s4 + $0x1c8] sm:$0xf]
  %v11283 = vld [vmem:[%s4 + $0x1cc] sm:$0xf]
  %v11284 = vld [vmem:[%s4 + $0x1d0] sm:$0xf]
  %v11285 = vld [vmem:[%s4 + $0x1d4] sm:$0xf]
  %v11286 = vld [vmem:[%s4 + $0x1d8] sm:$0xf]
  %v11287 = vld [vmem:[%s4 + $0x1dc] sm:$0xf]
  %v11288 = vld [vmem:[%s4 + $0x1e0] sm:$0xf]
  %v11289 = vld [vmem:[%s4 + $0x1e4] sm:$0xf]
  %v11290 = vld [vmem:[%s4 + $0x1e8] sm:$0xf]
  %v11291 = vld [vmem:[%s4 + $0x1ec] sm:$0xf]
  %v11292 = vld [vmem:[%s4 + $0x1f0] sm:$0xf]
  %v11293 = vld [vmem:[%s4 + $0x1f4] sm:$0xf]
  %v11294 = vld [vmem:[%s4 + $0x1f8] sm:$0xf]
  %v11295 = vld [vmem:[%s4 + $0x1fc] sm:$0xf]
  %v11296 = vld [vmem:[%s4 + $0x200] sm:$0xf]
  %v11297 = vld [vmem:[%s4 + $0x204] sm:$0xf]
  %v11298 = vld [vmem:[%s4 + $0x208] sm:$0xf]
  %v11299 = vld [vmem:[%s4 + $0x20c] sm:$0xf]
  %v11300 = vld [vmem:[%s4 + $0x210] sm:$0xf]
  %v11301 = vld [vmem:[%s4 + $0x214] sm:$0xf]
  %v11302 = vld [vmem:[%s4 + $0x218] sm:$0xf]
  %v11303 = vld [vmem:[%s4 + $0x21c] sm:$0xf]
  %v11304 = vld [vmem:[%s4 + $0x220] sm:$0xf]
  %v11305 = vld [vmem:[%s4 + $0x224] sm:$0xf]
  %v11306 = vld [vmem:[%s4 + $0x228] sm:$0xf]
  %v11307 = vld [vmem:[%s4 + $0x22c] sm:$0xf]
  %v11308 = vld [vmem:[%s4 + $0x230] sm:$0xf]
  %v11309 = vld [vmem:[%s4 + $0x234] sm:$0xf]
  %v11310 = vld [vmem:[%s4 + $0x238] sm:$0xf]
  %v11311 = vld [vmem:[%s4 + $0x23c] sm:$0xf]
  %v11456 = vunpack.c.l.b16 %v11168
  %v11457 = vunpack.c.l.b16 %v11169
  %v11458 = vunpack.c.l.b16 %v11170
  %v11459 = vunpack.c.l.b16 %v11171
  %v11460 = vunpack.c.l.b16 %v11172
  %v11461 = vunpack.c.l.b16 %v11173
  %v11462 = vunpack.c.l.b16 %v11174
  %v11463 = vunpack.c.l.b16 %v11175
  %v11464 = vunpack.c.l.b16 %v11176
  %v11465 = vunpack.c.l.b16 %v11177
  %v11466 = vunpack.c.l.b16 %v11178
  %v11467 = vunpack.c.l.b16 %v11179
  %v11468 = vunpack.c.l.b16 %v11180
  %v11469 = vunpack.c.l.b16 %v11181
  %v11470 = vunpack.c.l.b16 %v11182
  %v11471 = vunpack.c.l.b16 %v11183
  %v11472 = vunpack.c.l.b16 %v11184
  %v11473 = vunpack.c.l.b16 %v11185
  %v11474 = vunpack.c.l.b16 %v11186
  %v11475 = vunpack.c.l.b16 %v11187
  %v11476 = vunpack.c.l.b16 %v11188
  %v11477 = vunpack.c.l.b16 %v11189
  %v11478 = vunpack.c.l.b16 %v11190
  %v11479 = vunpack.c.l.b16 %v11191
  %v11480 = vunpack.c.l.b16 %v11192
  %v11481 = vunpack.c.l.b16 %v11193
  %v11482 = vunpack.c.l.b16 %v11194
  %v11483 = vunpack.c.l.b16 %v11195
  %v11484 = vunpack.c.l.b16 %v11196
  %v11485 = vunpack.c.l.b16 %v11197
  %v11486 = vunpack.c.l.b16 %v11198
  %v11487 = vunpack.c.l.b16 %v11199
  %v11488 = vunpack.c.l.b16 %v11200
  %v11489 = vunpack.c.l.b16 %v11201
  %v11490 = vunpack.c.l.b16 %v11202
  %v11491 = vunpack.c.l.b16 %v11203
  %v11492 = vunpack.c.l.b16 %v11204
  %v11493 = vunpack.c.l.b16 %v11205
  %v11494 = vunpack.c.l.b16 %v11206
  %v11495 = vunpack.c.l.b16 %v11207
  %v11496 = vunpack.c.l.b16 %v11208
  %v11497 = vunpack.c.l.b16 %v11209
  %v11498 = vunpack.c.l.b16 %v11210
  %v11499 = vunpack.c.l.b16 %v11211
  %v11500 = vunpack.c.l.b16 %v11212
  %v11501 = vunpack.c.l.b16 %v11213
  %v11502 = vunpack.c.l.b16 %v11214
  %v11503 = vunpack.c.l.b16 %v11215
  %v11504 = vunpack.c.l.b16 %v11216
  %v11505 = vunpack.c.l.b16 %v11217
  %v11506 = vunpack.c.l.b16 %v11218
  %v11507 = vunpack.c.l.b16 %v11219
  %v11508 = vunpack.c.l.b16 %v11220
  %v11509 = vunpack.c.l.b16 %v11221
  %v11510 = vunpack.c.l.b16 %v11222
  %v11511 = vunpack.c.l.b16 %v11223
  %v11512 = vunpack.c.l.b16 %v11224
  %v11513 = vunpack.c.l.b16 %v11225
  %v11514 = vunpack.c.l.b16 %v11226
  %v11515 = vunpack.c.l.b16 %v11227
  %v11516 = vunpack.c.l.b16 %v11228
  %v11517 = vunpack.c.l.b16 %v11229
  %v11518 = vunpack.c.l.b16 %v11230
  %v11519 = vunpack.c.l.b16 %v11231
  %v11520 = vunpack.c.l.b16 %v11232
  %v11521 = vunpack.c.l.b16 %v11233
  %v11522 = vunpack.c.l.b16 %v11234
  %v11523 = vunpack.c.l.b16 %v11235
  %v11524 = vunpack.c.l.b16 %v11236
  %v11525 = vunpack.c.l.b16 %v11237
  %v11526 = vunpack.c.l.b16 %v11238
  %v11527 = vunpack.c.l.b16 %v11239
  %v11528 = vunpack.c.l.b16 %v11240
  %v11529 = vunpack.c.l.b16 %v11241
  %v11530 = vunpack.c.l.b16 %v11242
  %v11531 = vunpack.c.l.b16 %v11243
  %v11532 = vunpack.c.l.b16 %v11244
  %v11533 = vunpack.c.l.b16 %v11245
  %v11534 = vunpack.c.l.b16 %v11246
  %v11535 = vunpack.c.l.b16 %v11247
  %v11536 = vunpack.c.l.b16 %v11248
  %v11537 = vunpack.c.l.b16 %v11249
  %v11538 = vunpack.c.l.b16 %v11250
  %v11539 = vunpack.c.l.b16 %v11251
  %v11540 = vunpack.c.l.b16 %v11252
  %v11541 = vunpack.c.l.b16 %v11253
  %v11542 = vunpack.c.l.b16 %v11254
  %v11543 = vunpack.c.l.b16 %v11255
  %v11544 = vunpack.c.l.b16 %v11256
  %v11545 = vunpack.c.l.b16 %v11257
  %v11546 = vunpack.c.l.b16 %v11258
  %v11547 = vunpack.c.l.b16 %v11259
  %v11548 = vunpack.c.l.b16 %v11260
  %v11549 = vunpack.c.l.b16 %v11261
  %v11550 = vunpack.c.l.b16 %v11262
  %v11551 = vunpack.c.l.b16 %v11263
  %v11552 = vunpack.c.l.b16 %v11264
  %v11553 = vunpack.c.l.b16 %v11265
  %v11554 = vunpack.c.l.b16 %v11266
  %v11555 = vunpack.c.l.b16 %v11267
  %v11556 = vunpack.c.l.b16 %v11268
  %v11557 = vunpack.c.l.b16 %v11269
  %v11558 = vunpack.c.l.b16 %v11270
  %v11559 = vunpack.c.l.b16 %v11271
  %v11560 = vunpack.c.l.b16 %v11272
  %v11561 = vunpack.c.l.b16 %v11273
  %v11562 = vunpack.c.l.b16 %v11274
  %v11563 = vunpack.c.l.b16 %v11275
  %v11564 = vunpack.c.l.b16 %v11276
  %v11565 = vunpack.c.l.b16 %v11277
  %v11566 = vunpack.c.l.b16 %v11278
  %v11567 = vunpack.c.l.b16 %v11279
  %v11568 = vunpack.c.l.b16 %v11280
  %v11569 = vunpack.c.l.b16 %v11281
  %v11570 = vunpack.c.l.b16 %v11282
  %v11571 = vunpack.c.l.b16 %v11283
  %v11572 = vunpack.c.l.b16 %v11284
  %v11573 = vunpack.c.l.b16 %v11285
  %v11574 = vunpack.c.l.b16 %v11286
  %v11575 = vunpack.c.l.b16 %v11287
  %v11576 = vunpack.c.l.b16 %v11288
  %v11577 = vunpack.c.l.b16 %v11289
  %v11578 = vunpack.c.l.b16 %v11290
  %v11579 = vunpack.c.l.b16 %v11291
  %v11580 = vunpack.c.l.b16 %v11292
  %v11581 = vunpack.c.l.b16 %v11293
  %v11582 = vunpack.c.l.b16 %v11294
  %v11583 = vunpack.c.l.b16 %v11295
  %v11584 = vunpack.c.l.b16 %v11296
  %v11585 = vunpack.c.l.b16 %v11297
  %v11586 = vunpack.c.l.b16 %v11298
  %v11587 = vunpack.c.l.b16 %v11299
  %v11588 = vunpack.c.l.b16 %v11300
  %v11589 = vunpack.c.l.b16 %v11301
  %v11590 = vunpack.c.l.b16 %v11302
  %v11591 = vunpack.c.l.b16 %v11303
  %v11592 = vunpack.c.l.b16 %v11304
  %v11593 = vunpack.c.l.b16 %v11305
  %v11594 = vunpack.c.l.b16 %v11306
  %v11595 = vunpack.c.l.b16 %v11307
  %v11596 = vunpack.c.l.b16 %v11308
  %v11597 = vunpack.c.l.b16 %v11309
  %v11598 = vunpack.c.l.b16 %v11310
  %v11599 = vunpack.c.l.b16 %v11311
  %v11600 = vpack.c.b16 %v11457, %v11456
  %v11601 = vpack.c.b16 %v11459, %v11458
  %v11602 = vpack.c.b16 %v11461, %v11460
  %v11603 = vpack.c.b16 %v11463, %v11462
  %v11604 = vpack.c.b16 %v11465, %v11464
  %v11605 = vpack.c.b16 %v11467, %v11466
  %v11606 = vpack.c.b16 %v11469, %v11468
  %v11607 = vpack.c.b16 %v11471, %v11470
  %v11608 = vpack.c.b16 %v11473, %v11472
  %v11609 = vpack.c.b16 %v11475, %v11474
  %v11610 = vpack.c.b16 %v11477, %v11476
  %v11611 = vpack.c.b16 %v11479, %v11478
  %v11612 = vpack.c.b16 %v11481, %v11480
  %v11613 = vpack.c.b16 %v11483, %v11482
  %v11614 = vpack.c.b16 %v11485, %v11484
  %v11615 = vpack.c.b16 %v11487, %v11486
  %v11616 = vpack.c.b16 %v11489, %v11488
  %v11617 = vpack.c.b16 %v11491, %v11490
  %v11618 = vpack.c.b16 %v11493, %v11492
  %v11619 = vpack.c.b16 %v11495, %v11494
  %v11620 = vpack.c.b16 %v11497, %v11496
  %v11621 = vpack.c.b16 %v11499, %v11498
  %v11622 = vpack.c.b16 %v11501, %v11500
  %v11623 = vpack.c.b16 %v11503, %v11502
  %v11624 = vpack.c.b16 %v11505, %v11504
  %v11625 = vpack.c.b16 %v11507, %v11506
  %v11626 = vpack.c.b16 %v11509, %v11508
  %v11627 = vpack.c.b16 %v11511, %v11510
  %v11628 = vpack.c.b16 %v11513, %v11512
  %v11629 = vpack.c.b16 %v11515, %v11514
  %v11630 = vpack.c.b16 %v11517, %v11516
  %v11631 = vpack.c.b16 %v11519, %v11518
  %v11632 = vpack.c.b16 %v11521, %v11520
  %v11633 = vpack.c.b16 %v11523, %v11522
  %v11634 = vpack.c.b16 %v11525, %v11524
  %v11635 = vpack.c.b16 %v11527, %v11526
  %v11636 = vpack.c.b16 %v11529, %v11528
  %v11637 = vpack.c.b16 %v11531, %v11530
  %v11638 = vpack.c.b16 %v11533, %v11532
  %v11639 = vpack.c.b16 %v11535, %v11534
  %v11640 = vpack.c.b16 %v11537, %v11536
  %v11641 = vpack.c.b16 %v11539, %v11538
  %v11642 = vpack.c.b16 %v11541, %v11540
  %v11643 = vpack.c.b16 %v11543, %v11542
  %v11644 = vpack.c.b16 %v11545, %v11544
  %v11645 = vpack.c.b16 %v11547, %v11546
  %v11646 = vpack.c.b16 %v11549, %v11548
  %v11647 = vpack.c.b16 %v11551, %v11550
  %v11648 = vpack.c.b16 %v11553, %v11552
  %v11649 = vpack.c.b16 %v11555, %v11554
  %v11650 = vpack.c.b16 %v11557, %v11556
  %v11651 = vpack.c.b16 %v11559, %v11558
  %v11652 = vpack.c.b16 %v11561, %v11560
  %v11653 = vpack.c.b16 %v11563, %v11562
  %v11654 = vpack.c.b16 %v11565, %v11564
  %v11655 = vpack.c.b16 %v11567, %v11566
  %v11656 = vpack.c.b16 %v11569, %v11568
  %v11657 = vpack.c.b16 %v11571, %v11570
  %v11658 = vpack.c.b16 %v11573, %v11572
  %v11659 = vpack.c.b16 %v11575, %v11574
  %v11660 = vpack.c.b16 %v11577, %v11576
  %v11661 = vpack.c.b16 %v11579, %v11578
  %v11662 = vpack.c.b16 %v11581, %v11580
  %v11663 = vpack.c.b16 %v11583, %v11582
  %v11664 = vpack.c.b16 %v11585, %v11584
  %v11665 = vpack.c.b16 %v11587, %v11586
  %v11666 = vpack.c.b16 %v11589, %v11588
  %v11667 = vpack.c.b16 %v11591, %v11590
  %v11668 = vpack.c.b16 %v11593, %v11592
  %v11669 = vpack.c.b16 %v11595, %v11594
  %v11670 = vpack.c.b16 %v11597, %v11596
  %v11671 = vpack.c.b16 %v11599, %v11598
  %11744 = vmatpush.bf16.msra.mxu0 %v11607
  %11745 = vmatpush.bf16.msra.mxu0 %v11606
  %11746 = vmatpush.bf16.msra.mxu0 %v11605
  %11747 = vmatpush.bf16.msra.mxu0 %v11604
  %11748 = vmatpush.bf16.msra.mxu0 %v11603
  %11749 = vmatpush.bf16.msra.mxu0 %v11602
  %11750 = vmatpush.bf16.msra.mxu0 %v11601
  %11751 = vmatpush.bf16.msra.mxu0 %v11600
  %11752 = vmatmul.bf16.gmra.mxu0 %v8512
  %v11753 = vpop.f32.mrf.mxu0
  %v11754 = vadd.f32 0.0, %v11753
  %v11755 = vpop.f32.mrf.mxu0
  %v11756 = vadd.f32 0.0, %v11755
  %11757 = vmatmul.bf16.gmra.mxu0 %v8513
  %v11758 = vpop.f32.mrf.mxu0
  %v11759 = vadd.f32 0.0, %v11758
  %v11760 = vpop.f32.mrf.mxu0
  %v11761 = vadd.f32 0.0, %v11760
  %11762 = vmatmul.bf16.gmra.mxu0 %v8514
  %v11763 = vpop.f32.mrf.mxu0
  %v11764 = vadd.f32 0.0, %v11763
  %v11765 = vpop.f32.mrf.mxu0
  %v11766 = vadd.f32 0.0, %v11765
  %11767 = vmatmul.bf16.gmra.mxu0 %v8515
  %v11768 = vpop.f32.mrf.mxu0
  %v11769 = vadd.f32 0.0, %v11768
  %v11770 = vpop.f32.mrf.mxu0
  %v11771 = vadd.f32 0.0, %v11770
  %11772 = vmatmul.bf16.gmra.mxu0 %v8516
  %v11773 = vpop.f32.mrf.mxu0
  %v11774 = vadd.f32 0.0, %v11773
  %v11775 = vpop.f32.mrf.mxu0
  %v11776 = vadd.f32 0.0, %v11775
  %11777 = vmatmul.bf16.gmra.mxu0 %v8517
  %v11778 = vpop.f32.mrf.mxu0
  %v11779 = vadd.f32 0.0, %v11778
  %v11780 = vpop.f32.mrf.mxu0
  %v11781 = vadd.f32 0.0, %v11780
  %11782 = vmatmul.bf16.gmra.mxu0 %v8518
  %v11783 = vpop.f32.mrf.mxu0
  %v11784 = vadd.f32 0.0, %v11783
  %v11785 = vpop.f32.mrf.mxu0
  %v11786 = vadd.f32 0.0, %v11785
  %11787 = vmatmul.bf16.gmra.mxu0 %v8519
  %v11788 = vpop.f32.mrf.mxu0
  %v11789 = vadd.f32 0.0, %v11788
  %v11790 = vpop.f32.mrf.mxu0
  %v11791 = vadd.f32 0.0, %v11790
  %11792 = vmatmul.bf16.gmra.mxu0 %v8520
  %v11793 = vpop.f32.mrf.mxu0
  %v11794 = vadd.f32 0.0, %v11793
  %v11795 = vpop.f32.mrf.mxu0
  %v11796 = vadd.f32 0.0, %v11795
  %11797 = vmatmul.bf16.gmra.mxu0 %v8521
  %v11798 = vpop.f32.mrf.mxu0
  %v11799 = vadd.f32 0.0, %v11798
  %v11800 = vpop.f32.mrf.mxu0
  %v11801 = vadd.f32 0.0, %v11800
  %11802 = vmatmul.bf16.gmra.mxu0 %v8522
  %v11803 = vpop.f32.mrf.mxu0
  %v11804 = vadd.f32 0.0, %v11803
  %v11805 = vpop.f32.mrf.mxu0
  %v11806 = vadd.f32 0.0, %v11805
  %11807 = vmatmul.bf16.gmra.mxu0 %v8523
  %v11808 = vpop.f32.mrf.mxu0
  %v11809 = vadd.f32 0.0, %v11808
  %v11810 = vpop.f32.mrf.mxu0
  %v11811 = vadd.f32 0.0, %v11810
  %11812 = vmatmul.bf16.gmra.mxu0 %v8524
  %v11813 = vpop.f32.mrf.mxu0
  %v11814 = vadd.f32 0.0, %v11813
  %v11815 = vpop.f32.mrf.mxu0
  %v11816 = vadd.f32 0.0, %v11815
  %11817 = vmatmul.bf16.gmra.mxu0 %v8525
  %v11818 = vpop.f32.mrf.mxu0
  %v11819 = vadd.f32 0.0, %v11818
  %v11820 = vpop.f32.mrf.mxu0
  %v11821 = vadd.f32 0.0, %v11820
  %11822 = vmatmul.bf16.gmra.mxu0 %v8526
  %v11823 = vpop.f32.mrf.mxu0
  %v11824 = vadd.f32 0.0, %v11823
  %v11825 = vpop.f32.mrf.mxu0
  %v11826 = vadd.f32 0.0, %v11825
  %11827 = vmatmul.bf16.gmra.mxu0 %v8527
  %v11828 = vpop.f32.mrf.mxu0
  %v11829 = vadd.f32 0.0, %v11828
  %v11830 = vpop.f32.mrf.mxu0
  %v11831 = vadd.f32 0.0, %v11830
  %11832 = vmatmul.bf16.gmra.mxu0 %v8528
  %v11833 = vpop.f32.mrf.mxu0
  %v11834 = vadd.f32 0.0, %v11833
  %v11835 = vpop.f32.mrf.mxu0
  %v11836 = vadd.f32 0.0, %v11835
  %11837 = vmatmul.bf16.gmra.mxu0 %v8529
  %v11838 = vpop.f32.mrf.mxu0
  %v11839 = vadd.f32 0.0, %v11838
  %v11840 = vpop.f32.mrf.mxu0
  %v11841 = vadd.f32 0.0, %v11840
  %11842 = vmatmul.bf16.gmra.mxu0 %v8530
  %v11843 = vpop.f32.mrf.mxu0
  %v11844 = vadd.f32 0.0, %v11843
  %v11845 = vpop.f32.mrf.mxu0
  %v11846 = vadd.f32 0.0, %v11845
  %11847 = vmatmul.bf16.gmra.mxu0 %v8531
  %v11848 = vpop.f32.mrf.mxu0
  %v11849 = vadd.f32 0.0, %v11848
  %v11850 = vpop.f32.mrf.mxu0
  %v11851 = vadd.f32 0.0, %v11850
  %11852 = vmatmul.bf16.gmra.mxu0 %v8532
  %v11853 = vpop.f32.mrf.mxu0
  %v11854 = vadd.f32 0.0, %v11853
  %v11855 = vpop.f32.mrf.mxu0
  %v11856 = vadd.f32 0.0, %v11855
  %11857 = vmatmul.bf16.gmra.mxu0 %v8533
  %v11858 = vpop.f32.mrf.mxu0
  %v11859 = vadd.f32 0.0, %v11858
  %v11860 = vpop.f32.mrf.mxu0
  %v11861 = vadd.f32 0.0, %v11860
  %11862 = vmatmul.bf16.gmra.mxu0 %v8534
  %v11863 = vpop.f32.mrf.mxu0
  %v11864 = vadd.f32 0.0, %v11863
  %v11865 = vpop.f32.mrf.mxu0
  %v11866 = vadd.f32 0.0, %v11865
  %11867 = vmatmul.bf16.gmra.mxu0 %v8535
  %v11868 = vpop.f32.mrf.mxu0
  %v11869 = vadd.f32 0.0, %v11868
  %v11870 = vpop.f32.mrf.mxu0
  %v11871 = vadd.f32 0.0, %v11870
  %11872 = vmatmul.bf16.gmra.mxu0 %v8536
  %v11873 = vpop.f32.mrf.mxu0
  %v11874 = vadd.f32 0.0, %v11873
  %v11875 = vpop.f32.mrf.mxu0
  %v11876 = vadd.f32 0.0, %v11875
  %11877 = vmatmul.bf16.gmra.mxu0 %v8537
  %v11878 = vpop.f32.mrf.mxu0
  %v11879 = vadd.f32 0.0, %v11878
  %v11880 = vpop.f32.mrf.mxu0
  %v11881 = vadd.f32 0.0, %v11880
  %11882 = vmatmul.bf16.gmra.mxu0 %v8538
  %v11883 = vpop.f32.mrf.mxu0
  %v11884 = vadd.f32 0.0, %v11883
  %v11885 = vpop.f32.mrf.mxu0
  %v11886 = vadd.f32 0.0, %v11885
  %11887 = vmatmul.bf16.gmra.mxu0 %v8539
  %v11888 = vpop.f32.mrf.mxu0
  %v11889 = vadd.f32 0.0, %v11888
  %v11890 = vpop.f32.mrf.mxu0
  %v11891 = vadd.f32 0.0, %v11890
  %11892 = vmatmul.bf16.gmra.mxu0 %v8540
  %v11893 = vpop.f32.mrf.mxu0
  %v11894 = vadd.f32 0.0, %v11893
  %v11895 = vpop.f32.mrf.mxu0
  %v11896 = vadd.f32 0.0, %v11895
  %11897 = vmatmul.bf16.gmra.mxu0 %v8541
  %v11898 = vpop.f32.mrf.mxu0
  %v11899 = vadd.f32 0.0, %v11898
  %v11900 = vpop.f32.mrf.mxu0
  %v11901 = vadd.f32 0.0, %v11900
  %11902 = vmatmul.bf16.gmra.mxu0 %v8542
  %v11903 = vpop.f32.mrf.mxu0
  %v11904 = vadd.f32 0.0, %v11903
  %v11905 = vpop.f32.mrf.mxu0
  %v11906 = vadd.f32 0.0, %v11905
  %11907 = vmatmul.bf16.gmra.mxu0 %v8543
  %v11908 = vpop.f32.mrf.mxu0
  %v11909 = vadd.f32 0.0, %v11908
  %v11910 = vpop.f32.mrf.mxu0
  %v11911 = vadd.f32 0.0, %v11910
  %11912 = vdwg.mxu0
  %11913 = vmatpush.bf16.msra.mxu0 %v11615
  %11914 = vmatpush.bf16.msra.mxu0 %v11614
  %11915 = vmatpush.bf16.msra.mxu0 %v11613
  %11916 = vmatpush.bf16.msra.mxu0 %v11612
  %11917 = vmatpush.bf16.msra.mxu0 %v11611
  %11918 = vmatpush.bf16.msra.mxu0 %v11610
  %11919 = vmatpush.bf16.msra.mxu0 %v11609
  %11920 = vmatpush.bf16.msra.mxu0 %v11608
  %11921 = vmatmul.bf16.gmra.mxu0 %v8683
  %v11922 = vpop.f32.mrf.mxu0
  %v11923 = vadd.f32 %v11754, %v11922
  %v11924 = vpop.f32.mrf.mxu0
  %v11925 = vadd.f32 %v11756, %v11924
  %11926 = vmatmul.bf16.gmra.mxu0 %v8695
  %v11927 = vpop.f32.mrf.mxu0
  %v11928 = vadd.f32 %v11759, %v11927
  %v11929 = vpop.f32.mrf.mxu0
  %v11930 = vadd.f32 %v11761, %v11929
  %11931 = vmatmul.bf16.gmra.mxu0 %v8707
  %v11932 = vpop.f32.mrf.mxu0
  %v11933 = vadd.f32 %v11764, %v11932
  %v11934 = vpop.f32.mrf.mxu0
  %v11935 = vadd.f32 %v11766, %v11934
  %11936 = vmatmul.bf16.gmra.mxu0 %v8719
  %v11937 = vpop.f32.mrf.mxu0
  %v11938 = vadd.f32 %v11769, %v11937
  %v11939 = vpop.f32.mrf.mxu0
  %v11940 = vadd.f32 %v11771, %v11939
  %11941 = vmatmul.bf16.gmra.mxu0 %v8731
  %v11942 = vpop.f32.mrf.mxu0
  %v11943 = vadd.f32 %v11774, %v11942
  %v11944 = vpop.f32.mrf.mxu0
  %v11945 = vadd.f32 %v11776, %v11944
  %11946 = vmatmul.bf16.gmra.mxu0 %v8743
  %v11947 = vpop.f32.mrf.mxu0
  %v11948 = vadd.f32 %v11779, %v11947
  %v11949 = vpop.f32.mrf.mxu0
  %v11950 = vadd.f32 %v11781, %v11949
  %11951 = vmatmul.bf16.gmra.mxu0 %v8755
  %v11952 = vpop.f32.mrf.mxu0
  %v11953 = vadd.f32 %v11784, %v11952
  %v11954 = vpop.f32.mrf.mxu0
  %v11955 = vadd.f32 %v11786, %v11954
  %11956 = vmatmul.bf16.gmra.mxu0 %v8767
  %v11957 = vpop.f32.mrf.mxu0
  %v11958 = vadd.f32 %v11789, %v11957
  %v11959 = vpop.f32.mrf.mxu0
  %v11960 = vadd.f32 %v11791, %v11959
  %11961 = vmatmul.bf16.gmra.mxu0 %v8779
  %v11962 = vpop.f32.mrf.mxu0
  %v11963 = vadd.f32 %v11794, %v11962
  %v11964 = vpop.f32.mrf.mxu0
  %v11965 = vadd.f32 %v11796, %v11964
  %11966 = vmatmul.bf16.gmra.mxu0 %v8791
  %v11967 = vpop.f32.mrf.mxu0
  %v11968 = vadd.f32 %v11799, %v11967
  %v11969 = vpop.f32.mrf.mxu0
  %v11970 = vadd.f32 %v11801, %v11969
  %11971 = vmatmul.bf16.gmra.mxu0 %v8803
  %v11972 = vpop.f32.mrf.mxu0
  %v11973 = vadd.f32 %v11804, %v11972
  %v11974 = vpop.f32.mrf.mxu0
  %v11975 = vadd.f32 %v11806, %v11974
  %11976 = vmatmul.bf16.gmra.mxu0 %v8815
  %v11977 = vpop.f32.mrf.mxu0
  %v11978 = vadd.f32 %v11809, %v11977
  %v11979 = vpop.f32.mrf.mxu0
  %v11980 = vadd.f32 %v11811, %v11979
  %11981 = vmatmul.bf16.gmra.mxu0 %v8827
  %v11982 = vpop.f32.mrf.mxu0
  %v11983 = vadd.f32 %v11814, %v11982
  %v11984 = vpop.f32.mrf.mxu0
  %v11985 = vadd.f32 %v11816, %v11984
  %11986 = vmatmul.bf16.gmra.mxu0 %v8839
  %v11987 = vpop.f32.mrf.mxu0
  %v11988 = vadd.f32 %v11819, %v11987
  %v11989 = vpop.f32.mrf.mxu0
  %v11990 = vadd.f32 %v11821, %v11989
  %11991 = vmatmul.bf16.gmra.mxu0 %v8851
  %v11992 = vpop.f32.mrf.mxu0
  %v11993 = vadd.f32 %v11824, %v11992
  %v11994 = vpop.f32.mrf.mxu0
  %v11995 = vadd.f32 %v11826, %v11994
  %11996 = vmatmul.bf16.gmra.mxu0 %v8863
  %v11997 = vpop.f32.mrf.mxu0
  %v11998 = vadd.f32 %v11829, %v11997
  %v11999 = vpop.f32.mrf.mxu0
  %v12000 = vadd.f32 %v11831, %v11999
  %12001 = vmatmul.bf16.gmra.mxu0 %v8875
  %v12002 = vpop.f32.mrf.mxu0
  %v12003 = vadd.f32 %v11834, %v12002
  %v12004 = vpop.f32.mrf.mxu0
  %v12005 = vadd.f32 %v11836, %v12004
  %12006 = vmatmul.bf16.gmra.mxu0 %v8887
  %v12007 = vpop.f32.mrf.mxu0
  %v12008 = vadd.f32 %v11839, %v12007
  %v12009 = vpop.f32.mrf.mxu0
  %v12010 = vadd.f32 %v11841, %v12009
  %12011 = vmatmul.bf16.gmra.mxu0 %v8899
  %v12012 = vpop.f32.mrf.mxu0
  %v12013 = vadd.f32 %v11844, %v12012
  %v12014 = vpop.f32.mrf.mxu0
  %v12015 = vadd.f32 %v11846, %v12014
  %12016 = vmatmul.bf16.gmra.mxu0 %v8911
  %v12017 = vpop.f32.mrf.mxu0
  %v12018 = vadd.f32 %v11849, %v12017
  %v12019 = vpop.f32.mrf.mxu0
  %v12020 = vadd.f32 %v11851, %v12019
  %12021 = vmatmul.bf16.gmra.mxu0 %v8923
  %v12022 = vpop.f32.mrf.mxu0
  %v12023 = vadd.f32 %v11854, %v12022
  %v12024 = vpop.f32.mrf.mxu0
  %v12025 = vadd.f32 %v11856, %v12024
  %12026 = vmatmul.bf16.gmra.mxu0 %v8935
  %v12027 = vpop.f32.mrf.mxu0
  %v12028 = vadd.f32 %v11859, %v12027
  %v12029 = vpop.f32.mrf.mxu0
  %v12030 = vadd.f32 %v11861, %v12029
  %12031 = vmatmul.bf16.gmra.mxu0 %v8947
  %v12032 = vpop.f32.mrf.mxu0
  %v12033 = vadd.f32 %v11864, %v12032
  %v12034 = vpop.f32.mrf.mxu0
  %v12035 = vadd.f32 %v11866, %v12034
  %12036 = vmatmul.bf16.gmra.mxu0 %v8959
  %v12037 = vpop.f32.mrf.mxu0
  %v12038 = vadd.f32 %v11869, %v12037
  %v12039 = vpop.f32.mrf.mxu0
  %v12040 = vadd.f32 %v11871, %v12039
  %12041 = vmatmul.bf16.gmra.mxu0 %v8971
  %v12042 = vpop.f32.mrf.mxu0
  %v12043 = vadd.f32 %v11874, %v12042
  %v12044 = vpop.f32.mrf.mxu0
  %v12045 = vadd.f32 %v11876, %v12044
  %12046 = vmatmul.bf16.gmra.mxu0 %v8983
  %v12047 = vpop.f32.mrf.mxu0
  %v12048 = vadd.f32 %v11879, %v12047
  %v12049 = vpop.f32.mrf.mxu0
  %v12050 = vadd.f32 %v11881, %v12049
  %12051 = vmatmul.bf16.gmra.mxu0 %v8995
  %v12052 = vpop.f32.mrf.mxu0
  %v12053 = vadd.f32 %v11884, %v12052
  %v12054 = vpop.f32.mrf.mxu0
  %v12055 = vadd.f32 %v11886, %v12054
  %12056 = vmatmul.bf16.gmra.mxu0 %v9007
  %v12057 = vpop.f32.mrf.mxu0
  %v12058 = vadd.f32 %v11889, %v12057
  %v12059 = vpop.f32.mrf.mxu0
  %v12060 = vadd.f32 %v11891, %v12059
  %12061 = vmatmul.bf16.gmra.mxu0 %v9019
  %v12062 = vpop.f32.mrf.mxu0
  %v12063 = vadd.f32 %v11894, %v12062
  %v12064 = vpop.f32.mrf.mxu0
  %v12065 = vadd.f32 %v11896, %v12064
  %12066 = vmatmul.bf16.gmra.mxu0 %v9031
  %v12067 = vpop.f32.mrf.mxu0
  %v12068 = vadd.f32 %v11899, %v12067
  %v12069 = vpop.f32.mrf.mxu0
  %v12070 = vadd.f32 %v11901, %v12069
  %12071 = vmatmul.bf16.gmra.mxu0 %v9043
  %v12072 = vpop.f32.mrf.mxu0
  %v12073 = vadd.f32 %v11904, %v12072
  %v12074 = vpop.f32.mrf.mxu0
  %v12075 = vadd.f32 %v11906, %v12074
  %12076 = vmatmul.bf16.gmra.mxu0 %v9055
  %v12077 = vpop.f32.mrf.mxu0
  %v12078 = vadd.f32 %v11909, %v12077
  %v12079 = vpop.f32.mrf.mxu0
  %v12080 = vadd.f32 %v11911, %v12079
  %12081 = vdwg.mxu0
  %12082 = vmatpush.bf16.msra.mxu0 %v11623
  %12083 = vmatpush.bf16.msra.mxu0 %v11622
  %12084 = vmatpush.bf16.msra.mxu0 %v11621
  %12085 = vmatpush.bf16.msra.mxu0 %v11620
  %12086 = vmatpush.bf16.msra.mxu0 %v11619
  %12087 = vmatpush.bf16.msra.mxu0 %v11618
  %12088 = vmatpush.bf16.msra.mxu0 %v11617
  %12089 = vmatpush.bf16.msra.mxu0 %v11616
  %12090 = vmatmul.bf16.gmra.mxu0 %v9186
  %v12091 = vpop.f32.mrf.mxu0
  %v12092 = vadd.f32 %v11923, %v12091
  %v12093 = vpop.f32.mrf.mxu0
  %v12094 = vadd.f32 %v11925, %v12093
  %12095 = vmatmul.bf16.gmra.mxu0 %v9189
  %v12096 = vpop.f32.mrf.mxu0
  %v12097 = vadd.f32 %v11928, %v12096
  %v12098 = vpop.f32.mrf.mxu0
  %v12099 = vadd.f32 %v11930, %v12098
  %12100 = vmatmul.bf16.gmra.mxu0 %v9192
  %v12101 = vpop.f32.mrf.mxu0
  %v12102 = vadd.f32 %v11933, %v12101
  %v12103 = vpop.f32.mrf.mxu0
  %v12104 = vadd.f32 %v11935, %v12103
  %12105 = vmatmul.bf16.gmra.mxu0 %v9195
  %v12106 = vpop.f32.mrf.mxu0
  %v12107 = vadd.f32 %v11938, %v12106
  %v12108 = vpop.f32.mrf.mxu0
  %v12109 = vadd.f32 %v11940, %v12108
  %12110 = vmatmul.bf16.gmra.mxu0 %v9198
  %v12111 = vpop.f32.mrf.mxu0
  %v12112 = vadd.f32 %v11943, %v12111
  %v12113 = vpop.f32.mrf.mxu0
  %v12114 = vadd.f32 %v11945, %v12113
  %12115 = vmatmul.bf16.gmra.mxu0 %v9201
  %v12116 = vpop.f32.mrf.mxu0
  %v12117 = vadd.f32 %v11948, %v12116
  %v12118 = vpop.f32.mrf.mxu0
  %v12119 = vadd.f32 %v11950, %v12118
  %12120 = vmatmul.bf16.gmra.mxu0 %v9204
  %v12121 = vpop.f32.mrf.mxu0
  %v12122 = vadd.f32 %v11953, %v12121
  %v12123 = vpop.f32.mrf.mxu0
  %v12124 = vadd.f32 %v11955, %v12123
  %12125 = vmatmul.bf16.gmra.mxu0 %v9207
  %v12126 = vpop.f32.mrf.mxu0
  %v12127 = vadd.f32 %v11958, %v12126
  %v12128 = vpop.f32.mrf.mxu0
  %v12129 = vadd.f32 %v11960, %v12128
  %12130 = vmatmul.bf16.gmra.mxu0 %v9210
  %v12131 = vpop.f32.mrf.mxu0
  %v12132 = vadd.f32 %v11963, %v12131
  %v12133 = vpop.f32.mrf.mxu0
  %v12134 = vadd.f32 %v11965, %v12133
  %12135 = vmatmul.bf16.gmra.mxu0 %v9213
  %v12136 = vpop.f32.mrf.mxu0
  %v12137 = vadd.f32 %v11968, %v12136
  %v12138 = vpop.f32.mrf.mxu0
  %v12139 = vadd.f32 %v11970, %v12138
  %12140 = vmatmul.bf16.gmra.mxu0 %v9216
  %v12141 = vpop.f32.mrf.mxu0
  %v12142 = vadd.f32 %v11973, %v12141
  %v12143 = vpop.f32.mrf.mxu0
  %v12144 = vadd.f32 %v11975, %v12143
  %12145 = vmatmul.bf16.gmra.mxu0 %v9219
  %v12146 = vpop.f32.mrf.mxu0
  %v12147 = vadd.f32 %v11978, %v12146
  %v12148 = vpop.f32.mrf.mxu0
  %v12149 = vadd.f32 %v11980, %v12148
  %12150 = vmatmul.bf16.gmra.mxu0 %v9222
  %v12151 = vpop.f32.mrf.mxu0
  %v12152 = vadd.f32 %v11983, %v12151
  %v12153 = vpop.f32.mrf.mxu0
  %v12154 = vadd.f32 %v11985, %v12153
  %12155 = vmatmul.bf16.gmra.mxu0 %v9225
  %v12156 = vpop.f32.mrf.mxu0
  %v12157 = vadd.f32 %v11988, %v12156
  %v12158 = vpop.f32.mrf.mxu0
  %v12159 = vadd.f32 %v11990, %v12158
  %12160 = vmatmul.bf16.gmra.mxu0 %v9228
  %v12161 = vpop.f32.mrf.mxu0
  %v12162 = vadd.f32 %v11993, %v12161
  %v12163 = vpop.f32.mrf.mxu0
  %v12164 = vadd.f32 %v11995, %v12163
  %12165 = vmatmul.bf16.gmra.mxu0 %v9231
  %v12166 = vpop.f32.mrf.mxu0
  %v12167 = vadd.f32 %v11998, %v12166
  %v12168 = vpop.f32.mrf.mxu0
  %v12169 = vadd.f32 %v12000, %v12168
  %12170 = vmatmul.bf16.gmra.mxu0 %v9234
  %v12171 = vpop.f32.mrf.mxu0
  %v12172 = vadd.f32 %v12003, %v12171
  %v12173 = vpop.f32.mrf.mxu0
  %v12174 = vadd.f32 %v12005, %v12173
  %12175 = vmatmul.bf16.gmra.mxu0 %v9237
  %v12176 = vpop.f32.mrf.mxu0
  %v12177 = vadd.f32 %v12008, %v12176
  %v12178 = vpop.f32.mrf.mxu0
  %v12179 = vadd.f32 %v12010, %v12178
  %12180 = vmatmul.bf16.gmra.mxu0 %v9240
  %v12181 = vpop.f32.mrf.mxu0
  %v12182 = vadd.f32 %v12013, %v12181
  %v12183 = vpop.f32.mrf.mxu0
  %v12184 = vadd.f32 %v12015, %v12183
  %12185 = vmatmul.bf16.gmra.mxu0 %v9243
  %v12186 = vpop.f32.mrf.mxu0
  %v12187 = vadd.f32 %v12018, %v12186
  %v12188 = vpop.f32.mrf.mxu0
  %v12189 = vadd.f32 %v12020, %v12188
  %12190 = vmatmul.bf16.gmra.mxu0 %v9246
  %v12191 = vpop.f32.mrf.mxu0
  %v12192 = vadd.f32 %v12023, %v12191
  %v12193 = vpop.f32.mrf.mxu0
  %v12194 = vadd.f32 %v12025, %v12193
  %12195 = vmatmul.bf16.gmra.mxu0 %v9249
  %v12196 = vpop.f32.mrf.mxu0
  %v12197 = vadd.f32 %v12028, %v12196
  %v12198 = vpop.f32.mrf.mxu0
  %v12199 = vadd.f32 %v12030, %v12198
  %12200 = vmatmul.bf16.gmra.mxu0 %v9252
  %v12201 = vpop.f32.mrf.mxu0
  %v12202 = vadd.f32 %v12033, %v12201
  %v12203 = vpop.f32.mrf.mxu0
  %v12204 = vadd.f32 %v12035, %v12203
  %12205 = vmatmul.bf16.gmra.mxu0 %v9255
  %v12206 = vpop.f32.mrf.mxu0
  %v12207 = vadd.f32 %v12038, %v12206
  %v12208 = vpop.f32.mrf.mxu0
  %v12209 = vadd.f32 %v12040, %v12208
  %12210 = vmatmul.bf16.gmra.mxu0 %v9258
  %v12211 = vpop.f32.mrf.mxu0
  %v12212 = vadd.f32 %v12043, %v12211
  %v12213 = vpop.f32.mrf.mxu0
  %v12214 = vadd.f32 %v12045, %v12213
  %12215 = vmatmul.bf16.gmra.mxu0 %v9261
  %v12216 = vpop.f32.mrf.mxu0
  %v12217 = vadd.f32 %v12048, %v12216
  %v12218 = vpop.f32.mrf.mxu0
  %v12219 = vadd.f32 %v12050, %v12218
  %12220 = vmatmul.bf16.gmra.mxu0 %v9264
  %v12221 = vpop.f32.mrf.mxu0
  %v12222 = vadd.f32 %v12053, %v12221
  %v12223 = vpop.f32.mrf.mxu0
  %v12224 = vadd.f32 %v12055, %v12223
  %12225 = vmatmul.bf16.gmra.mxu0 %v9267
  %v12226 = vpop.f32.mrf.mxu0
  %v12227 = vadd.f32 %v12058, %v12226
  %v12228 = vpop.f32.mrf.mxu0
  %v12229 = vadd.f32 %v12060, %v12228
  %12230 = vmatmul.bf16.gmra.mxu0 %v9270
  %v12231 = vpop.f32.mrf.mxu0
  %v12232 = vadd.f32 %v12063, %v12231
  %v12233 = vpop.f32.mrf.mxu0
  %v12234 = vadd.f32 %v12065, %v12233
  %12235 = vmatmul.bf16.gmra.mxu0 %v9273
  %v12236 = vpop.f32.mrf.mxu0
  %v12237 = vadd.f32 %v12068, %v12236
  %v12238 = vpop.f32.mrf.mxu0
  %v12239 = vadd.f32 %v12070, %v12238
  %12240 = vmatmul.bf16.gmra.mxu0 %v9276
  %v12241 = vpop.f32.mrf.mxu0
  %v12242 = vadd.f32 %v12073, %v12241
  %v12243 = vpop.f32.mrf.mxu0
  %v12244 = vadd.f32 %v12075, %v12243
  %12245 = vmatmul.bf16.gmra.mxu0 %v9279
  %v12246 = vpop.f32.mrf.mxu0
  %v12247 = vadd.f32 %v12078, %v12246
  %v12248 = vpop.f32.mrf.mxu0
  %v12249 = vadd.f32 %v12080, %v12248
  %12250 = vdwg.mxu0
  %12251 = vmatpush.bf16.msra.mxu0 %v11631
  %12252 = vmatpush.bf16.msra.mxu0 %v11630
  %12253 = vmatpush.bf16.msra.mxu0 %v11629
  %12254 = vmatpush.bf16.msra.mxu0 %v11628
  %12255 = vmatpush.bf16.msra.mxu0 %v11627
  %12256 = vmatpush.bf16.msra.mxu0 %v11626
  %12257 = vmatpush.bf16.msra.mxu0 %v11625
  %12258 = vmatpush.bf16.msra.mxu0 %v11624
  %12259 = vmatmul.bf16.gmra.mxu0 %v9440
  %v12260 = vpop.f32.mrf.mxu0
  %v12261 = vadd.f32 %v12092, %v12260
  %v12262 = vpop.f32.mrf.mxu0
  %v12263 = vadd.f32 %v12094, %v12262
  %12264 = vmatmul.bf16.gmra.mxu0 %v9441
  %v12265 = vpop.f32.mrf.mxu0
  %v12266 = vadd.f32 %v12097, %v12265
  %v12267 = vpop.f32.mrf.mxu0
  %v12268 = vadd.f32 %v12099, %v12267
  %12269 = vmatmul.bf16.gmra.mxu0 %v9442
  %v12270 = vpop.f32.mrf.mxu0
  %v12271 = vadd.f32 %v12102, %v12270
  %v12272 = vpop.f32.mrf.mxu0
  %v12273 = vadd.f32 %v12104, %v12272
  %12274 = vmatmul.bf16.gmra.mxu0 %v9443
  %v12275 = vpop.f32.mrf.mxu0
  %v12276 = vadd.f32 %v12107, %v12275
  %v12277 = vpop.f32.mrf.mxu0
  %v12278 = vadd.f32 %v12109, %v12277
  %12279 = vmatmul.bf16.gmra.mxu0 %v9444
  %v12280 = vpop.f32.mrf.mxu0
  %v12281 = vadd.f32 %v12112, %v12280
  %v12282 = vpop.f32.mrf.mxu0
  %v12283 = vadd.f32 %v12114, %v12282
  %12284 = vmatmul.bf16.gmra.mxu0 %v9445
  %v12285 = vpop.f32.mrf.mxu0
  %v12286 = vadd.f32 %v12117, %v12285
  %v12287 = vpop.f32.mrf.mxu0
  %v12288 = vadd.f32 %v12119, %v12287
  %12289 = vmatmul.bf16.gmra.mxu0 %v9446
  %v12290 = vpop.f32.mrf.mxu0
  %v12291 = vadd.f32 %v12122, %v12290
  %v12292 = vpop.f32.mrf.mxu0
  %v12293 = vadd.f32 %v12124, %v12292
  %12294 = vmatmul.bf16.gmra.mxu0 %v9447
  %v12295 = vpop.f32.mrf.mxu0
  %v12296 = vadd.f32 %v12127, %v12295
  %v12297 = vpop.f32.mrf.mxu0
  %v12298 = vadd.f32 %v12129, %v12297
  %12299 = vmatmul.bf16.gmra.mxu0 %v9448
  %v12300 = vpop.f32.mrf.mxu0
  %v12301 = vadd.f32 %v12132, %v12300
  %v12302 = vpop.f32.mrf.mxu0
  %v12303 = vadd.f32 %v12134, %v12302
  %12304 = vmatmul.bf16.gmra.mxu0 %v9449
  %v12305 = vpop.f32.mrf.mxu0
  %v12306 = vadd.f32 %v12137, %v12305
  %v12307 = vpop.f32.mrf.mxu0
  %v12308 = vadd.f32 %v12139, %v12307
  %12309 = vmatmul.bf16.gmra.mxu0 %v9450
  %v12310 = vpop.f32.mrf.mxu0
  %v12311 = vadd.f32 %v12142, %v12310
  %v12312 = vpop.f32.mrf.mxu0
  %v12313 = vadd.f32 %v12144, %v12312
  %12314 = vmatmul.bf16.gmra.mxu0 %v9451
  %v12315 = vpop.f32.mrf.mxu0
  %v12316 = vadd.f32 %v12147, %v12315
  %v12317 = vpop.f32.mrf.mxu0
  %v12318 = vadd.f32 %v12149, %v12317
  %12319 = vmatmul.bf16.gmra.mxu0 %v9452
  %v12320 = vpop.f32.mrf.mxu0
  %v12321 = vadd.f32 %v12152, %v12320
  %v12322 = vpop.f32.mrf.mxu0
  %v12323 = vadd.f32 %v12154, %v12322
  %12324 = vmatmul.bf16.gmra.mxu0 %v9453
  %v12325 = vpop.f32.mrf.mxu0
  %v12326 = vadd.f32 %v12157, %v12325
  %v12327 = vpop.f32.mrf.mxu0
  %v12328 = vadd.f32 %v12159, %v12327
  %12329 = vmatmul.bf16.gmra.mxu0 %v9454
  %v12330 = vpop.f32.mrf.mxu0
  %v12331 = vadd.f32 %v12162, %v12330
  %v12332 = vpop.f32.mrf.mxu0
  %v12333 = vadd.f32 %v12164, %v12332
  %12334 = vmatmul.bf16.gmra.mxu0 %v9455
  %v12335 = vpop.f32.mrf.mxu0
  %v12336 = vadd.f32 %v12167, %v12335
  %v12337 = vpop.f32.mrf.mxu0
  %v12338 = vadd.f32 %v12169, %v12337
  %12339 = vmatmul.bf16.gmra.mxu0 %v9456
  %v12340 = vpop.f32.mrf.mxu0
  %v12341 = vadd.f32 %v12172, %v12340
  %v12342 = vpop.f32.mrf.mxu0
  %v12343 = vadd.f32 %v12174, %v12342
  %12344 = vmatmul.bf16.gmra.mxu0 %v9457
  %v12345 = vpop.f32.mrf.mxu0
  %v12346 = vadd.f32 %v12177, %v12345
  %v12347 = vpop.f32.mrf.mxu0
  %v12348 = vadd.f32 %v12179, %v12347
  %12349 = vmatmul.bf16.gmra.mxu0 %v9458
  %v12350 = vpop.f32.mrf.mxu0
  %v12351 = vadd.f32 %v12182, %v12350
  %v12352 = vpop.f32.mrf.mxu0
  %v12353 = vadd.f32 %v12184, %v12352
  %12354 = vmatmul.bf16.gmra.mxu0 %v9459
  %v12355 = vpop.f32.mrf.mxu0
  %v12356 = vadd.f32 %v12187, %v12355
  %v12357 = vpop.f32.mrf.mxu0
  %v12358 = vadd.f32 %v12189, %v12357
  %12359 = vmatmul.bf16.gmra.mxu0 %v9460
  %v12360 = vpop.f32.mrf.mxu0
  %v12361 = vadd.f32 %v12192, %v12360
  %v12362 = vpop.f32.mrf.mxu0
  %v12363 = vadd.f32 %v12194, %v12362
  %12364 = vmatmul.bf16.gmra.mxu0 %v9461
  %v12365 = vpop.f32.mrf.mxu0
  %v12366 = vadd.f32 %v12197, %v12365
  %v12367 = vpop.f32.mrf.mxu0
  %v12368 = vadd.f32 %v12199, %v12367
  %12369 = vmatmul.bf16.gmra.mxu0 %v9462
  %v12370 = vpop.f32.mrf.mxu0
  %v12371 = vadd.f32 %v12202, %v12370
  %v12372 = vpop.f32.mrf.mxu0
  %v12373 = vadd.f32 %v12204, %v12372
  %12374 = vmatmul.bf16.gmra.mxu0 %v9463
  %v12375 = vpop.f32.mrf.mxu0
  %v12376 = vadd.f32 %v12207, %v12375
  %v12377 = vpop.f32.mrf.mxu0
  %v12378 = vadd.f32 %v12209, %v12377
  %12379 = vmatmul.bf16.gmra.mxu0 %v9464
  %v12380 = vpop.f32.mrf.mxu0
  %v12381 = vadd.f32 %v12212, %v12380
  %v12382 = vpop.f32.mrf.mxu0
  %v12383 = vadd.f32 %v12214, %v12382
  %12384 = vmatmul.bf16.gmra.mxu0 %v9465
  %v12385 = vpop.f32.mrf.mxu0
  %v12386 = vadd.f32 %v12217, %v12385
  %v12387 = vpop.f32.mrf.mxu0
  %v12388 = vadd.f32 %v12219, %v12387
  %12389 = vmatmul.bf16.gmra.mxu0 %v9466
  %v12390 = vpop.f32.mrf.mxu0
  %v12391 = vadd.f32 %v12222, %v12390
  %v12392 = vpop.f32.mrf.mxu0
  %v12393 = vadd.f32 %v12224, %v12392
  %12394 = vmatmul.bf16.gmra.mxu0 %v9467
  %v12395 = vpop.f32.mrf.mxu0
  %v12396 = vadd.f32 %v12227, %v12395
  %v12397 = vpop.f32.mrf.mxu0
  %v12398 = vadd.f32 %v12229, %v12397
  %12399 = vmatmul.bf16.gmra.mxu0 %v9468
  %v12400 = vpop.f32.mrf.mxu0
  %v12401 = vadd.f32 %v12232, %v12400
  %v12402 = vpop.f32.mrf.mxu0
  %v12403 = vadd.f32 %v12234, %v12402
  %12404 = vmatmul.bf16.gmra.mxu0 %v9469
  %v12405 = vpop.f32.mrf.mxu0
  %v12406 = vadd.f32 %v12237, %v12405
  %v12407 = vpop.f32.mrf.mxu0
  %v12408 = vadd.f32 %v12239, %v12407
  %12409 = vmatmul.bf16.gmra.mxu0 %v9470
  %v12410 = vpop.f32.mrf.mxu0
  %v12411 = vadd.f32 %v12242, %v12410
  %v12412 = vpop.f32.mrf.mxu0
  %v12413 = vadd.f32 %v12244, %v12412
  %12414 = vmatmul.bf16.gmra.mxu0 %v9471
  %v12415 = vpop.f32.mrf.mxu0
  %v12416 = vadd.f32 %v12247, %v12415
  %v12417 = vpop.f32.mrf.mxu0
  %v12418 = vadd.f32 %v12249, %v12417
  %12419 = vdwg.mxu0
  %12420 = vmatpush.bf16.msra.mxu0 %v11639
  %12421 = vmatpush.bf16.msra.mxu0 %v11638
  %12422 = vmatpush.bf16.msra.mxu0 %v11637
  %12423 = vmatpush.bf16.msra.mxu0 %v11636
  %12424 = vmatpush.bf16.msra.mxu0 %v11635
  %12425 = vmatpush.bf16.msra.mxu0 %v11634
  %12426 = vmatpush.bf16.msra.mxu0 %v11633
  %12427 = vmatpush.bf16.msra.mxu0 %v11632
  %12428 = vmatmul.bf16.gmra.mxu0 %v9611
  %v12429 = vpop.f32.mrf.mxu0
  %v12430 = vadd.f32 %v12261, %v12429
  %v12431 = vpop.f32.mrf.mxu0
  %v12432 = vadd.f32 %v12263, %v12431
  %12433 = vmatmul.bf16.gmra.mxu0 %v9623
  %v12434 = vpop.f32.mrf.mxu0
  %v12435 = vadd.f32 %v12266, %v12434
  %v12436 = vpop.f32.mrf.mxu0
  %v12437 = vadd.f32 %v12268, %v12436
  %12438 = vmatmul.bf16.gmra.mxu0 %v9635
  %v12439 = vpop.f32.mrf.mxu0
  %v12440 = vadd.f32 %v12271, %v12439
  %v12441 = vpop.f32.mrf.mxu0
  %v12442 = vadd.f32 %v12273, %v12441
  %12443 = vmatmul.bf16.gmra.mxu0 %v9647
  %v12444 = vpop.f32.mrf.mxu0
  %v12445 = vadd.f32 %v12276, %v12444
  %v12446 = vpop.f32.mrf.mxu0
  %v12447 = vadd.f32 %v12278, %v12446
  %12448 = vmatmul.bf16.gmra.mxu0 %v9659
  %v12449 = vpop.f32.mrf.mxu0
  %v12450 = vadd.f32 %v12281, %v12449
  %v12451 = vpop.f32.mrf.mxu0
  %v12452 = vadd.f32 %v12283, %v12451
  %12453 = vmatmul.bf16.gmra.mxu0 %v9671
  %v12454 = vpop.f32.mrf.mxu0
  %v12455 = vadd.f32 %v12286, %v12454
  %v12456 = vpop.f32.mrf.mxu0
  %v12457 = vadd.f32 %v12288, %v12456
  %12458 = vmatmul.bf16.gmra.mxu0 %v9683
  %v12459 = vpop.f32.mrf.mxu0
  %v12460 = vadd.f32 %v12291, %v12459
  %v12461 = vpop.f32.mrf.mxu0
  %v12462 = vadd.f32 %v12293, %v12461
  %12463 = vmatmul.bf16.gmra.mxu0 %v9695
  %v12464 = vpop.f32.mrf.mxu0
  %v12465 = vadd.f32 %v12296, %v12464
  %v12466 = vpop.f32.mrf.mxu0
  %v12467 = vadd.f32 %v12298, %v12466
  %12468 = vmatmul.bf16.gmra.mxu0 %v9707
  %v12469 = vpop.f32.mrf.mxu0
  %v12470 = vadd.f32 %v12301, %v12469
  %v12471 = vpop.f32.mrf.mxu0
  %v12472 = vadd.f32 %v12303, %v12471
  %12473 = vmatmul.bf16.gmra.mxu0 %v9719
  %v12474 = vpop.f32.mrf.mxu0
  %v12475 = vadd.f32 %v12306, %v12474
  %v12476 = vpop.f32.mrf.mxu0
  %v12477 = vadd.f32 %v12308, %v12476
  %12478 = vmatmul.bf16.gmra.mxu0 %v9731
  %v12479 = vpop.f32.mrf.mxu0
  %v12480 = vadd.f32 %v12311, %v12479
  %v12481 = vpop.f32.mrf.mxu0
  %v12482 = vadd.f32 %v12313, %v12481
  %12483 = vmatmul.bf16.gmra.mxu0 %v9743
  %v12484 = vpop.f32.mrf.mxu0
  %v12485 = vadd.f32 %v12316, %v12484
  %v12486 = vpop.f32.mrf.mxu0
  %v12487 = vadd.f32 %v12318, %v12486
  %12488 = vmatmul.bf16.gmra.mxu0 %v9755
  %v12489 = vpop.f32.mrf.mxu0
  %v12490 = vadd.f32 %v12321, %v12489
  %v12491 = vpop.f32.mrf.mxu0
  %v12492 = vadd.f32 %v12323, %v12491
  %12493 = vmatmul.bf16.gmra.mxu0 %v9767
  %v12494 = vpop.f32.mrf.mxu0
  %v12495 = vadd.f32 %v12326, %v12494
  %v12496 = vpop.f32.mrf.mxu0
  %v12497 = vadd.f32 %v12328, %v12496
  %12498 = vmatmul.bf16.gmra.mxu0 %v9779
  %v12499 = vpop.f32.mrf.mxu0
  %v12500 = vadd.f32 %v12331, %v12499
  %v12501 = vpop.f32.mrf.mxu0
  %v12502 = vadd.f32 %v12333, %v12501
  %12503 = vmatmul.bf16.gmra.mxu0 %v9791
  %v12504 = vpop.f32.mrf.mxu0
  %v12505 = vadd.f32 %v12336, %v12504
  %v12506 = vpop.f32.mrf.mxu0
  %v12507 = vadd.f32 %v12338, %v12506
  %12508 = vmatmul.bf16.gmra.mxu0 %v9803
  %v12509 = vpop.f32.mrf.mxu0
  %v12510 = vadd.f32 %v12341, %v12509
  %v12511 = vpop.f32.mrf.mxu0
  %v12512 = vadd.f32 %v12343, %v12511
  %12513 = vmatmul.bf16.gmra.mxu0 %v9815
  %v12514 = vpop.f32.mrf.mxu0
  %v12515 = vadd.f32 %v12346, %v12514
  %v12516 = vpop.f32.mrf.mxu0
  %v12517 = vadd.f32 %v12348, %v12516
  %12518 = vmatmul.bf16.gmra.mxu0 %v9827
  %v12519 = vpop.f32.mrf.mxu0
  %v12520 = vadd.f32 %v12351, %v12519
  %v12521 = vpop.f32.mrf.mxu0
  %v12522 = vadd.f32 %v12353, %v12521
  %12523 = vmatmul.bf16.gmra.mxu0 %v9839
  %v12524 = vpop.f32.mrf.mxu0
  %v12525 = vadd.f32 %v12356, %v12524
  %v12526 = vpop.f32.mrf.mxu0
  %v12527 = vadd.f32 %v12358, %v12526
  %12528 = vmatmul.bf16.gmra.mxu0 %v9851
  %v12529 = vpop.f32.mrf.mxu0
  %v12530 = vadd.f32 %v12361, %v12529
  %v12531 = vpop.f32.mrf.mxu0
  %v12532 = vadd.f32 %v12363, %v12531
  %12533 = vmatmul.bf16.gmra.mxu0 %v9863
  %v12534 = vpop.f32.mrf.mxu0
  %v12535 = vadd.f32 %v12366, %v12534
  %v12536 = vpop.f32.mrf.mxu0
  %v12537 = vadd.f32 %v12368, %v12536
  %12538 = vmatmul.bf16.gmra.mxu0 %v9875
  %v12539 = vpop.f32.mrf.mxu0
  %v12540 = vadd.f32 %v12371, %v12539
  %v12541 = vpop.f32.mrf.mxu0
  %v12542 = vadd.f32 %v12373, %v12541
  %12543 = vmatmul.bf16.gmra.mxu0 %v9887
  %v12544 = vpop.f32.mrf.mxu0
  %v12545 = vadd.f32 %v12376, %v12544
  %v12546 = vpop.f32.mrf.mxu0
  %v12547 = vadd.f32 %v12378, %v12546
  %12548 = vmatmul.bf16.gmra.mxu0 %v9899
  %v12549 = vpop.f32.mrf.mxu0
  %v12550 = vadd.f32 %v12381, %v12549
  %v12551 = vpop.f32.mrf.mxu0
  %v12552 = vadd.f32 %v12383, %v12551
  %12553 = vmatmul.bf16.gmra.mxu0 %v9911
  %v12554 = vpop.f32.mrf.mxu0
  %v12555 = vadd.f32 %v12386, %v12554
  %v12556 = vpop.f32.mrf.mxu0
  %v12557 = vadd.f32 %v12388, %v12556
  %12558 = vmatmul.bf16.gmra.mxu0 %v9923
  %v12559 = vpop.f32.mrf.mxu0
  %v12560 = vadd.f32 %v12391, %v12559
  %v12561 = vpop.f32.mrf.mxu0
  %v12562 = vadd.f32 %v12393, %v12561
  %12563 = vmatmul.bf16.gmra.mxu0 %v9935
  %v12564 = vpop.f32.mrf.mxu0
  %v12565 = vadd.f32 %v12396, %v12564
  %v12566 = vpop.f32.mrf.mxu0
  %v12567 = vadd.f32 %v12398, %v12566
  %12568 = vmatmul.bf16.gmra.mxu0 %v9947
  %v12569 = vpop.f32.mrf.mxu0
  %v12570 = vadd.f32 %v12401, %v12569
  %v12571 = vpop.f32.mrf.mxu0
  %v12572 = vadd.f32 %v12403, %v12571
  %12573 = vmatmul.bf16.gmra.mxu0 %v9959
  %v12574 = vpop.f32.mrf.mxu0
  %v12575 = vadd.f32 %v12406, %v12574
  %v12576 = vpop.f32.mrf.mxu0
  %v12577 = vadd.f32 %v12408, %v12576
  %12578 = vmatmul.bf16.gmra.mxu0 %v9971
  %v12579 = vpop.f32.mrf.mxu0
  %v12580 = vadd.f32 %v12411, %v12579
  %v12581 = vpop.f32.mrf.mxu0
  %v12582 = vadd.f32 %v12413, %v12581
  %12583 = vmatmul.bf16.gmra.mxu0 %v9983
  %v12584 = vpop.f32.mrf.mxu0
  %v12585 = vadd.f32 %v12416, %v12584
  %v12586 = vpop.f32.mrf.mxu0
  %v12587 = vadd.f32 %v12418, %v12586
  %12588 = vdwg.mxu0
  %12589 = vmatpush.bf16.msra.mxu0 %v11647
  %12590 = vmatpush.bf16.msra.mxu0 %v11646
  %12591 = vmatpush.bf16.msra.mxu0 %v11645
  %12592 = vmatpush.bf16.msra.mxu0 %v11644
  %12593 = vmatpush.bf16.msra.mxu0 %v11643
  %12594 = vmatpush.bf16.msra.mxu0 %v11642
  %12595 = vmatpush.bf16.msra.mxu0 %v11641
  %12596 = vmatpush.bf16.msra.mxu0 %v11640
  %12597 = vmatmul.bf16.gmra.mxu0 %v10114
  %v12598 = vpop.f32.mrf.mxu0
  %v12599 = vadd.f32 %v12430, %v12598
  %v12600 = vpop.f32.mrf.mxu0
  %v12601 = vadd.f32 %v12432, %v12600
  %12602 = vmatmul.bf16.gmra.mxu0 %v10117
  %v12603 = vpop.f32.mrf.mxu0
  %v12604 = vadd.f32 %v12435, %v12603
  %v12605 = vpop.f32.mrf.mxu0
  %v12606 = vadd.f32 %v12437, %v12605
  %12607 = vmatmul.bf16.gmra.mxu0 %v10120
  %v12608 = vpop.f32.mrf.mxu0
  %v12609 = vadd.f32 %v12440, %v12608
  %v12610 = vpop.f32.mrf.mxu0
  %v12611 = vadd.f32 %v12442, %v12610
  %12612 = vmatmul.bf16.gmra.mxu0 %v10123
  %v12613 = vpop.f32.mrf.mxu0
  %v12614 = vadd.f32 %v12445, %v12613
  %v12615 = vpop.f32.mrf.mxu0
  %v12616 = vadd.f32 %v12447, %v12615
  %12617 = vmatmul.bf16.gmra.mxu0 %v10126
  %v12618 = vpop.f32.mrf.mxu0
  %v12619 = vadd.f32 %v12450, %v12618
  %v12620 = vpop.f32.mrf.mxu0
  %v12621 = vadd.f32 %v12452, %v12620
  %12622 = vmatmul.bf16.gmra.mxu0 %v10129
  %v12623 = vpop.f32.mrf.mxu0
  %v12624 = vadd.f32 %v12455, %v12623
  %v12625 = vpop.f32.mrf.mxu0
  %v12626 = vadd.f32 %v12457, %v12625
  %12627 = vmatmul.bf16.gmra.mxu0 %v10132
  %v12628 = vpop.f32.mrf.mxu0
  %v12629 = vadd.f32 %v12460, %v12628
  %v12630 = vpop.f32.mrf.mxu0
  %v12631 = vadd.f32 %v12462, %v12630
  %12632 = vmatmul.bf16.gmra.mxu0 %v10135
  %v12633 = vpop.f32.mrf.mxu0
  %v12634 = vadd.f32 %v12465, %v12633
  %v12635 = vpop.f32.mrf.mxu0
  %v12636 = vadd.f32 %v12467, %v12635
  %12637 = vmatmul.bf16.gmra.mxu0 %v10138
  %v12638 = vpop.f32.mrf.mxu0
  %v12639 = vadd.f32 %v12470, %v12638
  %v12640 = vpop.f32.mrf.mxu0
  %v12641 = vadd.f32 %v12472, %v12640
  %12642 = vmatmul.bf16.gmra.mxu0 %v10141
  %v12643 = vpop.f32.mrf.mxu0
  %v12644 = vadd.f32 %v12475, %v12643
  %v12645 = vpop.f32.mrf.mxu0
  %v12646 = vadd.f32 %v12477, %v12645
  %12647 = vmatmul.bf16.gmra.mxu0 %v10144
  %v12648 = vpop.f32.mrf.mxu0
  %v12649 = vadd.f32 %v12480, %v12648
  %v12650 = vpop.f32.mrf.mxu0
  %v12651 = vadd.f32 %v12482, %v12650
  %12652 = vmatmul.bf16.gmra.mxu0 %v10147
  %v12653 = vpop.f32.mrf.mxu0
  %v12654 = vadd.f32 %v12485, %v12653
  %v12655 = vpop.f32.mrf.mxu0
  %v12656 = vadd.f32 %v12487, %v12655
  %12657 = vmatmul.bf16.gmra.mxu0 %v10150
  %v12658 = vpop.f32.mrf.mxu0
  %v12659 = vadd.f32 %v12490, %v12658
  %v12660 = vpop.f32.mrf.mxu0
  %v12661 = vadd.f32 %v12492, %v12660
  %12662 = vmatmul.bf16.gmra.mxu0 %v10153
  %v12663 = vpop.f32.mrf.mxu0
  %v12664 = vadd.f32 %v12495, %v12663
  %v12665 = vpop.f32.mrf.mxu0
  %v12666 = vadd.f32 %v12497, %v12665
  %12667 = vmatmul.bf16.gmra.mxu0 %v10156
  %v12668 = vpop.f32.mrf.mxu0
  %v12669 = vadd.f32 %v12500, %v12668
  %v12670 = vpop.f32.mrf.mxu0
  %v12671 = vadd.f32 %v12502, %v12670
  %12672 = vmatmul.bf16.gmra.mxu0 %v10159
  %v12673 = vpop.f32.mrf.mxu0
  %v12674 = vadd.f32 %v12505, %v12673
  %v12675 = vpop.f32.mrf.mxu0
  %v12676 = vadd.f32 %v12507, %v12675
  %12677 = vmatmul.bf16.gmra.mxu0 %v10162
  %v12678 = vpop.f32.mrf.mxu0
  %v12679 = vadd.f32 %v12510, %v12678
  %v12680 = vpop.f32.mrf.mxu0
  %v12681 = vadd.f32 %v12512, %v12680
  %12682 = vmatmul.bf16.gmra.mxu0 %v10165
  %v12683 = vpop.f32.mrf.mxu0
  %v12684 = vadd.f32 %v12515, %v12683
  %v12685 = vpop.f32.mrf.mxu0
  %v12686 = vadd.f32 %v12517, %v12685
  %12687 = vmatmul.bf16.gmra.mxu0 %v10168
  %v12688 = vpop.f32.mrf.mxu0
  %v12689 = vadd.f32 %v12520, %v12688
  %v12690 = vpop.f32.mrf.mxu0
  %v12691 = vadd.f32 %v12522, %v12690
  %12692 = vmatmul.bf16.gmra.mxu0 %v10171
  %v12693 = vpop.f32.mrf.mxu0
  %v12694 = vadd.f32 %v12525, %v12693
  %v12695 = vpop.f32.mrf.mxu0
  %v12696 = vadd.f32 %v12527, %v12695
  %12697 = vmatmul.bf16.gmra.mxu0 %v10174
  %v12698 = vpop.f32.mrf.mxu0
  %v12699 = vadd.f32 %v12530, %v12698
  %v12700 = vpop.f32.mrf.mxu0
  %v12701 = vadd.f32 %v12532, %v12700
  %12702 = vmatmul.bf16.gmra.mxu0 %v10177
  %v12703 = vpop.f32.mrf.mxu0
  %v12704 = vadd.f32 %v12535, %v12703
  %v12705 = vpop.f32.mrf.mxu0
  %v12706 = vadd.f32 %v12537, %v12705
  %12707 = vmatmul.bf16.gmra.mxu0 %v10180
  %v12708 = vpop.f32.mrf.mxu0
  %v12709 = vadd.f32 %v12540, %v12708
  %v12710 = vpop.f32.mrf.mxu0
  %v12711 = vadd.f32 %v12542, %v12710
  %12712 = vmatmul.bf16.gmra.mxu0 %v10183
  %v12713 = vpop.f32.mrf.mxu0
  %v12714 = vadd.f32 %v12545, %v12713
  %v12715 = vpop.f32.mrf.mxu0
  %v12716 = vadd.f32 %v12547, %v12715
  %12717 = vmatmul.bf16.gmra.mxu0 %v10186
  %v12718 = vpop.f32.mrf.mxu0
  %v12719 = vadd.f32 %v12550, %v12718
  %v12720 = vpop.f32.mrf.mxu0
  %v12721 = vadd.f32 %v12552, %v12720
  %12722 = vmatmul.bf16.gmra.mxu0 %v10189
  %v12723 = vpop.f32.mrf.mxu0
  %v12724 = vadd.f32 %v12555, %v12723
  %v12725 = vpop.f32.mrf.mxu0
  %v12726 = vadd.f32 %v12557, %v12725
  %12727 = vmatmul.bf16.gmra.mxu0 %v10192
  %v12728 = vpop.f32.mrf.mxu0
  %v12729 = vadd.f32 %v12560, %v12728
  %v12730 = vpop.f32.mrf.mxu0
  %v12731 = vadd.f32 %v12562, %v12730
  %12732 = vmatmul.bf16.gmra.mxu0 %v10195
  %v12733 = vpop.f32.mrf.mxu0
  %v12734 = vadd.f32 %v12565, %v12733
  %v12735 = vpop.f32.mrf.mxu0
  %v12736 = vadd.f32 %v12567, %v12735
  %12737 = vmatmul.bf16.gmra.mxu0 %v10198
  %v12738 = vpop.f32.mrf.mxu0
  %v12739 = vadd.f32 %v12570, %v12738
  %v12740 = vpop.f32.mrf.mxu0
  %v12741 = vadd.f32 %v12572, %v12740
  %12742 = vmatmul.bf16.gmra.mxu0 %v10201
  %v12743 = vpop.f32.mrf.mxu0
  %v12744 = vadd.f32 %v12575, %v12743
  %v12745 = vpop.f32.mrf.mxu0
  %v12746 = vadd.f32 %v12577, %v12745
  %12747 = vmatmul.bf16.gmra.mxu0 %v10204
  %v12748 = vpop.f32.mrf.mxu0
  %v12749 = vadd.f32 %v12580, %v12748
  %v12750 = vpop.f32.mrf.mxu0
  %v12751 = vadd.f32 %v12582, %v12750
  %12752 = vmatmul.bf16.gmra.mxu0 %v10207
  %v12753 = vpop.f32.mrf.mxu0
  %v12754 = vadd.f32 %v12585, %v12753
  %v12755 = vpop.f32.mrf.mxu0
  %v12756 = vadd.f32 %v12587, %v12755
  %12757 = vdwg.mxu0
  %12758 = vmatpush.bf16.msra.mxu0 %v11655
  %12759 = vmatpush.bf16.msra.mxu0 %v11654
  %12760 = vmatpush.bf16.msra.mxu0 %v11653
  %12761 = vmatpush.bf16.msra.mxu0 %v11652
  %12762 = vmatpush.bf16.msra.mxu0 %v11651
  %12763 = vmatpush.bf16.msra.mxu0 %v11650
  %12764 = vmatpush.bf16.msra.mxu0 %v11649
  %12765 = vmatpush.bf16.msra.mxu0 %v11648
  %12766 = vmatmul.bf16.gmra.mxu0 %v10368
  %v12767 = vpop.f32.mrf.mxu0
  %v12768 = vadd.f32 %v12599, %v12767
  %v12769 = vpop.f32.mrf.mxu0
  %v12770 = vadd.f32 %v12601, %v12769
  %12771 = vmatmul.bf16.gmra.mxu0 %v10369
  %v12772 = vpop.f32.mrf.mxu0
  %v12773 = vadd.f32 %v12604, %v12772
  %v12774 = vpop.f32.mrf.mxu0
  %v12775 = vadd.f32 %v12606, %v12774
  %12776 = vmatmul.bf16.gmra.mxu0 %v10370
  %v12777 = vpop.f32.mrf.mxu0
  %v12778 = vadd.f32 %v12609, %v12777
  %v12779 = vpop.f32.mrf.mxu0
  %v12780 = vadd.f32 %v12611, %v12779
  %12781 = vmatmul.bf16.gmra.mxu0 %v10371
  %v12782 = vpop.f32.mrf.mxu0
  %v12783 = vadd.f32 %v12614, %v12782
  %v12784 = vpop.f32.mrf.mxu0
  %v12785 = vadd.f32 %v12616, %v12784
  %12786 = vmatmul.bf16.gmra.mxu0 %v10372
  %v12787 = vpop.f32.mrf.mxu0
  %v12788 = vadd.f32 %v12619, %v12787
  %v12789 = vpop.f32.mrf.mxu0
  %v12790 = vadd.f32 %v12621, %v12789
  %12791 = vmatmul.bf16.gmra.mxu0 %v10373
  %v12792 = vpop.f32.mrf.mxu0
  %v12793 = vadd.f32 %v12624, %v12792
  %v12794 = vpop.f32.mrf.mxu0
  %v12795 = vadd.f32 %v12626, %v12794
  %12796 = vmatmul.bf16.gmra.mxu0 %v10374
  %v12797 = vpop.f32.mrf.mxu0
  %v12798 = vadd.f32 %v12629, %v12797
  %v12799 = vpop.f32.mrf.mxu0
  %v12800 = vadd.f32 %v12631, %v12799
  %12801 = vmatmul.bf16.gmra.mxu0 %v10375
  %v12802 = vpop.f32.mrf.mxu0
  %v12803 = vadd.f32 %v12634, %v12802
  %v12804 = vpop.f32.mrf.mxu0
  %v12805 = vadd.f32 %v12636, %v12804
  %12806 = vmatmul.bf16.gmra.mxu0 %v10376
  %v12807 = vpop.f32.mrf.mxu0
  %v12808 = vadd.f32 %v12639, %v12807
  %v12809 = vpop.f32.mrf.mxu0
  %v12810 = vadd.f32 %v12641, %v12809
  %12811 = vmatmul.bf16.gmra.mxu0 %v10377
  %v12812 = vpop.f32.mrf.mxu0
  %v12813 = vadd.f32 %v12644, %v12812
  %v12814 = vpop.f32.mrf.mxu0
  %v12815 = vadd.f32 %v12646, %v12814
  %12816 = vmatmul.bf16.gmra.mxu0 %v10378
  %v12817 = vpop.f32.mrf.mxu0
  %v12818 = vadd.f32 %v12649, %v12817
  %v12819 = vpop.f32.mrf.mxu0
  %v12820 = vadd.f32 %v12651, %v12819
  %12821 = vmatmul.bf16.gmra.mxu0 %v10379
  %v12822 = vpop.f32.mrf.mxu0
  %v12823 = vadd.f32 %v12654, %v12822
  %v12824 = vpop.f32.mrf.mxu0
  %v12825 = vadd.f32 %v12656, %v12824
  %12826 = vmatmul.bf16.gmra.mxu0 %v10380
  %v12827 = vpop.f32.mrf.mxu0
  %v12828 = vadd.f32 %v12659, %v12827
  %v12829 = vpop.f32.mrf.mxu0
  %v12830 = vadd.f32 %v12661, %v12829
  %12831 = vmatmul.bf16.gmra.mxu0 %v10381
  %v12832 = vpop.f32.mrf.mxu0
  %v12833 = vadd.f32 %v12664, %v12832
  %v12834 = vpop.f32.mrf.mxu0
  %v12835 = vadd.f32 %v12666, %v12834
  %12836 = vmatmul.bf16.gmra.mxu0 %v10382
  %v12837 = vpop.f32.mrf.mxu0
  %v12838 = vadd.f32 %v12669, %v12837
  %v12839 = vpop.f32.mrf.mxu0
  %v12840 = vadd.f32 %v12671, %v12839
  %12841 = vmatmul.bf16.gmra.mxu0 %v10383
  %v12842 = vpop.f32.mrf.mxu0
  %v12843 = vadd.f32 %v12674, %v12842
  %v12844 = vpop.f32.mrf.mxu0
  %v12845 = vadd.f32 %v12676, %v12844
  %12846 = vmatmul.bf16.gmra.mxu0 %v10384
  %v12847 = vpop.f32.mrf.mxu0
  %v12848 = vadd.f32 %v12679, %v12847
  %v12849 = vpop.f32.mrf.mxu0
  %v12850 = vadd.f32 %v12681, %v12849
  %12851 = vmatmul.bf16.gmra.mxu0 %v10385
  %v12852 = vpop.f32.mrf.mxu0
  %v12853 = vadd.f32 %v12684, %v12852
  %v12854 = vpop.f32.mrf.mxu0
  %v12855 = vadd.f32 %v12686, %v12854
  %12856 = vmatmul.bf16.gmra.mxu0 %v10386
  %v12857 = vpop.f32.mrf.mxu0
  %v12858 = vadd.f32 %v12689, %v12857
  %v12859 = vpop.f32.mrf.mxu0
  %v12860 = vadd.f32 %v12691, %v12859
  %12861 = vmatmul.bf16.gmra.mxu0 %v10387
  %v12862 = vpop.f32.mrf.mxu0
  %v12863 = vadd.f32 %v12694, %v12862
  %v12864 = vpop.f32.mrf.mxu0
  %v12865 = vadd.f32 %v12696, %v12864
  %12866 = vmatmul.bf16.gmra.mxu0 %v10388
  %v12867 = vpop.f32.mrf.mxu0
  %v12868 = vadd.f32 %v12699, %v12867
  %v12869 = vpop.f32.mrf.mxu0
  %v12870 = vadd.f32 %v12701, %v12869
  %12871 = vmatmul.bf16.gmra.mxu0 %v10389
  %v12872 = vpop.f32.mrf.mxu0
  %v12873 = vadd.f32 %v12704, %v12872
  %v12874 = vpop.f32.mrf.mxu0
  %v12875 = vadd.f32 %v12706, %v12874
  %12876 = vmatmul.bf16.gmra.mxu0 %v10390
  %v12877 = vpop.f32.mrf.mxu0
  %v12878 = vadd.f32 %v12709, %v12877
  %v12879 = vpop.f32.mrf.mxu0
  %v12880 = vadd.f32 %v12711, %v12879
  %12881 = vmatmul.bf16.gmra.mxu0 %v10391
  %v12882 = vpop.f32.mrf.mxu0
  %v12883 = vadd.f32 %v12714, %v12882
  %v12884 = vpop.f32.mrf.mxu0
  %v12885 = vadd.f32 %v12716, %v12884
  %12886 = vmatmul.bf16.gmra.mxu0 %v10392
  %v12887 = vpop.f32.mrf.mxu0
  %v12888 = vadd.f32 %v12719, %v12887
  %v12889 = vpop.f32.mrf.mxu0
  %v12890 = vadd.f32 %v12721, %v12889
  %12891 = vmatmul.bf16.gmra.mxu0 %v10393
  %v12892 = vpop.f32.mrf.mxu0
  %v12893 = vadd.f32 %v12724, %v12892
  %v12894 = vpop.f32.mrf.mxu0
  %v12895 = vadd.f32 %v12726, %v12894
  %12896 = vmatmul.bf16.gmra.mxu0 %v10394
  %v12897 = vpop.f32.mrf.mxu0
  %v12898 = vadd.f32 %v12729, %v12897
  %v12899 = vpop.f32.mrf.mxu0
  %v12900 = vadd.f32 %v12731, %v12899
  %12901 = vmatmul.bf16.gmra.mxu0 %v10395
  %v12902 = vpop.f32.mrf.mxu0
  %v12903 = vadd.f32 %v12734, %v12902
  %v12904 = vpop.f32.mrf.mxu0
  %v12905 = vadd.f32 %v12736, %v12904
  %12906 = vmatmul.bf16.gmra.mxu0 %v10396
  %v12907 = vpop.f32.mrf.mxu0
  %v12908 = vadd.f32 %v12739, %v12907
  %v12909 = vpop.f32.mrf.mxu0
  %v12910 = vadd.f32 %v12741, %v12909
  %12911 = vmatmul.bf16.gmra.mxu0 %v10397
  %v12912 = vpop.f32.mrf.mxu0
  %v12913 = vadd.f32 %v12744, %v12912
  %v12914 = vpop.f32.mrf.mxu0
  %v12915 = vadd.f32 %v12746, %v12914
  %12916 = vmatmul.bf16.gmra.mxu0 %v10398
  %v12917 = vpop.f32.mrf.mxu0
  %v12918 = vadd.f32 %v12749, %v12917
  %v12919 = vpop.f32.mrf.mxu0
  %v12920 = vadd.f32 %v12751, %v12919
  %12921 = vmatmul.bf16.gmra.mxu0 %v10399
  %v12922 = vpop.f32.mrf.mxu0
  %v12923 = vadd.f32 %v12754, %v12922
  %v12924 = vpop.f32.mrf.mxu0
  %v12925 = vadd.f32 %v12756, %v12924
  %12926 = vdwg.mxu0
  %12927 = vmatpush.bf16.msra.mxu0 %v11663
  %12928 = vmatpush.bf16.msra.mxu0 %v11662
  %12929 = vmatpush.bf16.msra.mxu0 %v11661
  %12930 = vmatpush.bf16.msra.mxu0 %v11660
  %12931 = vmatpush.bf16.msra.mxu0 %v11659
  %12932 = vmatpush.bf16.msra.mxu0 %v11658
  %12933 = vmatpush.bf16.msra.mxu0 %v11657
  %12934 = vmatpush.bf16.msra.mxu0 %v11656
  %12935 = vmatmul.bf16.gmra.mxu0 %v10539
  %v12936 = vpop.f32.mrf.mxu0
  %v12937 = vadd.f32 %v12768, %v12936
  %v12938 = vpop.f32.mrf.mxu0
  %v12939 = vadd.f32 %v12770, %v12938
  %12940 = vmatmul.bf16.gmra.mxu0 %v10551
  %v12941 = vpop.f32.mrf.mxu0
  %v12942 = vadd.f32 %v12773, %v12941
  %v12943 = vpop.f32.mrf.mxu0
  %v12944 = vadd.f32 %v12775, %v12943
  %12945 = vmatmul.bf16.gmra.mxu0 %v10563
  %v12946 = vpop.f32.mrf.mxu0
  %v12947 = vadd.f32 %v12778, %v12946
  %v12948 = vpop.f32.mrf.mxu0
  %v12949 = vadd.f32 %v12780, %v12948
  %12950 = vmatmul.bf16.gmra.mxu0 %v10575
  %v12951 = vpop.f32.mrf.mxu0
  %v12952 = vadd.f32 %v12783, %v12951
  %v12953 = vpop.f32.mrf.mxu0
  %v12954 = vadd.f32 %v12785, %v12953
  %12955 = vmatmul.bf16.gmra.mxu0 %v10587
  %v12956 = vpop.f32.mrf.mxu0
  %v12957 = vadd.f32 %v12788, %v12956
  %v12958 = vpop.f32.mrf.mxu0
  %v12959 = vadd.f32 %v12790, %v12958
  %12960 = vmatmul.bf16.gmra.mxu0 %v10599
  %v12961 = vpop.f32.mrf.mxu0
  %v12962 = vadd.f32 %v12793, %v12961
  %v12963 = vpop.f32.mrf.mxu0
  %v12964 = vadd.f32 %v12795, %v12963
  %12965 = vmatmul.bf16.gmra.mxu0 %v10611
  %v12966 = vpop.f32.mrf.mxu0
  %v12967 = vadd.f32 %v12798, %v12966
  %v12968 = vpop.f32.mrf.mxu0
  %v12969 = vadd.f32 %v12800, %v12968
  %12970 = vmatmul.bf16.gmra.mxu0 %v10623
  %v12971 = vpop.f32.mrf.mxu0
  %v12972 = vadd.f32 %v12803, %v12971
  %v12973 = vpop.f32.mrf.mxu0
  %v12974 = vadd.f32 %v12805, %v12973
  %12975 = vmatmul.bf16.gmra.mxu0 %v10635
  %v12976 = vpop.f32.mrf.mxu0
  %v12977 = vadd.f32 %v12808, %v12976
  %v12978 = vpop.f32.mrf.mxu0
  %v12979 = vadd.f32 %v12810, %v12978
  %12980 = vmatmul.bf16.gmra.mxu0 %v10647
  %v12981 = vpop.f32.mrf.mxu0
  %v12982 = vadd.f32 %v12813, %v12981
  %v12983 = vpop.f32.mrf.mxu0
  %v12984 = vadd.f32 %v12815, %v12983
  %12985 = vmatmul.bf16.gmra.mxu0 %v10659
  %v12986 = vpop.f32.mrf.mxu0
  %v12987 = vadd.f32 %v12818, %v12986
  %v12988 = vpop.f32.mrf.mxu0
  %v12989 = vadd.f32 %v12820, %v12988
  %12990 = vmatmul.bf16.gmra.mxu0 %v10671
  %v12991 = vpop.f32.mrf.mxu0
  %v12992 = vadd.f32 %v12823, %v12991
  %v12993 = vpop.f32.mrf.mxu0
  %v12994 = vadd.f32 %v12825, %v12993
  %12995 = vmatmul.bf16.gmra.mxu0 %v10683
  %v12996 = vpop.f32.mrf.mxu0
  %v12997 = vadd.f32 %v12828, %v12996
  %v12998 = vpop.f32.mrf.mxu0
  %v12999 = vadd.f32 %v12830, %v12998
  %13000 = vmatmul.bf16.gmra.mxu0 %v10695
  %v13001 = vpop.f32.mrf.mxu0
  %v13002 = vadd.f32 %v12833, %v13001
  %v13003 = vpop.f32.mrf.mxu0
  %v13004 = vadd.f32 %v12835, %v13003
  %13005 = vmatmul.bf16.gmra.mxu0 %v10707
  %v13006 = vpop.f32.mrf.mxu0
  %v13007 = vadd.f32 %v12838, %v13006
  %v13008 = vpop.f32.mrf.mxu0
  %v13009 = vadd.f32 %v12840, %v13008
  %13010 = vmatmul.bf16.gmra.mxu0 %v10719
  %v13011 = vpop.f32.mrf.mxu0
  %v13012 = vadd.f32 %v12843, %v13011
  %v13013 = vpop.f32.mrf.mxu0
  %v13014 = vadd.f32 %v12845, %v13013
  %13015 = vmatmul.bf16.gmra.mxu0 %v10731
  %v13016 = vpop.f32.mrf.mxu0
  %v13017 = vadd.f32 %v12848, %v13016
  %v13018 = vpop.f32.mrf.mxu0
  %v13019 = vadd.f32 %v12850, %v13018
  %13020 = vmatmul.bf16.gmra.mxu0 %v10743
  %v13021 = vpop.f32.mrf.mxu0
  %v13022 = vadd.f32 %v12853, %v13021
  %v13023 = vpop.f32.mrf.mxu0
  %v13024 = vadd.f32 %v12855, %v13023
  %13025 = vmatmul.bf16.gmra.mxu0 %v10755
  %v13026 = vpop.f32.mrf.mxu0
  %v13027 = vadd.f32 %v12858, %v13026
  %v13028 = vpop.f32.mrf.mxu0
  %v13029 = vadd.f32 %v12860, %v13028
  %13030 = vmatmul.bf16.gmra.mxu0 %v10767
  %v13031 = vpop.f32.mrf.mxu0
  %v13032 = vadd.f32 %v12863, %v13031
  %v13033 = vpop.f32.mrf.mxu0
  %v13034 = vadd.f32 %v12865, %v13033
  %13035 = vmatmul.bf16.gmra.mxu0 %v10779
  %v13036 = vpop.f32.mrf.mxu0
  %v13037 = vadd.f32 %v12868, %v13036
  %v13038 = vpop.f32.mrf.mxu0
  %v13039 = vadd.f32 %v12870, %v13038
  %13040 = vmatmul.bf16.gmra.mxu0 %v10791
  %v13041 = vpop.f32.mrf.mxu0
  %v13042 = vadd.f32 %v12873, %v13041
  %v13043 = vpop.f32.mrf.mxu0
  %v13044 = vadd.f32 %v12875, %v13043
  %13045 = vmatmul.bf16.gmra.mxu0 %v10803
  %v13046 = vpop.f32.mrf.mxu0
  %v13047 = vadd.f32 %v12878, %v13046
  %v13048 = vpop.f32.mrf.mxu0
  %v13049 = vadd.f32 %v12880, %v13048
  %13050 = vmatmul.bf16.gmra.mxu0 %v10815
  %v13051 = vpop.f32.mrf.mxu0
  %v13052 = vadd.f32 %v12883, %v13051
  %v13053 = vpop.f32.mrf.mxu0
  %v13054 = vadd.f32 %v12885, %v13053
  %13055 = vmatmul.bf16.gmra.mxu0 %v10827
  %v13056 = vpop.f32.mrf.mxu0
  %v13057 = vadd.f32 %v12888, %v13056
  %v13058 = vpop.f32.mrf.mxu0
  %v13059 = vadd.f32 %v12890, %v13058
  %13060 = vmatmul.bf16.gmra.mxu0 %v10839
  %v13061 = vpop.f32.mrf.mxu0
  %v13062 = vadd.f32 %v12893, %v13061
  %v13063 = vpop.f32.mrf.mxu0
  %v13064 = vadd.f32 %v12895, %v13063
  %13065 = vmatmul.bf16.gmra.mxu0 %v10851
  %v13066 = vpop.f32.mrf.mxu0
  %v13067 = vadd.f32 %v12898, %v13066
  %v13068 = vpop.f32.mrf.mxu0
  %v13069 = vadd.f32 %v12900, %v13068
  %13070 = vmatmul.bf16.gmra.mxu0 %v10863
  %v13071 = vpop.f32.mrf.mxu0
  %v13072 = vadd.f32 %v12903, %v13071
  %v13073 = vpop.f32.mrf.mxu0
  %v13074 = vadd.f32 %v12905, %v13073
  %13075 = vmatmul.bf16.gmra.mxu0 %v10875
  %v13076 = vpop.f32.mrf.mxu0
  %v13077 = vadd.f32 %v12908, %v13076
  %v13078 = vpop.f32.mrf.mxu0
  %v13079 = vadd.f32 %v12910, %v13078
  %13080 = vmatmul.bf16.gmra.mxu0 %v10887
  %v13081 = vpop.f32.mrf.mxu0
  %v13082 = vadd.f32 %v12913, %v13081
  %v13083 = vpop.f32.mrf.mxu0
  %v13084 = vadd.f32 %v12915, %v13083
  %13085 = vmatmul.bf16.gmra.mxu0 %v10899
  %v13086 = vpop.f32.mrf.mxu0
  %v13087 = vadd.f32 %v12918, %v13086
  %v13088 = vpop.f32.mrf.mxu0
  %v13089 = vadd.f32 %v12920, %v13088
  %13090 = vmatmul.bf16.gmra.mxu0 %v10911
  %v13091 = vpop.f32.mrf.mxu0
  %v13092 = vadd.f32 %v12923, %v13091
  %v13093 = vpop.f32.mrf.mxu0
  %v13094 = vadd.f32 %v12925, %v13093
  %13095 = vdwg.mxu0
  %13096 = vmatpush.bf16.msra.mxu0 %v11671
  %13097 = vmatpush.bf16.msra.mxu0 %v11670
  %13098 = vmatpush.bf16.msra.mxu0 %v11669
  %13099 = vmatpush.bf16.msra.mxu0 %v11668
  %13100 = vmatpush.bf16.msra.mxu0 %v11667
  %13101 = vmatpush.bf16.msra.mxu0 %v11666
  %13102 = vmatpush.bf16.msra.mxu0 %v11665
  %13103 = vmatpush.bf16.msra.mxu0 %v11664
  %13104 = vmatmul.bf16.gmra.mxu0 %v11042
  %v13105 = vpop.f32.mrf.mxu0
  %v13106 = vadd.f32 %v12937, %v13105
  %v13107 = vpop.f32.mrf.mxu0
  %v13108 = vadd.f32 %v12939, %v13107
  %13109 = vmatmul.bf16.gmra.mxu0 %v11045
  %v13110 = vpop.f32.mrf.mxu0
  %v13111 = vadd.f32 %v12942, %v13110
  %v13112 = vpop.f32.mrf.mxu0
  %v13113 = vadd.f32 %v12944, %v13112
  %13114 = vmatmul.bf16.gmra.mxu0 %v11048
  %v13115 = vpop.f32.mrf.mxu0
  %v13116 = vadd.f32 %v12947, %v13115
  %v13117 = vpop.f32.mrf.mxu0
  %v13118 = vadd.f32 %v12949, %v13117
  %13119 = vmatmul.bf16.gmra.mxu0 %v11051
  %v13120 = vpop.f32.mrf.mxu0
  %v13121 = vadd.f32 %v12952, %v13120
  %v13122 = vpop.f32.mrf.mxu0
  %v13123 = vadd.f32 %v12954, %v13122
  %13124 = vmatmul.bf16.gmra.mxu0 %v11054
  %v13125 = vpop.f32.mrf.mxu0
  %v13126 = vadd.f32 %v12957, %v13125
  %v13127 = vpop.f32.mrf.mxu0
  %v13128 = vadd.f32 %v12959, %v13127
  %13129 = vmatmul.bf16.gmra.mxu0 %v11057
  %v13130 = vpop.f32.mrf.mxu0
  %v13131 = vadd.f32 %v12962, %v13130
  %v13132 = vpop.f32.mrf.mxu0
  %v13133 = vadd.f32 %v12964, %v13132
  %13134 = vmatmul.bf16.gmra.mxu0 %v11060
  %v13135 = vpop.f32.mrf.mxu0
  %v13136 = vadd.f32 %v12967, %v13135
  %v13137 = vpop.f32.mrf.mxu0
  %v13138 = vadd.f32 %v12969, %v13137
  %13139 = vmatmul.bf16.gmra.mxu0 %v11063
  %v13140 = vpop.f32.mrf.mxu0
  %v13141 = vadd.f32 %v12972, %v13140
  %v13142 = vpop.f32.mrf.mxu0
  %v13143 = vadd.f32 %v12974, %v13142
  %13144 = vmatmul.bf16.gmra.mxu0 %v11066
  %v13145 = vpop.f32.mrf.mxu0
  %v13146 = vadd.f32 %v12977, %v13145
  %v13147 = vpop.f32.mrf.mxu0
  %v13148 = vadd.f32 %v12979, %v13147
  %13149 = vmatmul.bf16.gmra.mxu0 %v11069
  %v13150 = vpop.f32.mrf.mxu0
  %v13151 = vadd.f32 %v12982, %v13150
  %v13152 = vpop.f32.mrf.mxu0
  %v13153 = vadd.f32 %v12984, %v13152
  %13154 = vmatmul.bf16.gmra.mxu0 %v11072
  %v13155 = vpop.f32.mrf.mxu0
  %v13156 = vadd.f32 %v12987, %v13155
  %v13157 = vpop.f32.mrf.mxu0
  %v13158 = vadd.f32 %v12989, %v13157
  %13159 = vmatmul.bf16.gmra.mxu0 %v11075
  %v13160 = vpop.f32.mrf.mxu0
  %v13161 = vadd.f32 %v12992, %v13160
  %v13162 = vpop.f32.mrf.mxu0
  %v13163 = vadd.f32 %v12994, %v13162
  %13164 = vmatmul.bf16.gmra.mxu0 %v11078
  %v13165 = vpop.f32.mrf.mxu0
  %v13166 = vadd.f32 %v12997, %v13165
  %v13167 = vpop.f32.mrf.mxu0
  %v13168 = vadd.f32 %v12999, %v13167
  %13169 = vmatmul.bf16.gmra.mxu0 %v11081
  %v13170 = vpop.f32.mrf.mxu0
  %v13171 = vadd.f32 %v13002, %v13170
  %v13172 = vpop.f32.mrf.mxu0
  %v13173 = vadd.f32 %v13004, %v13172
  %13174 = vmatmul.bf16.gmra.mxu0 %v11084
  %v13175 = vpop.f32.mrf.mxu0
  %v13176 = vadd.f32 %v13007, %v13175
  %v13177 = vpop.f32.mrf.mxu0
  %v13178 = vadd.f32 %v13009, %v13177
  %13179 = vmatmul.bf16.gmra.mxu0 %v11087
  %v13180 = vpop.f32.mrf.mxu0
  %v13181 = vadd.f32 %v13012, %v13180
  %v13182 = vpop.f32.mrf.mxu0
  %v13183 = vadd.f32 %v13014, %v13182
  %13184 = vmatmul.bf16.gmra.mxu0 %v11090
  %v13185 = vpop.f32.mrf.mxu0
  %v13186 = vadd.f32 %v13017, %v13185
  %v13187 = vpop.f32.mrf.mxu0
  %v13188 = vadd.f32 %v13019, %v13187
  %13189 = vmatmul.bf16.gmra.mxu0 %v11093
  %v13190 = vpop.f32.mrf.mxu0
  %v13191 = vadd.f32 %v13022, %v13190
  %v13192 = vpop.f32.mrf.mxu0
  %v13193 = vadd.f32 %v13024, %v13192
  %13194 = vmatmul.bf16.gmra.mxu0 %v11096
  %v13195 = vpop.f32.mrf.mxu0
  %v13196 = vadd.f32 %v13027, %v13195
  %v13197 = vpop.f32.mrf.mxu0
  %v13198 = vadd.f32 %v13029, %v13197
  %13199 = vmatmul.bf16.gmra.mxu0 %v11099
  %v13200 = vpop.f32.mrf.mxu0
  %v13201 = vadd.f32 %v13032, %v13200
  %v13202 = vpop.f32.mrf.mxu0
  %v13203 = vadd.f32 %v13034, %v13202
  %13204 = vmatmul.bf16.gmra.mxu0 %v11102
  %v13205 = vpop.f32.mrf.mxu0
  %v13206 = vadd.f32 %v13037, %v13205
  %v13207 = vpop.f32.mrf.mxu0
  %v13208 = vadd.f32 %v13039, %v13207
  %13209 = vmatmul.bf16.gmra.mxu0 %v11105
  %v13210 = vpop.f32.mrf.mxu0
  %v13211 = vadd.f32 %v13042, %v13210
  %v13212 = vpop.f32.mrf.mxu0
  %v13213 = vadd.f32 %v13044, %v13212
  %13214 = vmatmul.bf16.gmra.mxu0 %v11108
  %v13215 = vpop.f32.mrf.mxu0
  %v13216 = vadd.f32 %v13047, %v13215
  %v13217 = vpop.f32.mrf.mxu0
  %v13218 = vadd.f32 %v13049, %v13217
  %13219 = vmatmul.bf16.gmra.mxu0 %v11111
  %v13220 = vpop.f32.mrf.mxu0
  %v13221 = vadd.f32 %v13052, %v13220
  %v13222 = vpop.f32.mrf.mxu0
  %v13223 = vadd.f32 %v13054, %v13222
  %13224 = vmatmul.bf16.gmra.mxu0 %v11114
  %v13225 = vpop.f32.mrf.mxu0
  %v13226 = vadd.f32 %v13057, %v13225
  %v13227 = vpop.f32.mrf.mxu0
  %v13228 = vadd.f32 %v13059, %v13227
  %13229 = vmatmul.bf16.gmra.mxu0 %v11117
  %v13230 = vpop.f32.mrf.mxu0
  %v13231 = vadd.f32 %v13062, %v13230
  %v13232 = vpop.f32.mrf.mxu0
  %v13233 = vadd.f32 %v13064, %v13232
  %13234 = vmatmul.bf16.gmra.mxu0 %v11120
  %v13235 = vpop.f32.mrf.mxu0
  %v13236 = vadd.f32 %v13067, %v13235
  %v13237 = vpop.f32.mrf.mxu0
  %v13238 = vadd.f32 %v13069, %v13237
  %13239 = vmatmul.bf16.gmra.mxu0 %v11123
  %v13240 = vpop.f32.mrf.mxu0
  %v13241 = vadd.f32 %v13072, %v13240
  %v13242 = vpop.f32.mrf.mxu0
  %v13243 = vadd.f32 %v13074, %v13242
  %13244 = vmatmul.bf16.gmra.mxu0 %v11126
  %v13245 = vpop.f32.mrf.mxu0
  %v13246 = vadd.f32 %v13077, %v13245
  %v13247 = vpop.f32.mrf.mxu0
  %v13248 = vadd.f32 %v13079, %v13247
  %13249 = vmatmul.bf16.gmra.mxu0 %v11129
  %v13250 = vpop.f32.mrf.mxu0
  %v13251 = vadd.f32 %v13082, %v13250
  %v13252 = vpop.f32.mrf.mxu0
  %v13253 = vadd.f32 %v13084, %v13252
  %13254 = vmatmul.bf16.gmra.mxu0 %v11132
  %v13255 = vpop.f32.mrf.mxu0
  %v13256 = vadd.f32 %v13087, %v13255
  %v13257 = vpop.f32.mrf.mxu0
  %v13258 = vadd.f32 %v13089, %v13257
  %13259 = vmatmul.bf16.gmra.mxu0 %v11135
  %v13260 = vpop.f32.mrf.mxu0
  %v13261 = vadd.f32 %v13092, %v13260
  %v13262 = vpop.f32.mrf.mxu0
  %v13263 = vadd.f32 %v13094, %v13262
  %13264 = vdwg.mxu0
  %v13265 = vld [vmem:[%s5] sm:$0x1]
  %v13266 = vld [vmem:[%s6] sm:$0x1]
  %v13267 = vadd.f32 %v13106, %v13108
  %v13268 = vadd.f32 %v13267, %v13111
  %v13269 = vadd.f32 %v13268, %v13113
  %v13270 = vadd.f32 %v13269, %v13116
  %v13271 = vadd.f32 %v13270, %v13118
  %v13272 = vadd.f32 %v13271, %v13121
  %v13273 = vadd.f32 %v13272, %v13123
  %v13274 = vadd.f32 %v13273, %v13126
  %v13275 = vadd.f32 %v13274, %v13128
  %v13276 = vadd.f32 %v13275, %v13131
  %v13277 = vadd.f32 %v13276, %v13133
  %v13278 = vadd.f32 %v13277, %v13136
  %v13279 = vadd.f32 %v13278, %v13138
  %v13280 = vadd.f32 %v13279, %v13141
  %v13281 = vadd.f32 %v13280, %v13143
  %v13282 = vadd.f32 %v13281, %v13146
  %v13283 = vadd.f32 %v13282, %v13148
  %v13284 = vadd.f32 %v13283, %v13151
  %v13285 = vadd.f32 %v13284, %v13153
  %v13286 = vadd.f32 %v13285, %v13156
  %v13287 = vadd.f32 %v13286, %v13158
  %v13288 = vadd.f32 %v13287, %v13161
  %v13289 = vadd.f32 %v13288, %v13163
  %v13290 = vadd.f32 %v13289, %v13166
  %v13291 = vadd.f32 %v13290, %v13168
  %v13292 = vadd.f32 %v13291, %v13171
  %v13293 = vadd.f32 %v13292, %v13173
  %v13294 = vadd.f32 %v13293, %v13176
  %v13295 = vadd.f32 %v13294, %v13178
  %v13296 = vadd.f32 %v13295, %v13181
  %v13297 = vadd.f32 %v13296, %v13183
  %v13298 = vadd.f32 %v13297, %v13186
  %v13299 = vadd.f32 %v13298, %v13188
  %v13300 = vadd.f32 %v13299, %v13191
  %v13301 = vadd.f32 %v13300, %v13193
  %v13302 = vadd.f32 %v13301, %v13196
  %v13303 = vadd.f32 %v13302, %v13198
  %v13304 = vadd.f32 %v13303, %v13201
  %v13305 = vadd.f32 %v13304, %v13203
  %v13306 = vadd.f32 %v13305, %v13206
  %v13307 = vadd.f32 %v13306, %v13208
  %v13308 = vadd.f32 %v13307, %v13211
  %v13309 = vadd.f32 %v13308, %v13213
  %v13310 = vadd.f32 %v13309, %v13216
  %v13311 = vadd.f32 %v13310, %v13218
  %v13312 = vadd.f32 %v13311, %v13221
  %v13313 = vadd.f32 %v13312, %v13223
  %v13314 = vadd.f32 %v13313, %v13226
  %v13315 = vadd.f32 %v13314, %v13228
  %v13316 = vadd.f32 %v13315, %v13231
  %v13317 = vadd.f32 %v13316, %v13233
  %v13318 = vadd.f32 %v13317, %v13236
  %v13319 = vadd.f32 %v13318, %v13238
  %v13320 = vadd.f32 %v13319, %v13241
  %v13321 = vadd.f32 %v13320, %v13243
  %v13322 = vadd.f32 %v13321, %v13246
  %v13323 = vadd.f32 %v13322, %v13248
  %v13324 = vadd.f32 %v13323, %v13251
  %v13325 = vadd.f32 %v13324, %v13253
  %v13326 = vadd.f32 %v13325, %v13256
  %v13327 = vadd.f32 %v13326, %v13258
  %v13328 = vadd.f32 %v13327, %v13261
  %v13329 = vadd.f32 %v13328, %v13263
  %v13330 = vrot.slane %v13329, 4
  %v13331 = vadd.f32 %v13329, %v13330
  %v13332 = vrot.slane %v13331, 2
  %v13333 = vadd.f32 %v13331, %v13332
  %v13334 = vrot.slane %v13333, 1
  %v13335 = vadd.f32 %v13333, %v13334
  %v13336 = vmul.f32 %v13106, %v13106
  %v13337 = vmul.f32 %v13108, %v13108
  %v13338 = vmul.f32 %v13111, %v13111
  %v13339 = vmul.f32 %v13113, %v13113
  %v13340 = vmul.f32 %v13116, %v13116
  %v13341 = vmul.f32 %v13118, %v13118
  %v13342 = vmul.f32 %v13121, %v13121
  %v13343 = vmul.f32 %v13123, %v13123
  %v13344 = vmul.f32 %v13126, %v13126
  %v13345 = vmul.f32 %v13128, %v13128
  %v13346 = vmul.f32 %v13131, %v13131
  %v13347 = vmul.f32 %v13133, %v13133
  %v13348 = vmul.f32 %v13136, %v13136
  %v13349 = vmul.f32 %v13138, %v13138
  %v13350 = vmul.f32 %v13141, %v13141
  %v13351 = vmul.f32 %v13143, %v13143
  %v13352 = vmul.f32 %v13146, %v13146
  %v13353 = vmul.f32 %v13148, %v13148
  %v13354 = vmul.f32 %v13151, %v13151
  %v13355 = vmul.f32 %v13153, %v13153
  %v13356 = vmul.f32 %v13156, %v13156
  %v13357 = vmul.f32 %v13158, %v13158
  %v13358 = vmul.f32 %v13161, %v13161
  %v13359 = vmul.f32 %v13163, %v13163
  %v13360 = vmul.f32 %v13166, %v13166
  %v13361 = vmul.f32 %v13168, %v13168
  %v13362 = vmul.f32 %v13171, %v13171
  %v13363 = vmul.f32 %v13173, %v13173
  %v13364 = vmul.f32 %v13176, %v13176
  %v13365 = vmul.f32 %v13178, %v13178
  %v13366 = vmul.f32 %v13181, %v13181
  %v13367 = vmul.f32 %v13183, %v13183
  %v13368 = vmul.f32 %v13186, %v13186
  %v13369 = vmul.f32 %v13188, %v13188
  %v13370 = vmul.f32 %v13191, %v13191
  %v13371 = vmul.f32 %v13193, %v13193
  %v13372 = vmul.f32 %v13196, %v13196
  %v13373 = vmul.f32 %v13198, %v13198
  %v13374 = vmul.f32 %v13201, %v13201
  %v13375 = vmul.f32 %v13203, %v13203
  %v13376 = vmul.f32 %v13206, %v13206
  %v13377 = vmul.f32 %v13208, %v13208
  %v13378 = vmul.f32 %v13211, %v13211
  %v13379 = vmul.f32 %v13213, %v13213
  %v13380 = vmul.f32 %v13216, %v13216
  %v13381 = vmul.f32 %v13218, %v13218
  %v13382 = vmul.f32 %v13221, %v13221
  %v13383 = vmul.f32 %v13223, %v13223
  %v13384 = vmul.f32 %v13226, %v13226
  %v13385 = vmul.f32 %v13228, %v13228
  %v13386 = vmul.f32 %v13231, %v13231
  %v13387 = vmul.f32 %v13233, %v13233
  %v13388 = vmul.f32 %v13236, %v13236
  %v13389 = vmul.f32 %v13238, %v13238
  %v13390 = vmul.f32 %v13241, %v13241
  %v13391 = vmul.f32 %v13243, %v13243
  %v13392 = vmul.f32 %v13246, %v13246
  %v13393 = vmul.f32 %v13248, %v13248
  %v13394 = vmul.f32 %v13251, %v13251
  %v13395 = vmul.f32 %v13253, %v13253
  %v13396 = vmul.f32 %v13256, %v13256
  %v13397 = vmul.f32 %v13258, %v13258
  %v13398 = vmul.f32 %v13261, %v13261
  %v13399 = vmul.f32 %v13263, %v13263
  %v13400 = vadd.f32 %v13336, %v13337
  %v13401 = vadd.f32 %v13400, %v13338
  %v13402 = vadd.f32 %v13401, %v13339
  %v13403 = vadd.f32 %v13402, %v13340
  %v13404 = vadd.f32 %v13403, %v13341
  %v13405 = vadd.f32 %v13404, %v13342
  %v13406 = vadd.f32 %v13405, %v13343
  %v13407 = vadd.f32 %v13406, %v13344
  %v13408 = vadd.f32 %v13407, %v13345
  %v13409 = vadd.f32 %v13408, %v13346
  %v13410 = vadd.f32 %v13409, %v13347
  %v13411 = vadd.f32 %v13410, %v13348
  %v13412 = vadd.f32 %v13411, %v13349
  %v13413 = vadd.f32 %v13412, %v13350
  %v13414 = vadd.f32 %v13413, %v13351
  %v13415 = vadd.f32 %v13414, %v13352
  %v13416 = vadd.f32 %v13415, %v13353
  %v13417 = vadd.f32 %v13416, %v13354
  %v13418 = vadd.f32 %v13417, %v13355
  %v13419 = vadd.f32 %v13418, %v13356
  %v13420 = vadd.f32 %v13419, %v13357
  %v13421 = vadd.f32 %v13420, %v13358
  %v13422 = vadd.f32 %v13421, %v13359
  %v13423 = vadd.f32 %v13422, %v13360
  %v13424 = vadd.f32 %v13423, %v13361
  %v13425 = vadd.f32 %v13424, %v13362
  %v13426 = vadd.f32 %v13425, %v13363
  %v13427 = vadd.f32 %v13426, %v13364
  %v13428 = vadd.f32 %v13427, %v13365
  %v13429 = vadd.f32 %v13428, %v13366
  %v13430 = vadd.f32 %v13429, %v13367
  %v13431 = vadd.f32 %v13430, %v13368
  %v13432 = vadd.f32 %v13431, %v13369
  %v13433 = vadd.f32 %v13432, %v13370
  %v13434 = vadd.f32 %v13433, %v13371
  %v13435 = vadd.f32 %v13434, %v13372
  %v13436 = vadd.f32 %v13435, %v13373
  %v13437 = vadd.f32 %v13436, %v13374
  %v13438 = vadd.f32 %v13437, %v13375
  %v13439 = vadd.f32 %v13438, %v13376
  %v13440 = vadd.f32 %v13439, %v13377
  %v13441 = vadd.f32 %v13440, %v13378
  %v13442 = vadd.f32 %v13441, %v13379
  %v13443 = vadd.f32 %v13442, %v13380
  %v13444 = vadd.f32 %v13443, %v13381
  %v13445 = vadd.f32 %v13444, %v13382
  %v13446 = vadd.f32 %v13445, %v13383
  %v13447 = vadd.f32 %v13446, %v13384
  %v13448 = vadd.f32 %v13447, %v13385
  %v13449 = vadd.f32 %v13448, %v13386
  %v13450 = vadd.f32 %v13449, %v13387
  %v13451 = vadd.f32 %v13450, %v13388
  %v13452 = vadd.f32 %v13451, %v13389
  %v13453 = vadd.f32 %v13452, %v13390
  %v13454 = vadd.f32 %v13453, %v13391
  %v13455 = vadd.f32 %v13454, %v13392
  %v13456 = vadd.f32 %v13455, %v13393
  %v13457 = vadd.f32 %v13456, %v13394
  %v13458 = vadd.f32 %v13457, %v13395
  %v13459 = vadd.f32 %v13458, %v13396
  %v13460 = vadd.f32 %v13459, %v13397
  %v13461 = vadd.f32 %v13460, %v13398
  %v13462 = vadd.f32 %v13461, %v13399
  %v13463 = vrot.slane %v13462, 4
  %v13464 = vadd.f32 %v13462, %v13463
  %v13465 = vrot.slane %v13464, 2
  %v13466 = vadd.f32 %v13464, %v13465
  %v13467 = vrot.slane %v13466, 1
  %v13468 = vadd.f32 %v13466, %v13467
  %v13469 = vmul.f32 %v13335, 0.001953125
  %v13470 = vmul.f32 %v13468, 0.001953125
  %v13471 = vmul.f32 %v13469, %v13469
  %v13472 = vsub.f32 %v13470, %v13471
  %v13473 = vmax.f32 %v13472, 0.0
  %v13474 = vadd.f32 %v13473, 1e-05
  %v13475 = vrsqrt.pop %v13474
  %v13476 = vmul.f32 %v13475, %v13474
  %v13477 = vmul.f32 %v13476, %v13475
  %v13478 = vmul.f32 0.5, %v13477
  %v13479 = vsub.f32 1.5, %v13478
  %v13480 = vmul.f32 %v13475, %v13479
  %vm13481 = vweird.f32 %v13474
  %vm13482 = vweird.f32 %v13475
  %vm13483 = vmor %vm13481, %vm13482
  %v13484 = vsel %vm13483, %v13475, %v13480
  %v13485 = vmul.f32 %v13265, %v13484
  %v13486 = vmul.f32 %v13469, %v13485
  %v13487 = vsub.f32 %v13266, %v13486
  %v13489 = vperm.slane %v13485, 0
  %v13491 = vmul.f32 %v13106, %v13489
  %v13492 = vmul.f32 %v13108, %v13489
  %v13493 = vmul.f32 %v13111, %v13489
  %v13494 = vmul.f32 %v13113, %v13489
  %v13495 = vmul.f32 %v13116, %v13489
  %v13496 = vmul.f32 %v13118, %v13489
  %v13497 = vmul.f32 %v13121, %v13489
  %v13498 = vmul.f32 %v13123, %v13489
  %v13499 = vmul.f32 %v13126, %v13489
  %v13500 = vmul.f32 %v13128, %v13489
  %v13501 = vmul.f32 %v13131, %v13489
  %v13502 = vmul.f32 %v13133, %v13489
  %v13503 = vmul.f32 %v13136, %v13489
  %v13504 = vmul.f32 %v13138, %v13489
  %v13505 = vmul.f32 %v13141, %v13489
  %v13506 = vmul.f32 %v13143, %v13489
  %v13507 = vmul.f32 %v13146, %v13489
  %v13508 = vmul.f32 %v13148, %v13489
  %v13509 = vmul.f32 %v13151, %v13489
  %v13510 = vmul.f32 %v13153, %v13489
  %v13511 = vmul.f32 %v13156, %v13489
  %v13512 = vmul.f32 %v13158, %v13489
  %v13513 = vmul.f32 %v13161, %v13489
  %v13514 = vmul.f32 %v13163, %v13489
  %v13515 = vmul.f32 %v13166, %v13489
  %v13516 = vmul.f32 %v13168, %v13489
  %v13517 = vmul.f32 %v13171, %v13489
  %v13518 = vmul.f32 %v13173, %v13489
  %v13519 = vmul.f32 %v13176, %v13489
  %v13520 = vmul.f32 %v13178, %v13489
  %v13521 = vmul.f32 %v13181, %v13489
  %v13522 = vmul.f32 %v13183, %v13489
  %v13523 = vmul.f32 %v13186, %v13489
  %v13524 = vmul.f32 %v13188, %v13489
  %v13525 = vmul.f32 %v13191, %v13489
  %v13526 = vmul.f32 %v13193, %v13489
  %v13527 = vmul.f32 %v13196, %v13489
  %v13528 = vmul.f32 %v13198, %v13489
  %v13529 = vmul.f32 %v13201, %v13489
  %v13530 = vmul.f32 %v13203, %v13489
  %v13531 = vmul.f32 %v13206, %v13489
  %v13532 = vmul.f32 %v13208, %v13489
  %v13533 = vmul.f32 %v13211, %v13489
  %v13534 = vmul.f32 %v13213, %v13489
  %v13535 = vmul.f32 %v13216, %v13489
  %v13536 = vmul.f32 %v13218, %v13489
  %v13537 = vmul.f32 %v13221, %v13489
  %v13538 = vmul.f32 %v13223, %v13489
  %v13539 = vmul.f32 %v13226, %v13489
  %v13540 = vmul.f32 %v13228, %v13489
  %v13541 = vmul.f32 %v13231, %v13489
  %v13542 = vmul.f32 %v13233, %v13489
  %v13543 = vmul.f32 %v13236, %v13489
  %v13544 = vmul.f32 %v13238, %v13489
  %v13545 = vmul.f32 %v13241, %v13489
  %v13546 = vmul.f32 %v13243, %v13489
  %v13547 = vmul.f32 %v13246, %v13489
  %v13548 = vmul.f32 %v13248, %v13489
  %v13549 = vmul.f32 %v13251, %v13489
  %v13550 = vmul.f32 %v13253, %v13489
  %v13551 = vmul.f32 %v13256, %v13489
  %v13552 = vmul.f32 %v13258, %v13489
  %v13553 = vmul.f32 %v13261, %v13489
  %v13554 = vmul.f32 %v13263, %v13489
  %v13556 = vperm.slane %v13487, 0
  %v13558 = vadd.f32 %v13491, %v13556
  %v13559 = vadd.f32 %v13492, %v13556
  %v13560 = vadd.f32 %v13493, %v13556
  %v13561 = vadd.f32 %v13494, %v13556
  %v13562 = vadd.f32 %v13495, %v13556
  %v13563 = vadd.f32 %v13496, %v13556
  %v13564 = vadd.f32 %v13497, %v13556
  %v13565 = vadd.f32 %v13498, %v13556
  %v13566 = vadd.f32 %v13499, %v13556
  %v13567 = vadd.f32 %v13500, %v13556
  %v13568 = vadd.f32 %v13501, %v13556
  %v13569 = vadd.f32 %v13502, %v13556
  %v13570 = vadd.f32 %v13503, %v13556
  %v13571 = vadd.f32 %v13504, %v13556
  %v13572 = vadd.f32 %v13505, %v13556
  %v13573 = vadd.f32 %v13506, %v13556
  %v13574 = vadd.f32 %v13507, %v13556
  %v13575 = vadd.f32 %v13508, %v13556
  %v13576 = vadd.f32 %v13509, %v13556
  %v13577 = vadd.f32 %v13510, %v13556
  %v13578 = vadd.f32 %v13511, %v13556
  %v13579 = vadd.f32 %v13512, %v13556
  %v13580 = vadd.f32 %v13513, %v13556
  %v13581 = vadd.f32 %v13514, %v13556
  %v13582 = vadd.f32 %v13515, %v13556
  %v13583 = vadd.f32 %v13516, %v13556
  %v13584 = vadd.f32 %v13517, %v13556
  %v13585 = vadd.f32 %v13518, %v13556
  %v13586 = vadd.f32 %v13519, %v13556
  %v13587 = vadd.f32 %v13520, %v13556
  %v13588 = vadd.f32 %v13521, %v13556
  %v13589 = vadd.f32 %v13522, %v13556
  %v13590 = vadd.f32 %v13523, %v13556
  %v13591 = vadd.f32 %v13524, %v13556
  %v13592 = vadd.f32 %v13525, %v13556
  %v13593 = vadd.f32 %v13526, %v13556
  %v13594 = vadd.f32 %v13527, %v13556
  %v13595 = vadd.f32 %v13528, %v13556
  %v13596 = vadd.f32 %v13529, %v13556
  %v13597 = vadd.f32 %v13530, %v13556
  %v13598 = vadd.f32 %v13531, %v13556
  %v13599 = vadd.f32 %v13532, %v13556
  %v13600 = vadd.f32 %v13533, %v13556
  %v13601 = vadd.f32 %v13534, %v13556
  %v13602 = vadd.f32 %v13535, %v13556
  %v13603 = vadd.f32 %v13536, %v13556
  %v13604 = vadd.f32 %v13537, %v13556
  %v13605 = vadd.f32 %v13538, %v13556
  %v13606 = vadd.f32 %v13539, %v13556
  %v13607 = vadd.f32 %v13540, %v13556
  %v13608 = vadd.f32 %v13541, %v13556
  %v13609 = vadd.f32 %v13542, %v13556
  %v13610 = vadd.f32 %v13543, %v13556
  %v13611 = vadd.f32 %v13544, %v13556
  %v13612 = vadd.f32 %v13545, %v13556
  %v13613 = vadd.f32 %v13546, %v13556
  %v13614 = vadd.f32 %v13547, %v13556
  %v13615 = vadd.f32 %v13548, %v13556
  %v13616 = vadd.f32 %v13549, %v13556
  %v13617 = vadd.f32 %v13550, %v13556
  %v13618 = vadd.f32 %v13551, %v13556
  %v13619 = vadd.f32 %v13552, %v13556
  %v13620 = vadd.f32 %v13553, %v13556
  %v13621 = vadd.f32 %v13554, %v13556
  %v13622 = vmax.f32 %v13558, 0.0
  %v13623 = vmax.f32 %v13559, 0.0
  %v13624 = vmax.f32 %v13560, 0.0
  %v13625 = vmax.f32 %v13561, 0.0
  %v13626 = vmax.f32 %v13562, 0.0
  %v13627 = vmax.f32 %v13563, 0.0
  %v13628 = vmax.f32 %v13564, 0.0
  %v13629 = vmax.f32 %v13565, 0.0
  %v13630 = vmax.f32 %v13566, 0.0
  %v13631 = vmax.f32 %v13567, 0.0
  %v13632 = vmax.f32 %v13568, 0.0
  %v13633 = vmax.f32 %v13569, 0.0
  %v13634 = vmax.f32 %v13570, 0.0
  %v13635 = vmax.f32 %v13571, 0.0
  %v13636 = vmax.f32 %v13572, 0.0
  %v13637 = vmax.f32 %v13573, 0.0
  %v13638 = vmax.f32 %v13574, 0.0
  %v13639 = vmax.f32 %v13575, 0.0
  %v13640 = vmax.f32 %v13576, 0.0
  %v13641 = vmax.f32 %v13577, 0.0
  %v13642 = vmax.f32 %v13578, 0.0
  %v13643 = vmax.f32 %v13579, 0.0
  %v13644 = vmax.f32 %v13580, 0.0
  %v13645 = vmax.f32 %v13581, 0.0
  %v13646 = vmax.f32 %v13582, 0.0
  %v13647 = vmax.f32 %v13583, 0.0
  %v13648 = vmax.f32 %v13584, 0.0
  %v13649 = vmax.f32 %v13585, 0.0
  %v13650 = vmax.f32 %v13586, 0.0
  %v13651 = vmax.f32 %v13587, 0.0
  %v13652 = vmax.f32 %v13588, 0.0
  %v13653 = vmax.f32 %v13589, 0.0
  %v13654 = vmax.f32 %v13590, 0.0
  %v13655 = vmax.f32 %v13591, 0.0
  %v13656 = vmax.f32 %v13592, 0.0
  %v13657 = vmax.f32 %v13593, 0.0
  %v13658 = vmax.f32 %v13594, 0.0
  %v13659 = vmax.f32 %v13595, 0.0
  %v13660 = vmax.f32 %v13596, 0.0
  %v13661 = vmax.f32 %v13597, 0.0
  %v13662 = vmax.f32 %v13598, 0.0
  %v13663 = vmax.f32 %v13599, 0.0
  %v13664 = vmax.f32 %v13600, 0.0
  %v13665 = vmax.f32 %v13601, 0.0
  %v13666 = vmax.f32 %v13602, 0.0
  %v13667 = vmax.f32 %v13603, 0.0
  %v13668 = vmax.f32 %v13604, 0.0
  %v13669 = vmax.f32 %v13605, 0.0
  %v13670 = vmax.f32 %v13606, 0.0
  %v13671 = vmax.f32 %v13607, 0.0
  %v13672 = vmax.f32 %v13608, 0.0
  %v13673 = vmax.f32 %v13609, 0.0
  %v13674 = vmax.f32 %v13610, 0.0
  %v13675 = vmax.f32 %v13611, 0.0
  %v13676 = vmax.f32 %v13612, 0.0
  %v13677 = vmax.f32 %v13613, 0.0
  %v13678 = vmax.f32 %v13614, 0.0
  %v13679 = vmax.f32 %v13615, 0.0
  %v13680 = vmax.f32 %v13616, 0.0
  %v13681 = vmax.f32 %v13617, 0.0
  %v13682 = vmax.f32 %v13618, 0.0
  %v13683 = vmax.f32 %v13619, 0.0
  %v13684 = vmax.f32 %v13620, 0.0
  %v13685 = vmax.f32 %v13621, 0.0
  %v13686 = vpack.c.bf16 %v13623, %v13622
  %v13687 = vpack.c.bf16 %v13625, %v13624
  %v13688 = vpack.c.bf16 %v13627, %v13626
  %v13689 = vpack.c.bf16 %v13629, %v13628
  %v13690 = vpack.c.bf16 %v13631, %v13630
  %v13691 = vpack.c.bf16 %v13633, %v13632
  %v13692 = vpack.c.bf16 %v13635, %v13634
  %v13693 = vpack.c.bf16 %v13637, %v13636
  %v13694 = vpack.c.bf16 %v13639, %v13638
  %v13695 = vpack.c.bf16 %v13641, %v13640
  %v13696 = vpack.c.bf16 %v13643, %v13642
  %v13697 = vpack.c.bf16 %v13645, %v13644
  %v13698 = vpack.c.bf16 %v13647, %v13646
  %v13699 = vpack.c.bf16 %v13649, %v13648
  %v13700 = vpack.c.bf16 %v13651, %v13650
  %v13701 = vpack.c.bf16 %v13653, %v13652
  %v13702 = vpack.c.bf16 %v13655, %v13654
  %v13703 = vpack.c.bf16 %v13657, %v13656
  %v13704 = vpack.c.bf16 %v13659, %v13658
  %v13705 = vpack.c.bf16 %v13661, %v13660
  %v13706 = vpack.c.bf16 %v13663, %v13662
  %v13707 = vpack.c.bf16 %v13665, %v13664
  %v13708 = vpack.c.bf16 %v13667, %v13666
  %v13709 = vpack.c.bf16 %v13669, %v13668
  %v13710 = vpack.c.bf16 %v13671, %v13670
  %v13711 = vpack.c.bf16 %v13673, %v13672
  %v13712 = vpack.c.bf16 %v13675, %v13674
  %v13713 = vpack.c.bf16 %v13677, %v13676
  %v13714 = vpack.c.bf16 %v13679, %v13678
  %v13715 = vpack.c.bf16 %v13681, %v13680
  %v13716 = vpack.c.bf16 %v13683, %v13682
  %v13717 = vpack.c.bf16 %v13685, %v13684
  %v13718 = vld [vmem:[%s7] sm:$0xf]
  %v13719 = vld [vmem:[%s7 + $0x4] sm:$0xf]
  %v13720 = vld [vmem:[%s7 + $0x8] sm:$0xf]
  %v13721 = vld [vmem:[%s7 + $0xc] sm:$0xf]
  %v13722 = vld [vmem:[%s7 + $0x10] sm:$0xf]
  %v13723 = vld [vmem:[%s7 + $0x14] sm:$0xf]
  %v13724 = vld [vmem:[%s7 + $0x18] sm:$0xf]
  %v13725 = vld [vmem:[%s7 + $0x1c] sm:$0xf]
  %v13726 = vld [vmem:[%s7 + $0x20] sm:$0xf]
  %v13727 = vld [vmem:[%s7 + $0x24] sm:$0xf]
  %v13728 = vld [vmem:[%s7 + $0x28] sm:$0xf]
  %v13729 = vld [vmem:[%s7 + $0x2c] sm:$0xf]
  %v13730 = vld [vmem:[%s7 + $0x30] sm:$0xf]
  %v13731 = vld [vmem:[%s7 + $0x34] sm:$0xf]
  %v13732 = vld [vmem:[%s7 + $0x38] sm:$0xf]
  %v13733 = vld [vmem:[%s7 + $0x3c] sm:$0xf]
  %v13734 = vld [vmem:[%s8] sm:$0x1]
  %v13736 = vperm.slane %v13734, 0
  %v13754 = vunpack.c.l.b16 %v13718
  %v13755 = vunpack.c.l.b16 %v13719
  %v13756 = vunpack.c.l.b16 %v13720
  %v13757 = vunpack.c.l.b16 %v13721
  %v13758 = vunpack.c.l.b16 %v13722
  %v13759 = vunpack.c.l.b16 %v13723
  %v13760 = vunpack.c.l.b16 %v13724
  %v13761 = vunpack.c.l.b16 %v13725
  %v13762 = vunpack.c.l.b16 %v13726
  %v13763 = vunpack.c.l.b16 %v13727
  %v13764 = vunpack.c.l.b16 %v13728
  %v13765 = vunpack.c.l.b16 %v13729
  %v13766 = vunpack.c.l.b16 %v13730
  %v13767 = vunpack.c.l.b16 %v13731
  %v13768 = vunpack.c.l.b16 %v13732
  %v13769 = vunpack.c.l.b16 %v13733
  %v13770 = vpack.c.b16 %v13755, %v13754
  %v13771 = vpack.c.b16 %v13757, %v13756
  %v13772 = vpack.c.b16 %v13759, %v13758
  %v13773 = vpack.c.b16 %v13761, %v13760
  %v13774 = vpack.c.b16 %v13763, %v13762
  %v13775 = vpack.c.b16 %v13765, %v13764
  %v13776 = vpack.c.b16 %v13767, %v13766
  %v13777 = vpack.c.b16 %v13769, %v13768
  %13786 = vmatpush.bf16.msra.mxu0 %v13777
  %13787 = vmatpush.bf16.msra.mxu0 %v13776
  %13788 = vmatpush.bf16.msra.mxu0 %v13775
  %13789 = vmatpush.bf16.msra.mxu0 %v13774
  %13790 = vmatpush.bf16.msra.mxu0 %v13773
  %13791 = vmatpush.bf16.msra.mxu0 %v13772
  %13792 = vmatpush.bf16.msra.mxu0 %v13771
  %13793 = vmatpush.bf16.msra.mxu0 %v13770
  %13794 = vmatmul.bf16.gmra.mxu0 %v13686
  %v13795 = vpop.f32.mrf.mxu0
  %v13796 = vadd.f32 %v13736, %v13795
  %v13797 = vpop.f32.mrf.mxu0
  %v13798 = vadd.f32 %v13736, %v13797
  %13799 = vmatmul.bf16.gmra.mxu0 %v13687
  %v13800 = vpop.f32.mrf.mxu0
  %v13801 = vadd.f32 %v13736, %v13800
  %v13802 = vpop.f32.mrf.mxu0
  %v13803 = vadd.f32 %v13736, %v13802
  %13804 = vmatmul.bf16.gmra.mxu0 %v13688
  %v13805 = vpop.f32.mrf.mxu0
  %v13806 = vadd.f32 %v13736, %v13805
  %v13807 = vpop.f32.mrf.mxu0
  %v13808 = vadd.f32 %v13736, %v13807
  %13809 = vmatmul.bf16.gmra.mxu0 %v13689
  %v13810 = vpop.f32.mrf.mxu0
  %v13811 = vadd.f32 %v13736, %v13810
  %v13812 = vpop.f32.mrf.mxu0
  %v13813 = vadd.f32 %v13736, %v13812
  %13814 = vmatmul.bf16.gmra.mxu0 %v13690
  %v13815 = vpop.f32.mrf.mxu0
  %v13816 = vadd.f32 %v13736, %v13815
  %v13817 = vpop.f32.mrf.mxu0
  %v13818 = vadd.f32 %v13736, %v13817
  %13819 = vmatmul.bf16.gmra.mxu0 %v13691
  %v13820 = vpop.f32.mrf.mxu0
  %v13821 = vadd.f32 %v13736, %v13820
  %v13822 = vpop.f32.mrf.mxu0
  %v13823 = vadd.f32 %v13736, %v13822
  %13824 = vmatmul.bf16.gmra.mxu0 %v13692
  %v13825 = vpop.f32.mrf.mxu0
  %v13826 = vadd.f32 %v13736, %v13825
  %v13827 = vpop.f32.mrf.mxu0
  %v13828 = vadd.f32 %v13736, %v13827
  %13829 = vmatmul.bf16.gmra.mxu0 %v13693
  %v13830 = vpop.f32.mrf.mxu0
  %v13831 = vadd.f32 %v13736, %v13830
  %v13832 = vpop.f32.mrf.mxu0
  %v13833 = vadd.f32 %v13736, %v13832
  %13834 = vmatmul.bf16.gmra.mxu0 %v13694
  %v13835 = vpop.f32.mrf.mxu0
  %v13836 = vadd.f32 %v13736, %v13835
  %v13837 = vpop.f32.mrf.mxu0
  %v13838 = vadd.f32 %v13736, %v13837
  %13839 = vmatmul.bf16.gmra.mxu0 %v13695
  %v13840 = vpop.f32.mrf.mxu0
  %v13841 = vadd.f32 %v13736, %v13840
  %v13842 = vpop.f32.mrf.mxu0
  %v13843 = vadd.f32 %v13736, %v13842
  %13844 = vmatmul.bf16.gmra.mxu0 %v13696
  %v13845 = vpop.f32.mrf.mxu0
  %v13846 = vadd.f32 %v13736, %v13845
  %v13847 = vpop.f32.mrf.mxu0
  %v13848 = vadd.f32 %v13736, %v13847
  %13849 = vmatmul.bf16.gmra.mxu0 %v13697
  %v13850 = vpop.f32.mrf.mxu0
  %v13851 = vadd.f32 %v13736, %v13850
  %v13852 = vpop.f32.mrf.mxu0
  %v13853 = vadd.f32 %v13736, %v13852
  %13854 = vmatmul.bf16.gmra.mxu0 %v13698
  %v13855 = vpop.f32.mrf.mxu0
  %v13856 = vadd.f32 %v13736, %v13855
  %v13857 = vpop.f32.mrf.mxu0
  %v13858 = vadd.f32 %v13736, %v13857
  %13859 = vmatmul.bf16.gmra.mxu0 %v13699
  %v13860 = vpop.f32.mrf.mxu0
  %v13861 = vadd.f32 %v13736, %v13860
  %v13862 = vpop.f32.mrf.mxu0
  %v13863 = vadd.f32 %v13736, %v13862
  %13864 = vmatmul.bf16.gmra.mxu0 %v13700
  %v13865 = vpop.f32.mrf.mxu0
  %v13866 = vadd.f32 %v13736, %v13865
  %v13867 = vpop.f32.mrf.mxu0
  %v13868 = vadd.f32 %v13736, %v13867
  %13869 = vmatmul.bf16.gmra.mxu0 %v13701
  %v13870 = vpop.f32.mrf.mxu0
  %v13871 = vadd.f32 %v13736, %v13870
  %v13872 = vpop.f32.mrf.mxu0
  %v13873 = vadd.f32 %v13736, %v13872
  %13874 = vmatmul.bf16.gmra.mxu0 %v13702
  %v13875 = vpop.f32.mrf.mxu0
  %v13876 = vadd.f32 %v13736, %v13875
  %v13877 = vpop.f32.mrf.mxu0
  %v13878 = vadd.f32 %v13736, %v13877
  %13879 = vmatmul.bf16.gmra.mxu0 %v13703
  %v13880 = vpop.f32.mrf.mxu0
  %v13881 = vadd.f32 %v13736, %v13880
  %v13882 = vpop.f32.mrf.mxu0
  %v13883 = vadd.f32 %v13736, %v13882
  %13884 = vmatmul.bf16.gmra.mxu0 %v13704
  %v13885 = vpop.f32.mrf.mxu0
  %v13886 = vadd.f32 %v13736, %v13885
  %v13887 = vpop.f32.mrf.mxu0
  %v13888 = vadd.f32 %v13736, %v13887
  %13889 = vmatmul.bf16.gmra.mxu0 %v13705
  %v13890 = vpop.f32.mrf.mxu0
  %v13891 = vadd.f32 %v13736, %v13890
  %v13892 = vpop.f32.mrf.mxu0
  %v13893 = vadd.f32 %v13736, %v13892
  %13894 = vmatmul.bf16.gmra.mxu0 %v13706
  %v13895 = vpop.f32.mrf.mxu0
  %v13896 = vadd.f32 %v13736, %v13895
  %v13897 = vpop.f32.mrf.mxu0
  %v13898 = vadd.f32 %v13736, %v13897
  %13899 = vmatmul.bf16.gmra.mxu0 %v13707
  %v13900 = vpop.f32.mrf.mxu0
  %v13901 = vadd.f32 %v13736, %v13900
  %v13902 = vpop.f32.mrf.mxu0
  %v13903 = vadd.f32 %v13736, %v13902
  %13904 = vmatmul.bf16.gmra.mxu0 %v13708
  %v13905 = vpop.f32.mrf.mxu0
  %v13906 = vadd.f32 %v13736, %v13905
  %v13907 = vpop.f32.mrf.mxu0
  %v13908 = vadd.f32 %v13736, %v13907
  %13909 = vmatmul.bf16.gmra.mxu0 %v13709
  %v13910 = vpop.f32.mrf.mxu0
  %v13911 = vadd.f32 %v13736, %v13910
  %v13912 = vpop.f32.mrf.mxu0
  %v13913 = vadd.f32 %v13736, %v13912
  %13914 = vmatmul.bf16.gmra.mxu0 %v13710
  %v13915 = vpop.f32.mrf.mxu0
  %v13916 = vadd.f32 %v13736, %v13915
  %v13917 = vpop.f32.mrf.mxu0
  %v13918 = vadd.f32 %v13736, %v13917
  %13919 = vmatmul.bf16.gmra.mxu0 %v13711
  %v13920 = vpop.f32.mrf.mxu0
  %v13921 = vadd.f32 %v13736, %v13920
  %v13922 = vpop.f32.mrf.mxu0
  %v13923 = vadd.f32 %v13736, %v13922
  %13924 = vmatmul.bf16.gmra.mxu0 %v13712
  %v13925 = vpop.f32.mrf.mxu0
  %v13926 = vadd.f32 %v13736, %v13925
  %v13927 = vpop.f32.mrf.mxu0
  %v13928 = vadd.f32 %v13736, %v13927
  %13929 = vmatmul.bf16.gmra.mxu0 %v13713
  %v13930 = vpop.f32.mrf.mxu0
  %v13931 = vadd.f32 %v13736, %v13930
  %v13932 = vpop.f32.mrf.mxu0
  %v13933 = vadd.f32 %v13736, %v13932
  %13934 = vmatmul.bf16.gmra.mxu0 %v13714
  %v13935 = vpop.f32.mrf.mxu0
  %v13936 = vadd.f32 %v13736, %v13935
  %v13937 = vpop.f32.mrf.mxu0
  %v13938 = vadd.f32 %v13736, %v13937
  %13939 = vmatmul.bf16.gmra.mxu0 %v13715
  %v13940 = vpop.f32.mrf.mxu0
  %v13941 = vadd.f32 %v13736, %v13940
  %v13942 = vpop.f32.mrf.mxu0
  %v13943 = vadd.f32 %v13736, %v13942
  %13944 = vmatmul.bf16.gmra.mxu0 %v13716
  %v13945 = vpop.f32.mrf.mxu0
  %v13946 = vadd.f32 %v13736, %v13945
  %v13947 = vpop.f32.mrf.mxu0
  %v13948 = vadd.f32 %v13736, %v13947
  %13949 = vmatmul.bf16.gmra.mxu0 %v13717
  %v13950 = vpop.f32.mrf.mxu0
  %v13951 = vadd.f32 %v13736, %v13950
  %v13952 = vpop.f32.mrf.mxu0
  %v13953 = vadd.f32 %v13736, %v13952
  %13954 = vdwg.mxu0
  %13955 = vst [vmem:[%s9] sm:$0xff] %v13796
  %13956 = vst [vmem:[%s9 + $0x8] sm:$0xff] %v13798
  %13957 = vst [vmem:[%s9 + $0x10] sm:$0xff] %v13801
  %13958 = vst [vmem:[%s9 + $0x18] sm:$0xff] %v13803
  %13959 = vst [vmem:[%s9 + $0x20] sm:$0xff] %v13806
  %13960 = vst [vmem:[%s9 + $0x28] sm:$0xff] %v13808
  %13961 = vst [vmem:[%s9 + $0x30] sm:$0xff] %v13811
  %13962 = vst [vmem:[%s9 + $0x38] sm:$0xff] %v13813
  %13963 = vst [vmem:[%s9 + $0x40] sm:$0xff] %v13816
  %13964 = vst [vmem:[%s9 + $0x48] sm:$0xff] %v13818
  %13965 = vst [vmem:[%s9 + $0x50] sm:$0xff] %v13821
  %13966 = vst [vmem:[%s9 + $0x58] sm:$0xff] %v13823
  %13967 = vst [vmem:[%s9 + $0x60] sm:$0xff] %v13826
  %13968 = vst [vmem:[%s9 + $0x68] sm:$0xff] %v13828
  %13969 = vst [vmem:[%s9 + $0x70] sm:$0xff] %v13831
  %13970 = vst [vmem:[%s9 + $0x78] sm:$0xff] %v13833
  %13971 = vst [vmem:[%s9 + $0x80] sm:$0xff] %v13836
  %13972 = vst [vmem:[%s9 + $0x88] sm:$0xff] %v13838
  %13973 = vst [vmem:[%s9 + $0x90] sm:$0xff] %v13841
  %13974 = vst [vmem:[%s9 + $0x98] sm:$0xff] %v13843
  %13975 = vst [vmem:[%s9 + $0xa0] sm:$0xff] %v13846
  %13976 = vst [vmem:[%s9 + $0xa8] sm:$0xff] %v13848
  %13977 = vst [vmem:[%s9 + $0xb0] sm:$0xff] %v13851
  %13978 = vst [vmem:[%s9 + $0xb8] sm:$0xff] %v13853
  %13979 = vst [vmem:[%s9 + $0xc0] sm:$0xff] %v13856
  %13980 = vst [vmem:[%s9 + $0xc8] sm:$0xff] %v13858
  %13981 = vst [vmem:[%s9 + $0xd0] sm:$0xff] %v13861
  %13982 = vst [vmem:[%s9 + $0xd8] sm:$0xff] %v13863
  %13983 = vst [vmem:[%s9 + $0xe0] sm:$0xff] %v13866
  %13984 = vst [vmem:[%s9 + $0xe8] sm:$0xff] %v13868
  %13985 = vst [vmem:[%s9 + $0xf0] sm:$0xff] %v13871
  %13986 = vst [vmem:[%s9 + $0xf8] sm:$0xff] %v13873
  %13987 = vst [vmem:[%s9 + $0x100] sm:$0xff] %v13876
  %13988 = vst [vmem:[%s9 + $0x108] sm:$0xff] %v13878
  %13989 = vst [vmem:[%s9 + $0x110] sm:$0xff] %v13881
  %13990 = vst [vmem:[%s9 + $0x118] sm:$0xff] %v13883
  %13991 = vst [vmem:[%s9 + $0x120] sm:$0xff] %v13886
  %13992 = vst [vmem:[%s9 + $0x128] sm:$0xff] %v13888
  %13993 = vst [vmem:[%s9 + $0x130] sm:$0xff] %v13891
  %13994 = vst [vmem:[%s9 + $0x138] sm:$0xff] %v13893
  %13995 = vst [vmem:[%s9 + $0x140] sm:$0xff] %v13896
  %13996 = vst [vmem:[%s9 + $0x148] sm:$0xff] %v13898
  %13997 = vst [vmem:[%s9 + $0x150] sm:$0xff] %v13901
  %13998 = vst [vmem:[%s9 + $0x158] sm:$0xff] %v13903
  %13999 = vst [vmem:[%s9 + $0x160] sm:$0xff] %v13906
  %14000 = vst [vmem:[%s9 + $0x168] sm:$0xff] %v13908
  %14001 = vst [vmem:[%s9 + $0x170] sm:$0xff] %v13911
  %14002 = vst [vmem:[%s9 + $0x178] sm:$0xff] %v13913
  %14003 = vst [vmem:[%s9 + $0x180] sm:$0xff] %v13916
  %14004 = vst [vmem:[%s9 + $0x188] sm:$0xff] %v13918
  %14005 = vst [vmem:[%s9 + $0x190] sm:$0xff] %v13921
  %14006 = vst [vmem:[%s9 + $0x198] sm:$0xff] %v13923
  %14007 = vst [vmem:[%s9 + $0x1a0] sm:$0xff] %v13926
  %14008 = vst [vmem:[%s9 + $0x1a8] sm:$0xff] %v13928
  %14009 = vst [vmem:[%s9 + $0x1b0] sm:$0xff] %v13931
  %14010 = vst [vmem:[%s9 + $0x1b8] sm:$0xff] %v13933
  %14011 = vst [vmem:[%s9 + $0x1c0] sm:$0xff] %v13936
  %14012 = vst [vmem:[%s9 + $0x1c8] sm:$0xff] %v13938
  %14013 = vst [vmem:[%s9 + $0x1d0] sm:$0xff] %v13941
  %14014 = vst [vmem:[%s9 + $0x1d8] sm:$0xff] %v13943
  %14015 = vst [vmem:[%s9 + $0x1e0] sm:$0xff] %v13946
  %14016 = vst [vmem:[%s9 + $0x1e8] sm:$0xff] %v13948
  %14017 = vst [vmem:[%s9 + $0x1f0] sm:$0xff] %v13951
  %14018 = vst [vmem:[%s9 + $0x1f8] sm:$0xff] %v13953
  // Predicated region
  $region38: #{_decoder_block_impl.1} parent=0 // pred_check
    _
  $region39: #{_decoder_block_impl.1} parent=0 // pred_check_branch
    %14020 = sbr.rel (0) target = $region41
  $region40: #{_decoder_block_impl.1} parent=0 // pred_region
    _
  $region41: #{_decoder_block_impl.1} parent=0 // pred_fallthru
    _
  // Predicated region
  $region42: #{_decoder_block_impl.1} parent=0 // pred_check
    _
  $region43: #{_decoder_block_impl.1} parent=0 // pred_check_branch
    %14022 = sbr.rel (0) target = $region45
  $region44: #{_decoder_block_impl.1} parent=0 // pred_region
    _
  $region45: #{_decoder_block_impl.1} parent=0 // pred_fallthru
    _

</llo_original>
